<compile_context>
chip_gen: v5e
topology: v5e:2x2
jax: 0.10.0
libtpu: 0.0.40
codegen_flags: <defaults>
</compile_context>

<pallas_src>
import math
import functools

import jax
import jax.numpy as jnp
from jax.experimental import pallas as pl
from jax.experimental.pallas import tpu as pltpu  # noqa: F401 (kept for TPU backend)

NUM_HEADS = 2          # Dynamics_function.head
VOCAB = 1001           # Dynamics_function.vocab
NUM_POSITIONS = 128    # Dynamics_function.batchsize -> num_positions


# ------------------------------ in-kernel math --------------------------------

def _layer_norm(x, g, b, eps=1e-5):
    mu = jnp.mean(x, axis=-1, keepdims=True)
    var = jnp.mean((x - mu) ** 2, axis=-1, keepdims=True)
    return (x - mu) * jax.lax.rsqrt(var + eps) * g + b


def _erf(x):
    # Abramowitz & Stegun 7.1.26 (|err| < 1.5e-7); uses only exp/abs/where/mul/add,
    # all of which lower cleanly in Mosaic.
    p = 0.3275911
    a1, a2, a3, a4, a5 = (0.254829592, -0.284496736, 1.421413741,
                          -1.453152027, 1.061405429)
    ax = jnp.abs(x)
    t = 1.0 / (1.0 + p * ax)
    poly = ((((a5 * t + a4) * t + a3) * t + a2) * t + a1) * t
    y = 1.0 - poly * jnp.exp(-ax * ax)
    return jnp.where(x < 0, -y, y)


def _gelu(x):
    # erf-based GELU, matching torch.nn.GELU() default (up to ~1.5e-7)
    return 0.5 * x * (1.0 + _erf(x * (1.0 / math.sqrt(2.0))))


# ------------------------- fused dual-transformer kernel ----------------------

def fused_dynamics_kernel(h_ref, mask_ref, avg_ref,
                          ln1g_ref, ln1b_ref, ln2g_ref, ln2b_ref,
                          wqkv_ref, bqkv_ref, wo_ref, bo_ref,
                          w1_ref, b1_ref, w2_ref, b2_ref,
                          lnfg_ref, lnfb_ref, wh_ref, bh_ref,
                          reward_ref, next_ref,
                          *, num_layers, num_heads):
    """Both transformers (reward & next-state) statically unrolled in one call.

    Activation layout is (M, E) with M = B_inner * L and row index m = b*L + l,
    kept 2-D across the entire stack (no 3-D reshapes anywhere).
    """
    f32, bf16 = jnp.float32, jnp.bfloat16
    _, M, E = h_ref.shape
    H = num_heads
    Dh = E // H
    NL = num_layers
    scale = 1.0 / math.sqrt(Dh)

    mask = mask_ref[...]      # (M, M) f32: 0 where attendable, -1e30 otherwise
    avg = avg_ref[...]        # (L, M) f32: averaging matrix for logits.mean(-2)

    for br in range(2):       # branch 0 = reward, branch 1 = next_state (static)
        x = h_ref[br].astype(f32)                                   # (M, E)

        for l in range(NL):   # num_layers is small & static
            # Block.forward: x <- ln_1(x); both residuals branch off that.
            x = _layer_norm(x, ln1g_ref[br, l], ln1b_ref[br, l])
            xb = x.astype(bf16)

            # ---- causal multi-head self-attention, fully flattened ----
            # Single fused QKV matmul (both heads): (M, E) x (E, 3E).
            qkv = jnp.dot(xb, wqkv_ref[br, l],
                          preferred_element_type=f32) + bqkv_ref[br, l]   # (M, 3E)
            heads = []
            for hh in range(H):                                     # H = 2, static
                q = qkv[:, hh * Dh:(hh + 1) * Dh].astype(bf16)              # (M, Dh)
                k = qkv[:, E + hh * Dh:E + (hh + 1) * Dh].astype(bf16)
                v = qkv[:, 2 * E + hh * Dh:2 * E + (hh + 1) * Dh].astype(bf16)
                # One (M, M) score matmul; mask enforces causal + block-diagonal
                # (no cross-batch attention), so no (B, L, Dh) reshape is needed.
                s = jax.lax.dot_general(q, k, (((1,), (1,)), ((), ())),
                                        preferred_element_type=f32)         # (M, M)
                s = s * scale + mask
                smax = jnp.max(s, axis=-1, keepdims=True)
                p = jnp.exp(s - smax)
                p = p / jnp.sum(p, axis=-1, keepdims=True)                   # exact
                heads.append(jnp.dot(p.astype(bf16), v,
                                     preferred_element_type=f32))            # (M, Dh)
            o = jnp.concatenate(heads, axis=-1)                              # (M, E)
            attn = jnp.dot(o.astype(bf16), wo_ref[br, l],
                           preferred_element_type=f32) + bo_ref[br, l]
            x = x + attn

            # ---- MLP: Linear(E,4E) -> GELU -> Linear(4E,E) ----
            y = _layer_norm(x, ln2g_ref[br, l], ln2b_ref[br, l])
            hmid = jnp.dot(y.astype(bf16), w1_ref[br, l],
                           preferred_element_type=f32) + b1_ref[br, l]
            hmid = _gelu(hmid)
            x = x + jnp.dot(hmid.astype(bf16), w2_ref[br, l],
                            preferred_element_type=f32) + b2_ref[br, l]

        # ---- final LayerNorm + head; logits.mean(-2) as an avg-matrix matmul ----
        x = _layer_norm(x, lnfg_ref[br], lnfb_ref[br])
        logits = jnp.dot(x.astype(bf16), wh_ref[br],
                         preferred_element_type=f32) + bh_ref[br]            # (M, C)
        res = jnp.dot(avg, logits, preferred_element_type=f32)               # (L, C)

        if br == 0:                       # reward head: raw logits.mean(-2)
            reward_ref[...] = res
        else:                             # next-state head: scale_to_bound fused
            mn = jnp.min(res, axis=1, keepdims=True)
            mx = jnp.max(res, axis=1, keepdims=True)
            sc = mx - mn
            sc = jnp.where(sc < 1e-5, sc + 1e-5, sc)   # scale[scale < 1e-5] += 1e-5
            next_ref[...] = (res - mn) / sc


# ------------------------------- JAX wrappers --------------------------------

_KERNEL_PARAM_ORDER = ('ln1g', 'ln1b', 'ln2g', 'ln2b',
                       'wqkv', 'bqkv', 'wo', 'bo',
                       'w1', 'b1', 'w2', 'b2',
                       'lnfg', 'lnfb', 'wh', 'bh')


def run_fused_transformers(h2, mask, avg, prep, *, num_heads=NUM_HEADS):
    L = avg.shape[0]
    C = prep['wh'].shape[-1]
    num_layers = prep['wqkv'].shape[1]
    args = (h2, mask, avg) + tuple(prep[k] for k in _KERNEL_PARAM_ORDER)
    kernel = functools.partial(fused_dynamics_kernel,
                               num_layers=num_layers, num_heads=num_heads)
    # No grid: the whole problem (<1 MiB of weights + activations) is VMEM
    # resident and both branches are unrolled inside one kernel invocation,
    # removing the 2-step grid overhead on single-TensorCore chips.
    # TODO(synk): on v7x the two independent branches could be split across the
    # two TensorCores with pl.core_map(pltpu.create_tensorcore_mesh(...)); kept
    # single-core here for portability across v5e/v6e/v7x.
    return pl.pallas_call(
        kernel,
        out_shape=(jax.ShapeDtypeStruct((L, C), jnp.float32),
                   jax.ShapeDtypeStruct((L, C), jnp.float32)),
    )(*args)


def embed_tokens_stacked(x, prep):
    """Prologue of decoder_only_transformer.forward for BOTH branches at once.

    x: (L, B_inner) floats in [0, 1) -> (2, B_inner*L, E) already in kernel row
    order (row = b*L + l); the gather is done directly in that order so no large
    transpose survives in XLA, and the SOS shift reuses an extended token table.
    """
    # TODO(synk): the nn.Embedding gather stays in plain XLA (same jit); a
    # 1002-row table gather has no clean/efficient in-kernel Pallas equivalent.
    L, B = x.shape
    tok_ext = prep['tok_ext']          # (2, VOCAB+1, E); last row is the SOS vector
    pos = prep['pos']                  # (2, NUM_POSITIONS, E)
    E = tok_ext.shape[-1]
    sos_id = tok_ext.shape[1] - 1
    ids = (x * 1000.0).astype(jnp.int32).T                           # (B, L)
    ids = jnp.concatenate([jnp.full((B, 1), sos_id, jnp.int32),
                           ids[:, :-1]], axis=1)                     # shift-right + SOS
    h = jnp.take(tok_ext, ids, axis=1)                               # (2, B, L, E)
    h = h + pos[:, None, :L, :]                                      # positional embed
    return h.reshape(2, B * L, E).astype(jnp.float32)


def dynamics_function_forward(state_normalized, action, prep):
    # x = torch.cat([state.T, action.T]).T == concat along the feature dim
    x = jnp.concatenate([state_normalized, action], axis=1)          # (L, B_inner)
    L, B = x.shape
    M = B * L

    h2 = embed_tokens_stacked(x, prep)                               # (2, M, E)

    # Causal + block-diagonal additive mask over flattened (M, M) scores
    # (row m = b*L + l).  Constant-folded by XLA under jit (depends on shapes only).
    m_idx = jnp.arange(M, dtype=jnp.int32)
    ii, jj = m_idx[:, None], m_idx[None, :]
    ok = ((ii // L) == (jj // L)) & ((jj % L) <= (ii % L))
    mask = jnp.where(ok, 0.0, -1e30).astype(jnp.float32)             # (M, M)

    # Averaging matrix implementing logits.mean(-2) (mean over the inner batch B).
    avg = ((m_idx[None, :] % L) == jnp.arange(L, dtype=jnp.int32)[:, None])
    avg = avg.astype(jnp.float32) / B                                # (L, M)

    reward, next_state_normalized = run_fused_transformers(h2, mask, avg, prep)
    return reward, next_state_normalized   # scale_to_bound_action fused in-kernel


# ----------------------------- parameter handling ------------------------------

def init_transformer_params(key, embed_dim, num_layers, num_classes):
    """PyTorch-layout parameters (nn.Linear weights are (out, in))."""
    E = embed_dim
    ks = jax.random.split(key, 8)
    s = 0.02
    return dict(
        sos=jax.random.normal(ks[0], (E,), jnp.float32),
        tok=s * jax.random.normal(ks[1], (VOCAB, E), jnp.float32),
        pos=s * jax.random.normal(ks[2], (NUM_POSITIONS, E), jnp.float32),
        ln1g=jnp.ones((num_layers, E), jnp.float32),
        ln1b=jnp.zeros((num_layers, E), jnp.float32),
        ln2g=jnp.ones((num_layers, E), jnp.float32),
        ln2b=jnp.zeros((num_layers, E), jnp.float32),
        wqkv=s * jax.random.normal(ks[3], (num_layers, 3 * E, E), jnp.float32),
        bqkv=jnp.zeros((num_layers, 3 * E), jnp.float32),
        wo=s * jax.random.normal(ks[4], (num_layers, E, E), jnp.float32),
        bo=jnp.zeros((num_layers, E), jnp.float32),
        w1=s * jax.random.normal(ks[5], (num_layers, 4 * E, E), jnp.float32),
        b1=jnp.zeros((num_layers, 4 * E), jnp.float32),
        w2=s * jax.random.normal(ks[6], (num_layers, E, 4 * E), jnp.float32),
        b2=jnp.zeros((num_layers, E), jnp.float32),
        lnfg=jnp.ones((E,), jnp.float32),
        lnfb=jnp.zeros((E,), jnp.float32),
        wh=s * jax.random.normal(ks[7], (num_classes, E), jnp.float32),
        bh=jnp.zeros((num_classes,), jnp.float32),
    )


def _prepare_branch(p):
    """Pre-transpose weights to (K, N), keep QKV fused (both heads), cast matmul
    weights to bf16, reshape biases/LN params to (..., 1, X) for 2-D broadcast."""
    bf = jnp.bfloat16
    return dict(
        ln1g=p['ln1g'][:, None, :], ln1b=p['ln1b'][:, None, :],   # (NL, 1, E)
        ln2g=p['ln2g'][:, None, :], ln2b=p['ln2b'][:, None, :],
        wqkv=jnp.transpose(p['wqkv'], (0, 2, 1)).astype(bf),      # (NL, E, 3E)
        bqkv=p['bqkv'][:, None, :],                               # (NL, 1, 3E)
        wo=jnp.transpose(p['wo'], (0, 2, 1)).astype(bf),          # (NL, E, E)
        bo=p['bo'][:, None, :],
        w1=jnp.transpose(p['w1'], (0, 2, 1)).astype(bf),          # (NL, E, 4E)
        b1=p['b1'][:, None, :],
        w2=jnp.transpose(p['w2'], (0, 2, 1)).astype(bf),          # (NL, 4E, E)
        b2=p['b2'][:, None, :],
        lnfg=p['lnfg'][None, :], lnfb=p['lnfb'][None, :],         # (1, E)
        wh=p['wh'].T.astype(bf),                                  # (E, C)
        bh=p['bh'][None, :],                                      # (1, C)
        tok_ext=jnp.concatenate([p['tok'], p['sos'][None, :]], axis=0),  # (V+1, E)
        pos=p['pos'],
    )


def prepare_dynamics_params(reward_params, next_params):
    r = _prepare_branch(reward_params)
    n = _prepare_branch(next_params)
    return {k: jnp.stack([r[k], n[k]], axis=0) for k in r}        # branch axis = 2


# ----------------------------------- main -------------------------------------

if __name__ == "__main__":
    # Dynamics_function(state_dimension, action_dimension, obs_dims, hidden, n_layers)
    state_dimension = 8
    action_dimension = 4
    hidden_layer_dimensions = 32
    number_of_hidden_layer = 2
    batch = 8          # outer batch; becomes the transformer "length" axis

    key = jax.random.PRNGKey(0)
    k_s, k_a, k_r, k_n = jax.random.split(key, 4)
    # inputs in [0, 1) so that (x * 1000).long() indexes the 1001-token vocab
    state_normalized = jax.random.uniform(k_s, (batch, state_dimension), jnp.float32)
    action = jax.random.uniform(k_a, (batch, action_dimension), jnp.float32)

    reward_params = init_transformer_params(
        k_r, hidden_layer_dimensions, number_of_hidden_layer, state_dimension)
    next_params = init_transformer_params(
        k_n, hidden_layer_dimensions, number_of_hidden_layer, state_dimension)

    prep = prepare_dynamics_params(reward_params, next_params)   # one-time host prep

    fwd = jax.jit(dynamics_function_forward)
    reward, next_state = fwd(state_normalized, action, prep)
    jax.block_until_ready((reward, next_state))

    assert reward.shape == (batch, state_dimension)
    assert next_state.shape == (batch, state_dimension)
    assert bool(jnp.all(jnp.isfinite(reward)))
    assert bool(jnp.all(jnp.isfinite(next_state)))
    # scale_to_bound_action output must lie in [0, 1]
    assert bool(jnp.all(next_state >= -1e-5)) and bool(jnp.all(next_state <= 1.0 + 1e-5))

    print("KERNEL_OK")
</pallas_src>

<mosaic_0001>
module attributes {stable_mosaic.version = 11 : i64} {
  func.func @fused_dynamics_kernel(%arg0: memref<2x96x32xf32, #tpu.memory_space<vmem>>, %arg1: memref<96x96xf32, #tpu.memory_space<vmem>>, %arg2: memref<8x96xf32, #tpu.memory_space<vmem>>, %arg3: memref<2x2x1x32xf32, #tpu.memory_space<vmem>>, %arg4: memref<2x2x1x32xf32, #tpu.memory_space<vmem>>, %arg5: memref<2x2x1x32xf32, #tpu.memory_space<vmem>>, %arg6: memref<2x2x1x32xf32, #tpu.memory_space<vmem>>, %arg7: memref<2x2x32x96xbf16, #tpu.memory_space<vmem>>, %arg8: memref<2x2x1x96xf32, #tpu.memory_space<vmem>>, %arg9: memref<2x2x32x32xbf16, #tpu.memory_space<vmem>>, %arg10: memref<2x2x1x32xf32, #tpu.memory_space<vmem>>, %arg11: memref<2x2x32x128xbf16, #tpu.memory_space<vmem>>, %arg12: memref<2x2x1x128xf32, #tpu.memory_space<vmem>>, %arg13: memref<2x2x128x32xbf16, #tpu.memory_space<vmem>>, %arg14: memref<2x2x1x32xf32, #tpu.memory_space<vmem>>, %arg15: memref<2x1x32xf32, #tpu.memory_space<vmem>>, %arg16: memref<2x1x32xf32, #tpu.memory_space<vmem>>, %arg17: memref<2x32x8xbf16, #tpu.memory_space<vmem>>, %arg18: memref<2x1x8xf32, #tpu.memory_space<vmem>>, %arg19: memref<8x8xf32, #tpu.memory_space<vmem>>, %arg20: memref<8x8xf32, #tpu.memory_space<vmem>>) attributes {dimension_semantics = [], scalar_prefetch = 0 : i64, scratch_operands = 0 : i64, tpu.core_type = #tpu.core_type<tc>} {
    %c0 = arith.constant 0 : index
    %c0_0 = arith.constant 0 : index
    %0 = vector.load %arg1[%c0, %c0_0] : memref<96x96xf32, #tpu.memory_space<vmem>>, vector<96x96xf32>
    %c0_1 = arith.constant 0 : index
    %c0_2 = arith.constant 0 : index
    %1 = vector.load %arg2[%c0_1, %c0_2] : memref<8x96xf32, #tpu.memory_space<vmem>>, vector<8x96xf32>
    %c0_3 = arith.constant 0 : index
    %c0_4 = arith.constant 0 : index
    %c0_5 = arith.constant 0 : index
    %2 = vector.load %arg0[%c0_3, %c0_4, %c0_5] : memref<2x96x32xf32, #tpu.memory_space<vmem>>, vector<1x96x32xf32>
    %3 = vector.shape_cast %2 : vector<1x96x32xf32> to vector<96x32xf32>
    %c0_6 = arith.constant 0 : index
    %c0_7 = arith.constant 0 : index
    %c0_8 = arith.constant 0 : index
    %c0_9 = arith.constant 0 : index
    %4 = vector.load %arg3[%c0_6, %c0_7, %c0_8, %c0_9] : memref<2x2x1x32xf32, #tpu.memory_space<vmem>>, vector<1x1x1x32xf32>
    %5 = vector.shape_cast %4 : vector<1x1x1x32xf32> to vector<1x32xf32>
    %c0_10 = arith.constant 0 : index
    %c0_11 = arith.constant 0 : index
    %c0_12 = arith.constant 0 : index
    %c0_13 = arith.constant 0 : index
    %6 = vector.load %arg4[%c0_10, %c0_11, %c0_12, %c0_13] : memref<2x2x1x32xf32, #tpu.memory_space<vmem>>, vector<1x1x1x32xf32>
    %7 = vector.shape_cast %6 : vector<1x1x1x32xf32> to vector<1x32xf32>
    %cst = arith.constant dense<0.000000e+00> : vector<96xf32>
    %8 = vector.multi_reduction <add>, %3, %cst [1] : vector<96x32xf32> to vector<96xf32>
    %9 = vector.shape_cast %8 : vector<96xf32> to vector<96x1xf32>
    %cst_14 = arith.constant 3.200000e+01 : f32
    %10 = vector.broadcast %cst_14 : f32 to vector<96x1xf32>
    %11 = arith.divf %9, %10 : vector<96x1xf32>
    %12 = vector.broadcast %11 : vector<96x1xf32> to vector<96x32xf32>
    %13 = arith.subf %3, %12 : vector<96x32xf32>
    %14 = arith.mulf %13, %13 : vector<96x32xf32>
    %cst_15 = arith.constant dense<0.000000e+00> : vector<96xf32>
    %15 = vector.multi_reduction <add>, %14, %cst_15 [1] : vector<96x32xf32> to vector<96xf32>
    %16 = vector.shape_cast %15 : vector<96xf32> to vector<96x1xf32>
    %cst_16 = arith.constant 3.200000e+01 : f32
    %17 = vector.broadcast %cst_16 : f32 to vector<96x1xf32>
    %18 = arith.divf %16, %17 : vector<96x1xf32>
    %19 = vector.broadcast %11 : vector<96x1xf32> to vector<96x32xf32>
    %20 = arith.subf %3, %19 : vector<96x32xf32>
    %cst_17 = arith.constant 9.99999974E-6 : f32
    %21 = vector.broadcast %cst_17 : f32 to vector<96x1xf32>
    %22 = arith.addf %18, %21 : vector<96x1xf32>
    %23 = math.rsqrt %22 : vector<96x1xf32>
    %24 = vector.broadcast %23 : vector<96x1xf32> to vector<96x32xf32>
    %25 = arith.mulf %20, %24 : vector<96x32xf32>
    %26 = vector.broadcast %5 : vector<1x32xf32> to vector<96x32xf32>
    %27 = arith.mulf %25, %26 : vector<96x32xf32>
    %28 = vector.broadcast %7 : vector<1x32xf32> to vector<96x32xf32>
    %29 = arith.addf %27, %28 : vector<96x32xf32>
    %30 = arith.truncf %29 : vector<96x32xf32> to vector<96x32xbf16>
    %c0_18 = arith.constant 0 : index
    %c0_19 = arith.constant 0 : index
    %c0_20 = arith.constant 0 : index
    %c0_21 = arith.constant 0 : index
    %31 = vector.load %arg7[%c0_18, %c0_19, %c0_20, %c0_21] : memref<2x2x32x96xbf16, #tpu.memory_space<vmem>>, vector<1x1x32x96xbf16>
    %32 = vector.shape_cast %31 : vector<1x1x32x96xbf16> to vector<32x96xbf16>
    %cst_22 = arith.constant dense<0.000000e+00> : vector<96x96xf32>
    %33 = tpu.matmul %30, %32, %cst_22 {dimension_numbers = #tpu.dot_dimension_numbers<[1], [0], [0], [1], [0, 0, 1, 1], [], []>} : vector<96x32xbf16>, vector<32x96xbf16>, vector<96x96xf32> -> vector<96x96xf32>
    %c0_23 = arith.constant 0 : index
    %c0_24 = arith.constant 0 : index
    %c0_25 = arith.constant 0 : index
    %c0_26 = arith.constant 0 : index
    %34 = vector.load %arg8[%c0_23, %c0_24, %c0_25, %c0_26] : memref<2x2x1x96xf32, #tpu.memory_space<vmem>>, vector<1x1x1x96xf32>
    %35 = vector.shape_cast %34 : vector<1x1x1x96xf32> to vector<1x96xf32>
    %36 = vector.broadcast %35 : vector<1x96xf32> to vector<96x96xf32>
    %37 = arith.addf %33, %36 : vector<96x96xf32>
    %38 = vector.extract_strided_slice %37 {offsets = [0, 0], sizes = [96, 16], strides = [1, 1]} : vector<96x96xf32> to vector<96x16xf32>
    %39 = arith.truncf %38 : vector<96x16xf32> to vector<96x16xbf16>
    %40 = vector.extract_strided_slice %37 {offsets = [0, 32], sizes = [96, 16], strides = [1, 1]} : vector<96x96xf32> to vector<96x16xf32>
    %41 = arith.truncf %40 : vector<96x16xf32> to vector<96x16xbf16>
    %42 = vector.extract_strided_slice %37 {offsets = [0, 64], sizes = [96, 16], strides = [1, 1]} : vector<96x96xf32> to vector<96x16xf32>
    %43 = arith.truncf %42 : vector<96x16xf32> to vector<96x16xbf16>
    %cst_27 = arith.constant dense<0.000000e+00> : vector<96x96xf32>
    %44 = tpu.matmul %39, %41, %cst_27 {dimension_numbers = #tpu.dot_dimension_numbers<[1], [1], [0], [0], [0, 0, 1, 0], [], []>} : vector<96x16xbf16>, vector<96x16xbf16>, vector<96x96xf32> -> vector<96x96xf32>
    %cst_28 = arith.constant 2.500000e-01 : f32
    %45 = vector.broadcast %cst_28 : f32 to vector<96x96xf32>
    %46 = arith.mulf %44, %45 : vector<96x96xf32>
    %47 = arith.addf %46, %0 : vector<96x96xf32>
    %cst_29 = arith.constant dense<0xFF800000> : vector<96xf32>
    %48 = vector.multi_reduction <maximumf>, %47, %cst_29 [1] : vector<96x96xf32> to vector<96xf32>
    %49 = vector.shape_cast %48 : vector<96xf32> to vector<96x1xf32>
    %50 = vector.broadcast %49 : vector<96x1xf32> to vector<96x96xf32>
    %51 = arith.subf %47, %50 : vector<96x96xf32>
    %52 = math.exp %51 : vector<96x96xf32>
    %cst_30 = arith.constant dense<0.000000e+00> : vector<96xf32>
    %53 = vector.multi_reduction <add>, %52, %cst_30 [1] : vector<96x96xf32> to vector<96xf32>
    %54 = vector.shape_cast %53 : vector<96xf32> to vector<96x1xf32>
    %55 = vector.broadcast %54 : vector<96x1xf32> to vector<96x96xf32>
    %56 = arith.divf %52, %55 : vector<96x96xf32>
    %57 = arith.truncf %56 : vector<96x96xf32> to vector<96x96xbf16>
    %cst_31 = arith.constant dense<0.000000e+00> : vector<96x16xf32>
    %58 = tpu.matmul %57, %43, %cst_31 {dimension_numbers = #tpu.dot_dimension_numbers<[1], [0], [0], [1], [0, 0, 1, 1], [], []>} : vector<96x96xbf16>, vector<96x16xbf16>, vector<96x16xf32> -> vector<96x16xf32>
    %59 = vector.extract_strided_slice %37 {offsets = [0, 16], sizes = [96, 16], strides = [1, 1]} : vector<96x96xf32> to vector<96x16xf32>
    %60 = arith.truncf %59 : vector<96x16xf32> to vector<96x16xbf16>
    %61 = vector.extract_strided_slice %37 {offsets = [0, 48], sizes = [96, 16], strides = [1, 1]} : vector<96x96xf32> to vector<96x16xf32>
    %62 = arith.truncf %61 : vector<96x16xf32> to vector<96x16xbf16>
    %63 = vector.extract_strided_slice %37 {offsets = [0, 80], sizes = [96, 16], strides = [1, 1]} : vector<96x96xf32> to vector<96x16xf32>
    %64 = arith.truncf %63 : vector<96x16xf32> to vector<96x16xbf16>
    %cst_32 = arith.constant dense<0.000000e+00> : vector<96x96xf32>
    %65 = tpu.matmul %60, %62, %cst_32 {dimension_numbers = #tpu.dot_dimension_numbers<[1], [1], [0], [0], [0, 0, 1, 0], [], []>} : vector<96x16xbf16>, vector<96x16xbf16>, vector<96x96xf32> -> vector<96x96xf32>
    %cst_33 = arith.constant 2.500000e-01 : f32
    %66 = vector.broadcast %cst_33 : f32 to vector<96x96xf32>
    %67 = arith.mulf %65, %66 : vector<96x96xf32>
    %68 = arith.addf %67, %0 : vector<96x96xf32>
    %cst_34 = arith.constant dense<0xFF800000> : vector<96xf32>
    %69 = vector.multi_reduction <maximumf>, %68, %cst_34 [1] : vector<96x96xf32> to vector<96xf32>
    %70 = vector.shape_cast %69 : vector<96xf32> to vector<96x1xf32>
    %71 = vector.broadcast %70 : vector<96x1xf32> to vector<96x96xf32>
    %72 = arith.subf %68, %71 : vector<96x96xf32>
    %73 = math.exp %72 : vector<96x96xf32>
    %cst_35 = arith.constant dense<0.000000e+00> : vector<96xf32>
    %74 = vector.multi_reduction <add>, %73, %cst_35 [1] : vector<96x96xf32> to vector<96xf32>
    %75 = vector.shape_cast %74 : vector<96xf32> to vector<96x1xf32>
    %76 = vector.broadcast %75 : vector<96x1xf32> to vector<96x96xf32>
    %77 = arith.divf %73, %76 : vector<96x96xf32>
    %78 = arith.truncf %77 : vector<96x96xf32> to vector<96x96xbf16>
    %cst_36 = arith.constant dense<0.000000e+00> : vector<96x16xf32>
    %79 = tpu.matmul %78, %64, %cst_36 {dimension_numbers = #tpu.dot_dimension_numbers<[1], [0], [0], [1], [0, 0, 1, 1], [], []>} : vector<96x96xbf16>, vector<96x16xbf16>, vector<96x16xf32> -> vector<96x16xf32>
    %80 = tpu.concatenate %58, %79 in 1 : vector<96x16xf32>, vector<96x16xf32> -> vector<96x32xf32>
    %81 = arith.truncf %80 : vector<96x32xf32> to vector<96x32xbf16>
    %c0_37 = arith.constant 0 : index
    %c0_38 = arith.constant 0 : index
    %c0_39 = arith.constant 0 : index
    %c0_40 = arith.constant 0 : index
    %82 = vector.load %arg9[%c0_37, %c0_38, %c0_39, %c0_40] : memref<2x2x32x32xbf16, #tpu.memory_space<vmem>>, vector<1x1x32x32xbf16>
    %83 = vector.shape_cast %82 : vector<1x1x32x32xbf16> to vector<32x32xbf16>
    %cst_41 = arith.constant dense<0.000000e+00> : vector<96x32xf32>
    %84 = tpu.matmul %81, %83, %cst_41 {dimension_numbers = #tpu.dot_dimension_numbers<[1], [0], [0], [1], [0, 0, 1, 1], [], []>} : vector<96x32xbf16>, vector<32x32xbf16>, vector<96x32xf32> -> vector<96x32xf32>
    %c0_42 = arith.constant 0 : index
    %c0_43 = arith.constant 0 : index
    %c0_44 = arith.constant 0 : index
    %c0_45 = arith.constant 0 : index
    %85 = vector.load %arg10[%c0_42, %c0_43, %c0_44, %c0_45] : memref<2x2x1x32xf32, #tpu.memory_space<vmem>>, vector<1x1x1x32xf32>
    %86 = vector.shape_cast %85 : vector<1x1x1x32xf32> to vector<1x32xf32>
    %87 = vector.broadcast %86 : vector<1x32xf32> to vector<96x32xf32>
    %88 = arith.addf %84, %87 : vector<96x32xf32>
    %89 = arith.addf %29, %88 : vector<96x32xf32>
    %c0_46 = arith.constant 0 : index
    %c0_47 = arith.constant 0 : index
    %c0_48 = arith.constant 0 : index
    %c0_49 = arith.constant 0 : index
    %90 = vector.load %arg5[%c0_46, %c0_47, %c0_48, %c0_49] : memref<2x2x1x32xf32, #tpu.memory_space<vmem>>, vector<1x1x1x32xf32>
    %91 = vector.shape_cast %90 : vector<1x1x1x32xf32> to vector<1x32xf32>
    %c0_50 = arith.constant 0 : index
    %c0_51 = arith.constant 0 : index
    %c0_52 = arith.constant 0 : index
    %c0_53 = arith.constant 0 : index
    %92 = vector.load %arg6[%c0_50, %c0_51, %c0_52, %c0_53] : memref<2x2x1x32xf32, #tpu.memory_space<vmem>>, vector<1x1x1x32xf32>
    %93 = vector.shape_cast %92 : vector<1x1x1x32xf32> to vector<1x32xf32>
    %cst_54 = arith.constant dense<0.000000e+00> : vector<96xf32>
    %94 = vector.multi_reduction <add>, %89, %cst_54 [1] : vector<96x32xf32> to vector<96xf32>
    %95 = vector.shape_cast %94 : vector<96xf32> to vector<96x1xf32>
    %cst_55 = arith.constant 3.200000e+01 : f32
    %96 = vector.broadcast %cst_55 : f32 to vector<96x1xf32>
    %97 = arith.divf %95, %96 : vector<96x1xf32>
    %98 = vector.broadcast %97 : vector<96x1xf32> to vector<96x32xf32>
    %99 = arith.subf %89, %98 : vector<96x32xf32>
    %100 = arith.mulf %99, %99 : vector<96x32xf32>
    %cst_56 = arith.constant dense<0.000000e+00> : vector<96xf32>
    %101 = vector.multi_reduction <add>, %100, %cst_56 [1] : vector<96x32xf32> to vector<96xf32>
    %102 = vector.shape_cast %101 : vector<96xf32> to vector<96x1xf32>
    %cst_57 = arith.constant 3.200000e+01 : f32
    %103 = vector.broadcast %cst_57 : f32 to vector<96x1xf32>
    %104 = arith.divf %102, %103 : vector<96x1xf32>
    %105 = vector.broadcast %97 : vector<96x1xf32> to vector<96x32xf32>
    %106 = arith.subf %89, %105 : vector<96x32xf32>
    %cst_58 = arith.constant 9.99999974E-6 : f32
    %107 = vector.broadcast %cst_58 : f32 to vector<96x1xf32>
    %108 = arith.addf %104, %107 : vector<96x1xf32>
    %109 = math.rsqrt %108 : vector<96x1xf32>
    %110 = vector.broadcast %109 : vector<96x1xf32> to vector<96x32xf32>
    %111 = arith.mulf %106, %110 : vector<96x32xf32>
    %112 = vector.broadcast %91 : vector<1x32xf32> to vector<96x32xf32>
    %113 = arith.mulf %111, %112 : vector<96x32xf32>
    %114 = vector.broadcast %93 : vector<1x32xf32> to vector<96x32xf32>
    %115 = arith.addf %113, %114 : vector<96x32xf32>
    %116 = arith.truncf %115 : vector<96x32xf32> to vector<96x32xbf16>
    %c0_59 = arith.constant 0 : index
    %c0_60 = arith.constant 0 : index
    %c0_61 = arith.constant 0 : index
    %c0_62 = arith.constant 0 : index
    %117 = vector.load %arg11[%c0_59, %c0_60, %c0_61, %c0_62] : memref<2x2x32x128xbf16, #tpu.memory_space<vmem>>, vector<1x1x32x128xbf16>
    %118 = vector.shape_cast %117 : vector<1x1x32x128xbf16> to vector<32x128xbf16>
    %cst_63 = arith.constant dense<0.000000e+00> : vector<96x128xf32>
    %119 = tpu.matmul %116, %118, %cst_63 {dimension_numbers = #tpu.dot_dimension_numbers<[1], [0], [0], [1], [0, 0, 1, 1], [], []>} : vector<96x32xbf16>, vector<32x128xbf16>, vector<96x128xf32> -> vector<96x128xf32>
    %c0_64 = arith.constant 0 : index
    %c0_65 = arith.constant 0 : index
    %c0_66 = arith.constant 0 : index
    %c0_67 = arith.constant 0 : index
    %120 = vector.load %arg12[%c0_64, %c0_65, %c0_66, %c0_67] : memref<2x2x1x128xf32, #tpu.memory_space<vmem>>, vector<1x1x1x128xf32>
    %121 = vector.shape_cast %120 : vector<1x1x1x128xf32> to vector<1x128xf32>
    %122 = vector.broadcast %121 : vector<1x128xf32> to vector<96x128xf32>
    %123 = arith.addf %119, %122 : vector<96x128xf32>
    %cst_68 = arith.constant 5.000000e-01 : f32
    %124 = vector.broadcast %cst_68 : f32 to vector<96x128xf32>
    %125 = arith.mulf %124, %123 : vector<96x128xf32>
    %cst_69 = arith.constant 0.707106769 : f32
    %126 = vector.broadcast %cst_69 : f32 to vector<96x128xf32>
    %127 = arith.mulf %123, %126 : vector<96x128xf32>
    %128 = math.absf %127 : vector<96x128xf32>
    %cst_70 = arith.constant 0.327591091 : f32
    %129 = vector.broadcast %cst_70 : f32 to vector<96x128xf32>
    %130 = arith.mulf %129, %128 : vector<96x128xf32>
    %cst_71 = arith.constant 1.000000e+00 : f32
    %131 = vector.broadcast %cst_71 : f32 to vector<96x128xf32>
    %132 = arith.addf %131, %130 : vector<96x128xf32>
    %cst_72 = arith.constant 1.000000e+00 : f32
    %133 = vector.broadcast %cst_72 : f32 to vector<96x128xf32>
    %134 = arith.divf %133, %132 : vector<96x128xf32>
    %cst_73 = arith.constant 1.06140542 : f32
    %135 = vector.broadcast %cst_73 : f32 to vector<96x128xf32>
    %136 = arith.mulf %135, %134 : vector<96x128xf32>
    %cst_74 = arith.constant -1.45315206 : f32
    %137 = vector.broadcast %cst_74 : f32 to vector<96x128xf32>
    %138 = arith.addf %136, %137 : vector<96x128xf32>
    %139 = arith.mulf %138, %134 : vector<96x128xf32>
    %cst_75 = arith.constant 1.42141378 : f32
    %140 = vector.broadcast %cst_75 : f32 to vector<96x128xf32>
    %141 = arith.addf %139, %140 : vector<96x128xf32>
    %142 = arith.mulf %141, %134 : vector<96x128xf32>
    %cst_76 = arith.constant -0.284496725 : f32
    %143 = vector.broadcast %cst_76 : f32 to vector<96x128xf32>
    %144 = arith.addf %142, %143 : vector<96x128xf32>
    %145 = arith.mulf %144, %134 : vector<96x128xf32>
    %cst_77 = arith.constant 0.254829586 : f32
    %146 = vector.broadcast %cst_77 : f32 to vector<96x128xf32>
    %147 = arith.addf %145, %146 : vector<96x128xf32>
    %148 = arith.mulf %147, %134 : vector<96x128xf32>
    %cst_78 = arith.constant 0.000000e+00 : f32
    %149 = vector.broadcast %cst_78 : f32 to vector<96x128xf32>
    %150 = arith.subf %149, %128 : vector<96x128xf32>
    %151 = arith.mulf %150, %128 : vector<96x128xf32>
    %152 = math.exp %151 : vector<96x128xf32>
    %153 = arith.mulf %148, %152 : vector<96x128xf32>
    %cst_79 = arith.constant 1.000000e+00 : f32
    %154 = vector.broadcast %cst_79 : f32 to vector<96x128xf32>
    %155 = arith.subf %154, %153 : vector<96x128xf32>
    %cst_80 = arith.constant 0.000000e+00 : f32
    %156 = vector.broadcast %cst_80 : f32 to vector<96x128xf32>
    %157 = arith.cmpf olt, %127, %156 : vector<96x128xf32>
    %cst_81 = arith.constant 0.000000e+00 : f32
    %158 = vector.broadcast %cst_81 : f32 to vector<96x128xf32>
    %159 = arith.subf %158, %155 : vector<96x128xf32>
    %160 = arith.select %157, %159, %155 : vector<96x128xi1>, vector<96x128xf32>
    %cst_82 = arith.constant 1.000000e+00 : f32
    %161 = vector.broadcast %cst_82 : f32 to vector<96x128xf32>
    %162 = arith.addf %161, %160 : vector<96x128xf32>
    %163 = arith.mulf %125, %162 : vector<96x128xf32>
    %164 = arith.truncf %163 : vector<96x128xf32> to vector<96x128xbf16>
    %c0_83 = arith.constant 0 : index
    %c0_84 = arith.constant 0 : index
    %c0_85 = arith.constant 0 : index
    %c0_86 = arith.constant 0 : index
    %165 = vector.load %arg13[%c0_83, %c0_84, %c0_85, %c0_86] : memref<2x2x128x32xbf16, #tpu.memory_space<vmem>>, vector<1x1x128x32xbf16>
    %166 = vector.shape_cast %165 : vector<1x1x128x32xbf16> to vector<128x32xbf16>
    %cst_87 = arith.constant dense<0.000000e+00> : vector<96x32xf32>
    %167 = tpu.matmul %164, %166, %cst_87 {dimension_numbers = #tpu.dot_dimension_numbers<[1], [0], [0], [1], [0, 0, 1, 1], [], []>} : vector<96x128xbf16>, vector<128x32xbf16>, vector<96x32xf32> -> vector<96x32xf32>
    %168 = arith.addf %89, %167 : vector<96x32xf32>
    %c0_88 = arith.constant 0 : index
    %c0_89 = arith.constant 0 : index
    %c0_90 = arith.constant 0 : index
    %c0_91 = arith.constant 0 : index
    %169 = vector.load %arg14[%c0_88, %c0_89, %c0_90, %c0_91] : memref<2x2x1x32xf32, #tpu.memory_space<vmem>>, vector<1x1x1x32xf32>
    %170 = vector.shape_cast %169 : vector<1x1x1x32xf32> to vector<1x32xf32>
    %171 = vector.broadcast %170 : vector<1x32xf32> to vector<96x32xf32>
    %172 = arith.addf %168, %171 : vector<96x32xf32>
    %c0_92 = arith.constant 0 : index
    %c1 = arith.constant 1 : index
    %c0_93 = arith.constant 0 : index
    %c0_94 = arith.constant 0 : index
    %173 = vector.load %arg3[%c0_92, %c1, %c0_93, %c0_94] : memref<2x2x1x32xf32, #tpu.memory_space<vmem>>, vector<1x1x1x32xf32>
    %174 = vector.shape_cast %173 : vector<1x1x1x32xf32> to vector<1x32xf32>
    %c0_95 = arith.constant 0 : index
    %c1_96 = arith.constant 1 : index
    %c0_97 = arith.constant 0 : index
    %c0_98 = arith.constant 0 : index
    %175 = vector.load %arg4[%c0_95, %c1_96, %c0_97, %c0_98] : memref<2x2x1x32xf32, #tpu.memory_space<vmem>>, vector<1x1x1x32xf32>
    %176 = vector.shape_cast %175 : vector<1x1x1x32xf32> to vector<1x32xf32>
    %cst_99 = arith.constant dense<0.000000e+00> : vector<96xf32>
    %177 = vector.multi_reduction <add>, %172, %cst_99 [1] : vector<96x32xf32> to vector<96xf32>
    %178 = vector.shape_cast %177 : vector<96xf32> to vector<96x1xf32>
    %cst_100 = arith.constant 3.200000e+01 : f32
    %179 = vector.broadcast %cst_100 : f32 to vector<96x1xf32>
    %180 = arith.divf %178, %179 : vector<96x1xf32>
    %181 = vector.broadcast %180 : vector<96x1xf32> to vector<96x32xf32>
    %182 = arith.subf %172, %181 : vector<96x32xf32>
    %183 = arith.mulf %182, %182 : vector<96x32xf32>
    %cst_101 = arith.constant dense<0.000000e+00> : vector<96xf32>
    %184 = vector.multi_reduction <add>, %183, %cst_101 [1] : vector<96x32xf32> to vector<96xf32>
    %185 = vector.shape_cast %184 : vector<96xf32> to vector<96x1xf32>
    %cst_102 = arith.constant 3.200000e+01 : f32
    %186 = vector.broadcast %cst_102 : f32 to vector<96x1xf32>
    %187 = arith.divf %185, %186 : vector<96x1xf32>
    %188 = vector.broadcast %180 : vector<96x1xf32> to vector<96x32xf32>
    %189 = arith.subf %172, %188 : vector<96x32xf32>
    %cst_103 = arith.constant 9.99999974E-6 : f32
    %190 = vector.broadcast %cst_103 : f32 to vector<96x1xf32>
    %191 = arith.addf %187, %190 : vector<96x1xf32>
    %192 = math.rsqrt %191 : vector<96x1xf32>
    %193 = vector.broadcast %192 : vector<96x1xf32> to vector<96x32xf32>
    %194 = arith.mulf %189, %193 : vector<96x32xf32>
    %195 = vector.broadcast %174 : vector<1x32xf32> to vector<96x32xf32>
    %196 = arith.mulf %194, %195 : vector<96x32xf32>
    %197 = vector.broadcast %176 : vector<1x32xf32> to vector<96x32xf32>
    %198 = arith.addf %196, %197 : vector<96x32xf32>
    %199 = arith.truncf %198 : vector<96x32xf32> to vector<96x32xbf16>
    %c0_104 = arith.constant 0 : index
    %c1_105 = arith.constant 1 : index
    %c0_106 = arith.constant 0 : index
    %c0_107 = arith.constant 0 : index
    %200 = vector.load %arg7[%c0_104, %c1_105, %c0_106, %c0_107] : memref<2x2x32x96xbf16, #tpu.memory_space<vmem>>, vector<1x1x32x96xbf16>
    %201 = vector.shape_cast %200 : vector<1x1x32x96xbf16> to vector<32x96xbf16>
    %cst_108 = arith.constant dense<0.000000e+00> : vector<96x96xf32>
    %202 = tpu.matmul %199, %201, %cst_108 {dimension_numbers = #tpu.dot_dimension_numbers<[1], [0], [0], [1], [0, 0, 1, 1], [], []>} : vector<96x32xbf16>, vector<32x96xbf16>, vector<96x96xf32> -> vector<96x96xf32>
    %c0_109 = arith.constant 0 : index
    %c1_110 = arith.constant 1 : index
    %c0_111 = arith.constant 0 : index
    %c0_112 = arith.constant 0 : index
    %203 = vector.load %arg8[%c0_109, %c1_110, %c0_111, %c0_112] : memref<2x2x1x96xf32, #tpu.memory_space<vmem>>, vector<1x1x1x96xf32>
    %204 = vector.shape_cast %203 : vector<1x1x1x96xf32> to vector<1x96xf32>
    %205 = vector.broadcast %204 : vector<1x96xf32> to vector<96x96xf32>
    %206 = arith.addf %202, %205 : vector<96x96xf32>
    %207 = vector.extract_strided_slice %206 {offsets = [0, 0], sizes = [96, 16], strides = [1, 1]} : vector<96x96xf32> to vector<96x16xf32>
    %208 = arith.truncf %207 : vector<96x16xf32> to vector<96x16xbf16>
    %209 = vector.extract_strided_slice %206 {offsets = [0, 32], sizes = [96, 16], strides = [1, 1]} : vector<96x96xf32> to vector<96x16xf32>
    %210 = arith.truncf %209 : vector<96x16xf32> to vector<96x16xbf16>
    %211 = vector.extract_strided_slice %206 {offsets = [0, 64], sizes = [96, 16], strides = [1, 1]} : vector<96x96xf32> to vector<96x16xf32>
    %212 = arith.truncf %211 : vector<96x16xf32> to vector<96x16xbf16>
    %cst_113 = arith.constant dense<0.000000e+00> : vector<96x96xf32>
    %213 = tpu.matmul %208, %210, %cst_113 {dimension_numbers = #tpu.dot_dimension_numbers<[1], [1], [0], [0], [0, 0, 1, 0], [], []>} : vector<96x16xbf16>, vector<96x16xbf16>, vector<96x96xf32> -> vector<96x96xf32>
    %cst_114 = arith.constant 2.500000e-01 : f32
    %214 = vector.broadcast %cst_114 : f32 to vector<96x96xf32>
    %215 = arith.mulf %213, %214 : vector<96x96xf32>
    %216 = arith.addf %215, %0 : vector<96x96xf32>
    %cst_115 = arith.constant dense<0xFF800000> : vector<96xf32>
    %217 = vector.multi_reduction <maximumf>, %216, %cst_115 [1] : vector<96x96xf32> to vector<96xf32>
    %218 = vector.shape_cast %217 : vector<96xf32> to vector<96x1xf32>
    %219 = vector.broadcast %218 : vector<96x1xf32> to vector<96x96xf32>
    %220 = arith.subf %216, %219 : vector<96x96xf32>
    %221 = math.exp %220 : vector<96x96xf32>
    %cst_116 = arith.constant dense<0.000000e+00> : vector<96xf32>
    %222 = vector.multi_reduction <add>, %221, %cst_116 [1] : vector<96x96xf32> to vector<96xf32>
    %223 = vector.shape_cast %222 : vector<96xf32> to vector<96x1xf32>
    %224 = vector.broadcast %223 : vector<96x1xf32> to vector<96x96xf32>
    %225 = arith.divf %221, %224 : vector<96x96xf32>
    %226 = arith.truncf %225 : vector<96x96xf32> to vector<96x96xbf16>
    %cst_117 = arith.constant dense<0.000000e+00> : vector<96x16xf32>
    %227 = tpu.matmul %226, %212, %cst_117 {dimension_numbers = #tpu.dot_dimension_numbers<[1], [0], [0], [1], [0, 0, 1, 1], [], []>} : vector<96x96xbf16>, vector<96x16xbf16>, vector<96x16xf32> -> vector<96x16xf32>
    %228 = vector.extract_strided_slice %206 {offsets = [0, 16], sizes = [96, 16], strides = [1, 1]} : vector<96x96xf32> to vector<96x16xf32>
    %229 = arith.truncf %228 : vector<96x16xf32> to vector<96x16xbf16>
    %230 = vector.extract_strided_slice %206 {offsets = [0, 48], sizes = [96, 16], strides = [1, 1]} : vector<96x96xf32> to vector<96x16xf32>
    %231 = arith.truncf %230 : vector<96x16xf32> to vector<96x16xbf16>
    %232 = vector.extract_strided_slice %206 {offsets = [0, 80], sizes = [96, 16], strides = [1, 1]} : vector<96x96xf32> to vector<96x16xf32>
    %233 = arith.truncf %232 : vector<96x16xf32> to vector<96x16xbf16>
    %cst_118 = arith.constant dense<0.000000e+00> : vector<96x96xf32>
    %234 = tpu.matmul %229, %231, %cst_118 {dimension_numbers = #tpu.dot_dimension_numbers<[1], [1], [0], [0], [0, 0, 1, 0], [], []>} : vector<96x16xbf16>, vector<96x16xbf16>, vector<96x96xf32> -> vector<96x96xf32>
    %cst_119 = arith.constant 2.500000e-01 : f32
    %235 = vector.broadcast %cst_119 : f32 to vector<96x96xf32>
    %236 = arith.mulf %234, %235 : vector<96x96xf32>
    %237 = arith.addf %236, %0 : vector<96x96xf32>
    %cst_120 = arith.constant dense<0xFF800000> : vector<96xf32>
    %238 = vector.multi_reduction <maximumf>, %237, %cst_120 [1] : vector<96x96xf32> to vector<96xf32>
    %239 = vector.shape_cast %238 : vector<96xf32> to vector<96x1xf32>
    %240 = vector.broadcast %239 : vector<96x1xf32> to vector<96x96xf32>
    %241 = arith.subf %237, %240 : vector<96x96xf32>
    %242 = math.exp %241 : vector<96x96xf32>
    %cst_121 = arith.constant dense<0.000000e+00> : vector<96xf32>
    %243 = vector.multi_reduction <add>, %242, %cst_121 [1] : vector<96x96xf32> to vector<96xf32>
    %244 = vector.shape_cast %243 : vector<96xf32> to vector<96x1xf32>
    %245 = vector.broadcast %244 : vector<96x1xf32> to vector<96x96xf32>
    %246 = arith.divf %242, %245 : vector<96x96xf32>
    %247 = arith.truncf %246 : vector<96x96xf32> to vector<96x96xbf16>
    %cst_122 = arith.constant dense<0.000000e+00> : vector<96x16xf32>
    %248 = tpu.matmul %247, %233, %cst_122 {dimension_numbers = #tpu.dot_dimension_numbers<[1], [0], [0], [1], [0, 0, 1, 1], [], []>} : vector<96x96xbf16>, vector<96x16xbf16>, vector<96x16xf32> -> vector<96x16xf32>
    %249 = tpu.concatenate %227, %248 in 1 : vector<96x16xf32>, vector<96x16xf32> -> vector<96x32xf32>
    %250 = arith.truncf %249 : vector<96x32xf32> to vector<96x32xbf16>
    %c0_123 = arith.constant 0 : index
    %c1_124 = arith.constant 1 : index
    %c0_125 = arith.constant 0 : index
    %c0_126 = arith.constant 0 : index
    %251 = vector.load %arg9[%c0_123, %c1_124, %c0_125, %c0_126] : memref<2x2x32x32xbf16, #tpu.memory_space<vmem>>, vector<1x1x32x32xbf16>
    %252 = vector.shape_cast %251 : vector<1x1x32x32xbf16> to vector<32x32xbf16>
    %cst_127 = arith.constant dense<0.000000e+00> : vector<96x32xf32>
    %253 = tpu.matmul %250, %252, %cst_127 {dimension_numbers = #tpu.dot_dimension_numbers<[1], [0], [0], [1], [0, 0, 1, 1], [], []>} : vector<96x32xbf16>, vector<32x32xbf16>, vector<96x32xf32> -> vector<96x32xf32>
    %c0_128 = arith.constant 0 : index
    %c1_129 = arith.constant 1 : index
    %c0_130 = arith.constant 0 : index
    %c0_131 = arith.constant 0 : index
    %254 = vector.load %arg10[%c0_128, %c1_129, %c0_130, %c0_131] : memref<2x2x1x32xf32, #tpu.memory_space<vmem>>, vector<1x1x1x32xf32>
    %255 = vector.shape_cast %254 : vector<1x1x1x32xf32> to vector<1x32xf32>
    %256 = vector.broadcast %255 : vector<1x32xf32> to vector<96x32xf32>
    %257 = arith.addf %253, %256 : vector<96x32xf32>
    %258 = arith.addf %198, %257 : vector<96x32xf32>
    %c0_132 = arith.constant 0 : index
    %c1_133 = arith.constant 1 : index
    %c0_134 = arith.constant 0 : index
    %c0_135 = arith.constant 0 : index
    %259 = vector.load %arg5[%c0_132, %c1_133, %c0_134, %c0_135] : memref<2x2x1x32xf32, #tpu.memory_space<vmem>>, vector<1x1x1x32xf32>
    %260 = vector.shape_cast %259 : vector<1x1x1x32xf32> to vector<1x32xf32>
    %c0_136 = arith.constant 0 : index
    %c1_137 = arith.constant 1 : index
    %c0_138 = arith.constant 0 : index
    %c0_139 = arith.constant 0 : index
    %261 = vector.load %arg6[%c0_136, %c1_137, %c0_138, %c0_139] : memref<2x2x1x32xf32, #tpu.memory_space<vmem>>, vector<1x1x1x32xf32>
    %262 = vector.shape_cast %261 : vector<1x1x1x32xf32> to vector<1x32xf32>
    %cst_140 = arith.constant dense<0.000000e+00> : vector<96xf32>
    %263 = vector.multi_reduction <add>, %258, %cst_140 [1] : vector<96x32xf32> to vector<96xf32>
    %264 = vector.shape_cast %263 : vector<96xf32> to vector<96x1xf32>
    %cst_141 = arith.constant 3.200000e+01 : f32
    %265 = vector.broadcast %cst_141 : f32 to vector<96x1xf32>
    %266 = arith.divf %264, %265 : vector<96x1xf32>
    %267 = vector.broadcast %266 : vector<96x1xf32> to vector<96x32xf32>
    %268 = arith.subf %258, %267 : vector<96x32xf32>
    %269 = arith.mulf %268, %268 : vector<96x32xf32>
    %cst_142 = arith.constant dense<0.000000e+00> : vector<96xf32>
    %270 = vector.multi_reduction <add>, %269, %cst_142 [1] : vector<96x32xf32> to vector<96xf32>
    %271 = vector.shape_cast %270 : vector<96xf32> to vector<96x1xf32>
    %cst_143 = arith.constant 3.200000e+01 : f32
    %272 = vector.broadcast %cst_143 : f32 to vector<96x1xf32>
    %273 = arith.divf %271, %272 : vector<96x1xf32>
    %274 = vector.broadcast %266 : vector<96x1xf32> to vector<96x32xf32>
    %275 = arith.subf %258, %274 : vector<96x32xf32>
    %cst_144 = arith.constant 9.99999974E-6 : f32
    %276 = vector.broadcast %cst_144 : f32 to vector<96x1xf32>
    %277 = arith.addf %273, %276 : vector<96x1xf32>
    %278 = math.rsqrt %277 : vector<96x1xf32>
    %279 = vector.broadcast %278 : vector<96x1xf32> to vector<96x32xf32>
    %280 = arith.mulf %275, %279 : vector<96x32xf32>
    %281 = vector.broadcast %260 : vector<1x32xf32> to vector<96x32xf32>
    %282 = arith.mulf %280, %281 : vector<96x32xf32>
    %283 = vector.broadcast %262 : vector<1x32xf32> to vector<96x32xf32>
    %284 = arith.addf %282, %283 : vector<96x32xf32>
    %285 = arith.truncf %284 : vector<96x32xf32> to vector<96x32xbf16>
    %c0_145 = arith.constant 0 : index
    %c1_146 = arith.constant 1 : index
    %c0_147 = arith.constant 0 : index
    %c0_148 = arith.constant 0 : index
    %286 = vector.load %arg11[%c0_145, %c1_146, %c0_147, %c0_148] : memref<2x2x32x128xbf16, #tpu.memory_space<vmem>>, vector<1x1x32x128xbf16>
    %287 = vector.shape_cast %286 : vector<1x1x32x128xbf16> to vector<32x128xbf16>
    %cst_149 = arith.constant dense<0.000000e+00> : vector<96x128xf32>
    %288 = tpu.matmul %285, %287, %cst_149 {dimension_numbers = #tpu.dot_dimension_numbers<[1], [0], [0], [1], [0, 0, 1, 1], [], []>} : vector<96x32xbf16>, vector<32x128xbf16>, vector<96x128xf32> -> vector<96x128xf32>
    %c0_150 = arith.constant 0 : index
    %c1_151 = arith.constant 1 : index
    %c0_152 = arith.constant 0 : index
    %c0_153 = arith.constant 0 : index
    %289 = vector.load %arg12[%c0_150, %c1_151, %c0_152, %c0_153] : memref<2x2x1x128xf32, #tpu.memory_space<vmem>>, vector<1x1x1x128xf32>
    %290 = vector.shape_cast %289 : vector<1x1x1x128xf32> to vector<1x128xf32>
    %291 = vector.broadcast %290 : vector<1x128xf32> to vector<96x128xf32>
    %292 = arith.addf %288, %291 : vector<96x128xf32>
    %cst_154 = arith.constant 5.000000e-01 : f32
    %293 = vector.broadcast %cst_154 : f32 to vector<96x128xf32>
    %294 = arith.mulf %293, %292 : vector<96x128xf32>
    %cst_155 = arith.constant 0.707106769 : f32
    %295 = vector.broadcast %cst_155 : f32 to vector<96x128xf32>
    %296 = arith.mulf %292, %295 : vector<96x128xf32>
    %297 = math.absf %296 : vector<96x128xf32>
    %cst_156 = arith.constant 0.327591091 : f32
    %298 = vector.broadcast %cst_156 : f32 to vector<96x128xf32>
    %299 = arith.mulf %298, %297 : vector<96x128xf32>
    %cst_157 = arith.constant 1.000000e+00 : f32
    %300 = vector.broadcast %cst_157 : f32 to vector<96x128xf32>
    %301 = arith.addf %300, %299 : vector<96x128xf32>
    %cst_158 = arith.constant 1.000000e+00 : f32
    %302 = vector.broadcast %cst_158 : f32 to vector<96x128xf32>
    %303 = arith.divf %302, %301 : vector<96x128xf32>
    %cst_159 = arith.constant 1.06140542 : f32
    %304 = vector.broadcast %cst_159 : f32 to vector<96x128xf32>
    %305 = arith.mulf %304, %303 : vector<96x128xf32>
    %cst_160 = arith.constant -1.45315206 : f32
    %306 = vector.broadcast %cst_160 : f32 to vector<96x128xf32>
    %307 = arith.addf %305, %306 : vector<96x128xf32>
    %308 = arith.mulf %307, %303 : vector<96x128xf32>
    %cst_161 = arith.constant 1.42141378 : f32
    %309 = vector.broadcast %cst_161 : f32 to vector<96x128xf32>
    %310 = arith.addf %308, %309 : vector<96x128xf32>
    %311 = arith.mulf %310, %303 : vector<96x128xf32>
    %cst_162 = arith.constant -0.284496725 : f32
    %312 = vector.broadcast %cst_162 : f32 to vector<96x128xf32>
    %313 = arith.addf %311, %312 : vector<96x128xf32>
    %314 = arith.mulf %313, %303 : vector<96x128xf32>
    %cst_163 = arith.constant 0.254829586 : f32
    %315 = vector.broadcast %cst_163 : f32 to vector<96x128xf32>
    %316 = arith.addf %314, %315 : vector<96x128xf32>
    %317 = arith.mulf %316, %303 : vector<96x128xf32>
    %cst_164 = arith.constant 0.000000e+00 : f32
    %318 = vector.broadcast %cst_164 : f32 to vector<96x128xf32>
    %319 = arith.subf %318, %297 : vector<96x128xf32>
    %320 = arith.mulf %319, %297 : vector<96x128xf32>
    %321 = math.exp %320 : vector<96x128xf32>
    %322 = arith.mulf %317, %321 : vector<96x128xf32>
    %cst_165 = arith.constant 1.000000e+00 : f32
    %323 = vector.broadcast %cst_165 : f32 to vector<96x128xf32>
    %324 = arith.subf %323, %322 : vector<96x128xf32>
    %cst_166 = arith.constant 0.000000e+00 : f32
    %325 = vector.broadcast %cst_166 : f32 to vector<96x128xf32>
    %326 = arith.cmpf olt, %296, %325 : vector<96x128xf32>
    %cst_167 = arith.constant 0.000000e+00 : f32
    %327 = vector.broadcast %cst_167 : f32 to vector<96x128xf32>
    %328 = arith.subf %327, %324 : vector<96x128xf32>
    %329 = arith.select %326, %328, %324 : vector<96x128xi1>, vector<96x128xf32>
    %cst_168 = arith.constant 1.000000e+00 : f32
    %330 = vector.broadcast %cst_168 : f32 to vector<96x128xf32>
    %331 = arith.addf %330, %329 : vector<96x128xf32>
    %332 = arith.mulf %294, %331 : vector<96x128xf32>
    %333 = arith.truncf %332 : vector<96x128xf32> to vector<96x128xbf16>
    %c0_169 = arith.constant 0 : index
    %c1_170 = arith.constant 1 : index
    %c0_171 = arith.constant 0 : index
    %c0_172 = arith.constant 0 : index
    %334 = vector.load %arg13[%c0_169, %c1_170, %c0_171, %c0_172] : memref<2x2x128x32xbf16, #tpu.memory_space<vmem>>, vector<1x1x128x32xbf16>
    %335 = vector.shape_cast %334 : vector<1x1x128x32xbf16> to vector<128x32xbf16>
    %cst_173 = arith.constant dense<0.000000e+00> : vector<96x32xf32>
    %336 = tpu.matmul %333, %335, %cst_173 {dimension_numbers = #tpu.dot_dimension_numbers<[1], [0], [0], [1], [0, 0, 1, 1], [], []>} : vector<96x128xbf16>, vector<128x32xbf16>, vector<96x32xf32> -> vector<96x32xf32>
    %337 = arith.addf %258, %336 : vector<96x32xf32>
    %c0_174 = arith.constant 0 : index
    %c1_175 = arith.constant 1 : index
    %c0_176 = arith.constant 0 : index
    %c0_177 = arith.constant 0 : index
    %338 = vector.load %arg14[%c0_174, %c1_175, %c0_176, %c0_177] : memref<2x2x1x32xf32, #tpu.memory_space<vmem>>, vector<1x1x1x32xf32>
    %339 = vector.shape_cast %338 : vector<1x1x1x32xf32> to vector<1x32xf32>
    %340 = vector.broadcast %339 : vector<1x32xf32> to vector<96x32xf32>
    %341 = arith.addf %337, %340 : vector<96x32xf32>
    %c0_178 = arith.constant 0 : index
    %c0_179 = arith.constant 0 : index
    %c0_180 = arith.constant 0 : index
    %342 = vector.load %arg15[%c0_178, %c0_179, %c0_180] : memref<2x1x32xf32, #tpu.memory_space<vmem>>, vector<1x1x32xf32>
    %343 = vector.shape_cast %342 : vector<1x1x32xf32> to vector<1x32xf32>
    %c0_181 = arith.constant 0 : index
    %c0_182 = arith.constant 0 : index
    %c0_183 = arith.constant 0 : index
    %344 = vector.load %arg16[%c0_181, %c0_182, %c0_183] : memref<2x1x32xf32, #tpu.memory_space<vmem>>, vector<1x1x32xf32>
    %345 = vector.shape_cast %344 : vector<1x1x32xf32> to vector<1x32xf32>
    %cst_184 = arith.constant dense<0.000000e+00> : vector<96xf32>
    %346 = vector.multi_reduction <add>, %341, %cst_184 [1] : vector<96x32xf32> to vector<96xf32>
    %347 = vector.shape_cast %346 : vector<96xf32> to vector<96x1xf32>
    %cst_185 = arith.constant 3.200000e+01 : f32
    %348 = vector.broadcast %cst_185 : f32 to vector<96x1xf32>
    %349 = arith.divf %347, %348 : vector<96x1xf32>
    %350 = vector.broadcast %349 : vector<96x1xf32> to vector<96x32xf32>
    %351 = arith.subf %341, %350 : vector<96x32xf32>
    %352 = arith.mulf %351, %351 : vector<96x32xf32>
    %cst_186 = arith.constant dense<0.000000e+00> : vector<96xf32>
    %353 = vector.multi_reduction <add>, %352, %cst_186 [1] : vector<96x32xf32> to vector<96xf32>
    %354 = vector.shape_cast %353 : vector<96xf32> to vector<96x1xf32>
    %cst_187 = arith.constant 3.200000e+01 : f32
    %355 = vector.broadcast %cst_187 : f32 to vector<96x1xf32>
    %356 = arith.divf %354, %355 : vector<96x1xf32>
    %357 = vector.broadcast %349 : vector<96x1xf32> to vector<96x32xf32>
    %358 = arith.subf %341, %357 : vector<96x32xf32>
    %cst_188 = arith.constant 9.99999974E-6 : f32
    %359 = vector.broadcast %cst_188 : f32 to vector<96x1xf32>
    %360 = arith.addf %356, %359 : vector<96x1xf32>
    %361 = math.rsqrt %360 : vector<96x1xf32>
    %362 = vector.broadcast %361 : vector<96x1xf32> to vector<96x32xf32>
    %363 = arith.mulf %358, %362 : vector<96x32xf32>
    %364 = vector.broadcast %343 : vector<1x32xf32> to vector<96x32xf32>
    %365 = arith.mulf %363, %364 : vector<96x32xf32>
    %366 = vector.broadcast %345 : vector<1x32xf32> to vector<96x32xf32>
    %367 = arith.addf %365, %366 : vector<96x32xf32>
    %368 = arith.truncf %367 : vector<96x32xf32> to vector<96x32xbf16>
    %c0_189 = arith.constant 0 : index
    %c0_190 = arith.constant 0 : index
    %c0_191 = arith.constant 0 : index
    %369 = vector.load %arg17[%c0_189, %c0_190, %c0_191] : memref<2x32x8xbf16, #tpu.memory_space<vmem>>, vector<1x32x8xbf16>
    %370 = vector.shape_cast %369 : vector<1x32x8xbf16> to vector<32x8xbf16>
    %cst_192 = arith.constant dense<0.000000e+00> : vector<96x8xf32>
    %371 = tpu.matmul %368, %370, %cst_192 {dimension_numbers = #tpu.dot_dimension_numbers<[1], [0], [0], [1], [0, 0, 1, 1], [], []>} : vector<96x32xbf16>, vector<32x8xbf16>, vector<96x8xf32> -> vector<96x8xf32>
    %c0_193 = arith.constant 0 : index
    %c0_194 = arith.constant 0 : index
    %c0_195 = arith.constant 0 : index
    %372 = vector.load %arg18[%c0_193, %c0_194, %c0_195] : memref<2x1x8xf32, #tpu.memory_space<vmem>>, vector<1x1x8xf32>
    %373 = vector.shape_cast %372 : vector<1x1x8xf32> to vector<1x8xf32>
    %374 = vector.broadcast %373 : vector<1x8xf32> to vector<96x8xf32>
    %375 = arith.addf %371, %374 : vector<96x8xf32>
    %cst_196 = arith.constant dense<0.000000e+00> : vector<8x8xf32>
    %376 = tpu.matmul %1, %375, %cst_196 {dimension_numbers = #tpu.dot_dimension_numbers<[1], [0], [0], [1], [0, 0, 1, 1], [], []>} : vector<8x96xf32>, vector<96x8xf32>, vector<8x8xf32> -> vector<8x8xf32>
    %c0_197 = arith.constant 0 : index
    %c0_198 = arith.constant 0 : index
    %377 = vector.load %arg19[%c0_197, %c0_198] : memref<8x8xf32, #tpu.memory_space<vmem>>, vector<8x8xf32>
    tpu.vector_store %arg19[%c0_197, %c0_198], %376 {strides = array<i32>} : memref<8x8xf32, #tpu.memory_space<vmem>>, vector<8x8xf32>,
    %c1_199 = arith.constant 1 : index
    %c0_200 = arith.constant 0 : index
    %c0_201 = arith.constant 0 : index
    %378 = vector.load %arg0[%c1_199, %c0_200, %c0_201] : memref<2x96x32xf32, #tpu.memory_space<vmem>>, vector<1x96x32xf32>
    %379 = vector.shape_cast %378 : vector<1x96x32xf32> to vector<96x32xf32>
    %c1_202 = arith.constant 1 : index
    %c0_203 = arith.constant 0 : index
    %c0_204 = arith.constant 0 : index
    %c0_205 = arith.constant 0 : index
    %380 = vector.load %arg3[%c1_202, %c0_203, %c0_204, %c0_205] : memref<2x2x1x32xf32, #tpu.memory_space<vmem>>, vector<1x1x1x32xf32>
    %381 = vector.shape_cast %380 : vector<1x1x1x32xf32> to vector<1x32xf32>
    %c1_206 = arith.constant 1 : index
    %c0_207 = arith.constant 0 : index
    %c0_208 = arith.constant 0 : index
    %c0_209 = arith.constant 0 : index
    %382 = vector.load %arg4[%c1_206, %c0_207, %c0_208, %c0_209] : memref<2x2x1x32xf32, #tpu.memory_space<vmem>>, vector<1x1x1x32xf32>
    %383 = vector.shape_cast %382 : vector<1x1x1x32xf32> to vector<1x32xf32>
    %cst_210 = arith.constant dense<0.000000e+00> : vector<96xf32>
    %384 = vector.multi_reduction <add>, %379, %cst_210 [1] : vector<96x32xf32> to vector<96xf32>
    %385 = vector.shape_cast %384 : vector<96xf32> to vector<96x1xf32>
    %cst_211 = arith.constant 3.200000e+01 : f32
    %386 = vector.broadcast %cst_211 : f32 to vector<96x1xf32>
    %387 = arith.divf %385, %386 : vector<96x1xf32>
    %388 = vector.broadcast %387 : vector<96x1xf32> to vector<96x32xf32>
    %389 = arith.subf %379, %388 : vector<96x32xf32>
    %390 = arith.mulf %389, %389 : vector<96x32xf32>
    %cst_212 = arith.constant dense<0.000000e+00> : vector<96xf32>
    %391 = vector.multi_reduction <add>, %390, %cst_212 [1] : vector<96x32xf32> to vector<96xf32>
    %392 = vector.shape_cast %391 : vector<96xf32> to vector<96x1xf32>
    %cst_213 = arith.constant 3.200000e+01 : f32
    %393 = vector.broadcast %cst_213 : f32 to vector<96x1xf32>
    %394 = arith.divf %392, %393 : vector<96x1xf32>
    %395 = vector.broadcast %387 : vector<96x1xf32> to vector<96x32xf32>
    %396 = arith.subf %379, %395 : vector<96x32xf32>
    %cst_214 = arith.constant 9.99999974E-6 : f32
    %397 = vector.broadcast %cst_214 : f32 to vector<96x1xf32>
    %398 = arith.addf %394, %397 : vector<96x1xf32>
    %399 = math.rsqrt %398 : vector<96x1xf32>
    %400 = vector.broadcast %399 : vector<96x1xf32> to vector<96x32xf32>
    %401 = arith.mulf %396, %400 : vector<96x32xf32>
    %402 = vector.broadcast %381 : vector<1x32xf32> to vector<96x32xf32>
    %403 = arith.mulf %401, %402 : vector<96x32xf32>
    %404 = vector.broadcast %383 : vector<1x32xf32> to vector<96x32xf32>
    %405 = arith.addf %403, %404 : vector<96x32xf32>
    %406 = arith.truncf %405 : vector<96x32xf32> to vector<96x32xbf16>
    %c1_215 = arith.constant 1 : index
    %c0_216 = arith.constant 0 : index
    %c0_217 = arith.constant 0 : index
    %c0_218 = arith.constant 0 : index
    %407 = vector.load %arg7[%c1_215, %c0_216, %c0_217, %c0_218] : memref<2x2x32x96xbf16, #tpu.memory_space<vmem>>, vector<1x1x32x96xbf16>
    %408 = vector.shape_cast %407 : vector<1x1x32x96xbf16> to vector<32x96xbf16>
    %cst_219 = arith.constant dense<0.000000e+00> : vector<96x96xf32>
    %409 = tpu.matmul %406, %408, %cst_219 {dimension_numbers = #tpu.dot_dimension_numbers<[1], [0], [0], [1], [0, 0, 1, 1], [], []>} : vector<96x32xbf16>, vector<32x96xbf16>, vector<96x96xf32> -> vector<96x96xf32>
    %c1_220 = arith.constant 1 : index
    %c0_221 = arith.constant 0 : index
    %c0_222 = arith.constant 0 : index
    %c0_223 = arith.constant 0 : index
    %410 = vector.load %arg8[%c1_220, %c0_221, %c0_222, %c0_223] : memref<2x2x1x96xf32, #tpu.memory_space<vmem>>, vector<1x1x1x96xf32>
    %411 = vector.shape_cast %410 : vector<1x1x1x96xf32> to vector<1x96xf32>
    %412 = vector.broadcast %411 : vector<1x96xf32> to vector<96x96xf32>
    %413 = arith.addf %409, %412 : vector<96x96xf32>
    %414 = vector.extract_strided_slice %413 {offsets = [0, 0], sizes = [96, 16], strides = [1, 1]} : vector<96x96xf32> to vector<96x16xf32>
    %415 = arith.truncf %414 : vector<96x16xf32> to vector<96x16xbf16>
    %416 = vector.extract_strided_slice %413 {offsets = [0, 32], sizes = [96, 16], strides = [1, 1]} : vector<96x96xf32> to vector<96x16xf32>
    %417 = arith.truncf %416 : vector<96x16xf32> to vector<96x16xbf16>
    %418 = vector.extract_strided_slice %413 {offsets = [0, 64], sizes = [96, 16], strides = [1, 1]} : vector<96x96xf32> to vector<96x16xf32>
    %419 = arith.truncf %418 : vector<96x16xf32> to vector<96x16xbf16>
    %cst_224 = arith.constant dense<0.000000e+00> : vector<96x96xf32>
    %420 = tpu.matmul %415, %417, %cst_224 {dimension_numbers = #tpu.dot_dimension_numbers<[1], [1], [0], [0], [0, 0, 1, 0], [], []>} : vector<96x16xbf16>, vector<96x16xbf16>, vector<96x96xf32> -> vector<96x96xf32>
    %cst_225 = arith.constant 2.500000e-01 : f32
    %421 = vector.broadcast %cst_225 : f32 to vector<96x96xf32>
    %422 = arith.mulf %420, %421 : vector<96x96xf32>
    %423 = arith.addf %422, %0 : vector<96x96xf32>
    %cst_226 = arith.constant dense<0xFF800000> : vector<96xf32>
    %424 = vector.multi_reduction <maximumf>, %423, %cst_226 [1] : vector<96x96xf32> to vector<96xf32>
    %425 = vector.shape_cast %424 : vector<96xf32> to vector<96x1xf32>
    %426 = vector.broadcast %425 : vector<96x1xf32> to vector<96x96xf32>
    %427 = arith.subf %423, %426 : vector<96x96xf32>
    %428 = math.exp %427 : vector<96x96xf32>
    %cst_227 = arith.constant dense<0.000000e+00> : vector<96xf32>
    %429 = vector.multi_reduction <add>, %428, %cst_227 [1] : vector<96x96xf32> to vector<96xf32>
    %430 = vector.shape_cast %429 : vector<96xf32> to vector<96x1xf32>
    %431 = vector.broadcast %430 : vector<96x1xf32> to vector<96x96xf32>
    %432 = arith.divf %428, %431 : vector<96x96xf32>
    %433 = arith.truncf %432 : vector<96x96xf32> to vector<96x96xbf16>
    %cst_228 = arith.constant dense<0.000000e+00> : vector<96x16xf32>
    %434 = tpu.matmul %433, %419, %cst_228 {dimension_numbers = #tpu.dot_dimension_numbers<[1], [0], [0], [1], [0, 0, 1, 1], [], []>} : vector<96x96xbf16>, vector<96x16xbf16>, vector<96x16xf32> -> vector<96x16xf32>
    %435 = vector.extract_strided_slice %413 {offsets = [0, 16], sizes = [96, 16], strides = [1, 1]} : vector<96x96xf32> to vector<96x16xf32>
    %436 = arith.truncf %435 : vector<96x16xf32> to vector<96x16xbf16>
    %437 = vector.extract_strided_slice %413 {offsets = [0, 48], sizes = [96, 16], strides = [1, 1]} : vector<96x96xf32> to vector<96x16xf32>
    %438 = arith.truncf %437 : vector<96x16xf32> to vector<96x16xbf16>
    %439 = vector.extract_strided_slice %413 {offsets = [0, 80], sizes = [96, 16], strides = [1, 1]} : vector<96x96xf32> to vector<96x16xf32>
    %440 = arith.truncf %439 : vector<96x16xf32> to vector<96x16xbf16>
    %cst_229 = arith.constant dense<0.000000e+00> : vector<96x96xf32>
    %441 = tpu.matmul %436, %438, %cst_229 {dimension_numbers = #tpu.dot_dimension_numbers<[1], [1], [0], [0], [0, 0, 1, 0], [], []>} : vector<96x16xbf16>, vector<96x16xbf16>, vector<96x96xf32> -> vector<96x96xf32>
    %cst_230 = arith.constant 2.500000e-01 : f32
    %442 = vector.broadcast %cst_230 : f32 to vector<96x96xf32>
    %443 = arith.mulf %441, %442 : vector<96x96xf32>
    %444 = arith.addf %443, %0 : vector<96x96xf32>
    %cst_231 = arith.constant dense<0xFF800000> : vector<96xf32>
    %445 = vector.multi_reduction <maximumf>, %444, %cst_231 [1] : vector<96x96xf32> to vector<96xf32>
    %446 = vector.shape_cast %445 : vector<96xf32> to vector<96x1xf32>
    %447 = vector.broadcast %446 : vector<96x1xf32> to vector<96x96xf32>
    %448 = arith.subf %444, %447 : vector<96x96xf32>
    %449 = math.exp %448 : vector<96x96xf32>
    %cst_232 = arith.constant dense<0.000000e+00> : vector<96xf32>
    %450 = vector.multi_reduction <add>, %449, %cst_232 [1] : vector<96x96xf32> to vector<96xf32>
    %451 = vector.shape_cast %450 : vector<96xf32> to vector<96x1xf32>
    %452 = vector.broadcast %451 : vector<96x1xf32> to vector<96x96xf32>
    %453 = arith.divf %449, %452 : vector<96x96xf32>
    %454 = arith.truncf %453 : vector<96x96xf32> to vector<96x96xbf16>
    %cst_233 = arith.constant dense<0.000000e+00> : vector<96x16xf32>
    %455 = tpu.matmul %454, %440, %cst_233 {dimension_numbers = #tpu.dot_dimension_numbers<[1], [0], [0], [1], [0, 0, 1, 1], [], []>} : vector<96x96xbf16>, vector<96x16xbf16>, vector<96x16xf32> -> vector<96x16xf32>
    %456 = tpu.concatenate %434, %455 in 1 : vector<96x16xf32>, vector<96x16xf32> -> vector<96x32xf32>
    %457 = arith.truncf %456 : vector<96x32xf32> to vector<96x32xbf16>
    %c1_234 = arith.constant 1 : index
    %c0_235 = arith.constant 0 : index
    %c0_236 = arith.constant 0 : index
    %c0_237 = arith.constant 0 : index
    %458 = vector.load %arg9[%c1_234, %c0_235, %c0_236, %c0_237] : memref<2x2x32x32xbf16, #tpu.memory_space<vmem>>, vector<1x1x32x32xbf16>
    %459 = vector.shape_cast %458 : vector<1x1x32x32xbf16> to vector<32x32xbf16>
    %cst_238 = arith.constant dense<0.000000e+00> : vector<96x32xf32>
    %460 = tpu.matmul %457, %459, %cst_238 {dimension_numbers = #tpu.dot_dimension_numbers<[1], [0], [0], [1], [0, 0, 1, 1], [], []>} : vector<96x32xbf16>, vector<32x32xbf16>, vector<96x32xf32> -> vector<96x32xf32>
    %c1_239 = arith.constant 1 : index
    %c0_240 = arith.constant 0 : index
    %c0_241 = arith.constant 0 : index
    %c0_242 = arith.constant 0 : index
    %461 = vector.load %arg10[%c1_239, %c0_240, %c0_241, %c0_242] : memref<2x2x1x32xf32, #tpu.memory_space<vmem>>, vector<1x1x1x32xf32>
    %462 = vector.shape_cast %461 : vector<1x1x1x32xf32> to vector<1x32xf32>
    %463 = vector.broadcast %462 : vector<1x32xf32> to vector<96x32xf32>
    %464 = arith.addf %460, %463 : vector<96x32xf32>
    %465 = arith.addf %405, %464 : vector<96x32xf32>
    %c1_243 = arith.constant 1 : index
    %c0_244 = arith.constant 0 : index
    %c0_245 = arith.constant 0 : index
    %c0_246 = arith.constant 0 : index
    %466 = vector.load %arg5[%c1_243, %c0_244, %c0_245, %c0_246] : memref<2x2x1x32xf32, #tpu.memory_space<vmem>>, vector<1x1x1x32xf32>
    %467 = vector.shape_cast %466 : vector<1x1x1x32xf32> to vector<1x32xf32>
    %c1_247 = arith.constant 1 : index
    %c0_248 = arith.constant 0 : index
    %c0_249 = arith.constant 0 : index
    %c0_250 = arith.constant 0 : index
    %468 = vector.load %arg6[%c1_247, %c0_248, %c0_249, %c0_250] : memref<2x2x1x32xf32, #tpu.memory_space<vmem>>, vector<1x1x1x32xf32>
    %469 = vector.shape_cast %468 : vector<1x1x1x32xf32> to vector<1x32xf32>
    %cst_251 = arith.constant dense<0.000000e+00> : vector<96xf32>
    %470 = vector.multi_reduction <add>, %465, %cst_251 [1] : vector<96x32xf32> to vector<96xf32>
    %471 = vector.shape_cast %470 : vector<96xf32> to vector<96x1xf32>
    %cst_252 = arith.constant 3.200000e+01 : f32
    %472 = vector.broadcast %cst_252 : f32 to vector<96x1xf32>
    %473 = arith.divf %471, %472 : vector<96x1xf32>
    %474 = vector.broadcast %473 : vector<96x1xf32> to vector<96x32xf32>
    %475 = arith.subf %465, %474 : vector<96x32xf32>
    %476 = arith.mulf %475, %475 : vector<96x32xf32>
    %cst_253 = arith.constant dense<0.000000e+00> : vector<96xf32>
    %477 = vector.multi_reduction <add>, %476, %cst_253 [1] : vector<96x32xf32> to vector<96xf32>
    %478 = vector.shape_cast %477 : vector<96xf32> to vector<96x1xf32>
    %cst_254 = arith.constant 3.200000e+01 : f32
    %479 = vector.broadcast %cst_254 : f32 to vector<96x1xf32>
    %480 = arith.divf %478, %479 : vector<96x1xf32>
    %481 = vector.broadcast %473 : vector<96x1xf32> to vector<96x32xf32>
    %482 = arith.subf %465, %481 : vector<96x32xf32>
    %cst_255 = arith.constant 9.99999974E-6 : f32
    %483 = vector.broadcast %cst_255 : f32 to vector<96x1xf32>
    %484 = arith.addf %480, %483 : vector<96x1xf32>
    %485 = math.rsqrt %484 : vector<96x1xf32>
    %486 = vector.broadcast %485 : vector<96x1xf32> to vector<96x32xf32>
    %487 = arith.mulf %482, %486 : vector<96x32xf32>
    %488 = vector.broadcast %467 : vector<1x32xf32> to vector<96x32xf32>
    %489 = arith.mulf %487, %488 : vector<96x32xf32>
    %490 = vector.broadcast %469 : vector<1x32xf32> to vector<96x32xf32>
    %491 = arith.addf %489, %490 : vector<96x32xf32>
    %492 = arith.truncf %491 : vector<96x32xf32> to vector<96x32xbf16>
    %c1_256 = arith.constant 1 : index
    %c0_257 = arith.constant 0 : index
    %c0_258 = arith.constant 0 : index
    %c0_259 = arith.constant 0 : index
    %493 = vector.load %arg11[%c1_256, %c0_257, %c0_258, %c0_259] : memref<2x2x32x128xbf16, #tpu.memory_space<vmem>>, vector<1x1x32x128xbf16>
    %494 = vector.shape_cast %493 : vector<1x1x32x128xbf16> to vector<32x128xbf16>
    %cst_260 = arith.constant dense<0.000000e+00> : vector<96x128xf32>
    %495 = tpu.matmul %492, %494, %cst_260 {dimension_numbers = #tpu.dot_dimension_numbers<[1], [0], [0], [1], [0, 0, 1, 1], [], []>} : vector<96x32xbf16>, vector<32x128xbf16>, vector<96x128xf32> -> vector<96x128xf32>
    %c1_261 = arith.constant 1 : index
    %c0_262 = arith.constant 0 : index
    %c0_263 = arith.constant 0 : index
    %c0_264 = arith.constant 0 : index
    %496 = vector.load %arg12[%c1_261, %c0_262, %c0_263, %c0_264] : memref<2x2x1x128xf32, #tpu.memory_space<vmem>>, vector<1x1x1x128xf32>
    %497 = vector.shape_cast %496 : vector<1x1x1x128xf32> to vector<1x128xf32>
    %498 = vector.broadcast %497 : vector<1x128xf32> to vector<96x128xf32>
    %499 = arith.addf %495, %498 : vector<96x128xf32>
    %cst_265 = arith.constant 5.000000e-01 : f32
    %500 = vector.broadcast %cst_265 : f32 to vector<96x128xf32>
    %501 = arith.mulf %500, %499 : vector<96x128xf32>
    %cst_266 = arith.constant 0.707106769 : f32
    %502 = vector.broadcast %cst_266 : f32 to vector<96x128xf32>
    %503 = arith.mulf %499, %502 : vector<96x128xf32>
    %504 = math.absf %503 : vector<96x128xf32>
    %cst_267 = arith.constant 0.327591091 : f32
    %505 = vector.broadcast %cst_267 : f32 to vector<96x128xf32>
    %506 = arith.mulf %505, %504 : vector<96x128xf32>
    %cst_268 = arith.constant 1.000000e+00 : f32
    %507 = vector.broadcast %cst_268 : f32 to vector<96x128xf32>
    %508 = arith.addf %507, %506 : vector<96x128xf32>
    %cst_269 = arith.constant 1.000000e+00 : f32
    %509 = vector.broadcast %cst_269 : f32 to vector<96x128xf32>
    %510 = arith.divf %509, %508 : vector<96x128xf32>
    %cst_270 = arith.constant 1.06140542 : f32
    %511 = vector.broadcast %cst_270 : f32 to vector<96x128xf32>
    %512 = arith.mulf %511, %510 : vector<96x128xf32>
    %cst_271 = arith.constant -1.45315206 : f32
    %513 = vector.broadcast %cst_271 : f32 to vector<96x128xf32>
    %514 = arith.addf %512, %513 : vector<96x128xf32>
    %515 = arith.mulf %514, %510 : vector<96x128xf32>
    %cst_272 = arith.constant 1.42141378 : f32
    %516 = vector.broadcast %cst_272 : f32 to vector<96x128xf32>
    %517 = arith.addf %515, %516 : vector<96x128xf32>
    %518 = arith.mulf %517, %510 : vector<96x128xf32>
    %cst_273 = arith.constant -0.284496725 : f32
    %519 = vector.broadcast %cst_273 : f32 to vector<96x128xf32>
    %520 = arith.addf %518, %519 : vector<96x128xf32>
    %521 = arith.mulf %520, %510 : vector<96x128xf32>
    %cst_274 = arith.constant 0.254829586 : f32
    %522 = vector.broadcast %cst_274 : f32 to vector<96x128xf32>
    %523 = arith.addf %521, %522 : vector<96x128xf32>
    %524 = arith.mulf %523, %510 : vector<96x128xf32>
    %cst_275 = arith.constant 0.000000e+00 : f32
    %525 = vector.broadcast %cst_275 : f32 to vector<96x128xf32>
    %526 = arith.subf %525, %504 : vector<96x128xf32>
    %527 = arith.mulf %526, %504 : vector<96x128xf32>
    %528 = math.exp %527 : vector<96x128xf32>
    %529 = arith.mulf %524, %528 : vector<96x128xf32>
    %cst_276 = arith.constant 1.000000e+00 : f32
    %530 = vector.broadcast %cst_276 : f32 to vector<96x128xf32>
    %531 = arith.subf %530, %529 : vector<96x128xf32>
    %cst_277 = arith.constant 0.000000e+00 : f32
    %532 = vector.broadcast %cst_277 : f32 to vector<96x128xf32>
    %533 = arith.cmpf olt, %503, %532 : vector<96x128xf32>
    %cst_278 = arith.constant 0.000000e+00 : f32
    %534 = vector.broadcast %cst_278 : f32 to vector<96x128xf32>
    %535 = arith.subf %534, %531 : vector<96x128xf32>
    %536 = arith.select %533, %535, %531 : vector<96x128xi1>, vector<96x128xf32>
    %cst_279 = arith.constant 1.000000e+00 : f32
    %537 = vector.broadcast %cst_279 : f32 to vector<96x128xf32>
    %538 = arith.addf %537, %536 : vector<96x128xf32>
    %539 = arith.mulf %501, %538 : vector<96x128xf32>
    %540 = arith.truncf %539 : vector<96x128xf32> to vector<96x128xbf16>
    %c1_280 = arith.constant 1 : index
    %c0_281 = arith.constant 0 : index
    %c0_282 = arith.constant 0 : index
    %c0_283 = arith.constant 0 : index
    %541 = vector.load %arg13[%c1_280, %c0_281, %c0_282, %c0_283] : memref<2x2x128x32xbf16, #tpu.memory_space<vmem>>, vector<1x1x128x32xbf16>
    %542 = vector.shape_cast %541 : vector<1x1x128x32xbf16> to vector<128x32xbf16>
    %cst_284 = arith.constant dense<0.000000e+00> : vector<96x32xf32>
    %543 = tpu.matmul %540, %542, %cst_284 {dimension_numbers = #tpu.dot_dimension_numbers<[1], [0], [0], [1], [0, 0, 1, 1], [], []>} : vector<96x128xbf16>, vector<128x32xbf16>, vector<96x32xf32> -> vector<96x32xf32>
    %544 = arith.addf %465, %543 : vector<96x32xf32>
    %c1_285 = arith.constant 1 : index
    %c0_286 = arith.constant 0 : index
    %c0_287 = arith.constant 0 : index
    %c0_288 = arith.constant 0 : index
    %545 = vector.load %arg14[%c1_285, %c0_286, %c0_287, %c0_288] : memref<2x2x1x32xf32, #tpu.memory_space<vmem>>, vector<1x1x1x32xf32>
    %546 = vector.shape_cast %545 : vector<1x1x1x32xf32> to vector<1x32xf32>
    %547 = vector.broadcast %546 : vector<1x32xf32> to vector<96x32xf32>
    %548 = arith.addf %544, %547 : vector<96x32xf32>
    %c1_289 = arith.constant 1 : index
    %c1_290 = arith.constant 1 : index
    %c0_291 = arith.constant 0 : index
    %c0_292 = arith.constant 0 : index
    %549 = vector.load %arg3[%c1_289, %c1_290, %c0_291, %c0_292] : memref<2x2x1x32xf32, #tpu.memory_space<vmem>>, vector<1x1x1x32xf32>
    %550 = vector.shape_cast %549 : vector<1x1x1x32xf32> to vector<1x32xf32>
    %c1_293 = arith.constant 1 : index
    %c1_294 = arith.constant 1 : index
    %c0_295 = arith.constant 0 : index
    %c0_296 = arith.constant 0 : index
    %551 = vector.load %arg4[%c1_293, %c1_294, %c0_295, %c0_296] : memref<2x2x1x32xf32, #tpu.memory_space<vmem>>, vector<1x1x1x32xf32>
    %552 = vector.shape_cast %551 : vector<1x1x1x32xf32> to vector<1x32xf32>
    %cst_297 = arith.constant dense<0.000000e+00> : vector<96xf32>
    %553 = vector.multi_reduction <add>, %548, %cst_297 [1] : vector<96x32xf32> to vector<96xf32>
    %554 = vector.shape_cast %553 : vector<96xf32> to vector<96x1xf32>
    %cst_298 = arith.constant 3.200000e+01 : f32
    %555 = vector.broadcast %cst_298 : f32 to vector<96x1xf32>
    %556 = arith.divf %554, %555 : vector<96x1xf32>
    %557 = vector.broadcast %556 : vector<96x1xf32> to vector<96x32xf32>
    %558 = arith.subf %548, %557 : vector<96x32xf32>
    %559 = arith.mulf %558, %558 : vector<96x32xf32>
    %cst_299 = arith.constant dense<0.000000e+00> : vector<96xf32>
    %560 = vector.multi_reduction <add>, %559, %cst_299 [1] : vector<96x32xf32> to vector<96xf32>
    %561 = vector.shape_cast %560 : vector<96xf32> to vector<96x1xf32>
    %cst_300 = arith.constant 3.200000e+01 : f32
    %562 = vector.broadcast %cst_300 : f32 to vector<96x1xf32>
    %563 = arith.divf %561, %562 : vector<96x1xf32>
    %564 = vector.broadcast %556 : vector<96x1xf32> to vector<96x32xf32>
    %565 = arith.subf %548, %564 : vector<96x32xf32>
    %cst_301 = arith.constant 9.99999974E-6 : f32
    %566 = vector.broadcast %cst_301 : f32 to vector<96x1xf32>
    %567 = arith.addf %563, %566 : vector<96x1xf32>
    %568 = math.rsqrt %567 : vector<96x1xf32>
    %569 = vector.broadcast %568 : vector<96x1xf32> to vector<96x32xf32>
    %570 = arith.mulf %565, %569 : vector<96x32xf32>
    %571 = vector.broadcast %550 : vector<1x32xf32> to vector<96x32xf32>
    %572 = arith.mulf %570, %571 : vector<96x32xf32>
    %573 = vector.broadcast %552 : vector<1x32xf32> to vector<96x32xf32>
    %574 = arith.addf %572, %573 : vector<96x32xf32>
    %575 = arith.truncf %574 : vector<96x32xf32> to vector<96x32xbf16>
    %c1_302 = arith.constant 1 : index
    %c1_303 = arith.constant 1 : index
    %c0_304 = arith.constant 0 : index
    %c0_305 = arith.constant 0 : index
    %576 = vector.load %arg7[%c1_302, %c1_303, %c0_304, %c0_305] : memref<2x2x32x96xbf16, #tpu.memory_space<vmem>>, vector<1x1x32x96xbf16>
    %577 = vector.shape_cast %576 : vector<1x1x32x96xbf16> to vector<32x96xbf16>
    %cst_306 = arith.constant dense<0.000000e+00> : vector<96x96xf32>
    %578 = tpu.matmul %575, %577, %cst_306 {dimension_numbers = #tpu.dot_dimension_numbers<[1], [0], [0], [1], [0, 0, 1, 1], [], []>} : vector<96x32xbf16>, vector<32x96xbf16>, vector<96x96xf32> -> vector<96x96xf32>
    %c1_307 = arith.constant 1 : index
    %c1_308 = arith.constant 1 : index
    %c0_309 = arith.constant 0 : index
    %c0_310 = arith.constant 0 : index
    %579 = vector.load %arg8[%c1_307, %c1_308, %c0_309, %c0_310] : memref<2x2x1x96xf32, #tpu.memory_space<vmem>>, vector<1x1x1x96xf32>
    %580 = vector.shape_cast %579 : vector<1x1x1x96xf32> to vector<1x96xf32>
    %581 = vector.broadcast %580 : vector<1x96xf32> to vector<96x96xf32>
    %582 = arith.addf %578, %581 : vector<96x96xf32>
    %583 = vector.extract_strided_slice %582 {offsets = [0, 0], sizes = [96, 16], strides = [1, 1]} : vector<96x96xf32> to vector<96x16xf32>
    %584 = arith.truncf %583 : vector<96x16xf32> to vector<96x16xbf16>
    %585 = vector.extract_strided_slice %582 {offsets = [0, 32], sizes = [96, 16], strides = [1, 1]} : vector<96x96xf32> to vector<96x16xf32>
    %586 = arith.truncf %585 : vector<96x16xf32> to vector<96x16xbf16>
    %587 = vector.extract_strided_slice %582 {offsets = [0, 64], sizes = [96, 16], strides = [1, 1]} : vector<96x96xf32> to vector<96x16xf32>
    %588 = arith.truncf %587 : vector<96x16xf32> to vector<96x16xbf16>
    %cst_311 = arith.constant dense<0.000000e+00> : vector<96x96xf32>
    %589 = tpu.matmul %584, %586, %cst_311 {dimension_numbers = #tpu.dot_dimension_numbers<[1], [1], [0], [0], [0, 0, 1, 0], [], []>} : vector<96x16xbf16>, vector<96x16xbf16>, vector<96x96xf32> -> vector<96x96xf32>
    %cst_312 = arith.constant 2.500000e-01 : f32
    %590 = vector.broadcast %cst_312 : f32 to vector<96x96xf32>
    %591 = arith.mulf %589, %590 : vector<96x96xf32>
    %592 = arith.addf %591, %0 : vector<96x96xf32>
    %cst_313 = arith.constant dense<0xFF800000> : vector<96xf32>
    %593 = vector.multi_reduction <maximumf>, %592, %cst_313 [1] : vector<96x96xf32> to vector<96xf32>
    %594 = vector.shape_cast %593 : vector<96xf32> to vector<96x1xf32>
    %595 = vector.broadcast %594 : vector<96x1xf32> to vector<96x96xf32>
    %596 = arith.subf %592, %595 : vector<96x96xf32>
    %597 = math.exp %596 : vector<96x96xf32>
    %cst_314 = arith.constant dense<0.000000e+00> : vector<96xf32>
    %598 = vector.multi_reduction <add>, %597, %cst_314 [1] : vector<96x96xf32> to vector<96xf32>
    %599 = vector.shape_cast %598 : vector<96xf32> to vector<96x1xf32>
    %600 = vector.broadcast %599 : vector<96x1xf32> to vector<96x96xf32>
    %601 = arith.divf %597, %600 : vector<96x96xf32>
    %602 = arith.truncf %601 : vector<96x96xf32> to vector<96x96xbf16>
    %cst_315 = arith.constant dense<0.000000e+00> : vector<96x16xf32>
    %603 = tpu.matmul %602, %588, %cst_315 {dimension_numbers = #tpu.dot_dimension_numbers<[1], [0], [0], [1], [0, 0, 1, 1], [], []>} : vector<96x96xbf16>, vector<96x16xbf16>, vector<96x16xf32> -> vector<96x16xf32>
    %604 = vector.extract_strided_slice %582 {offsets = [0, 16], sizes = [96, 16], strides = [1, 1]} : vector<96x96xf32> to vector<96x16xf32>
    %605 = arith.truncf %604 : vector<96x16xf32> to vector<96x16xbf16>
    %606 = vector.extract_strided_slice %582 {offsets = [0, 48], sizes = [96, 16], strides = [1, 1]} : vector<96x96xf32> to vector<96x16xf32>
    %607 = arith.truncf %606 : vector<96x16xf32> to vector<96x16xbf16>
    %608 = vector.extract_strided_slice %582 {offsets = [0, 80], sizes = [96, 16], strides = [1, 1]} : vector<96x96xf32> to vector<96x16xf32>
    %609 = arith.truncf %608 : vector<96x16xf32> to vector<96x16xbf16>
    %cst_316 = arith.constant dense<0.000000e+00> : vector<96x96xf32>
    %610 = tpu.matmul %605, %607, %cst_316 {dimension_numbers = #tpu.dot_dimension_numbers<[1], [1], [0], [0], [0, 0, 1, 0], [], []>} : vector<96x16xbf16>, vector<96x16xbf16>, vector<96x96xf32> -> vector<96x96xf32>
    %cst_317 = arith.constant 2.500000e-01 : f32
    %611 = vector.broadcast %cst_317 : f32 to vector<96x96xf32>
    %612 = arith.mulf %610, %611 : vector<96x96xf32>
    %613 = arith.addf %612, %0 : vector<96x96xf32>
    %cst_318 = arith.constant dense<0xFF800000> : vector<96xf32>
    %614 = vector.multi_reduction <maximumf>, %613, %cst_318 [1] : vector<96x96xf32> to vector<96xf32>
    %615 = vector.shape_cast %614 : vector<96xf32> to vector<96x1xf32>
    %616 = vector.broadcast %615 : vector<96x1xf32> to vector<96x96xf32>
    %617 = arith.subf %613, %616 : vector<96x96xf32>
    %618 = math.exp %617 : vector<96x96xf32>
    %cst_319 = arith.constant dense<0.000000e+00> : vector<96xf32>
    %619 = vector.multi_reduction <add>, %618, %cst_319 [1] : vector<96x96xf32> to vector<96xf32>
    %620 = vector.shape_cast %619 : vector<96xf32> to vector<96x1xf32>
    %621 = vector.broadcast %620 : vector<96x1xf32> to vector<96x96xf32>
    %622 = arith.divf %618, %621 : vector<96x96xf32>
    %623 = arith.truncf %622 : vector<96x96xf32> to vector<96x96xbf16>
    %cst_320 = arith.constant dense<0.000000e+00> : vector<96x16xf32>
    %624 = tpu.matmul %623, %609, %cst_320 {dimension_numbers = #tpu.dot_dimension_numbers<[1], [0], [0], [1], [0, 0, 1, 1], [], []>} : vector<96x96xbf16>, vector<96x16xbf16>, vector<96x16xf32> -> vector<96x16xf32>
    %625 = tpu.concatenate %603, %624 in 1 : vector<96x16xf32>, vector<96x16xf32> -> vector<96x32xf32>
    %626 = arith.truncf %625 : vector<96x32xf32> to vector<96x32xbf16>
    %c1_321 = arith.constant 1 : index
    %c1_322 = arith.constant 1 : index
    %c0_323 = arith.constant 0 : index
    %c0_324 = arith.constant 0 : index
    %627 = vector.load %arg9[%c1_321, %c1_322, %c0_323, %c0_324] : memref<2x2x32x32xbf16, #tpu.memory_space<vmem>>, vector<1x1x32x32xbf16>
    %628 = vector.shape_cast %627 : vector<1x1x32x32xbf16> to vector<32x32xbf16>
    %cst_325 = arith.constant dense<0.000000e+00> : vector<96x32xf32>
    %629 = tpu.matmul %626, %628, %cst_325 {dimension_numbers = #tpu.dot_dimension_numbers<[1], [0], [0], [1], [0, 0, 1, 1], [], []>} : vector<96x32xbf16>, vector<32x32xbf16>, vector<96x32xf32> -> vector<96x32xf32>
    %c1_326 = arith.constant 1 : index
    %c1_327 = arith.constant 1 : index
    %c0_328 = arith.constant 0 : index
    %c0_329 = arith.constant 0 : index
    %630 = vector.load %arg10[%c1_326, %c1_327, %c0_328, %c0_329] : memref<2x2x1x32xf32, #tpu.memory_space<vmem>>, vector<1x1x1x32xf32>
    %631 = vector.shape_cast %630 : vector<1x1x1x32xf32> to vector<1x32xf32>
    %632 = vector.broadcast %631 : vector<1x32xf32> to vector<96x32xf32>
    %633 = arith.addf %629, %632 : vector<96x32xf32>
    %634 = arith.addf %574, %633 : vector<96x32xf32>
    %c1_330 = arith.constant 1 : index
    %c1_331 = arith.constant 1 : index
    %c0_332 = arith.constant 0 : index
    %c0_333 = arith.constant 0 : index
    %635 = vector.load %arg5[%c1_330, %c1_331, %c0_332, %c0_333] : memref<2x2x1x32xf32, #tpu.memory_space<vmem>>, vector<1x1x1x32xf32>
    %636 = vector.shape_cast %635 : vector<1x1x1x32xf32> to vector<1x32xf32>
    %c1_334 = arith.constant 1 : index
    %c1_335 = arith.constant 1 : index
    %c0_336 = arith.constant 0 : index
    %c0_337 = arith.constant 0 : index
    %637 = vector.load %arg6[%c1_334, %c1_335, %c0_336, %c0_337] : memref<2x2x1x32xf32, #tpu.memory_space<vmem>>, vector<1x1x1x32xf32>
    %638 = vector.shape_cast %637 : vector<1x1x1x32xf32> to vector<1x32xf32>
    %cst_338 = arith.constant dense<0.000000e+00> : vector<96xf32>
    %639 = vector.multi_reduction <add>, %634, %cst_338 [1] : vector<96x32xf32> to vector<96xf32>
    %640 = vector.shape_cast %639 : vector<96xf32> to vector<96x1xf32>
    %cst_339 = arith.constant 3.200000e+01 : f32
    %641 = vector.broadcast %cst_339 : f32 to vector<96x1xf32>
    %642 = arith.divf %640, %641 : vector<96x1xf32>
    %643 = vector.broadcast %642 : vector<96x1xf32> to vector<96x32xf32>
    %644 = arith.subf %634, %643 : vector<96x32xf32>
    %645 = arith.mulf %644, %644 : vector<96x32xf32>
    %cst_340 = arith.constant dense<0.000000e+00> : vector<96xf32>
    %646 = vector.multi_reduction <add>, %645, %cst_340 [1] : vector<96x32xf32> to vector<96xf32>
    %647 = vector.shape_cast %646 : vector<96xf32> to vector<96x1xf32>
    %cst_341 = arith.constant 3.200000e+01 : f32
    %648 = vector.broadcast %cst_341 : f32 to vector<96x1xf32>
    %649 = arith.divf %647, %648 : vector<96x1xf32>
    %650 = vector.broadcast %642 : vector<96x1xf32> to vector<96x32xf32>
    %651 = arith.subf %634, %650 : vector<96x32xf32>
    %cst_342 = arith.constant 9.99999974E-6 : f32
    %652 = vector.broadcast %cst_342 : f32 to vector<96x1xf32>
    %653 = arith.addf %649, %652 : vector<96x1xf32>
    %654 = math.rsqrt %653 : vector<96x1xf32>
    %655 = vector.broadcast %654 : vector<96x1xf32> to vector<96x32xf32>
    %656 = arith.mulf %651, %655 : vector<96x32xf32>
    %657 = vector.broadcast %636 : vector<1x32xf32> to vector<96x32xf32>
    %658 = arith.mulf %656, %657 : vector<96x32xf32>
    %659 = vector.broadcast %638 : vector<1x32xf32> to vector<96x32xf32>
    %660 = arith.addf %658, %659 : vector<96x32xf32>
    %661 = arith.truncf %660 : vector<96x32xf32> to vector<96x32xbf16>
    %c1_343 = arith.constant 1 : index
    %c1_344 = arith.constant 1 : index
    %c0_345 = arith.constant 0 : index
    %c0_346 = arith.constant 0 : index
    %662 = vector.load %arg11[%c1_343, %c1_344, %c0_345, %c0_346] : memref<2x2x32x128xbf16, #tpu.memory_space<vmem>>, vector<1x1x32x128xbf16>
    %663 = vector.shape_cast %662 : vector<1x1x32x128xbf16> to vector<32x128xbf16>
    %cst_347 = arith.constant dense<0.000000e+00> : vector<96x128xf32>
    %664 = tpu.matmul %661, %663, %cst_347 {dimension_numbers = #tpu.dot_dimension_numbers<[1], [0], [0], [1], [0, 0, 1, 1], [], []>} : vector<96x32xbf16>, vector<32x128xbf16>, vector<96x128xf32> -> vector<96x128xf32>
    %c1_348 = arith.constant 1 : index
    %c1_349 = arith.constant 1 : index
    %c0_350 = arith.constant 0 : index
    %c0_351 = arith.constant 0 : index
    %665 = vector.load %arg12[%c1_348, %c1_349, %c0_350, %c0_351] : memref<2x2x1x128xf32, #tpu.memory_space<vmem>>, vector<1x1x1x128xf32>
    %666 = vector.shape_cast %665 : vector<1x1x1x128xf32> to vector<1x128xf32>
    %667 = vector.broadcast %666 : vector<1x128xf32> to vector<96x128xf32>
    %668 = arith.addf %664, %667 : vector<96x128xf32>
    %cst_352 = arith.constant 5.000000e-01 : f32
    %669 = vector.broadcast %cst_352 : f32 to vector<96x128xf32>
    %670 = arith.mulf %669, %668 : vector<96x128xf32>
    %cst_353 = arith.constant 0.707106769 : f32
    %671 = vector.broadcast %cst_353 : f32 to vector<96x128xf32>
    %672 = arith.mulf %668, %671 : vector<96x128xf32>
    %673 = math.absf %672 : vector<96x128xf32>
    %cst_354 = arith.constant 0.327591091 : f32
    %674 = vector.broadcast %cst_354 : f32 to vector<96x128xf32>
    %675 = arith.mulf %674, %673 : vector<96x128xf32>
    %cst_355 = arith.constant 1.000000e+00 : f32
    %676 = vector.broadcast %cst_355 : f32 to vector<96x128xf32>
    %677 = arith.addf %676, %675 : vector<96x128xf32>
    %cst_356 = arith.constant 1.000000e+00 : f32
    %678 = vector.broadcast %cst_356 : f32 to vector<96x128xf32>
    %679 = arith.divf %678, %677 : vector<96x128xf32>
    %cst_357 = arith.constant 1.06140542 : f32
    %680 = vector.broadcast %cst_357 : f32 to vector<96x128xf32>
    %681 = arith.mulf %680, %679 : vector<96x128xf32>
    %cst_358 = arith.constant -1.45315206 : f32
    %682 = vector.broadcast %cst_358 : f32 to vector<96x128xf32>
    %683 = arith.addf %681, %682 : vector<96x128xf32>
    %684 = arith.mulf %683, %679 : vector<96x128xf32>
    %cst_359 = arith.constant 1.42141378 : f32
    %685 = vector.broadcast %cst_359 : f32 to vector<96x128xf32>
    %686 = arith.addf %684, %685 : vector<96x128xf32>
    %687 = arith.mulf %686, %679 : vector<96x128xf32>
    %cst_360 = arith.constant -0.284496725 : f32
    %688 = vector.broadcast %cst_360 : f32 to vector<96x128xf32>
    %689 = arith.addf %687, %688 : vector<96x128xf32>
    %690 = arith.mulf %689, %679 : vector<96x128xf32>
    %cst_361 = arith.constant 0.254829586 : f32
    %691 = vector.broadcast %cst_361 : f32 to vector<96x128xf32>
    %692 = arith.addf %690, %691 : vector<96x128xf32>
    %693 = arith.mulf %692, %679 : vector<96x128xf32>
    %cst_362 = arith.constant 0.000000e+00 : f32
    %694 = vector.broadcast %cst_362 : f32 to vector<96x128xf32>
    %695 = arith.subf %694, %673 : vector<96x128xf32>
    %696 = arith.mulf %695, %673 : vector<96x128xf32>
    %697 = math.exp %696 : vector<96x128xf32>
    %698 = arith.mulf %693, %697 : vector<96x128xf32>
    %cst_363 = arith.constant 1.000000e+00 : f32
    %699 = vector.broadcast %cst_363 : f32 to vector<96x128xf32>
    %700 = arith.subf %699, %698 : vector<96x128xf32>
    %cst_364 = arith.constant 0.000000e+00 : f32
    %701 = vector.broadcast %cst_364 : f32 to vector<96x128xf32>
    %702 = arith.cmpf olt, %672, %701 : vector<96x128xf32>
    %cst_365 = arith.constant 0.000000e+00 : f32
    %703 = vector.broadcast %cst_365 : f32 to vector<96x128xf32>
    %704 = arith.subf %703, %700 : vector<96x128xf32>
    %705 = arith.select %702, %704, %700 : vector<96x128xi1>, vector<96x128xf32>
    %cst_366 = arith.constant 1.000000e+00 : f32
    %706 = vector.broadcast %cst_366 : f32 to vector<96x128xf32>
    %707 = arith.addf %706, %705 : vector<96x128xf32>
    %708 = arith.mulf %670, %707 : vector<96x128xf32>
    %709 = arith.truncf %708 : vector<96x128xf32> to vector<96x128xbf16>
    %c1_367 = arith.constant 1 : index
    %c1_368 = arith.constant 1 : index
    %c0_369 = arith.constant 0 : index
    %c0_370 = arith.constant 0 : index
    %710 = vector.load %arg13[%c1_367, %c1_368, %c0_369, %c0_370] : memref<2x2x128x32xbf16, #tpu.memory_space<vmem>>, vector<1x1x128x32xbf16>
    %711 = vector.shape_cast %710 : vector<1x1x128x32xbf16> to vector<128x32xbf16>
    %cst_371 = arith.constant dense<0.000000e+00> : vector<96x32xf32>
    %712 = tpu.matmul %709, %711, %cst_371 {dimension_numbers = #tpu.dot_dimension_numbers<[1], [0], [0], [1], [0, 0, 1, 1], [], []>} : vector<96x128xbf16>, vector<128x32xbf16>, vector<96x32xf32> -> vector<96x32xf32>
    %713 = arith.addf %634, %712 : vector<96x32xf32>
    %c1_372 = arith.constant 1 : index
    %c1_373 = arith.constant 1 : index
    %c0_374 = arith.constant 0 : index
    %c0_375 = arith.constant 0 : index
    %714 = vector.load %arg14[%c1_372, %c1_373, %c0_374, %c0_375] : memref<2x2x1x32xf32, #tpu.memory_space<vmem>>, vector<1x1x1x32xf32>
    %715 = vector.shape_cast %714 : vector<1x1x1x32xf32> to vector<1x32xf32>
    %716 = vector.broadcast %715 : vector<1x32xf32> to vector<96x32xf32>
    %717 = arith.addf %713, %716 : vector<96x32xf32>
    %c1_376 = arith.constant 1 : index
    %c0_377 = arith.constant 0 : index
    %c0_378 = arith.constant 0 : index
    %718 = vector.load %arg15[%c1_376, %c0_377, %c0_378] : memref<2x1x32xf32, #tpu.memory_space<vmem>>, vector<1x1x32xf32>
    %719 = vector.shape_cast %718 : vector<1x1x32xf32> to vector<1x32xf32>
    %c1_379 = arith.constant 1 : index
    %c0_380 = arith.constant 0 : index
    %c0_381 = arith.constant 0 : index
    %720 = vector.load %arg16[%c1_379, %c0_380, %c0_381] : memref<2x1x32xf32, #tpu.memory_space<vmem>>, vector<1x1x32xf32>
    %721 = vector.shape_cast %720 : vector<1x1x32xf32> to vector<1x32xf32>
    %cst_382 = arith.constant dense<0.000000e+00> : vector<96xf32>
    %722 = vector.multi_reduction <add>, %717, %cst_382 [1] : vector<96x32xf32> to vector<96xf32>
    %723 = vector.shape_cast %722 : vector<96xf32> to vector<96x1xf32>
    %cst_383 = arith.constant 3.200000e+01 : f32
    %724 = vector.broadcast %cst_383 : f32 to vector<96x1xf32>
    %725 = arith.divf %723, %724 : vector<96x1xf32>
    %726 = vector.broadcast %725 : vector<96x1xf32> to vector<96x32xf32>
    %727 = arith.subf %717, %726 : vector<96x32xf32>
    %728 = arith.mulf %727, %727 : vector<96x32xf32>
    %cst_384 = arith.constant dense<0.000000e+00> : vector<96xf32>
    %729 = vector.multi_reduction <add>, %728, %cst_384 [1] : vector<96x32xf32> to vector<96xf32>
    %730 = vector.shape_cast %729 : vector<96xf32> to vector<96x1xf32>
    %cst_385 = arith.constant 3.200000e+01 : f32
    %731 = vector.broadcast %cst_385 : f32 to vector<96x1xf32>
    %732 = arith.divf %730, %731 : vector<96x1xf32>
    %733 = vector.broadcast %725 : vector<96x1xf32> to vector<96x32xf32>
    %734 = arith.subf %717, %733 : vector<96x32xf32>
    %cst_386 = arith.constant 9.99999974E-6 : f32
    %735 = vector.broadcast %cst_386 : f32 to vector<96x1xf32>
    %736 = arith.addf %732, %735 : vector<96x1xf32>
    %737 = math.rsqrt %736 : vector<96x1xf32>
    %738 = vector.broadcast %737 : vector<96x1xf32> to vector<96x32xf32>
    %739 = arith.mulf %734, %738 : vector<96x32xf32>
    %740 = vector.broadcast %719 : vector<1x32xf32> to vector<96x32xf32>
    %741 = arith.mulf %739, %740 : vector<96x32xf32>
    %742 = vector.broadcast %721 : vector<1x32xf32> to vector<96x32xf32>
    %743 = arith.addf %741, %742 : vector<96x32xf32>
    %744 = arith.truncf %743 : vector<96x32xf32> to vector<96x32xbf16>
    %c1_387 = arith.constant 1 : index
    %c0_388 = arith.constant 0 : index
    %c0_389 = arith.constant 0 : index
    %745 = vector.load %arg17[%c1_387, %c0_388, %c0_389] : memref<2x32x8xbf16, #tpu.memory_space<vmem>>, vector<1x32x8xbf16>
    %746 = vector.shape_cast %745 : vector<1x32x8xbf16> to vector<32x8xbf16>
    %cst_390 = arith.constant dense<0.000000e+00> : vector<96x8xf32>
    %747 = tpu.matmul %744, %746, %cst_390 {dimension_numbers = #tpu.dot_dimension_numbers<[1], [0], [0], [1], [0, 0, 1, 1], [], []>} : vector<96x32xbf16>, vector<32x8xbf16>, vector<96x8xf32> -> vector<96x8xf32>
    %c1_391 = arith.constant 1 : index
    %c0_392 = arith.constant 0 : index
    %c0_393 = arith.constant 0 : index
    %748 = vector.load %arg18[%c1_391, %c0_392, %c0_393] : memref<2x1x8xf32, #tpu.memory_space<vmem>>, vector<1x1x8xf32>
    %749 = vector.shape_cast %748 : vector<1x1x8xf32> to vector<1x8xf32>
    %750 = vector.broadcast %749 : vector<1x8xf32> to vector<96x8xf32>
    %751 = arith.addf %747, %750 : vector<96x8xf32>
    %cst_394 = arith.constant dense<0.000000e+00> : vector<8x8xf32>
    %752 = tpu.matmul %1, %751, %cst_394 {dimension_numbers = #tpu.dot_dimension_numbers<[1], [0], [0], [1], [0, 0, 1, 1], [], []>} : vector<8x96xf32>, vector<96x8xf32>, vector<8x8xf32> -> vector<8x8xf32>
    %cst_395 = arith.constant dense<0x7F800000> : vector<8xf32>
    %753 = vector.multi_reduction <minimumf>, %752, %cst_395 [1] : vector<8x8xf32> to vector<8xf32>
    %754 = vector.shape_cast %753 : vector<8xf32> to vector<8x1xf32>
    %cst_396 = arith.constant dense<0xFF800000> : vector<8xf32>
    %755 = vector.multi_reduction <maximumf>, %752, %cst_396 [1] : vector<8x8xf32> to vector<8xf32>
    %756 = vector.shape_cast %755 : vector<8xf32> to vector<8x1xf32>
    %757 = arith.subf %756, %754 : vector<8x1xf32>
    %cst_397 = arith.constant 9.99999974E-6 : f32
    %758 = vector.broadcast %cst_397 : f32 to vector<8x1xf32>
    %759 = arith.cmpf olt, %757, %758 : vector<8x1xf32>
    %cst_398 = arith.constant 9.99999974E-6 : f32
    %760 = vector.broadcast %cst_398 : f32 to vector<8x1xf32>
    %761 = arith.addf %757, %760 : vector<8x1xf32>
    %762 = arith.select %759, %761, %757 : vector<8x1xi1>, vector<8x1xf32>
    %763 = vector.broadcast %754 : vector<8x1xf32> to vector<8x8xf32>
    %764 = arith.subf %752, %763 : vector<8x8xf32>
    %765 = vector.broadcast %762 : vector<8x1xf32> to vector<8x8xf32>
    %766 = arith.divf %764, %765 : vector<8x8xf32>
    %c0_399 = arith.constant 0 : index
    %c0_400 = arith.constant 0 : index
    %767 = vector.load %arg20[%c0_399, %c0_400] : memref<8x8xf32, #tpu.memory_space<vmem>>, vector<8x8xf32>
    tpu.vector_store %arg20[%c0_399, %c0_400], %766 {strides = array<i32>} : memref<8x8xf32, #tpu.memory_space<vmem>>, vector<8x8xf32>,
    return
  }
}

</mosaic_0001>

<llo_original>
// kernel: dynamics_function_forward.1
$region0: #{dynamics_function_forward.1}
  #allocation0 [shape = 'u32[]', space=smem, size = 0x4, offset = 0x4, fixed_abs, tag = 'smem constant byte address 0x4 - core index']
  #allocation1 [shape = 'u32[72,128]{1,0:T(1,128)}', space=vmem, size = 0x9000, scoped, tag = 'internal scratch']
  %s0 = inlined_call_operand.vmem [shape: f32[2,96,32], index: 0, kind: input, shape index: {}]
  %s1 = inlined_call_operand.vmem [shape: f32[96,96], index: 1, kind: input, shape index: {}]
  %s2 = inlined_call_operand.vmem [shape: f32[8,96], index: 2, kind: input, shape index: {}]
  %s3 = inlined_call_operand.vmem [shape: f32[2,2,1,32], index: 3, kind: input, shape index: {}]
  %s4 = inlined_call_operand.vmem [shape: f32[2,2,1,32], index: 4, kind: input, shape index: {}]
  %s5 = inlined_call_operand.vmem [shape: f32[2,2,1,32], index: 5, kind: input, shape index: {}]
  %s6 = inlined_call_operand.vmem [shape: f32[2,2,1,32], index: 6, kind: input, shape index: {}]
  %s7 = inlined_call_operand.vmem [shape: bf16[2,2,32,96], index: 7, kind: input, shape index: {}]
  %s8 = inlined_call_operand.vmem [shape: f32[2,2,1,96], index: 8, kind: input, shape index: {}]
  %s9 = inlined_call_operand.vmem [shape: bf16[2,2,32,32], index: 9, kind: input, shape index: {}]
  %s10 = inlined_call_operand.vmem [shape: f32[2,2,1,32], index: 10, kind: input, shape index: {}]
  %s11 = inlined_call_operand.vmem [shape: bf16[2,2,32,128], index: 11, kind: input, shape index: {}]
  %s12 = inlined_call_operand.vmem [shape: f32[2,2,1,128], index: 12, kind: input, shape index: {}]
  %s13 = inlined_call_operand.vmem [shape: bf16[2,2,128,32], index: 13, kind: input, shape index: {}]
  %s14 = inlined_call_operand.vmem [shape: f32[2,2,1,32], index: 14, kind: input, shape index: {}]
  %s15 = inlined_call_operand.vmem [shape: f32[2,1,32], index: 15, kind: input, shape index: {}]
  %s16 = inlined_call_operand.vmem [shape: f32[2,1,32], index: 16, kind: input, shape index: {}]
  %s17 = inlined_call_operand.vmem [shape: bf16[2,32,8], index: 17, kind: input, shape index: {}]
  %s18 = inlined_call_operand.vmem [shape: f32[2,1,8], index: 18, kind: input, shape index: {}]
  %s19 = inlined_call_operand.hbm [shape: f32[8,8], index: 19, kind: output, shape index: {0}]
  %s20 = inlined_call_operand.hbm [shape: f32[8,8], index: 20, kind: output, shape index: {1}]
  %21 = xla_tuple %s19, %s20
  %s22 = sld [smem:[#allocation0]]
  $region94: #{dynamics_function_forward.1} parent=0
    _
  %s24 = ssub.s32 1, %s22
  %s25 = scalar_select 0, %s24, %s22
  $region1: #{dynamics_function_forward.1} parent=0
    #allocation2 [shape = 'u8[4096]{0}', space=vmem, size = 0x1000, scoped, tag = 'output window, operand 0, single buffered']
    #allocation3 [shape = 's32[1]{0}', space=sflag, size = 0x4, scoped, tag = 'scoped memory for dynamics_function_forward.1']
    #allocation4 [shape = 'u8[4096]{0}', space=vmem, size = 0x1000, scoped, tag = 'output window, operand 1, single buffered']
    #allocation5 [shape = 's32[1]{0}', space=sflag, size = 0x4, scoped, tag = 'scoped memory for dynamics_function_forward.1']
    %26 = vsyncpa [#allocation3], 0
    %27 = vsyncpa [#allocation5], 0
    // Predicated region
    $region2: #{dynamics_function_forward.1} parent=1 // pred_check
      _
    $region3: #{dynamics_function_forward.1} parent=1 // pred_check_branch
      %29 = sbr.rel (0) target = $region5
    $region4: #{dynamics_function_forward.1} parent=1 // pred_region
      _
    $region5: #{dynamics_function_forward.1} parent=1 // pred_fallthru
      _
    // Predicated region
    $region6: #{dynamics_function_forward.1} parent=1 // pred_check
      _
    $region7: #{dynamics_function_forward.1} parent=1 // pred_check_branch
      %31 = sbr.rel (0) target = $region9
    $region8: #{dynamics_function_forward.1} parent=1 // pred_region
      _
    $region9: #{dynamics_function_forward.1} parent=1 // pred_fallthru
      _
    // Predicated region
    $region10: #{dynamics_function_forward.1} parent=1 // pred_check
      _
    $region11: #{dynamics_function_forward.1} parent=1 // pred_check_branch
      %33 = sbr.rel (0) target = $region13
    $region12: #{dynamics_function_forward.1} parent=1 // pred_region
      _
    $region13: #{dynamics_function_forward.1} parent=1 // pred_fallthru
      _
    // Predicated region
    $region14: #{dynamics_function_forward.1} parent=1 // pred_check
      _
    $region15: #{dynamics_function_forward.1} parent=1 // pred_check_branch
      %35 = sbr.rel (0) target = $region17
    $region16: #{dynamics_function_forward.1} parent=1 // pred_region
      _
    $region17: #{dynamics_function_forward.1} parent=1 // pred_fallthru
      _
    // Predicated region
    $region18: #{dynamics_function_forward.1} parent=1 // pred_check
      _
    $region19: #{dynamics_function_forward.1} parent=1 // pred_check_branch
      %37 = sbr.rel (0) target = $region21
    $region20: #{dynamics_function_forward.1} parent=1 // pred_region
      _
    $region21: #{dynamics_function_forward.1} parent=1 // pred_fallthru
      _
    // Predicated region
    $region22: #{dynamics_function_forward.1} parent=1 // pred_check
      _
    $region23: #{dynamics_function_forward.1} parent=1 // pred_check_branch
      %39 = sbr.rel (0) target = $region25
    $region24: #{dynamics_function_forward.1} parent=1 // pred_region
      _
    $region25: #{dynamics_function_forward.1} parent=1 // pred_fallthru
      _
    // Predicated region
    $region26: #{dynamics_function_forward.1} parent=1 // pred_check
      _
    $region27: #{dynamics_function_forward.1} parent=1 // pred_check_branch
      %41 = sbr.rel (0) target = $region29
    $region28: #{dynamics_function_forward.1} parent=1 // pred_region
      _
    $region29: #{dynamics_function_forward.1} parent=1 // pred_fallthru
      _
    // Predicated region
    $region30: #{dynamics_function_forward.1} parent=1 // pred_check
      _
    $region31: #{dynamics_function_forward.1} parent=1 // pred_check_branch
      %43 = sbr.rel (0) target = $region33
    $region32: #{dynamics_function_forward.1} parent=1 // pred_region
      _
    $region33: #{dynamics_function_forward.1} parent=1 // pred_fallthru
      _
    // Predicated region
    $region34: #{dynamics_function_forward.1} parent=1 // pred_check
      _
    $region35: #{dynamics_function_forward.1} parent=1 // pred_check_branch
      %45 = sbr.rel (0) target = $region37
    $region36: #{dynamics_function_forward.1} parent=1 // pred_region
      _
    $region37: #{dynamics_function_forward.1} parent=1 // pred_fallthru
      _
    // Predicated region
    $region38: #{dynamics_function_forward.1} parent=1 // pred_check
      _
    $region39: #{dynamics_function_forward.1} parent=1 // pred_check_branch
      %47 = sbr.rel (0) target = $region41
    $region40: #{dynamics_function_forward.1} parent=1 // pred_region
      _
    $region41: #{dynamics_function_forward.1} parent=1 // pred_fallthru
      _
    // Predicated region
    $region42: #{dynamics_function_forward.1} parent=1 // pred_check
      _
    $region43: #{dynamics_function_forward.1} parent=1 // pred_check_branch
      %49 = sbr.rel (0) target = $region45
    $region44: #{dynamics_function_forward.1} parent=1 // pred_region
      _
    $region45: #{dynamics_function_forward.1} parent=1 // pred_fallthru
      _
    // Predicated region
    $region46: #{dynamics_function_forward.1} parent=1 // pred_check
      _
    $region47: #{dynamics_function_forward.1} parent=1 // pred_check_branch
      %51 = sbr.rel (0) target = $region49
    $region48: #{dynamics_function_forward.1} parent=1 // pred_region
      _
    $region49: #{dynamics_function_forward.1} parent=1 // pred_fallthru
      _
    // Predicated region
    $region50: #{dynamics_function_forward.1} parent=1 // pred_check
      _
    $region51: #{dynamics_function_forward.1} parent=1 // pred_check_branch
      %53 = sbr.rel (0) target = $region53
    $region52: #{dynamics_function_forward.1} parent=1 // pred_region
      _
    $region53: #{dynamics_function_forward.1} parent=1 // pred_fallthru
      _
    // Predicated region
    $region54: #{dynamics_function_forward.1} parent=1 // pred_check
      _
    $region55: #{dynamics_function_forward.1} parent=1 // pred_check_branch
      %55 = sbr.rel (0) target = $region57
    $region56: #{dynamics_function_forward.1} parent=1 // pred_region
      _
    $region57: #{dynamics_function_forward.1} parent=1 // pred_fallthru
      _
    // Predicated region
    $region58: #{dynamics_function_forward.1} parent=1 // pred_check
      _
    $region59: #{dynamics_function_forward.1} parent=1 // pred_check_branch
      %57 = sbr.rel (0) target = $region61
    $region60: #{dynamics_function_forward.1} parent=1 // pred_region
      _
    $region61: #{dynamics_function_forward.1} parent=1 // pred_fallthru
      _
    // Predicated region
    $region62: #{dynamics_function_forward.1} parent=1 // pred_check
      _
    $region63: #{dynamics_function_forward.1} parent=1 // pred_check_branch
      %59 = sbr.rel (0) target = $region65
    $region64: #{dynamics_function_forward.1} parent=1 // pred_region
      _
    $region65: #{dynamics_function_forward.1} parent=1 // pred_fallthru
      _
    // Predicated region
    $region66: #{dynamics_function_forward.1} parent=1 // pred_check
      _
    $region67: #{dynamics_function_forward.1} parent=1 // pred_check_branch
      %61 = sbr.rel (0) target = $region69
    $region68: #{dynamics_function_forward.1} parent=1 // pred_region
      _
    $region69: #{dynamics_function_forward.1} parent=1 // pred_fallthru
      _
    // Predicated region
    $region70: #{dynamics_function_forward.1} parent=1 // pred_check
      _
    $region71: #{dynamics_function_forward.1} parent=1 // pred_check_branch
      %63 = sbr.rel (0) target = $region73
    $region72: #{dynamics_function_forward.1} parent=1 // pred_region
      _
    $region73: #{dynamics_function_forward.1} parent=1 // pred_fallthru
      _
    // Predicated region
    $region74: #{dynamics_function_forward.1} parent=1 // pred_check
      _
    $region75: #{dynamics_function_forward.1} parent=1 // pred_check_branch
      %65 = sbr.rel (0) target = $region77
    $region76: #{dynamics_function_forward.1} parent=1 // pred_region
      _
    $region77: #{dynamics_function_forward.1} parent=1 // pred_fallthru
      _
    %v67 = vld [vmem:[%s1] sm:$0xff]
    %v68 = vld [vmem:[%s1 + $0x8] sm:$0xff]
    %v69 = vld [vmem:[%s1 + $0x10] sm:$0xff]
    %v70 = vld [vmem:[%s1 + $0x18] sm:$0xff]
    %v71 = vld [vmem:[%s1 + $0x20] sm:$0xff]
    %v72 = vld [vmem:[%s1 + $0x28] sm:$0xff]
    %v73 = vld [vmem:[%s1 + $0x30] sm:$0xff]
    %v74 = vld [vmem:[%s1 + $0x38] sm:$0xff]
    %v75 = vld [vmem:[%s1 + $0x40] sm:$0xff]
    %v76 = vld [vmem:[%s1 + $0x48] sm:$0xff]
    %v77 = vld [vmem:[%s1 + $0x50] sm:$0xff]
    %v78 = vld [vmem:[%s1 + $0x58] sm:$0xff]
    %v79 = vld [vmem:[%s2] sm:$0xff]
    %v80 = vld [vmem:[%s0] sm:$0xff]
    %v81 = vld [vmem:[%s0 + $0x8] sm:$0xff]
    %v82 = vld [vmem:[%s0 + $0x10] sm:$0xff]
    %v83 = vld [vmem:[%s0 + $0x18] sm:$0xff]
    %v84 = vld [vmem:[%s0 + $0x20] sm:$0xff]
    %v85 = vld [vmem:[%s0 + $0x28] sm:$0xff]
    %v86 = vld [vmem:[%s0 + $0x30] sm:$0xff]
    %v87 = vld [vmem:[%s0 + $0x38] sm:$0xff]
    %v88 = vld [vmem:[%s0 + $0x40] sm:$0xff]
    %v89 = vld [vmem:[%s0 + $0x48] sm:$0xff]
    %v90 = vld [vmem:[%s0 + $0x50] sm:$0xff]
    %v91 = vld [vmem:[%s0 + $0x58] sm:$0xff]
    %v92 = vld [vmem:[%s3] sm:$0x1]
    %v93 = vld [vmem:[%s4] sm:$0x1]
    %vm94 = vcmask 261120
    %v95 = vsel %vm94, %v80, 0.0
    %96 = vadd.xlane.f32.xlu0 %v95
    %v97 = vpop.xlane.xlu0 %96
    %v98 = vsel %vm94, %v81, 0.0
    %99 = vadd.xlane.f32.xlu0 %v98
    %v100 = vpop.xlane.xlu0 %99
    %v101 = vsel %vm94, %v82, 0.0
    %102 = vadd.xlane.f32.xlu0 %v101
    %v103 = vpop.xlane.xlu0 %102
    %v104 = vsel %vm94, %v83, 0.0
    %105 = vadd.xlane.f32.xlu0 %v104
    %v106 = vpop.xlane.xlu0 %105
    %v107 = vsel %vm94, %v84, 0.0
    %108 = vadd.xlane.f32.xlu0 %v107
    %v109 = vpop.xlane.xlu0 %108
    %v110 = vsel %vm94, %v85, 0.0
    %111 = vadd.xlane.f32.xlu0 %v110
    %v112 = vpop.xlane.xlu0 %111
    %v113 = vsel %vm94, %v86, 0.0
    %114 = vadd.xlane.f32.xlu0 %v113
    %v115 = vpop.xlane.xlu0 %114
    %v116 = vsel %vm94, %v87, 0.0
    %117 = vadd.xlane.f32.xlu0 %v116
    %v118 = vpop.xlane.xlu0 %117
    %v119 = vsel %vm94, %v88, 0.0
    %120 = vadd.xlane.f32.xlu0 %v119
    %v121 = vpop.xlane.xlu0 %120
    %v122 = vsel %vm94, %v89, 0.0
    %123 = vadd.xlane.f32.xlu0 %v122
    %v124 = vpop.xlane.xlu0 %123
    %v125 = vsel %vm94, %v90, 0.0
    %126 = vadd.xlane.f32.xlu0 %v125
    %v127 = vpop.xlane.xlu0 %126
    %v128 = vsel %vm94, %v91, 0.0
    %129 = vadd.xlane.f32.xlu0 %v128
    %v130 = vpop.xlane.xlu0 %129
    %v131 = vrcp.pop 32.0
    %v132 = vmul.f32 32.0, %v131
    %v133 = vsub.f32 1.0, %v132
    %v134 = vmul.f32 %v131, %v133
    %v135 = vadd.f32 %v131, %v134
    %vm136 = vweird.f32 %v131
    %v137 = vsel %vm136, %v131, %v135
    %v138 = vmul.f32 %v97, %v137
    %v139 = vmul.f32 %v100, %v137
    %v140 = vmul.f32 %v103, %v137
    %v141 = vmul.f32 %v106, %v137
    %v142 = vmul.f32 %v109, %v137
    %v143 = vmul.f32 %v112, %v137
    %v144 = vmul.f32 %v115, %v137
    %v145 = vmul.f32 %v118, %v137
    %v146 = vmul.f32 %v121, %v137
    %v147 = vmul.f32 %v124, %v137
    %v148 = vmul.f32 %v127, %v137
    %v149 = vmul.f32 %v130, %v137
    %v150 = vsub.f32 %v80, %v138
    %v151 = vsub.f32 %v81, %v139
    %v152 = vsub.f32 %v82, %v140
    %v153 = vsub.f32 %v83, %v141
    %v154 = vsub.f32 %v84, %v142
    %v155 = vsub.f32 %v85, %v143
    %v156 = vsub.f32 %v86, %v144
    %v157 = vsub.f32 %v87, %v145
    %v158 = vsub.f32 %v88, %v146
    %v159 = vsub.f32 %v89, %v147
    %v160 = vsub.f32 %v90, %v148
    %v161 = vsub.f32 %v91, %v149
    %v162 = vmul.f32 %v150, %v150
    %v163 = vmul.f32 %v151, %v151
    %v164 = vmul.f32 %v152, %v152
    %v165 = vmul.f32 %v153, %v153
    %v166 = vmul.f32 %v154, %v154
    %v167 = vmul.f32 %v155, %v155
    %v168 = vmul.f32 %v156, %v156
    %v169 = vmul.f32 %v157, %v157
    %v170 = vmul.f32 %v158, %v158
    %v171 = vmul.f32 %v159, %v159
    %v172 = vmul.f32 %v160, %v160
    %v173 = vmul.f32 %v161, %v161
    %v174 = vsel %vm94, %v162, 0.0
    %175 = vadd.xlane.f32.xlu0 %v174
    %v176 = vpop.xlane.xlu0 %175
    %v177 = vsel %vm94, %v163, 0.0
    %178 = vadd.xlane.f32.xlu0 %v177
    %v179 = vpop.xlane.xlu0 %178
    %v180 = vsel %vm94, %v164, 0.0
    %181 = vadd.xlane.f32.xlu0 %v180
    %v182 = vpop.xlane.xlu0 %181
    %v183 = vsel %vm94, %v165, 0.0
    %184 = vadd.xlane.f32.xlu0 %v183
    %v185 = vpop.xlane.xlu0 %184
    %v186 = vsel %vm94, %v166, 0.0
    %187 = vadd.xlane.f32.xlu0 %v186
    %v188 = vpop.xlane.xlu0 %187
    %v189 = vsel %vm94, %v167, 0.0
    %190 = vadd.xlane.f32.xlu0 %v189
    %v191 = vpop.xlane.xlu0 %190
    %v192 = vsel %vm94, %v168, 0.0
    %193 = vadd.xlane.f32.xlu0 %v192
    %v194 = vpop.xlane.xlu0 %193
    %v195 = vsel %vm94, %v169, 0.0
    %196 = vadd.xlane.f32.xlu0 %v195
    %v197 = vpop.xlane.xlu0 %196
    %v198 = vsel %vm94, %v170, 0.0
    %199 = vadd.xlane.f32.xlu0 %v198
    %v200 = vpop.xlane.xlu0 %199
    %v201 = vsel %vm94, %v171, 0.0
    %202 = vadd.xlane.f32.xlu0 %v201
    %v203 = vpop.xlane.xlu0 %202
    %v204 = vsel %vm94, %v172, 0.0
    %205 = vadd.xlane.f32.xlu0 %v204
    %v206 = vpop.xlane.xlu0 %205
    %v207 = vsel %vm94, %v173, 0.0
    %208 = vadd.xlane.f32.xlu0 %v207
    %v209 = vpop.xlane.xlu0 %208
    %v210 = vmul.f32 %v176, %v137
    %v211 = vmul.f32 %v179, %v137
    %v212 = vmul.f32 %v182, %v137
    %v213 = vmul.f32 %v185, %v137
    %v214 = vmul.f32 %v188, %v137
    %v215 = vmul.f32 %v191, %v137
    %v216 = vmul.f32 %v194, %v137
    %v217 = vmul.f32 %v197, %v137
    %v218 = vmul.f32 %v200, %v137
    %v219 = vmul.f32 %v203, %v137
    %v220 = vmul.f32 %v206, %v137
    %v221 = vmul.f32 %v209, %v137
    %v222 = vadd.f32 %v210, 1e-05
    %v223 = vadd.f32 %v211, 1e-05
    %v224 = vadd.f32 %v212, 1e-05
    %v225 = vadd.f32 %v213, 1e-05
    %v226 = vadd.f32 %v214, 1e-05
    %v227 = vadd.f32 %v215, 1e-05
    %v228 = vadd.f32 %v216, 1e-05
    %v229 = vadd.f32 %v217, 1e-05
    %v230 = vadd.f32 %v218, 1e-05
    %v231 = vadd.f32 %v219, 1e-05
    %v232 = vadd.f32 %v220, 1e-05
    %v233 = vadd.f32 %v221, 1e-05
    %v234 = vrsqrt.pop %v222
    %v235 = vmul.f32 %v234, %v222
    %v236 = vmul.f32 %v235, %v234
    %v237 = vmul.f32 0.5, %v236
    %v238 = vsub.f32 1.5, %v237
    %v239 = vmul.f32 %v234, %v238
    %vm240 = vweird.f32 %v222
    %vm241 = vweird.f32 %v234
    %vm242 = vmor %vm240, %vm241
    %v243 = vsel %vm242, %v234, %v239
    %v244 = vrsqrt.pop %v223
    %v245 = vmul.f32 %v244, %v223
    %v246 = vmul.f32 %v245, %v244
    %v247 = vmul.f32 0.5, %v246
    %v248 = vsub.f32 1.5, %v247
    %v249 = vmul.f32 %v244, %v248
    %vm250 = vweird.f32 %v223
    %vm251 = vweird.f32 %v244
    %vm252 = vmor %vm250, %vm251
    %v253 = vsel %vm252, %v244, %v249
    %v254 = vrsqrt.pop %v224
    %v255 = vmul.f32 %v254, %v224
    %v256 = vmul.f32 %v255, %v254
    %v257 = vmul.f32 0.5, %v256
    %v258 = vsub.f32 1.5, %v257
    %v259 = vmul.f32 %v254, %v258
    %vm260 = vweird.f32 %v224
    %vm261 = vweird.f32 %v254
    %vm262 = vmor %vm260, %vm261
    %v263 = vsel %vm262, %v254, %v259
    %v264 = vrsqrt.pop %v225
    %v265 = vmul.f32 %v264, %v225
    %v266 = vmul.f32 %v265, %v264
    %v267 = vmul.f32 0.5, %v266
    %v268 = vsub.f32 1.5, %v267
    %v269 = vmul.f32 %v264, %v268
    %vm270 = vweird.f32 %v225
    %vm271 = vweird.f32 %v264
    %vm272 = vmor %vm270, %vm271
    %v273 = vsel %vm272, %v264, %v269
    %v274 = vrsqrt.pop %v226
    %v275 = vmul.f32 %v274, %v226
    %v276 = vmul.f32 %v275, %v274
    %v277 = vmul.f32 0.5, %v276
    %v278 = vsub.f32 1.5, %v277
    %v279 = vmul.f32 %v274, %v278
    %vm280 = vweird.f32 %v226
    %vm281 = vweird.f32 %v274
    %vm282 = vmor %vm280, %vm281
    %v283 = vsel %vm282, %v274, %v279
    %v284 = vrsqrt.pop %v227
    %v285 = vmul.f32 %v284, %v227
    %v286 = vmul.f32 %v285, %v284
    %v287 = vmul.f32 0.5, %v286
    %v288 = vsub.f32 1.5, %v287
    %v289 = vmul.f32 %v284, %v288
    %vm290 = vweird.f32 %v227
    %vm291 = vweird.f32 %v284
    %vm292 = vmor %vm290, %vm291
    %v293 = vsel %vm292, %v284, %v289
    %v294 = vrsqrt.pop %v228
    %v295 = vmul.f32 %v294, %v228
    %v296 = vmul.f32 %v295, %v294
    %v297 = vmul.f32 0.5, %v296
    %v298 = vsub.f32 1.5, %v297
    %v299 = vmul.f32 %v294, %v298
    %vm300 = vweird.f32 %v228
    %vm301 = vweird.f32 %v294
    %vm302 = vmor %vm300, %vm301
    %v303 = vsel %vm302, %v294, %v299
    %v304 = vrsqrt.pop %v229
    %v305 = vmul.f32 %v304, %v229
    %v306 = vmul.f32 %v305, %v304
    %v307 = vmul.f32 0.5, %v306
    %v308 = vsub.f32 1.5, %v307
    %v309 = vmul.f32 %v304, %v308
    %vm310 = vweird.f32 %v229
    %vm311 = vweird.f32 %v304
    %vm312 = vmor %vm310, %vm311
    %v313 = vsel %vm312, %v304, %v309
    %v314 = vrsqrt.pop %v230
    %v315 = vmul.f32 %v314, %v230
    %v316 = vmul.f32 %v315, %v314
    %v317 = vmul.f32 0.5, %v316
    %v318 = vsub.f32 1.5, %v317
    %v319 = vmul.f32 %v314, %v318
    %vm320 = vweird.f32 %v230
    %vm321 = vweird.f32 %v314
    %vm322 = vmor %vm320, %vm321
    %v323 = vsel %vm322, %v314, %v319
    %v324 = vrsqrt.pop %v231
    %v325 = vmul.f32 %v324, %v231
    %v326 = vmul.f32 %v325, %v324
    %v327 = vmul.f32 0.5, %v326
    %v328 = vsub.f32 1.5, %v327
    %v329 = vmul.f32 %v324, %v328
    %vm330 = vweird.f32 %v231
    %vm331 = vweird.f32 %v324
    %vm332 = vmor %vm330, %vm331
    %v333 = vsel %vm332, %v324, %v329
    %v334 = vrsqrt.pop %v232
    %v335 = vmul.f32 %v334, %v232
    %v336 = vmul.f32 %v335, %v334
    %v337 = vmul.f32 0.5, %v336
    %v338 = vsub.f32 1.5, %v337
    %v339 = vmul.f32 %v334, %v338
    %vm340 = vweird.f32 %v232
    %vm341 = vweird.f32 %v334
    %vm342 = vmor %vm340, %vm341
    %v343 = vsel %vm342, %v334, %v339
    %v344 = vrsqrt.pop %v233
    %v345 = vmul.f32 %v344, %v233
    %v346 = vmul.f32 %v345, %v344
    %v347 = vmul.f32 0.5, %v346
    %v348 = vsub.f32 1.5, %v347
    %v349 = vmul.f32 %v344, %v348
    %vm350 = vweird.f32 %v233
    %vm351 = vweird.f32 %v344
    %vm352 = vmor %vm350, %vm351
    %v353 = vsel %vm352, %v344, %v349
    %v354 = vmul.f32 %v150, %v243
    %v355 = vmul.f32 %v151, %v253
    %v356 = vmul.f32 %v152, %v263
    %v357 = vmul.f32 %v153, %v273
    %v358 = vmul.f32 %v154, %v283
    %v359 = vmul.f32 %v155, %v293
    %v360 = vmul.f32 %v156, %v303
    %v361 = vmul.f32 %v157, %v313
    %v362 = vmul.f32 %v158, %v323
    %v363 = vmul.f32 %v159, %v333
    %v364 = vmul.f32 %v160, %v343
    %v365 = vmul.f32 %v161, %v353
    %v367 = vperm.slane %v92, 0
    %v369 = vmul.f32 %v354, %v367
    %v370 = vmul.f32 %v355, %v367
    %v371 = vmul.f32 %v356, %v367
    %v372 = vmul.f32 %v357, %v367
    %v373 = vmul.f32 %v358, %v367
    %v374 = vmul.f32 %v359, %v367
    %v375 = vmul.f32 %v360, %v367
    %v376 = vmul.f32 %v361, %v367
    %v377 = vmul.f32 %v362, %v367
    %v378 = vmul.f32 %v363, %v367
    %v379 = vmul.f32 %v364, %v367
    %v380 = vmul.f32 %v365, %v367
    %v382 = vperm.slane %v93, 0
    %v384 = vadd.f32 %v369, %v382
    %v385 = vadd.f32 %v370, %v382
    %v386 = vadd.f32 %v371, %v382
    %v387 = vadd.f32 %v372, %v382
    %v388 = vadd.f32 %v373, %v382
    %v389 = vadd.f32 %v374, %v382
    %v390 = vadd.f32 %v375, %v382
    %v391 = vadd.f32 %v376, %v382
    %v392 = vadd.f32 %v377, %v382
    %v393 = vadd.f32 %v378, %v382
    %v394 = vadd.f32 %v379, %v382
    %v395 = vadd.f32 %v380, %v382
    %v396 = vpack.c.bf16 %v385, %v384
    %v397 = vpack.c.bf16 %v387, %v386
    %v398 = vpack.c.bf16 %v389, %v388
    %v399 = vpack.c.bf16 %v391, %v390
    %v400 = vpack.c.bf16 %v393, %v392
    %v401 = vpack.c.bf16 %v395, %v394
    %v402 = vld [vmem:[%s7] sm:$0xf]
    %v403 = vld [vmem:[%s7 + $0x4] sm:$0xf]
    %v404 = vld [vmem:[%s7 + $0x8] sm:$0xf]
    %v405 = vld [vmem:[%s7 + $0xc] sm:$0xf]
    %v406 = vld [vmem:[%s8] sm:$0x1]
    %v408 = vperm.slane %v406, 0
    %v414 = vunpack.c.l.b16 %v402
    %v415 = vunpack.c.l.b16 %v403
    %v416 = vunpack.c.l.b16 %v404
    %v417 = vunpack.c.l.b16 %v405
    %v418 = vpack.c.b16 %v415, %v414
    %v419 = vpack.c.b16 %v417, %v416
    %v423 = vsel %vm94, %v396, 0
    %v426 = vsel %vm94, %v397, 0
    %v429 = vsel %vm94, %v398, 0
    %v432 = vsel %vm94, %v399, 0
    %v435 = vsel %vm94, %v400, 0
    %v438 = vsel %vm94, %v401, 0
    %440 = vmatpush.bf16.msra.mxu0 0
    %441 = vmatpush.bf16.msra.mxu0 0
    %442 = vmatpush.bf16.msra.mxu0 0
    %443 = vmatpush.bf16.msra.mxu0 0
    %444 = vmatpush.bf16.msra.mxu0 0
    %445 = vmatpush.bf16.msra.mxu0 0
    %446 = vmatpush.bf16.msra.mxu0 %v419
    %447 = vmatpush.bf16.msra.mxu0 %v418
    %448 = vmatmul.bf16.gmra.mxu0 %v423
    %v449 = vpop.f32.mrf.mxu0
    %v450 = vadd.f32 %v408, %v449
    %v451 = vpop.f32.mrf.mxu0
    %v452 = vadd.f32 %v408, %v451
    %453 = vmatmul.bf16.gmra.mxu0 %v426
    %v454 = vpop.f32.mrf.mxu0
    %v455 = vadd.f32 %v408, %v454
    %v456 = vpop.f32.mrf.mxu0
    %v457 = vadd.f32 %v408, %v456
    %458 = vmatmul.bf16.gmra.mxu0 %v429
    %v459 = vpop.f32.mrf.mxu0
    %v460 = vadd.f32 %v408, %v459
    %v461 = vpop.f32.mrf.mxu0
    %v462 = vadd.f32 %v408, %v461
    %463 = vmatmul.bf16.gmra.mxu0 %v432
    %v464 = vpop.f32.mrf.mxu0
    %v465 = vadd.f32 %v408, %v464
    %v466 = vpop.f32.mrf.mxu0
    %v467 = vadd.f32 %v408, %v466
    %468 = vmatmul.bf16.gmra.mxu0 %v435
    %v469 = vpop.f32.mrf.mxu0
    %v470 = vadd.f32 %v408, %v469
    %v471 = vpop.f32.mrf.mxu0
    %v472 = vadd.f32 %v408, %v471
    %473 = vmatmul.bf16.gmra.mxu0 %v438
    %v474 = vpop.f32.mrf.mxu0
    %v475 = vadd.f32 %v408, %v474
    %v476 = vpop.f32.mrf.mxu0
    %v477 = vadd.f32 %v408, %v476
    %478 = vdwg.mxu0
    %v479 = vpack.c.bf16 %v452, %v450
    %v480 = vpack.c.bf16 %v457, %v455
    %v481 = vpack.c.bf16 %v462, %v460
    %v482 = vpack.c.bf16 %v467, %v465
    %v483 = vpack.c.bf16 %v472, %v470
    %v484 = vpack.c.bf16 %v477, %v475
    %491 = vrot.lane.b32.xlu0 %v479, 96
    %v492 = vpop.permute.xlu0 %491
    %493 = vrot.lane.b32.xlu0 %v480, 96
    %v494 = vpop.permute.xlu0 %493
    %495 = vrot.lane.b32.xlu0 %v481, 96
    %v496 = vpop.permute.xlu0 %495
    %497 = vrot.lane.b32.xlu0 %v482, 96
    %v498 = vpop.permute.xlu0 %497
    %499 = vrot.lane.b32.xlu0 %v483, 96
    %v500 = vpop.permute.xlu0 %499
    %501 = vrot.lane.b32.xlu0 %v484, 96
    %v502 = vpop.permute.xlu0 %501
    %vm503 = vcmask 130048
    %v505 = vsel %vm503, %v479, 0
    %v508 = vsel %vm503, %v480, 0
    %v511 = vsel %vm503, %v481, 0
    %v514 = vsel %vm503, %v482, 0
    %v517 = vsel %vm503, %v483, 0
    %v520 = vsel %vm503, %v484, 0
    %v523 = vsel %vm503, %v492, 0
    %v526 = vsel %vm503, %v494, 0
    %v529 = vsel %vm503, %v496, 0
    %v532 = vsel %vm503, %v498, 0
    %v535 = vsel %vm503, %v500, 0
    %v538 = vsel %vm503, %v502, 0
    %540 = vmatpush.bf16.xpose.msra.mxu0 0
    %541 = vmatpush.bf16.xpose.msra.mxu0 0
    %542 = vmatpush.bf16.xpose.msra.mxu0 %v538
    %543 = vmatpush.bf16.xpose.msra.mxu0 %v535
    %544 = vmatpush.bf16.xpose.msra.mxu0 %v532
    %545 = vmatpush.bf16.xpose.msra.mxu0 %v529
    %546 = vmatpush.bf16.xpose.msra.mxu0 %v526
    %547 = vmatpush.bf16.xpose.msra.mxu0 %v523
    %548 = vmatmul.bf16.gmra.mxu0 %v505
    %v549 = vpop.f32.mrf.mxu0
    %v550 = vadd.f32 0.0, %v549
    %v551 = vpop.f32.mrf.mxu0
    %v552 = vadd.f32 0.0, %v551
    %553 = vmatmul.bf16.gmra.mxu0 %v508
    %v554 = vpop.f32.mrf.mxu0
    %v555 = vadd.f32 0.0, %v554
    %v556 = vpop.f32.mrf.mxu0
    %v557 = vadd.f32 0.0, %v556
    %558 = vmatmul.bf16.gmra.mxu0 %v511
    %v559 = vpop.f32.mrf.mxu0
    %v560 = vadd.f32 0.0, %v559
    %v561 = vpop.f32.mrf.mxu0
    %v562 = vadd.f32 0.0, %v561
    %563 = vmatmul.bf16.gmra.mxu0 %v514
    %v564 = vpop.f32.mrf.mxu0
    %v565 = vadd.f32 0.0, %v564
    %v566 = vpop.f32.mrf.mxu0
    %v567 = vadd.f32 0.0, %v566
    %568 = vmatmul.bf16.gmra.mxu0 %v517
    %v569 = vpop.f32.mrf.mxu0
    %v570 = vadd.f32 0.0, %v569
    %v571 = vpop.f32.mrf.mxu0
    %v572 = vadd.f32 0.0, %v571
    %573 = vmatmul.bf16.gmra.mxu0 %v520
    %v574 = vpop.f32.mrf.mxu0
    %v575 = vadd.f32 0.0, %v574
    %v576 = vpop.f32.mrf.mxu0
    %v577 = vadd.f32 0.0, %v576
    %578 = vdwg.mxu0
    %v579 = vmul.f32 %v550, 0.25
    %v580 = vmul.f32 %v552, 0.25
    %v581 = vmul.f32 %v555, 0.25
    %v582 = vmul.f32 %v557, 0.25
    %v583 = vmul.f32 %v560, 0.25
    %v584 = vmul.f32 %v562, 0.25
    %v585 = vmul.f32 %v565, 0.25
    %v586 = vmul.f32 %v567, 0.25
    %v587 = vmul.f32 %v570, 0.25
    %v588 = vmul.f32 %v572, 0.25
    %v589 = vmul.f32 %v575, 0.25
    %v590 = vmul.f32 %v577, 0.25
    %v591 = vadd.f32 %v579, %v67
    %v592 = vadd.f32 %v580, %v68
    %v593 = vadd.f32 %v581, %v69
    %v594 = vadd.f32 %v582, %v70
    %v595 = vadd.f32 %v583, %v71
    %v596 = vadd.f32 %v584, %v72
    %v597 = vadd.f32 %v585, %v73
    %v598 = vadd.f32 %v586, %v74
    %v599 = vadd.f32 %v587, %v75
    %v600 = vadd.f32 %v588, %v76
    %v601 = vadd.f32 %v589, %v77
    %v602 = vadd.f32 %v590, %v78
    %vm603 = vcmask 785408
    %v604 = vsel %vm603, %v591, -inf
    %605 = vmax.xlane.f32.xlu0 %v604
    %v606 = vpop.xlane.xlu0 %605
    %v607 = vsel %vm603, %v592, -inf
    %608 = vmax.xlane.f32.xlu0 %v607
    %v609 = vpop.xlane.xlu0 %608
    %v610 = vsel %vm603, %v593, -inf
    %611 = vmax.xlane.f32.xlu0 %v610
    %v612 = vpop.xlane.xlu0 %611
    %v613 = vsel %vm603, %v594, -inf
    %614 = vmax.xlane.f32.xlu0 %v613
    %v615 = vpop.xlane.xlu0 %614
    %v616 = vsel %vm603, %v595, -inf
    %617 = vmax.xlane.f32.xlu0 %v616
    %v618 = vpop.xlane.xlu0 %617
    %v619 = vsel %vm603, %v596, -inf
    %620 = vmax.xlane.f32.xlu0 %v619
    %v621 = vpop.xlane.xlu0 %620
    %v622 = vsel %vm603, %v597, -inf
    %623 = vmax.xlane.f32.xlu0 %v622
    %v624 = vpop.xlane.xlu0 %623
    %v625 = vsel %vm603, %v598, -inf
    %626 = vmax.xlane.f32.xlu0 %v625
    %v627 = vpop.xlane.xlu0 %626
    %v628 = vsel %vm603, %v599, -inf
    %629 = vmax.xlane.f32.xlu0 %v628
    %v630 = vpop.xlane.xlu0 %629
    %v631 = vsel %vm603, %v600, -inf
    %632 = vmax.xlane.f32.xlu0 %v631
    %v633 = vpop.xlane.xlu0 %632
    %v634 = vsel %vm603, %v601, -inf
    %635 = vmax.xlane.f32.xlu0 %v634
    %v636 = vpop.xlane.xlu0 %635
    %v637 = vsel %vm603, %v602, -inf
    %638 = vmax.xlane.f32.xlu0 %v637
    %v639 = vpop.xlane.xlu0 %638
    %v640 = vsub.f32 %v591, %v606
    %v641 = vsub.f32 %v592, %v609
    %v642 = vsub.f32 %v593, %v612
    %v643 = vsub.f32 %v594, %v615
    %v644 = vsub.f32 %v595, %v618
    %v645 = vsub.f32 %v596, %v621
    %v646 = vsub.f32 %v597, %v624
    %v647 = vsub.f32 %v598, %v627
    %v648 = vsub.f32 %v599, %v630
    %v649 = vsub.f32 %v600, %v633
    %v650 = vsub.f32 %v601, %v636
    %v651 = vsub.f32 %v602, %v639
    %v652 = vmul.f32 %v640, 1.442695
    %v653 = vpow.pop %v652
    %v654 = vmul.f32 %v641, 1.442695
    %v655 = vpow.pop %v654
    %v656 = vmul.f32 %v642, 1.442695
    %v657 = vpow.pop %v656
    %v658 = vmul.f32 %v643, 1.442695
    %v659 = vpow.pop %v658
    %v660 = vmul.f32 %v644, 1.442695
    %v661 = vpow.pop %v660
    %v662 = vmul.f32 %v645, 1.442695
    %v663 = vpow.pop %v662
    %v664 = vmul.f32 %v646, 1.442695
    %v665 = vpow.pop %v664
    %v666 = vmul.f32 %v647, 1.442695
    %v667 = vpow.pop %v666
    %v668 = vmul.f32 %v648, 1.442695
    %v669 = vpow.pop %v668
    %v670 = vmul.f32 %v649, 1.442695
    %v671 = vpow.pop %v670
    %v672 = vmul.f32 %v650, 1.442695
    %v673 = vpow.pop %v672
    %v674 = vmul.f32 %v651, 1.442695
    %v675 = vpow.pop %v674
    %v676 = vsel %vm603, %v653, 0.0
    %677 = vadd.xlane.f32.xlu0 %v676
    %v678 = vpop.xlane.xlu0 %677
    %v679 = vsel %vm603, %v655, 0.0
    %680 = vadd.xlane.f32.xlu0 %v679
    %v681 = vpop.xlane.xlu0 %680
    %v682 = vsel %vm603, %v657, 0.0
    %683 = vadd.xlane.f32.xlu0 %v682
    %v684 = vpop.xlane.xlu0 %683
    %v685 = vsel %vm603, %v659, 0.0
    %686 = vadd.xlane.f32.xlu0 %v685
    %v687 = vpop.xlane.xlu0 %686
    %v688 = vsel %vm603, %v661, 0.0
    %689 = vadd.xlane.f32.xlu0 %v688
    %v690 = vpop.xlane.xlu0 %689
    %v691 = vsel %vm603, %v663, 0.0
    %692 = vadd.xlane.f32.xlu0 %v691
    %v693 = vpop.xlane.xlu0 %692
    %v694 = vsel %vm603, %v665, 0.0
    %695 = vadd.xlane.f32.xlu0 %v694
    %v696 = vpop.xlane.xlu0 %695
    %v697 = vsel %vm603, %v667, 0.0
    %698 = vadd.xlane.f32.xlu0 %v697
    %v699 = vpop.xlane.xlu0 %698
    %v700 = vsel %vm603, %v669, 0.0
    %701 = vadd.xlane.f32.xlu0 %v700
    %v702 = vpop.xlane.xlu0 %701
    %v703 = vsel %vm603, %v671, 0.0
    %704 = vadd.xlane.f32.xlu0 %v703
    %v705 = vpop.xlane.xlu0 %704
    %v706 = vsel %vm603, %v673, 0.0
    %707 = vadd.xlane.f32.xlu0 %v706
    %v708 = vpop.xlane.xlu0 %707
    %v709 = vsel %vm603, %v675, 0.0
    %710 = vadd.xlane.f32.xlu0 %v709
    %v711 = vpop.xlane.xlu0 %710
    %v712 = vrcp.pop %v678
    %v713 = vmul.f32 %v678, %v712
    %v714 = vsub.f32 1.0, %v713
    %v715 = vmul.f32 %v712, %v714
    %v716 = vadd.f32 %v712, %v715
    %vm717 = vweird.f32 %v678
    %vm718 = vweird.f32 %v712
    %vm719 = vmor %vm717, %vm718
    %v720 = vsel %vm719, %v712, %v716
    %v721 = vand.u32 2147483647, %v678
    %vm722 = vcmp.eq.f32.partialorder %v721, 8.507059e+37
    %v723 = vand.u32 %v678, 2147483648
    %v724 = vor.u32 1.1754944e-38, %v723
    %v725 = vsel %vm722, %v724, %v720
    %v726 = vmul.f32 %v653, %v725
    %v727 = vrcp.pop %v681
    %v728 = vmul.f32 %v681, %v727
    %v729 = vsub.f32 1.0, %v728
    %v730 = vmul.f32 %v727, %v729
    %v731 = vadd.f32 %v727, %v730
    %vm732 = vweird.f32 %v681
    %vm733 = vweird.f32 %v727
    %vm734 = vmor %vm732, %vm733
    %v735 = vsel %vm734, %v727, %v731
    %v736 = vand.u32 2147483647, %v681
    %vm737 = vcmp.eq.f32.partialorder %v736, 8.507059e+37
    %v738 = vand.u32 %v681, 2147483648
    %v739 = vor.u32 1.1754944e-38, %v738
    %v740 = vsel %vm737, %v739, %v735
    %v741 = vmul.f32 %v655, %v740
    %v742 = vrcp.pop %v684
    %v743 = vmul.f32 %v684, %v742
    %v744 = vsub.f32 1.0, %v743
    %v745 = vmul.f32 %v742, %v744
    %v746 = vadd.f32 %v742, %v745
    %vm747 = vweird.f32 %v684
    %vm748 = vweird.f32 %v742
    %vm749 = vmor %vm747, %vm748
    %v750 = vsel %vm749, %v742, %v746
    %v751 = vand.u32 2147483647, %v684
    %vm752 = vcmp.eq.f32.partialorder %v751, 8.507059e+37
    %v753 = vand.u32 %v684, 2147483648
    %v754 = vor.u32 1.1754944e-38, %v753
    %v755 = vsel %vm752, %v754, %v750
    %v756 = vmul.f32 %v657, %v755
    %v757 = vrcp.pop %v687
    %v758 = vmul.f32 %v687, %v757
    %v759 = vsub.f32 1.0, %v758
    %v760 = vmul.f32 %v757, %v759
    %v761 = vadd.f32 %v757, %v760
    %vm762 = vweird.f32 %v687
    %vm763 = vweird.f32 %v757
    %vm764 = vmor %vm762, %vm763
    %v765 = vsel %vm764, %v757, %v761
    %v766 = vand.u32 2147483647, %v687
    %vm767 = vcmp.eq.f32.partialorder %v766, 8.507059e+37
    %v768 = vand.u32 %v687, 2147483648
    %v769 = vor.u32 1.1754944e-38, %v768
    %v770 = vsel %vm767, %v769, %v765
    %v771 = vmul.f32 %v659, %v770
    %v772 = vrcp.pop %v690
    %v773 = vmul.f32 %v690, %v772
    %v774 = vsub.f32 1.0, %v773
    %v775 = vmul.f32 %v772, %v774
    %v776 = vadd.f32 %v772, %v775
    %vm777 = vweird.f32 %v690
    %vm778 = vweird.f32 %v772
    %vm779 = vmor %vm777, %vm778
    %v780 = vsel %vm779, %v772, %v776
    %v781 = vand.u32 2147483647, %v690
    %vm782 = vcmp.eq.f32.partialorder %v781, 8.507059e+37
    %v783 = vand.u32 %v690, 2147483648
    %v784 = vor.u32 1.1754944e-38, %v783
    %v785 = vsel %vm782, %v784, %v780
    %v786 = vmul.f32 %v661, %v785
    %v787 = vrcp.pop %v693
    %v788 = vmul.f32 %v693, %v787
    %v789 = vsub.f32 1.0, %v788
    %v790 = vmul.f32 %v787, %v789
    %v791 = vadd.f32 %v787, %v790
    %vm792 = vweird.f32 %v693
    %vm793 = vweird.f32 %v787
    %vm794 = vmor %vm792, %vm793
    %v795 = vsel %vm794, %v787, %v791
    %v796 = vand.u32 2147483647, %v693
    %vm797 = vcmp.eq.f32.partialorder %v796, 8.507059e+37
    %v798 = vand.u32 %v693, 2147483648
    %v799 = vor.u32 1.1754944e-38, %v798
    %v800 = vsel %vm797, %v799, %v795
    %v801 = vmul.f32 %v663, %v800
    %v802 = vrcp.pop %v696
    %v803 = vmul.f32 %v696, %v802
    %v804 = vsub.f32 1.0, %v803
    %v805 = vmul.f32 %v802, %v804
    %v806 = vadd.f32 %v802, %v805
    %vm807 = vweird.f32 %v696
    %vm808 = vweird.f32 %v802
    %vm809 = vmor %vm807, %vm808
    %v810 = vsel %vm809, %v802, %v806
    %v811 = vand.u32 2147483647, %v696
    %vm812 = vcmp.eq.f32.partialorder %v811, 8.507059e+37
    %v813 = vand.u32 %v696, 2147483648
    %v814 = vor.u32 1.1754944e-38, %v813
    %v815 = vsel %vm812, %v814, %v810
    %v816 = vmul.f32 %v665, %v815
    %v817 = vrcp.pop %v699
    %v818 = vmul.f32 %v699, %v817
    %v819 = vsub.f32 1.0, %v818
    %v820 = vmul.f32 %v817, %v819
    %v821 = vadd.f32 %v817, %v820
    %vm822 = vweird.f32 %v699
    %vm823 = vweird.f32 %v817
    %vm824 = vmor %vm822, %vm823
    %v825 = vsel %vm824, %v817, %v821
    %v826 = vand.u32 2147483647, %v699
    %vm827 = vcmp.eq.f32.partialorder %v826, 8.507059e+37
    %v828 = vand.u32 %v699, 2147483648
    %v829 = vor.u32 1.1754944e-38, %v828
    %v830 = vsel %vm827, %v829, %v825
    %v831 = vmul.f32 %v667, %v830
    %v832 = vrcp.pop %v702
    %v833 = vmul.f32 %v702, %v832
    %v834 = vsub.f32 1.0, %v833
    %v835 = vmul.f32 %v832, %v834
    %v836 = vadd.f32 %v832, %v835
    %vm837 = vweird.f32 %v702
    %vm838 = vweird.f32 %v832
    %vm839 = vmor %vm837, %vm838
    %v840 = vsel %vm839, %v832, %v836
    %v841 = vand.u32 2147483647, %v702
    %vm842 = vcmp.eq.f32.partialorder %v841, 8.507059e+37
    %v843 = vand.u32 %v702, 2147483648
    %v844 = vor.u32 1.1754944e-38, %v843
    %v845 = vsel %vm842, %v844, %v840
    %v846 = vmul.f32 %v669, %v845
    %v847 = vrcp.pop %v705
    %v848 = vmul.f32 %v705, %v847
    %v849 = vsub.f32 1.0, %v848
    %v850 = vmul.f32 %v847, %v849
    %v851 = vadd.f32 %v847, %v850
    %vm852 = vweird.f32 %v705
    %vm853 = vweird.f32 %v847
    %vm854 = vmor %vm852, %vm853
    %v855 = vsel %vm854, %v847, %v851
    %v856 = vand.u32 2147483647, %v705
    %vm857 = vcmp.eq.f32.partialorder %v856, 8.507059e+37
    %v858 = vand.u32 %v705, 2147483648
    %v859 = vor.u32 1.1754944e-38, %v858
    %v860 = vsel %vm857, %v859, %v855
    %v861 = vmul.f32 %v671, %v860
    %v862 = vrcp.pop %v708
    %v863 = vmul.f32 %v708, %v862
    %v864 = vsub.f32 1.0, %v863
    %v865 = vmul.f32 %v862, %v864
    %v866 = vadd.f32 %v862, %v865
    %vm867 = vweird.f32 %v708
    %vm868 = vweird.f32 %v862
    %vm869 = vmor %vm867, %vm868
    %v870 = vsel %vm869, %v862, %v866
    %v871 = vand.u32 2147483647, %v708
    %vm872 = vcmp.eq.f32.partialorder %v871, 8.507059e+37
    %v873 = vand.u32 %v708, 2147483648
    %v874 = vor.u32 1.1754944e-38, %v873
    %v875 = vsel %vm872, %v874, %v870
    %v876 = vmul.f32 %v673, %v875
    %v877 = vrcp.pop %v711
    %v878 = vmul.f32 %v711, %v877
    %v879 = vsub.f32 1.0, %v878
    %v880 = vmul.f32 %v877, %v879
    %v881 = vadd.f32 %v877, %v880
    %vm882 = vweird.f32 %v711
    %vm883 = vweird.f32 %v877
    %vm884 = vmor %vm882, %vm883
    %v885 = vsel %vm884, %v877, %v881
    %v886 = vand.u32 2147483647, %v711
    %vm887 = vcmp.eq.f32.partialorder %v886, 8.507059e+37
    %v888 = vand.u32 %v711, 2147483648
    %v889 = vor.u32 1.1754944e-38, %v888
    %v890 = vsel %vm887, %v889, %v885
    %v891 = vmul.f32 %v675, %v890
    %v892 = vpack.c.bf16 %v741, %v726
    %v893 = vpack.c.bf16 %v771, %v756
    %v894 = vpack.c.bf16 %v801, %v786
    %v895 = vpack.c.bf16 %v831, %v816
    %v896 = vpack.c.bf16 %v861, %v846
    %v897 = vpack.c.bf16 %v891, %v876
    %898 = vrot.lane.b32.xlu0 %v479, 64
    %v899 = vpop.permute.xlu0 %898
    %900 = vrot.lane.b32.xlu0 %v480, 64
    %v901 = vpop.permute.xlu0 %900
    %902 = vrot.lane.b32.xlu0 %v481, 64
    %v903 = vpop.permute.xlu0 %902
    %904 = vrot.lane.b32.xlu0 %v482, 64
    %v905 = vpop.permute.xlu0 %904
    %906 = vrot.lane.b32.xlu0 %v483, 64
    %v907 = vpop.permute.xlu0 %906
    %908 = vrot.lane.b32.xlu0 %v484, 64
    %v909 = vpop.permute.xlu0 %908
    %v917 = vsel %vm603, %v892, 0
    %v920 = vsel %vm603, %v893, 0
    %v923 = vsel %vm603, %v894, 0
    %v926 = vsel %vm603, %v895, 0
    %v929 = vsel %vm603, %v896, 0
    %v932 = vsel %vm603, %v897, 0
    %934 = vmatpush.bf16.msra.mxu0 0
    %935 = vmatpush.bf16.msra.mxu0 0
    %936 = vmatpush.bf16.msra.mxu0 %v909
    %937 = vmatpush.bf16.msra.mxu0 %v907
    %938 = vmatpush.bf16.msra.mxu0 %v905
    %939 = vmatpush.bf16.msra.mxu0 %v903
    %940 = vmatpush.bf16.msra.mxu0 %v901
    %941 = vmatpush.bf16.msra.mxu0 %v899
    %942 = vmatmul.bf16.gmra.mxu0 %v917
    %v943 = vpop.f32.mrf.mxu0
    %v944 = vadd.f32 0.0, %v943
    %v945 = vpop.f32.mrf.mxu0
    %v946 = vadd.f32 0.0, %v945
    %947 = vmatmul.bf16.gmra.mxu0 %v920
    %v948 = vpop.f32.mrf.mxu0
    %v949 = vadd.f32 0.0, %v948
    %v950 = vpop.f32.mrf.mxu0
    %v951 = vadd.f32 0.0, %v950
    %952 = vmatmul.bf16.gmra.mxu0 %v923
    %v953 = vpop.f32.mrf.mxu0
    %v954 = vadd.f32 0.0, %v953
    %v955 = vpop.f32.mrf.mxu0
    %v956 = vadd.f32 0.0, %v955
    %957 = vmatmul.bf16.gmra.mxu0 %v926
    %v958 = vpop.f32.mrf.mxu0
    %v959 = vadd.f32 0.0, %v958
    %v960 = vpop.f32.mrf.mxu0
    %v961 = vadd.f32 0.0, %v960
    %962 = vmatmul.bf16.gmra.mxu0 %v929
    %v963 = vpop.f32.mrf.mxu0
    %v964 = vadd.f32 0.0, %v963
    %v965 = vpop.f32.mrf.mxu0
    %v966 = vadd.f32 0.0, %v965
    %967 = vmatmul.bf16.gmra.mxu0 %v932
    %v968 = vpop.f32.mrf.mxu0
    %v969 = vadd.f32 0.0, %v968
    %v970 = vpop.f32.mrf.mxu0
    %v971 = vadd.f32 0.0, %v970
    %972 = vdwg.mxu0
    %973 = vrot.lane.b32.xlu0 %v479, 112
    %v974 = vpop.permute.xlu0 %973
    %975 = vrot.lane.b32.xlu0 %v480, 112
    %v976 = vpop.permute.xlu0 %975
    %977 = vrot.lane.b32.xlu0 %v481, 112
    %v978 = vpop.permute.xlu0 %977
    %979 = vrot.lane.b32.xlu0 %v482, 112
    %v980 = vpop.permute.xlu0 %979
    %981 = vrot.lane.b32.xlu0 %v483, 112
    %v982 = vpop.permute.xlu0 %981
    %983 = vrot.lane.b32.xlu0 %v484, 112
    %v984 = vpop.permute.xlu0 %983
    %985 = vrot.lane.b32.xlu0 %v479, 80
    %v986 = vpop.permute.xlu0 %985
    %987 = vrot.lane.b32.xlu0 %v480, 80
    %v988 = vpop.permute.xlu0 %987
    %989 = vrot.lane.b32.xlu0 %v481, 80
    %v990 = vpop.permute.xlu0 %989
    %991 = vrot.lane.b32.xlu0 %v482, 80
    %v992 = vpop.permute.xlu0 %991
    %993 = vrot.lane.b32.xlu0 %v483, 80
    %v994 = vpop.permute.xlu0 %993
    %995 = vrot.lane.b32.xlu0 %v484, 80
    %v996 = vpop.permute.xlu0 %995
    %v998 = vsel %vm503, %v974, 0
    %v1001 = vsel %vm503, %v976, 0
    %v1004 = vsel %vm503, %v978, 0
    %v1007 = vsel %vm503, %v980, 0
    %v1010 = vsel %vm503, %v982, 0
    %v1013 = vsel %vm503, %v984, 0
    %v1016 = vsel %vm503, %v986, 0
    %v1019 = vsel %vm503, %v988, 0
    %v1022 = vsel %vm503, %v990, 0
    %v1025 = vsel %vm503, %v992, 0
    %v1028 = vsel %vm503, %v994, 0
    %v1031 = vsel %vm503, %v996, 0
    %1033 = vmatpush.bf16.xpose.msra.mxu0 0
    %1034 = vmatpush.bf16.xpose.msra.mxu0 0
    %1035 = vmatpush.bf16.xpose.msra.mxu0 %v1031
    %1036 = vmatpush.bf16.xpose.msra.mxu0 %v1028
    %1037 = vmatpush.bf16.xpose.msra.mxu0 %v1025
    %1038 = vmatpush.bf16.xpose.msra.mxu0 %v1022
    %1039 = vmatpush.bf16.xpose.msra.mxu0 %v1019
    %1040 = vmatpush.bf16.xpose.msra.mxu0 %v1016
    %1041 = vmatmul.bf16.gmra.mxu0 %v998
    %v1042 = vpop.f32.mrf.mxu0
    %v1043 = vadd.f32 0.0, %v1042
    %v1044 = vpop.f32.mrf.mxu0
    %v1045 = vadd.f32 0.0, %v1044
    %1046 = vmatmul.bf16.gmra.mxu0 %v1001
    %v1047 = vpop.f32.mrf.mxu0
    %v1048 = vadd.f32 0.0, %v1047
    %v1049 = vpop.f32.mrf.mxu0
    %v1050 = vadd.f32 0.0, %v1049
    %1051 = vmatmul.bf16.gmra.mxu0 %v1004
    %v1052 = vpop.f32.mrf.mxu0
    %v1053 = vadd.f32 0.0, %v1052
    %v1054 = vpop.f32.mrf.mxu0
    %v1055 = vadd.f32 0.0, %v1054
    %1056 = vmatmul.bf16.gmra.mxu0 %v1007
    %v1057 = vpop.f32.mrf.mxu0
    %v1058 = vadd.f32 0.0, %v1057
    %v1059 = vpop.f32.mrf.mxu0
    %v1060 = vadd.f32 0.0, %v1059
    %1061 = vmatmul.bf16.gmra.mxu0 %v1010
    %v1062 = vpop.f32.mrf.mxu0
    %v1063 = vadd.f32 0.0, %v1062
    %v1064 = vpop.f32.mrf.mxu0
    %v1065 = vadd.f32 0.0, %v1064
    %1066 = vmatmul.bf16.gmra.mxu0 %v1013
    %v1067 = vpop.f32.mrf.mxu0
    %v1068 = vadd.f32 0.0, %v1067
    %v1069 = vpop.f32.mrf.mxu0
    %v1070 = vadd.f32 0.0, %v1069
    %1071 = vdwg.mxu0
    %v1072 = vmul.f32 %v1043, 0.25
    %v1073 = vmul.f32 %v1045, 0.25
    %v1074 = vmul.f32 %v1048, 0.25
    %v1075 = vmul.f32 %v1050, 0.25
    %v1076 = vmul.f32 %v1053, 0.25
    %v1077 = vmul.f32 %v1055, 0.25
    %v1078 = vmul.f32 %v1058, 0.25
    %v1079 = vmul.f32 %v1060, 0.25
    %v1080 = vmul.f32 %v1063, 0.25
    %v1081 = vmul.f32 %v1065, 0.25
    %v1082 = vmul.f32 %v1068, 0.25
    %v1083 = vmul.f32 %v1070, 0.25
    %v1084 = vadd.f32 %v1072, %v67
    %v1085 = vadd.f32 %v1073, %v68
    %v1086 = vadd.f32 %v1074, %v69
    %v1087 = vadd.f32 %v1075, %v70
    %v1088 = vadd.f32 %v1076, %v71
    %v1089 = vadd.f32 %v1077, %v72
    %v1090 = vadd.f32 %v1078, %v73
    %v1091 = vadd.f32 %v1079, %v74
    %v1092 = vadd.f32 %v1080, %v75
    %v1093 = vadd.f32 %v1081, %v76
    %v1094 = vadd.f32 %v1082, %v77
    %v1095 = vadd.f32 %v1083, %v78
    %v1096 = vsel %vm603, %v1084, -inf
    %1097 = vmax.xlane.f32.xlu0 %v1096
    %v1098 = vpop.xlane.xlu0 %1097
    %v1099 = vsel %vm603, %v1085, -inf
    %1100 = vmax.xlane.f32.xlu0 %v1099
    %v1101 = vpop.xlane.xlu0 %1100
    %v1102 = vsel %vm603, %v1086, -inf
    %1103 = vmax.xlane.f32.xlu0 %v1102
    %v1104 = vpop.xlane.xlu0 %1103
    %v1105 = vsel %vm603, %v1087, -inf
    %1106 = vmax.xlane.f32.xlu0 %v1105
    %v1107 = vpop.xlane.xlu0 %1106
    %v1108 = vsel %vm603, %v1088, -inf
    %1109 = vmax.xlane.f32.xlu0 %v1108
    %v1110 = vpop.xlane.xlu0 %1109
    %v1111 = vsel %vm603, %v1089, -inf
    %1112 = vmax.xlane.f32.xlu0 %v1111
    %v1113 = vpop.xlane.xlu0 %1112
    %v1114 = vsel %vm603, %v1090, -inf
    %1115 = vmax.xlane.f32.xlu0 %v1114
    %v1116 = vpop.xlane.xlu0 %1115
    %v1117 = vsel %vm603, %v1091, -inf
    %1118 = vmax.xlane.f32.xlu0 %v1117
    %v1119 = vpop.xlane.xlu0 %1118
    %v1120 = vsel %vm603, %v1092, -inf
    %1121 = vmax.xlane.f32.xlu0 %v1120
    %v1122 = vpop.xlane.xlu0 %1121
    %v1123 = vsel %vm603, %v1093, -inf
    %1124 = vmax.xlane.f32.xlu0 %v1123
    %v1125 = vpop.xlane.xlu0 %1124
    %v1126 = vsel %vm603, %v1094, -inf
    %1127 = vmax.xlane.f32.xlu0 %v1126
    %v1128 = vpop.xlane.xlu0 %1127
    %v1129 = vsel %vm603, %v1095, -inf
    %1130 = vmax.xlane.f32.xlu0 %v1129
    %v1131 = vpop.xlane.xlu0 %1130
    %v1132 = vsub.f32 %v1084, %v1098
    %v1133 = vsub.f32 %v1085, %v1101
    %v1134 = vsub.f32 %v1086, %v1104
    %v1135 = vsub.f32 %v1087, %v1107
    %v1136 = vsub.f32 %v1088, %v1110
    %v1137 = vsub.f32 %v1089, %v1113
    %v1138 = vsub.f32 %v1090, %v1116
    %v1139 = vsub.f32 %v1091, %v1119
    %v1140 = vsub.f32 %v1092, %v1122
    %v1141 = vsub.f32 %v1093, %v1125
    %v1142 = vsub.f32 %v1094, %v1128
    %v1143 = vsub.f32 %v1095, %v1131
    %v1144 = vmul.f32 %v1132, 1.442695
    %v1145 = vpow.pop %v1144
    %v1146 = vmul.f32 %v1133, 1.442695
    %v1147 = vpow.pop %v1146
    %v1148 = vmul.f32 %v1134, 1.442695
    %v1149 = vpow.pop %v1148
    %v1150 = vmul.f32 %v1135, 1.442695
    %v1151 = vpow.pop %v1150
    %v1152 = vmul.f32 %v1136, 1.442695
    %v1153 = vpow.pop %v1152
    %v1154 = vmul.f32 %v1137, 1.442695
    %v1155 = vpow.pop %v1154
    %v1156 = vmul.f32 %v1138, 1.442695
    %v1157 = vpow.pop %v1156
    %v1158 = vmul.f32 %v1139, 1.442695
    %v1159 = vpow.pop %v1158
    %v1160 = vmul.f32 %v1140, 1.442695
    %v1161 = vpow.pop %v1160
    %v1162 = vmul.f32 %v1141, 1.442695
    %v1163 = vpow.pop %v1162
    %v1164 = vmul.f32 %v1142, 1.442695
    %v1165 = vpow.pop %v1164
    %v1166 = vmul.f32 %v1143, 1.442695
    %v1167 = vpow.pop %v1166
    %v1168 = vsel %vm603, %v1145, 0.0
    %1169 = vadd.xlane.f32.xlu0 %v1168
    %v1170 = vpop.xlane.xlu0 %1169
    %v1171 = vsel %vm603, %v1147, 0.0
    %1172 = vadd.xlane.f32.xlu0 %v1171
    %v1173 = vpop.xlane.xlu0 %1172
    %v1174 = vsel %vm603, %v1149, 0.0
    %1175 = vadd.xlane.f32.xlu0 %v1174
    %v1176 = vpop.xlane.xlu0 %1175
    %v1177 = vsel %vm603, %v1151, 0.0
    %1178 = vadd.xlane.f32.xlu0 %v1177
    %v1179 = vpop.xlane.xlu0 %1178
    %v1180 = vsel %vm603, %v1153, 0.0
    %1181 = vadd.xlane.f32.xlu0 %v1180
    %v1182 = vpop.xlane.xlu0 %1181
    %v1183 = vsel %vm603, %v1155, 0.0
    %1184 = vadd.xlane.f32.xlu0 %v1183
    %v1185 = vpop.xlane.xlu0 %1184
    %v1186 = vsel %vm603, %v1157, 0.0
    %1187 = vadd.xlane.f32.xlu0 %v1186
    %v1188 = vpop.xlane.xlu0 %1187
    %v1189 = vsel %vm603, %v1159, 0.0
    %1190 = vadd.xlane.f32.xlu0 %v1189
    %v1191 = vpop.xlane.xlu0 %1190
    %v1192 = vsel %vm603, %v1161, 0.0
    %1193 = vadd.xlane.f32.xlu0 %v1192
    %v1194 = vpop.xlane.xlu0 %1193
    %v1195 = vsel %vm603, %v1163, 0.0
    %1196 = vadd.xlane.f32.xlu0 %v1195
    %v1197 = vpop.xlane.xlu0 %1196
    %v1198 = vsel %vm603, %v1165, 0.0
    %1199 = vadd.xlane.f32.xlu0 %v1198
    %v1200 = vpop.xlane.xlu0 %1199
    %v1201 = vsel %vm603, %v1167, 0.0
    %1202 = vadd.xlane.f32.xlu0 %v1201
    %v1203 = vpop.xlane.xlu0 %1202
    %v1204 = vrcp.pop %v1170
    %v1205 = vmul.f32 %v1170, %v1204
    %v1206 = vsub.f32 1.0, %v1205
    %v1207 = vmul.f32 %v1204, %v1206
    %v1208 = vadd.f32 %v1204, %v1207
    %vm1209 = vweird.f32 %v1170
    %vm1210 = vweird.f32 %v1204
    %vm1211 = vmor %vm1209, %vm1210
    %v1212 = vsel %vm1211, %v1204, %v1208
    %v1213 = vand.u32 2147483647, %v1170
    %vm1214 = vcmp.eq.f32.partialorder %v1213, 8.507059e+37
    %v1215 = vand.u32 %v1170, 2147483648
    %v1216 = vor.u32 1.1754944e-38, %v1215
    %v1217 = vsel %vm1214, %v1216, %v1212
    %v1218 = vmul.f32 %v1145, %v1217
    %v1219 = vrcp.pop %v1173
    %v1220 = vmul.f32 %v1173, %v1219
    %v1221 = vsub.f32 1.0, %v1220
    %v1222 = vmul.f32 %v1219, %v1221
    %v1223 = vadd.f32 %v1219, %v1222
    %vm1224 = vweird.f32 %v1173
    %vm1225 = vweird.f32 %v1219
    %vm1226 = vmor %vm1224, %vm1225
    %v1227 = vsel %vm1226, %v1219, %v1223
    %v1228 = vand.u32 2147483647, %v1173
    %vm1229 = vcmp.eq.f32.partialorder %v1228, 8.507059e+37
    %v1230 = vand.u32 %v1173, 2147483648
    %v1231 = vor.u32 1.1754944e-38, %v1230
    %v1232 = vsel %vm1229, %v1231, %v1227
    %v1233 = vmul.f32 %v1147, %v1232
    %v1234 = vrcp.pop %v1176
    %v1235 = vmul.f32 %v1176, %v1234
    %v1236 = vsub.f32 1.0, %v1235
    %v1237 = vmul.f32 %v1234, %v1236
    %v1238 = vadd.f32 %v1234, %v1237
    %vm1239 = vweird.f32 %v1176
    %vm1240 = vweird.f32 %v1234
    %vm1241 = vmor %vm1239, %vm1240
    %v1242 = vsel %vm1241, %v1234, %v1238
    %v1243 = vand.u32 2147483647, %v1176
    %vm1244 = vcmp.eq.f32.partialorder %v1243, 8.507059e+37
    %v1245 = vand.u32 %v1176, 2147483648
    %v1246 = vor.u32 1.1754944e-38, %v1245
    %v1247 = vsel %vm1244, %v1246, %v1242
    %v1248 = vmul.f32 %v1149, %v1247
    %v1249 = vrcp.pop %v1179
    %v1250 = vmul.f32 %v1179, %v1249
    %v1251 = vsub.f32 1.0, %v1250
    %v1252 = vmul.f32 %v1249, %v1251
    %v1253 = vadd.f32 %v1249, %v1252
    %vm1254 = vweird.f32 %v1179
    %vm1255 = vweird.f32 %v1249
    %vm1256 = vmor %vm1254, %vm1255
    %v1257 = vsel %vm1256, %v1249, %v1253
    %v1258 = vand.u32 2147483647, %v1179
    %vm1259 = vcmp.eq.f32.partialorder %v1258, 8.507059e+37
    %v1260 = vand.u32 %v1179, 2147483648
    %v1261 = vor.u32 1.1754944e-38, %v1260
    %v1262 = vsel %vm1259, %v1261, %v1257
    %v1263 = vmul.f32 %v1151, %v1262
    %v1264 = vrcp.pop %v1182
    %v1265 = vmul.f32 %v1182, %v1264
    %v1266 = vsub.f32 1.0, %v1265
    %v1267 = vmul.f32 %v1264, %v1266
    %v1268 = vadd.f32 %v1264, %v1267
    %vm1269 = vweird.f32 %v1182
    %vm1270 = vweird.f32 %v1264
    %vm1271 = vmor %vm1269, %vm1270
    %v1272 = vsel %vm1271, %v1264, %v1268
    %v1273 = vand.u32 2147483647, %v1182
    %vm1274 = vcmp.eq.f32.partialorder %v1273, 8.507059e+37
    %v1275 = vand.u32 %v1182, 2147483648
    %v1276 = vor.u32 1.1754944e-38, %v1275
    %v1277 = vsel %vm1274, %v1276, %v1272
    %v1278 = vmul.f32 %v1153, %v1277
    %v1279 = vrcp.pop %v1185
    %v1280 = vmul.f32 %v1185, %v1279
    %v1281 = vsub.f32 1.0, %v1280
    %v1282 = vmul.f32 %v1279, %v1281
    %v1283 = vadd.f32 %v1279, %v1282
    %vm1284 = vweird.f32 %v1185
    %vm1285 = vweird.f32 %v1279
    %vm1286 = vmor %vm1284, %vm1285
    %v1287 = vsel %vm1286, %v1279, %v1283
    %v1288 = vand.u32 2147483647, %v1185
    %vm1289 = vcmp.eq.f32.partialorder %v1288, 8.507059e+37
    %v1290 = vand.u32 %v1185, 2147483648
    %v1291 = vor.u32 1.1754944e-38, %v1290
    %v1292 = vsel %vm1289, %v1291, %v1287
    %v1293 = vmul.f32 %v1155, %v1292
    %v1294 = vrcp.pop %v1188
    %v1295 = vmul.f32 %v1188, %v1294
    %v1296 = vsub.f32 1.0, %v1295
    %v1297 = vmul.f32 %v1294, %v1296
    %v1298 = vadd.f32 %v1294, %v1297
    %vm1299 = vweird.f32 %v1188
    %vm1300 = vweird.f32 %v1294
    %vm1301 = vmor %vm1299, %vm1300
    %v1302 = vsel %vm1301, %v1294, %v1298
    %v1303 = vand.u32 2147483647, %v1188
    %vm1304 = vcmp.eq.f32.partialorder %v1303, 8.507059e+37
    %v1305 = vand.u32 %v1188, 2147483648
    %v1306 = vor.u32 1.1754944e-38, %v1305
    %v1307 = vsel %vm1304, %v1306, %v1302
    %v1308 = vmul.f32 %v1157, %v1307
    %v1309 = vrcp.pop %v1191
    %v1310 = vmul.f32 %v1191, %v1309
    %v1311 = vsub.f32 1.0, %v1310
    %v1312 = vmul.f32 %v1309, %v1311
    %v1313 = vadd.f32 %v1309, %v1312
    %vm1314 = vweird.f32 %v1191
    %vm1315 = vweird.f32 %v1309
    %vm1316 = vmor %vm1314, %vm1315
    %v1317 = vsel %vm1316, %v1309, %v1313
    %v1318 = vand.u32 2147483647, %v1191
    %vm1319 = vcmp.eq.f32.partialorder %v1318, 8.507059e+37
    %v1320 = vand.u32 %v1191, 2147483648
    %v1321 = vor.u32 1.1754944e-38, %v1320
    %v1322 = vsel %vm1319, %v1321, %v1317
    %v1323 = vmul.f32 %v1159, %v1322
    %v1324 = vrcp.pop %v1194
    %v1325 = vmul.f32 %v1194, %v1324
    %v1326 = vsub.f32 1.0, %v1325
    %v1327 = vmul.f32 %v1324, %v1326
    %v1328 = vadd.f32 %v1324, %v1327
    %vm1329 = vweird.f32 %v1194
    %vm1330 = vweird.f32 %v1324
    %vm1331 = vmor %vm1329, %vm1330
    %v1332 = vsel %vm1331, %v1324, %v1328
    %v1333 = vand.u32 2147483647, %v1194
    %vm1334 = vcmp.eq.f32.partialorder %v1333, 8.507059e+37
    %v1335 = vand.u32 %v1194, 2147483648
    %v1336 = vor.u32 1.1754944e-38, %v1335
    %v1337 = vsel %vm1334, %v1336, %v1332
    %v1338 = vmul.f32 %v1161, %v1337
    %v1339 = vrcp.pop %v1197
    %v1340 = vmul.f32 %v1197, %v1339
    %v1341 = vsub.f32 1.0, %v1340
    %v1342 = vmul.f32 %v1339, %v1341
    %v1343 = vadd.f32 %v1339, %v1342
    %vm1344 = vweird.f32 %v1197
    %vm1345 = vweird.f32 %v1339
    %vm1346 = vmor %vm1344, %vm1345
    %v1347 = vsel %vm1346, %v1339, %v1343
    %v1348 = vand.u32 2147483647, %v1197
    %vm1349 = vcmp.eq.f32.partialorder %v1348, 8.507059e+37
    %v1350 = vand.u32 %v1197, 2147483648
    %v1351 = vor.u32 1.1754944e-38, %v1350
    %v1352 = vsel %vm1349, %v1351, %v1347
    %v1353 = vmul.f32 %v1163, %v1352
    %v1354 = vrcp.pop %v1200
    %v1355 = vmul.f32 %v1200, %v1354
    %v1356 = vsub.f32 1.0, %v1355
    %v1357 = vmul.f32 %v1354, %v1356
    %v1358 = vadd.f32 %v1354, %v1357
    %vm1359 = vweird.f32 %v1200
    %vm1360 = vweird.f32 %v1354
    %vm1361 = vmor %vm1359, %vm1360
    %v1362 = vsel %vm1361, %v1354, %v1358
    %v1363 = vand.u32 2147483647, %v1200
    %vm1364 = vcmp.eq.f32.partialorder %v1363, 8.507059e+37
    %v1365 = vand.u32 %v1200, 2147483648
    %v1366 = vor.u32 1.1754944e-38, %v1365
    %v1367 = vsel %vm1364, %v1366, %v1362
    %v1368 = vmul.f32 %v1165, %v1367
    %v1369 = vrcp.pop %v1203
    %v1370 = vmul.f32 %v1203, %v1369
    %v1371 = vsub.f32 1.0, %v1370
    %v1372 = vmul.f32 %v1369, %v1371
    %v1373 = vadd.f32 %v1369, %v1372
    %vm1374 = vweird.f32 %v1203
    %vm1375 = vweird.f32 %v1369
    %vm1376 = vmor %vm1374, %vm1375
    %v1377 = vsel %vm1376, %v1369, %v1373
    %v1378 = vand.u32 2147483647, %v1203
    %vm1379 = vcmp.eq.f32.partialorder %v1378, 8.507059e+37
    %v1380 = vand.u32 %v1203, 2147483648
    %v1381 = vor.u32 1.1754944e-38, %v1380
    %v1382 = vsel %vm1379, %v1381, %v1377
    %v1383 = vmul.f32 %v1167, %v1382
    %v1384 = vpack.c.bf16 %v1233, %v1218
    %v1385 = vpack.c.bf16 %v1263, %v1248
    %v1386 = vpack.c.bf16 %v1293, %v1278
    %v1387 = vpack.c.bf16 %v1323, %v1308
    %v1388 = vpack.c.bf16 %v1353, %v1338
    %v1389 = vpack.c.bf16 %v1383, %v1368
    %1390 = vrot.lane.b32.xlu0 %v479, 48
    %v1391 = vpop.permute.xlu0 %1390
    %1392 = vrot.lane.b32.xlu0 %v480, 48
    %v1393 = vpop.permute.xlu0 %1392
    %1394 = vrot.lane.b32.xlu0 %v481, 48
    %v1395 = vpop.permute.xlu0 %1394
    %1396 = vrot.lane.b32.xlu0 %v482, 48
    %v1397 = vpop.permute.xlu0 %1396
    %1398 = vrot.lane.b32.xlu0 %v483, 48
    %v1399 = vpop.permute.xlu0 %1398
    %1400 = vrot.lane.b32.xlu0 %v484, 48
    %v1401 = vpop.permute.xlu0 %1400
    %v1409 = vsel %vm603, %v1384, 0
    %v1412 = vsel %vm603, %v1385, 0
    %v1415 = vsel %vm603, %v1386, 0
    %v1418 = vsel %vm603, %v1387, 0
    %v1421 = vsel %vm603, %v1388, 0
    %v1424 = vsel %vm603, %v1389, 0
    %1426 = vmatpush.bf16.msra.mxu0 0
    %1427 = vmatpush.bf16.msra.mxu0 0
    %1428 = vmatpush.bf16.msra.mxu0 %v1401
    %1429 = vmatpush.bf16.msra.mxu0 %v1399
    %1430 = vmatpush.bf16.msra.mxu0 %v1397
    %1431 = vmatpush.bf16.msra.mxu0 %v1395
    %1432 = vmatpush.bf16.msra.mxu0 %v1393
    %1433 = vmatpush.bf16.msra.mxu0 %v1391
    %1434 = vmatmul.bf16.gmra.mxu0 %v1409
    %v1435 = vpop.f32.mrf.mxu0
    %v1436 = vadd.f32 0.0, %v1435
    %v1437 = vpop.f32.mrf.mxu0
    %v1438 = vadd.f32 0.0, %v1437
    %1439 = vmatmul.bf16.gmra.mxu0 %v1412
    %v1440 = vpop.f32.mrf.mxu0
    %v1441 = vadd.f32 0.0, %v1440
    %v1442 = vpop.f32.mrf.mxu0
    %v1443 = vadd.f32 0.0, %v1442
    %1444 = vmatmul.bf16.gmra.mxu0 %v1415
    %v1445 = vpop.f32.mrf.mxu0
    %v1446 = vadd.f32 0.0, %v1445
    %v1447 = vpop.f32.mrf.mxu0
    %v1448 = vadd.f32 0.0, %v1447
    %1449 = vmatmul.bf16.gmra.mxu0 %v1418
    %v1450 = vpop.f32.mrf.mxu0
    %v1451 = vadd.f32 0.0, %v1450
    %v1452 = vpop.f32.mrf.mxu0
    %v1453 = vadd.f32 0.0, %v1452
    %1454 = vmatmul.bf16.gmra.mxu0 %v1421
    %v1455 = vpop.f32.mrf.mxu0
    %v1456 = vadd.f32 0.0, %v1455
    %v1457 = vpop.f32.mrf.mxu0
    %v1458 = vadd.f32 0.0, %v1457
    %1459 = vmatmul.bf16.gmra.mxu0 %v1424
    %v1460 = vpop.f32.mrf.mxu0
    %v1461 = vadd.f32 0.0, %v1460
    %v1462 = vpop.f32.mrf.mxu0
    %v1463 = vadd.f32 0.0, %v1462
    %1464 = vdwg.mxu0
    %1477 = vrot.lane.b32.xlu0 %v1436, 16
    %v1478 = vpop.permute.xlu0 %1477
    %1479 = vrot.lane.b32.xlu0 %v1438, 16
    %v1480 = vpop.permute.xlu0 %1479
    %1481 = vrot.lane.b32.xlu0 %v1441, 16
    %v1482 = vpop.permute.xlu0 %1481
    %1483 = vrot.lane.b32.xlu0 %v1443, 16
    %v1484 = vpop.permute.xlu0 %1483
    %1485 = vrot.lane.b32.xlu0 %v1446, 16
    %v1486 = vpop.permute.xlu0 %1485
    %1487 = vrot.lane.b32.xlu0 %v1448, 16
    %v1488 = vpop.permute.xlu0 %1487
    %1489 = vrot.lane.b32.xlu0 %v1451, 16
    %v1490 = vpop.permute.xlu0 %1489
    %1491 = vrot.lane.b32.xlu0 %v1453, 16
    %v1492 = vpop.permute.xlu0 %1491
    %1493 = vrot.lane.b32.xlu0 %v1456, 16
    %v1494 = vpop.permute.xlu0 %1493
    %1495 = vrot.lane.b32.xlu0 %v1458, 16
    %v1496 = vpop.permute.xlu0 %1495
    %1497 = vrot.lane.b32.xlu0 %v1461, 16
    %v1498 = vpop.permute.xlu0 %1497
    %1499 = vrot.lane.b32.xlu0 %v1463, 16
    %v1500 = vpop.permute.xlu0 %1499
    %v1513 = vsel %vm503, %v944, %v1478
    %v1514 = vsel %vm503, %v946, %v1480
    %v1515 = vsel %vm503, %v949, %v1482
    %v1516 = vsel %vm503, %v951, %v1484
    %v1517 = vsel %vm503, %v954, %v1486
    %v1518 = vsel %vm503, %v956, %v1488
    %v1519 = vsel %vm503, %v959, %v1490
    %v1520 = vsel %vm503, %v961, %v1492
    %v1521 = vsel %vm503, %v964, %v1494
    %v1522 = vsel %vm503, %v966, %v1496
    %v1523 = vsel %vm503, %v969, %v1498
    %v1524 = vsel %vm503, %v971, %v1500
    %v1525 = vpack.c.bf16 %v1514, %v1513
    %v1526 = vpack.c.bf16 %v1516, %v1515
    %v1527 = vpack.c.bf16 %v1518, %v1517
    %v1528 = vpack.c.bf16 %v1520, %v1519
    %v1529 = vpack.c.bf16 %v1522, %v1521
    %v1530 = vpack.c.bf16 %v1524, %v1523
    %v1531 = vld [vmem:[%s9] sm:$0xf]
    %v1532 = vld [vmem:[%s9 + $0x4] sm:$0xf]
    %v1533 = vld [vmem:[%s9 + $0x8] sm:$0xf]
    %v1534 = vld [vmem:[%s9 + $0xc] sm:$0xf]
    %v1535 = vld [vmem:[%s10] sm:$0x1]
    %v1537 = vperm.slane %v1535, 0
    %v1543 = vunpack.c.l.b16 %v1531
    %v1544 = vunpack.c.l.b16 %v1532
    %v1545 = vunpack.c.l.b16 %v1533
    %v1546 = vunpack.c.l.b16 %v1534
    %v1547 = vpack.c.b16 %v1544, %v1543
    %v1548 = vpack.c.b16 %v1546, %v1545
    %v1552 = vsel %vm94, %v1525, 0
    %v1555 = vsel %vm94, %v1526, 0
    %v1558 = vsel %vm94, %v1527, 0
    %v1561 = vsel %vm94, %v1528, 0
    %v1564 = vsel %vm94, %v1529, 0
    %v1567 = vsel %vm94, %v1530, 0
    %1569 = vmatpush.bf16.msra.mxu0 0
    %1570 = vmatpush.bf16.msra.mxu0 0
    %1571 = vmatpush.bf16.msra.mxu0 0
    %1572 = vmatpush.bf16.msra.mxu0 0
    %1573 = vmatpush.bf16.msra.mxu0 0
    %1574 = vmatpush.bf16.msra.mxu0 0
    %1575 = vmatpush.bf16.msra.mxu0 %v1548
    %1576 = vmatpush.bf16.msra.mxu0 %v1547
    %1577 = vmatmul.bf16.gmra.mxu0 %v1552
    %v1578 = vpop.f32.mrf.mxu0
    %v1579 = vadd.f32 %v1537, %v1578
    %v1580 = vpop.f32.mrf.mxu0
    %v1581 = vadd.f32 %v1537, %v1580
    %1582 = vmatmul.bf16.gmra.mxu0 %v1555
    %v1583 = vpop.f32.mrf.mxu0
    %v1584 = vadd.f32 %v1537, %v1583
    %v1585 = vpop.f32.mrf.mxu0
    %v1586 = vadd.f32 %v1537, %v1585
    %1587 = vmatmul.bf16.gmra.mxu0 %v1558
    %v1588 = vpop.f32.mrf.mxu0
    %v1589 = vadd.f32 %v1537, %v1588
    %v1590 = vpop.f32.mrf.mxu0
    %v1591 = vadd.f32 %v1537, %v1590
    %1592 = vmatmul.bf16.gmra.mxu0 %v1561
    %v1593 = vpop.f32.mrf.mxu0
    %v1594 = vadd.f32 %v1537, %v1593
    %v1595 = vpop.f32.mrf.mxu0
    %v1596 = vadd.f32 %v1537, %v1595
    %1597 = vmatmul.bf16.gmra.mxu0 %v1564
    %v1598 = vpop.f32.mrf.mxu0
    %v1599 = vadd.f32 %v1537, %v1598
    %v1600 = vpop.f32.mrf.mxu0
    %v1601 = vadd.f32 %v1537, %v1600
    %1602 = vmatmul.bf16.gmra.mxu0 %v1567
    %v1603 = vpop.f32.mrf.mxu0
    %v1604 = vadd.f32 %v1537, %v1603
    %v1605 = vpop.f32.mrf.mxu0
    %v1606 = vadd.f32 %v1537, %v1605
    %1607 = vdwg.mxu0
    %v1608 = vadd.f32 %v384, %v1579
    %v1609 = vadd.f32 %v385, %v1581
    %v1610 = vadd.f32 %v386, %v1584
    %v1611 = vadd.f32 %v387, %v1586
    %v1612 = vadd.f32 %v388, %v1589
    %v1613 = vadd.f32 %v389, %v1591
    %v1614 = vadd.f32 %v390, %v1594
    %v1615 = vadd.f32 %v391, %v1596
    %v1616 = vadd.f32 %v392, %v1599
    %v1617 = vadd.f32 %v393, %v1601
    %v1618 = vadd.f32 %v394, %v1604
    %v1619 = vadd.f32 %v395, %v1606
    %v1620 = vld [vmem:[%s5] sm:$0x1]
    %v1621 = vld [vmem:[%s6] sm:$0x1]
    %v1622 = vsel %vm94, %v1608, 0.0
    %1623 = vadd.xlane.f32.xlu0 %v1622
    %v1624 = vpop.xlane.xlu0 %1623
    %v1625 = vsel %vm94, %v1609, 0.0
    %1626 = vadd.xlane.f32.xlu0 %v1625
    %v1627 = vpop.xlane.xlu0 %1626
    %v1628 = vsel %vm94, %v1610, 0.0
    %1629 = vadd.xlane.f32.xlu0 %v1628
    %v1630 = vpop.xlane.xlu0 %1629
    %v1631 = vsel %vm94, %v1611, 0.0
    %1632 = vadd.xlane.f32.xlu0 %v1631
    %v1633 = vpop.xlane.xlu0 %1632
    %v1634 = vsel %vm94, %v1612, 0.0
    %1635 = vadd.xlane.f32.xlu0 %v1634
    %v1636 = vpop.xlane.xlu0 %1635
    %v1637 = vsel %vm94, %v1613, 0.0
    %1638 = vadd.xlane.f32.xlu0 %v1637
    %v1639 = vpop.xlane.xlu0 %1638
    %v1640 = vsel %vm94, %v1614, 0.0
    %1641 = vadd.xlane.f32.xlu0 %v1640
    %v1642 = vpop.xlane.xlu0 %1641
    %v1643 = vsel %vm94, %v1615, 0.0
    %1644 = vadd.xlane.f32.xlu0 %v1643
    %v1645 = vpop.xlane.xlu0 %1644
    %v1646 = vsel %vm94, %v1616, 0.0
    %1647 = vadd.xlane.f32.xlu0 %v1646
    %v1648 = vpop.xlane.xlu0 %1647
    %v1649 = vsel %vm94, %v1617, 0.0
    %1650 = vadd.xlane.f32.xlu0 %v1649
    %v1651 = vpop.xlane.xlu0 %1650
    %v1652 = vsel %vm94, %v1618, 0.0
    %1653 = vadd.xlane.f32.xlu0 %v1652
    %v1654 = vpop.xlane.xlu0 %1653
    %v1655 = vsel %vm94, %v1619, 0.0
    %1656 = vadd.xlane.f32.xlu0 %v1655
    %v1657 = vpop.xlane.xlu0 %1656
    %v1658 = vmul.f32 %v1624, %v137
    %v1659 = vmul.f32 %v1627, %v137
    %v1660 = vmul.f32 %v1630, %v137
    %v1661 = vmul.f32 %v1633, %v137
    %v1662 = vmul.f32 %v1636, %v137
    %v1663 = vmul.f32 %v1639, %v137
    %v1664 = vmul.f32 %v1642, %v137
    %v1665 = vmul.f32 %v1645, %v137
    %v1666 = vmul.f32 %v1648, %v137
    %v1667 = vmul.f32 %v1651, %v137
    %v1668 = vmul.f32 %v1654, %v137
    %v1669 = vmul.f32 %v1657, %v137
    %v1670 = vsub.f32 %v1608, %v1658
    %v1671 = vsub.f32 %v1609, %v1659
    %v1672 = vsub.f32 %v1610, %v1660
    %v1673 = vsub.f32 %v1611, %v1661
    %v1674 = vsub.f32 %v1612, %v1662
    %v1675 = vsub.f32 %v1613, %v1663
    %v1676 = vsub.f32 %v1614, %v1664
    %v1677 = vsub.f32 %v1615, %v1665
    %v1678 = vsub.f32 %v1616, %v1666
    %v1679 = vsub.f32 %v1617, %v1667
    %v1680 = vsub.f32 %v1618, %v1668
    %v1681 = vsub.f32 %v1619, %v1669
    %v1682 = vmul.f32 %v1670, %v1670
    %v1683 = vmul.f32 %v1671, %v1671
    %v1684 = vmul.f32 %v1672, %v1672
    %v1685 = vmul.f32 %v1673, %v1673
    %v1686 = vmul.f32 %v1674, %v1674
    %v1687 = vmul.f32 %v1675, %v1675
    %v1688 = vmul.f32 %v1676, %v1676
    %v1689 = vmul.f32 %v1677, %v1677
    %v1690 = vmul.f32 %v1678, %v1678
    %v1691 = vmul.f32 %v1679, %v1679
    %v1692 = vmul.f32 %v1680, %v1680
    %v1693 = vmul.f32 %v1681, %v1681
    %v1694 = vsel %vm94, %v1682, 0.0
    %1695 = vadd.xlane.f32.xlu0 %v1694
    %v1696 = vpop.xlane.xlu0 %1695
    %v1697 = vsel %vm94, %v1683, 0.0
    %1698 = vadd.xlane.f32.xlu0 %v1697
    %v1699 = vpop.xlane.xlu0 %1698
    %v1700 = vsel %vm94, %v1684, 0.0
    %1701 = vadd.xlane.f32.xlu0 %v1700
    %v1702 = vpop.xlane.xlu0 %1701
    %v1703 = vsel %vm94, %v1685, 0.0
    %1704 = vadd.xlane.f32.xlu0 %v1703
    %v1705 = vpop.xlane.xlu0 %1704
    %v1706 = vsel %vm94, %v1686, 0.0
    %1707 = vadd.xlane.f32.xlu0 %v1706
    %v1708 = vpop.xlane.xlu0 %1707
    %v1709 = vsel %vm94, %v1687, 0.0
    %1710 = vadd.xlane.f32.xlu0 %v1709
    %v1711 = vpop.xlane.xlu0 %1710
    %v1712 = vsel %vm94, %v1688, 0.0
    %1713 = vadd.xlane.f32.xlu0 %v1712
    %v1714 = vpop.xlane.xlu0 %1713
    %v1715 = vsel %vm94, %v1689, 0.0
    %1716 = vadd.xlane.f32.xlu0 %v1715
    %v1717 = vpop.xlane.xlu0 %1716
    %v1718 = vsel %vm94, %v1690, 0.0
    %1719 = vadd.xlane.f32.xlu0 %v1718
    %v1720 = vpop.xlane.xlu0 %1719
    %v1721 = vsel %vm94, %v1691, 0.0
    %1722 = vadd.xlane.f32.xlu0 %v1721
    %v1723 = vpop.xlane.xlu0 %1722
    %v1724 = vsel %vm94, %v1692, 0.0
    %1725 = vadd.xlane.f32.xlu0 %v1724
    %v1726 = vpop.xlane.xlu0 %1725
    %v1727 = vsel %vm94, %v1693, 0.0
    %1728 = vadd.xlane.f32.xlu0 %v1727
    %v1729 = vpop.xlane.xlu0 %1728
    %v1730 = vmul.f32 %v1696, %v137
    %v1731 = vmul.f32 %v1699, %v137
    %v1732 = vmul.f32 %v1702, %v137
    %v1733 = vmul.f32 %v1705, %v137
    %v1734 = vmul.f32 %v1708, %v137
    %v1735 = vmul.f32 %v1711, %v137
    %v1736 = vmul.f32 %v1714, %v137
    %v1737 = vmul.f32 %v1717, %v137
    %v1738 = vmul.f32 %v1720, %v137
    %v1739 = vmul.f32 %v1723, %v137
    %v1740 = vmul.f32 %v1726, %v137
    %v1741 = vmul.f32 %v1729, %v137
    %v1742 = vadd.f32 %v1730, 1e-05
    %v1743 = vadd.f32 %v1731, 1e-05
    %v1744 = vadd.f32 %v1732, 1e-05
    %v1745 = vadd.f32 %v1733, 1e-05
    %v1746 = vadd.f32 %v1734, 1e-05
    %v1747 = vadd.f32 %v1735, 1e-05
    %v1748 = vadd.f32 %v1736, 1e-05
    %v1749 = vadd.f32 %v1737, 1e-05
    %v1750 = vadd.f32 %v1738, 1e-05
    %v1751 = vadd.f32 %v1739, 1e-05
    %v1752 = vadd.f32 %v1740, 1e-05
    %v1753 = vadd.f32 %v1741, 1e-05
    %v1754 = vrsqrt.pop %v1742
    %v1755 = vmul.f32 %v1754, %v1742
    %v1756 = vmul.f32 %v1755, %v1754
    %v1757 = vmul.f32 0.5, %v1756
    %v1758 = vsub.f32 1.5, %v1757
    %v1759 = vmul.f32 %v1754, %v1758
    %vm1760 = vweird.f32 %v1742
    %vm1761 = vweird.f32 %v1754
    %vm1762 = vmor %vm1760, %vm1761
    %v1763 = vsel %vm1762, %v1754, %v1759
    %v1764 = vrsqrt.pop %v1743
    %v1765 = vmul.f32 %v1764, %v1743
    %v1766 = vmul.f32 %v1765, %v1764
    %v1767 = vmul.f32 0.5, %v1766
    %v1768 = vsub.f32 1.5, %v1767
    %v1769 = vmul.f32 %v1764, %v1768
    %vm1770 = vweird.f32 %v1743
    %vm1771 = vweird.f32 %v1764
    %vm1772 = vmor %vm1770, %vm1771
    %v1773 = vsel %vm1772, %v1764, %v1769
    %v1774 = vrsqrt.pop %v1744
    %v1775 = vmul.f32 %v1774, %v1744
    %v1776 = vmul.f32 %v1775, %v1774
    %v1777 = vmul.f32 0.5, %v1776
    %v1778 = vsub.f32 1.5, %v1777
    %v1779 = vmul.f32 %v1774, %v1778
    %vm1780 = vweird.f32 %v1744
    %vm1781 = vweird.f32 %v1774
    %vm1782 = vmor %vm1780, %vm1781
    %v1783 = vsel %vm1782, %v1774, %v1779
    %v1784 = vrsqrt.pop %v1745
    %v1785 = vmul.f32 %v1784, %v1745
    %v1786 = vmul.f32 %v1785, %v1784
    %v1787 = vmul.f32 0.5, %v1786
    %v1788 = vsub.f32 1.5, %v1787
    %v1789 = vmul.f32 %v1784, %v1788
    %vm1790 = vweird.f32 %v1745
    %vm1791 = vweird.f32 %v1784
    %vm1792 = vmor %vm1790, %vm1791
    %v1793 = vsel %vm1792, %v1784, %v1789
    %v1794 = vrsqrt.pop %v1746
    %v1795 = vmul.f32 %v1794, %v1746
    %v1796 = vmul.f32 %v1795, %v1794
    %v1797 = vmul.f32 0.5, %v1796
    %v1798 = vsub.f32 1.5, %v1797
    %v1799 = vmul.f32 %v1794, %v1798
    %vm1800 = vweird.f32 %v1746
    %vm1801 = vweird.f32 %v1794
    %vm1802 = vmor %vm1800, %vm1801
    %v1803 = vsel %vm1802, %v1794, %v1799
    %v1804 = vrsqrt.pop %v1747
    %v1805 = vmul.f32 %v1804, %v1747
    %v1806 = vmul.f32 %v1805, %v1804
    %v1807 = vmul.f32 0.5, %v1806
    %v1808 = vsub.f32 1.5, %v1807
    %v1809 = vmul.f32 %v1804, %v1808
    %vm1810 = vweird.f32 %v1747
    %vm1811 = vweird.f32 %v1804
    %vm1812 = vmor %vm1810, %vm1811
    %v1813 = vsel %vm1812, %v1804, %v1809
    %v1814 = vrsqrt.pop %v1748
    %v1815 = vmul.f32 %v1814, %v1748
    %v1816 = vmul.f32 %v1815, %v1814
    %v1817 = vmul.f32 0.5, %v1816
    %v1818 = vsub.f32 1.5, %v1817
    %v1819 = vmul.f32 %v1814, %v1818
    %vm1820 = vweird.f32 %v1748
    %vm1821 = vweird.f32 %v1814
    %vm1822 = vmor %vm1820, %vm1821
    %v1823 = vsel %vm1822, %v1814, %v1819
    %v1824 = vrsqrt.pop %v1749
    %v1825 = vmul.f32 %v1824, %v1749
    %v1826 = vmul.f32 %v1825, %v1824
    %v1827 = vmul.f32 0.5, %v1826
    %v1828 = vsub.f32 1.5, %v1827
    %v1829 = vmul.f32 %v1824, %v1828
    %vm1830 = vweird.f32 %v1749
    %vm1831 = vweird.f32 %v1824
    %vm1832 = vmor %vm1830, %vm1831
    %v1833 = vsel %vm1832, %v1824, %v1829
    %v1834 = vrsqrt.pop %v1750
    %v1835 = vmul.f32 %v1834, %v1750
    %v1836 = vmul.f32 %v1835, %v1834
    %v1837 = vmul.f32 0.5, %v1836
    %v1838 = vsub.f32 1.5, %v1837
    %v1839 = vmul.f32 %v1834, %v1838
    %vm1840 = vweird.f32 %v1750
    %vm1841 = vweird.f32 %v1834
    %vm1842 = vmor %vm1840, %vm1841
    %v1843 = vsel %vm1842, %v1834, %v1839
    %v1844 = vrsqrt.pop %v1751
    %v1845 = vmul.f32 %v1844, %v1751
    %v1846 = vmul.f32 %v1845, %v1844
    %v1847 = vmul.f32 0.5, %v1846
    %v1848 = vsub.f32 1.5, %v1847
    %v1849 = vmul.f32 %v1844, %v1848
    %vm1850 = vweird.f32 %v1751
    %vm1851 = vweird.f32 %v1844
    %vm1852 = vmor %vm1850, %vm1851
    %v1853 = vsel %vm1852, %v1844, %v1849
    %v1854 = vrsqrt.pop %v1752
    %v1855 = vmul.f32 %v1854, %v1752
    %v1856 = vmul.f32 %v1855, %v1854
    %v1857 = vmul.f32 0.5, %v1856
    %v1858 = vsub.f32 1.5, %v1857
    %v1859 = vmul.f32 %v1854, %v1858
    %vm1860 = vweird.f32 %v1752
    %vm1861 = vweird.f32 %v1854
    %vm1862 = vmor %vm1860, %vm1861
    %v1863 = vsel %vm1862, %v1854, %v1859
    %v1864 = vrsqrt.pop %v1753
    %v1865 = vmul.f32 %v1864, %v1753
    %v1866 = vmul.f32 %v1865, %v1864
    %v1867 = vmul.f32 0.5, %v1866
    %v1868 = vsub.f32 1.5, %v1867
    %v1869 = vmul.f32 %v1864, %v1868
    %vm1870 = vweird.f32 %v1753
    %vm1871 = vweird.f32 %v1864
    %vm1872 = vmor %vm1870, %vm1871
    %v1873 = vsel %vm1872, %v1864, %v1869
    %v1874 = vmul.f32 %v1670, %v1763
    %v1875 = vmul.f32 %v1671, %v1773
    %v1876 = vmul.f32 %v1672, %v1783
    %v1877 = vmul.f32 %v1673, %v1793
    %v1878 = vmul.f32 %v1674, %v1803
    %v1879 = vmul.f32 %v1675, %v1813
    %v1880 = vmul.f32 %v1676, %v1823
    %v1881 = vmul.f32 %v1677, %v1833
    %v1882 = vmul.f32 %v1678, %v1843
    %v1883 = vmul.f32 %v1679, %v1853
    %v1884 = vmul.f32 %v1680, %v1863
    %v1885 = vmul.f32 %v1681, %v1873
    %v1887 = vperm.slane %v1620, 0
    %v1889 = vmul.f32 %v1874, %v1887
    %v1890 = vmul.f32 %v1875, %v1887
    %v1891 = vmul.f32 %v1876, %v1887
    %v1892 = vmul.f32 %v1877, %v1887
    %v1893 = vmul.f32 %v1878, %v1887
    %v1894 = vmul.f32 %v1879, %v1887
    %v1895 = vmul.f32 %v1880, %v1887
    %v1896 = vmul.f32 %v1881, %v1887
    %v1897 = vmul.f32 %v1882, %v1887
    %v1898 = vmul.f32 %v1883, %v1887
    %v1899 = vmul.f32 %v1884, %v1887
    %v1900 = vmul.f32 %v1885, %v1887
    %v1902 = vperm.slane %v1621, 0
    %v1904 = vadd.f32 %v1889, %v1902
    %v1905 = vadd.f32 %v1890, %v1902
    %v1906 = vadd.f32 %v1891, %v1902
    %v1907 = vadd.f32 %v1892, %v1902
    %v1908 = vadd.f32 %v1893, %v1902
    %v1909 = vadd.f32 %v1894, %v1902
    %v1910 = vadd.f32 %v1895, %v1902
    %v1911 = vadd.f32 %v1896, %v1902
    %v1912 = vadd.f32 %v1897, %v1902
    %v1913 = vadd.f32 %v1898, %v1902
    %v1914 = vadd.f32 %v1899, %v1902
    %v1915 = vadd.f32 %v1900, %v1902
    %v1916 = vpack.c.bf16 %v1905, %v1904
    %v1917 = vpack.c.bf16 %v1907, %v1906
    %v1918 = vpack.c.bf16 %v1909, %v1908
    %v1919 = vpack.c.bf16 %v1911, %v1910
    %v1920 = vpack.c.bf16 %v1913, %v1912
    %v1921 = vpack.c.bf16 %v1915, %v1914
    %v1922 = vld [vmem:[%s11] sm:$0xf]
    %v1923 = vld [vmem:[%s11 + $0x4] sm:$0xf]
    %v1924 = vld [vmem:[%s11 + $0x8] sm:$0xf]
    %v1925 = vld [vmem:[%s11 + $0xc] sm:$0xf]
    %v1926 = vld [vmem:[%s12] sm:$0x1]
    %v1928 = vperm.slane %v1926, 0
    %v1934 = vunpack.c.l.b16 %v1922
    %v1935 = vunpack.c.l.b16 %v1923
    %v1936 = vunpack.c.l.b16 %v1924
    %v1937 = vunpack.c.l.b16 %v1925
    %v1938 = vpack.c.b16 %v1935, %v1934
    %v1939 = vpack.c.b16 %v1937, %v1936
    %v1943 = vsel %vm94, %v1916, 0
    %v1946 = vsel %vm94, %v1917, 0
    %v1949 = vsel %vm94, %v1918, 0
    %v1952 = vsel %vm94, %v1919, 0
    %v1955 = vsel %vm94, %v1920, 0
    %v1958 = vsel %vm94, %v1921, 0
    %1960 = vmatpush.bf16.msra.mxu0 0
    %1961 = vmatpush.bf16.msra.mxu0 0
    %1962 = vmatpush.bf16.msra.mxu0 0
    %1963 = vmatpush.bf16.msra.mxu0 0
    %1964 = vmatpush.bf16.msra.mxu0 0
    %1965 = vmatpush.bf16.msra.mxu0 0
    %1966 = vmatpush.bf16.msra.mxu0 %v1939
    %1967 = vmatpush.bf16.msra.mxu0 %v1938
    %1968 = vmatmul.bf16.gmra.mxu0 %v1943
    %v1969 = vpop.f32.mrf.mxu0
    %v1970 = vadd.f32 %v1928, %v1969
    %v1971 = vpop.f32.mrf.mxu0
    %v1972 = vadd.f32 %v1928, %v1971
    %1973 = vmatmul.bf16.gmra.mxu0 %v1946
    %v1974 = vpop.f32.mrf.mxu0
    %v1975 = vadd.f32 %v1928, %v1974
    %v1976 = vpop.f32.mrf.mxu0
    %v1977 = vadd.f32 %v1928, %v1976
    %1978 = vmatmul.bf16.gmra.mxu0 %v1949
    %v1979 = vpop.f32.mrf.mxu0
    %v1980 = vadd.f32 %v1928, %v1979
    %v1981 = vpop.f32.mrf.mxu0
    %v1982 = vadd.f32 %v1928, %v1981
    %1983 = vmatmul.bf16.gmra.mxu0 %v1952
    %v1984 = vpop.f32.mrf.mxu0
    %v1985 = vadd.f32 %v1928, %v1984
    %v1986 = vpop.f32.mrf.mxu0
    %v1987 = vadd.f32 %v1928, %v1986
    %1988 = vmatmul.bf16.gmra.mxu0 %v1955
    %v1989 = vpop.f32.mrf.mxu0
    %v1990 = vadd.f32 %v1928, %v1989
    %v1991 = vpop.f32.mrf.mxu0
    %v1992 = vadd.f32 %v1928, %v1991
    %1993 = vmatmul.bf16.gmra.mxu0 %v1958
    %v1994 = vpop.f32.mrf.mxu0
    %v1995 = vadd.f32 %v1928, %v1994
    %v1996 = vpop.f32.mrf.mxu0
    %v1997 = vadd.f32 %v1928, %v1996
    %1998 = vdwg.mxu0
    %v1999 = vmul.f32 %v1970, 0.5
    %v2000 = vmul.f32 %v1972, 0.5
    %v2001 = vmul.f32 %v1975, 0.5
    %v2002 = vmul.f32 %v1977, 0.5
    %v2003 = vmul.f32 %v1980, 0.5
    %v2004 = vmul.f32 %v1982, 0.5
    %v2005 = vmul.f32 %v1985, 0.5
    %v2006 = vmul.f32 %v1987, 0.5
    %v2007 = vmul.f32 %v1990, 0.5
    %v2008 = vmul.f32 %v1992, 0.5
    %v2009 = vmul.f32 %v1995, 0.5
    %v2010 = vmul.f32 %v1997, 0.5
    %v2011 = vmul.f32 %v1970, 0.70710677
    %v2012 = vmul.f32 %v1972, 0.70710677
    %v2013 = vmul.f32 %v1975, 0.70710677
    %v2014 = vmul.f32 %v1977, 0.70710677
    %v2015 = vmul.f32 %v1980, 0.70710677
    %v2016 = vmul.f32 %v1982, 0.70710677
    %v2017 = vmul.f32 %v1985, 0.70710677
    %v2018 = vmul.f32 %v1987, 0.70710677
    %v2019 = vmul.f32 %v1990, 0.70710677
    %v2020 = vmul.f32 %v1992, 0.70710677
    %v2021 = vmul.f32 %v1995, 0.70710677
    %v2022 = vmul.f32 %v1997, 0.70710677
    %v2023 = vand.u32 2147483647, %v2011
    %v2024 = vand.u32 2147483647, %v2012
    %v2025 = vand.u32 2147483647, %v2013
    %v2026 = vand.u32 2147483647, %v2014
    %v2027 = vand.u32 2147483647, %v2015
    %v2028 = vand.u32 2147483647, %v2016
    %v2029 = vand.u32 2147483647, %v2017
    %v2030 = vand.u32 2147483647, %v2018
    %v2031 = vand.u32 2147483647, %v2019
    %v2032 = vand.u32 2147483647, %v2020
    %v2033 = vand.u32 2147483647, %v2021
    %v2034 = vand.u32 2147483647, %v2022
    %v2035 = vmul.f32 %v2023, 0.3275911
    %v2036 = vmul.f32 %v2024, 0.3275911
    %v2037 = vmul.f32 %v2025, 0.3275911
    %v2038 = vmul.f32 %v2026, 0.3275911
    %v2039 = vmul.f32 %v2027, 0.3275911
    %v2040 = vmul.f32 %v2028, 0.3275911
    %v2041 = vmul.f32 %v2029, 0.3275911
    %v2042 = vmul.f32 %v2030, 0.3275911
    %v2043 = vmul.f32 %v2031, 0.3275911
    %v2044 = vmul.f32 %v2032, 0.3275911
    %v2045 = vmul.f32 %v2033, 0.3275911
    %v2046 = vmul.f32 %v2034, 0.3275911
    %v2047 = vadd.f32 %v2035, 1.0
    %v2048 = vadd.f32 %v2036, 1.0
    %v2049 = vadd.f32 %v2037, 1.0
    %v2050 = vadd.f32 %v2038, 1.0
    %v2051 = vadd.f32 %v2039, 1.0
    %v2052 = vadd.f32 %v2040, 1.0
    %v2053 = vadd.f32 %v2041, 1.0
    %v2054 = vadd.f32 %v2042, 1.0
    %v2055 = vadd.f32 %v2043, 1.0
    %v2056 = vadd.f32 %v2044, 1.0
    %v2057 = vadd.f32 %v2045, 1.0
    %v2058 = vadd.f32 %v2046, 1.0
    %v2059 = vrcp.pop %v2047
    %v2060 = vmul.f32 %v2047, %v2059
    %v2061 = vsub.f32 1.0, %v2060
    %v2062 = vmul.f32 %v2059, %v2061
    %v2063 = vadd.f32 %v2059, %v2062
    %vm2064 = vweird.f32 %v2047
    %vm2065 = vweird.f32 %v2059
    %vm2066 = vmor %vm2064, %vm2065
    %v2067 = vsel %vm2066, %v2059, %v2063
    %v2068 = vand.u32 2147483647, %v2047
    %vm2069 = vcmp.eq.f32.partialorder %v2068, 8.507059e+37
    %v2070 = vand.u32 %v2047, 2147483648
    %v2071 = vor.u32 1.1754944e-38, %v2070
    %v2072 = vsel %vm2069, %v2071, %v2067
    %v2073 = vmul.f32 1.0, %v2072
    %v2074 = vrcp.pop %v2048
    %v2075 = vmul.f32 %v2048, %v2074
    %v2076 = vsub.f32 1.0, %v2075
    %v2077 = vmul.f32 %v2074, %v2076
    %v2078 = vadd.f32 %v2074, %v2077
    %vm2079 = vweird.f32 %v2048
    %vm2080 = vweird.f32 %v2074
    %vm2081 = vmor %vm2079, %vm2080
    %v2082 = vsel %vm2081, %v2074, %v2078
    %v2083 = vand.u32 2147483647, %v2048
    %vm2084 = vcmp.eq.f32.partialorder %v2083, 8.507059e+37
    %v2085 = vand.u32 %v2048, 2147483648
    %v2086 = vor.u32 1.1754944e-38, %v2085
    %v2087 = vsel %vm2084, %v2086, %v2082
    %v2088 = vmul.f32 1.0, %v2087
    %v2089 = vrcp.pop %v2049
    %v2090 = vmul.f32 %v2049, %v2089
    %v2091 = vsub.f32 1.0, %v2090
    %v2092 = vmul.f32 %v2089, %v2091
    %v2093 = vadd.f32 %v2089, %v2092
    %vm2094 = vweird.f32 %v2049
    %vm2095 = vweird.f32 %v2089
    %vm2096 = vmor %vm2094, %vm2095
    %v2097 = vsel %vm2096, %v2089, %v2093
    %v2098 = vand.u32 2147483647, %v2049
    %vm2099 = vcmp.eq.f32.partialorder %v2098, 8.507059e+37
    %v2100 = vand.u32 %v2049, 2147483648
    %v2101 = vor.u32 1.1754944e-38, %v2100
    %v2102 = vsel %vm2099, %v2101, %v2097
    %v2103 = vmul.f32 1.0, %v2102
    %v2104 = vrcp.pop %v2050
    %v2105 = vmul.f32 %v2050, %v2104
    %v2106 = vsub.f32 1.0, %v2105
    %v2107 = vmul.f32 %v2104, %v2106
    %v2108 = vadd.f32 %v2104, %v2107
    %vm2109 = vweird.f32 %v2050
    %vm2110 = vweird.f32 %v2104
    %vm2111 = vmor %vm2109, %vm2110
    %v2112 = vsel %vm2111, %v2104, %v2108
    %v2113 = vand.u32 2147483647, %v2050
    %vm2114 = vcmp.eq.f32.partialorder %v2113, 8.507059e+37
    %v2115 = vand.u32 %v2050, 2147483648
    %v2116 = vor.u32 1.1754944e-38, %v2115
    %v2117 = vsel %vm2114, %v2116, %v2112
    %v2118 = vmul.f32 1.0, %v2117
    %v2119 = vrcp.pop %v2051
    %v2120 = vmul.f32 %v2051, %v2119
    %v2121 = vsub.f32 1.0, %v2120
    %v2122 = vmul.f32 %v2119, %v2121
    %v2123 = vadd.f32 %v2119, %v2122
    %vm2124 = vweird.f32 %v2051
    %vm2125 = vweird.f32 %v2119
    %vm2126 = vmor %vm2124, %vm2125
    %v2127 = vsel %vm2126, %v2119, %v2123
    %v2128 = vand.u32 2147483647, %v2051
    %vm2129 = vcmp.eq.f32.partialorder %v2128, 8.507059e+37
    %v2130 = vand.u32 %v2051, 2147483648
    %v2131 = vor.u32 1.1754944e-38, %v2130
    %v2132 = vsel %vm2129, %v2131, %v2127
    %v2133 = vmul.f32 1.0, %v2132
    %v2134 = vrcp.pop %v2052
    %v2135 = vmul.f32 %v2052, %v2134
    %v2136 = vsub.f32 1.0, %v2135
    %v2137 = vmul.f32 %v2134, %v2136
    %v2138 = vadd.f32 %v2134, %v2137
    %vm2139 = vweird.f32 %v2052
    %vm2140 = vweird.f32 %v2134
    %vm2141 = vmor %vm2139, %vm2140
    %v2142 = vsel %vm2141, %v2134, %v2138
    %v2143 = vand.u32 2147483647, %v2052
    %vm2144 = vcmp.eq.f32.partialorder %v2143, 8.507059e+37
    %v2145 = vand.u32 %v2052, 2147483648
    %v2146 = vor.u32 1.1754944e-38, %v2145
    %v2147 = vsel %vm2144, %v2146, %v2142
    %v2148 = vmul.f32 1.0, %v2147
    %v2149 = vrcp.pop %v2053
    %v2150 = vmul.f32 %v2053, %v2149
    %v2151 = vsub.f32 1.0, %v2150
    %v2152 = vmul.f32 %v2149, %v2151
    %v2153 = vadd.f32 %v2149, %v2152
    %vm2154 = vweird.f32 %v2053
    %vm2155 = vweird.f32 %v2149
    %vm2156 = vmor %vm2154, %vm2155
    %v2157 = vsel %vm2156, %v2149, %v2153
    %v2158 = vand.u32 2147483647, %v2053
    %vm2159 = vcmp.eq.f32.partialorder %v2158, 8.507059e+37
    %v2160 = vand.u32 %v2053, 2147483648
    %v2161 = vor.u32 1.1754944e-38, %v2160
    %v2162 = vsel %vm2159, %v2161, %v2157
    %v2163 = vmul.f32 1.0, %v2162
    %v2164 = vrcp.pop %v2054
    %v2165 = vmul.f32 %v2054, %v2164
    %v2166 = vsub.f32 1.0, %v2165
    %v2167 = vmul.f32 %v2164, %v2166
    %v2168 = vadd.f32 %v2164, %v2167
    %vm2169 = vweird.f32 %v2054
    %vm2170 = vweird.f32 %v2164
    %vm2171 = vmor %vm2169, %vm2170
    %v2172 = vsel %vm2171, %v2164, %v2168
    %v2173 = vand.u32 2147483647, %v2054
    %vm2174 = vcmp.eq.f32.partialorder %v2173, 8.507059e+37
    %v2175 = vand.u32 %v2054, 2147483648
    %v2176 = vor.u32 1.1754944e-38, %v2175
    %v2177 = vsel %vm2174, %v2176, %v2172
    %v2178 = vmul.f32 1.0, %v2177
    %v2179 = vrcp.pop %v2055
    %v2180 = vmul.f32 %v2055, %v2179
    %v2181 = vsub.f32 1.0, %v2180
    %v2182 = vmul.f32 %v2179, %v2181
    %v2183 = vadd.f32 %v2179, %v2182
    %vm2184 = vweird.f32 %v2055
    %vm2185 = vweird.f32 %v2179
    %vm2186 = vmor %vm2184, %vm2185
    %v2187 = vsel %vm2186, %v2179, %v2183
    %v2188 = vand.u32 2147483647, %v2055
    %vm2189 = vcmp.eq.f32.partialorder %v2188, 8.507059e+37
    %v2190 = vand.u32 %v2055, 2147483648
    %v2191 = vor.u32 1.1754944e-38, %v2190
    %v2192 = vsel %vm2189, %v2191, %v2187
    %v2193 = vmul.f32 1.0, %v2192
    %v2194 = vrcp.pop %v2056
    %v2195 = vmul.f32 %v2056, %v2194
    %v2196 = vsub.f32 1.0, %v2195
    %v2197 = vmul.f32 %v2194, %v2196
    %v2198 = vadd.f32 %v2194, %v2197
    %vm2199 = vweird.f32 %v2056
    %vm2200 = vweird.f32 %v2194
    %vm2201 = vmor %vm2199, %vm2200
    %v2202 = vsel %vm2201, %v2194, %v2198
    %v2203 = vand.u32 2147483647, %v2056
    %vm2204 = vcmp.eq.f32.partialorder %v2203, 8.507059e+37
    %v2205 = vand.u32 %v2056, 2147483648
    %v2206 = vor.u32 1.1754944e-38, %v2205
    %v2207 = vsel %vm2204, %v2206, %v2202
    %v2208 = vmul.f32 1.0, %v2207
    %v2209 = vrcp.pop %v2057
    %v2210 = vmul.f32 %v2057, %v2209
    %v2211 = vsub.f32 1.0, %v2210
    %v2212 = vmul.f32 %v2209, %v2211
    %v2213 = vadd.f32 %v2209, %v2212
    %vm2214 = vweird.f32 %v2057
    %vm2215 = vweird.f32 %v2209
    %vm2216 = vmor %vm2214, %vm2215
    %v2217 = vsel %vm2216, %v2209, %v2213
    %v2218 = vand.u32 2147483647, %v2057
    %vm2219 = vcmp.eq.f32.partialorder %v2218, 8.507059e+37
    %v2220 = vand.u32 %v2057, 2147483648
    %v2221 = vor.u32 1.1754944e-38, %v2220
    %v2222 = vsel %vm2219, %v2221, %v2217
    %v2223 = vmul.f32 1.0, %v2222
    %v2224 = vrcp.pop %v2058
    %v2225 = vmul.f32 %v2058, %v2224
    %v2226 = vsub.f32 1.0, %v2225
    %v2227 = vmul.f32 %v2224, %v2226
    %v2228 = vadd.f32 %v2224, %v2227
    %vm2229 = vweird.f32 %v2058
    %vm2230 = vweird.f32 %v2224
    %vm2231 = vmor %vm2229, %vm2230
    %v2232 = vsel %vm2231, %v2224, %v2228
    %v2233 = vand.u32 2147483647, %v2058
    %vm2234 = vcmp.eq.f32.partialorder %v2233, 8.507059e+37
    %v2235 = vand.u32 %v2058, 2147483648
    %v2236 = vor.u32 1.1754944e-38, %v2235
    %v2237 = vsel %vm2234, %v2236, %v2232
    %v2238 = vmul.f32 1.0, %v2237
    %v2239 = vmul.f32 %v2073, 1.0614054
    %v2240 = vmul.f32 %v2088, 1.0614054
    %v2241 = vmul.f32 %v2103, 1.0614054
    %v2242 = vmul.f32 %v2118, 1.0614054
    %v2243 = vmul.f32 %v2133, 1.0614054
    %v2244 = vmul.f32 %v2148, 1.0614054
    %v2245 = vmul.f32 %v2163, 1.0614054
    %v2246 = vmul.f32 %v2178, 1.0614054
    %v2247 = vmul.f32 %v2193, 1.0614054
    %v2248 = vmul.f32 %v2208, 1.0614054
    %v2249 = vmul.f32 %v2223, 1.0614054
    %v2250 = vmul.f32 %v2238, 1.0614054
    %v2251 = vadd.f32 %v2239, -1.4531521
    %v2252 = vadd.f32 %v2240, -1.4531521
    %v2253 = vadd.f32 %v2241, -1.4531521
    %v2254 = vadd.f32 %v2242, -1.4531521
    %v2255 = vadd.f32 %v2243, -1.4531521
    %v2256 = vadd.f32 %v2244, -1.4531521
    %v2257 = vadd.f32 %v2245, -1.4531521
    %v2258 = vadd.f32 %v2246, -1.4531521
    %v2259 = vadd.f32 %v2247, -1.4531521
    %v2260 = vadd.f32 %v2248, -1.4531521
    %v2261 = vadd.f32 %v2249, -1.4531521
    %v2262 = vadd.f32 %v2250, -1.4531521
    %v2263 = vmul.f32 %v2251, %v2073
    %v2264 = vmul.f32 %v2252, %v2088
    %v2265 = vmul.f32 %v2253, %v2103
    %v2266 = vmul.f32 %v2254, %v2118
    %v2267 = vmul.f32 %v2255, %v2133
    %v2268 = vmul.f32 %v2256, %v2148
    %v2269 = vmul.f32 %v2257, %v2163
    %v2270 = vmul.f32 %v2258, %v2178
    %v2271 = vmul.f32 %v2259, %v2193
    %v2272 = vmul.f32 %v2260, %v2208
    %v2273 = vmul.f32 %v2261, %v2223
    %v2274 = vmul.f32 %v2262, %v2238
    %v2275 = vadd.f32 %v2263, 1.4214138
    %v2276 = vadd.f32 %v2264, 1.4214138
    %v2277 = vadd.f32 %v2265, 1.4214138
    %v2278 = vadd.f32 %v2266, 1.4214138
    %v2279 = vadd.f32 %v2267, 1.4214138
    %v2280 = vadd.f32 %v2268, 1.4214138
    %v2281 = vadd.f32 %v2269, 1.4214138
    %v2282 = vadd.f32 %v2270, 1.4214138
    %v2283 = vadd.f32 %v2271, 1.4214138
    %v2284 = vadd.f32 %v2272, 1.4214138
    %v2285 = vadd.f32 %v2273, 1.4214138
    %v2286 = vadd.f32 %v2274, 1.4214138
    %v2287 = vmul.f32 %v2275, %v2073
    %v2288 = vmul.f32 %v2276, %v2088
    %v2289 = vmul.f32 %v2277, %v2103
    %v2290 = vmul.f32 %v2278, %v2118
    %v2291 = vmul.f32 %v2279, %v2133
    %v2292 = vmul.f32 %v2280, %v2148
    %v2293 = vmul.f32 %v2281, %v2163
    %v2294 = vmul.f32 %v2282, %v2178
    %v2295 = vmul.f32 %v2283, %v2193
    %v2296 = vmul.f32 %v2284, %v2208
    %v2297 = vmul.f32 %v2285, %v2223
    %v2298 = vmul.f32 %v2286, %v2238
    %v2299 = vadd.f32 %v2287, -0.28449672
    %v2300 = vadd.f32 %v2288, -0.28449672
    %v2301 = vadd.f32 %v2289, -0.28449672
    %v2302 = vadd.f32 %v2290, -0.28449672
    %v2303 = vadd.f32 %v2291, -0.28449672
    %v2304 = vadd.f32 %v2292, -0.28449672
    %v2305 = vadd.f32 %v2293, -0.28449672
    %v2306 = vadd.f32 %v2294, -0.28449672
    %v2307 = vadd.f32 %v2295, -0.28449672
    %v2308 = vadd.f32 %v2296, -0.28449672
    %v2309 = vadd.f32 %v2297, -0.28449672
    %v2310 = vadd.f32 %v2298, -0.28449672
    %v2311 = vmul.f32 %v2299, %v2073
    %v2312 = vmul.f32 %v2300, %v2088
    %v2313 = vmul.f32 %v2301, %v2103
    %v2314 = vmul.f32 %v2302, %v2118
    %v2315 = vmul.f32 %v2303, %v2133
    %v2316 = vmul.f32 %v2304, %v2148
    %v2317 = vmul.f32 %v2305, %v2163
    %v2318 = vmul.f32 %v2306, %v2178
    %v2319 = vmul.f32 %v2307, %v2193
    %v2320 = vmul.f32 %v2308, %v2208
    %v2321 = vmul.f32 %v2309, %v2223
    %v2322 = vmul.f32 %v2310, %v2238
    %v2323 = vadd.f32 %v2311, 0.2548296
    %v2324 = vadd.f32 %v2312, 0.2548296
    %v2325 = vadd.f32 %v2313, 0.2548296
    %v2326 = vadd.f32 %v2314, 0.2548296
    %v2327 = vadd.f32 %v2315, 0.2548296
    %v2328 = vadd.f32 %v2316, 0.2548296
    %v2329 = vadd.f32 %v2317, 0.2548296
    %v2330 = vadd.f32 %v2318, 0.2548296
    %v2331 = vadd.f32 %v2319, 0.2548296
    %v2332 = vadd.f32 %v2320, 0.2548296
    %v2333 = vadd.f32 %v2321, 0.2548296
    %v2334 = vadd.f32 %v2322, 0.2548296
    %v2335 = vmul.f32 %v2323, %v2073
    %v2336 = vmul.f32 %v2324, %v2088
    %v2337 = vmul.f32 %v2325, %v2103
    %v2338 = vmul.f32 %v2326, %v2118
    %v2339 = vmul.f32 %v2327, %v2133
    %v2340 = vmul.f32 %v2328, %v2148
    %v2341 = vmul.f32 %v2329, %v2163
    %v2342 = vmul.f32 %v2330, %v2178
    %v2343 = vmul.f32 %v2331, %v2193
    %v2344 = vmul.f32 %v2332, %v2208
    %v2345 = vmul.f32 %v2333, %v2223
    %v2346 = vmul.f32 %v2334, %v2238
    %v2347 = vsub.f32 0.0, %v2023
    %v2348 = vsub.f32 0.0, %v2024
    %v2349 = vsub.f32 0.0, %v2025
    %v2350 = vsub.f32 0.0, %v2026
    %v2351 = vsub.f32 0.0, %v2027
    %v2352 = vsub.f32 0.0, %v2028
    %v2353 = vsub.f32 0.0, %v2029
    %v2354 = vsub.f32 0.0, %v2030
    %v2355 = vsub.f32 0.0, %v2031
    %v2356 = vsub.f32 0.0, %v2032
    %v2357 = vsub.f32 0.0, %v2033
    %v2358 = vsub.f32 0.0, %v2034
    %v2359 = vmul.f32 %v2347, %v2023
    %v2360 = vmul.f32 %v2348, %v2024
    %v2361 = vmul.f32 %v2349, %v2025
    %v2362 = vmul.f32 %v2350, %v2026
    %v2363 = vmul.f32 %v2351, %v2027
    %v2364 = vmul.f32 %v2352, %v2028
    %v2365 = vmul.f32 %v2353, %v2029
    %v2366 = vmul.f32 %v2354, %v2030
    %v2367 = vmul.f32 %v2355, %v2031
    %v2368 = vmul.f32 %v2356, %v2032
    %v2369 = vmul.f32 %v2357, %v2033
    %v2370 = vmul.f32 %v2358, %v2034
    %v2371 = vmul.f32 %v2359, 1.442695
    %v2372 = vpow.pop %v2371
    %v2373 = vmul.f32 %v2360, 1.442695
    %v2374 = vpow.pop %v2373
    %v2375 = vmul.f32 %v2361, 1.442695
    %v2376 = vpow.pop %v2375
    %v2377 = vmul.f32 %v2362, 1.442695
    %v2378 = vpow.pop %v2377
    %v2379 = vmul.f32 %v2363, 1.442695
    %v2380 = vpow.pop %v2379
    %v2381 = vmul.f32 %v2364, 1.442695
    %v2382 = vpow.pop %v2381
    %v2383 = vmul.f32 %v2365, 1.442695
    %v2384 = vpow.pop %v2383
    %v2385 = vmul.f32 %v2366, 1.442695
    %v2386 = vpow.pop %v2385
    %v2387 = vmul.f32 %v2367, 1.442695
    %v2388 = vpow.pop %v2387
    %v2389 = vmul.f32 %v2368, 1.442695
    %v2390 = vpow.pop %v2389
    %v2391 = vmul.f32 %v2369, 1.442695
    %v2392 = vpow.pop %v2391
    %v2393 = vmul.f32 %v2370, 1.442695
    %v2394 = vpow.pop %v2393
    %v2395 = vmul.f32 %v2335, %v2372
    %v2396 = vmul.f32 %v2336, %v2374
    %v2397 = vmul.f32 %v2337, %v2376
    %v2398 = vmul.f32 %v2338, %v2378
    %v2399 = vmul.f32 %v2339, %v2380
    %v2400 = vmul.f32 %v2340, %v2382
    %v2401 = vmul.f32 %v2341, %v2384
    %v2402 = vmul.f32 %v2342, %v2386
    %v2403 = vmul.f32 %v2343, %v2388
    %v2404 = vmul.f32 %v2344, %v2390
    %v2405 = vmul.f32 %v2345, %v2392
    %v2406 = vmul.f32 %v2346, %v2394
    %v2407 = vsub.f32 1.0, %v2395
    %v2408 = vsub.f32 1.0, %v2396
    %v2409 = vsub.f32 1.0, %v2397
    %v2410 = vsub.f32 1.0, %v2398
    %v2411 = vsub.f32 1.0, %v2399
    %v2412 = vsub.f32 1.0, %v2400
    %v2413 = vsub.f32 1.0, %v2401
    %v2414 = vsub.f32 1.0, %v2402
    %v2415 = vsub.f32 1.0, %v2403
    %v2416 = vsub.f32 1.0, %v2404
    %v2417 = vsub.f32 1.0, %v2405
    %v2418 = vsub.f32 1.0, %v2406
    %vm2419 = vcmp.lt.f32.partialorder %v2011, 0.0
    %vm2420 = vcmp.lt.f32.partialorder %v2012, 0.0
    %vm2421 = vcmp.lt.f32.partialorder %v2013, 0.0
    %vm2422 = vcmp.lt.f32.partialorder %v2014, 0.0
    %vm2423 = vcmp.lt.f32.partialorder %v2015, 0.0
    %vm2424 = vcmp.lt.f32.partialorder %v2016, 0.0
    %vm2425 = vcmp.lt.f32.partialorder %v2017, 0.0
    %vm2426 = vcmp.lt.f32.partialorder %v2018, 0.0
    %vm2427 = vcmp.lt.f32.partialorder %v2019, 0.0
    %vm2428 = vcmp.lt.f32.partialorder %v2020, 0.0
    %vm2429 = vcmp.lt.f32.partialorder %v2021, 0.0
    %vm2430 = vcmp.lt.f32.partialorder %v2022, 0.0
    %v2431 = vsub.f32 0.0, %v2407
    %v2432 = vsub.f32 0.0, %v2408
    %v2433 = vsub.f32 0.0, %v2409
    %v2434 = vsub.f32 0.0, %v2410
    %v2435 = vsub.f32 0.0, %v2411
    %v2436 = vsub.f32 0.0, %v2412
    %v2437 = vsub.f32 0.0, %v2413
    %v2438 = vsub.f32 0.0, %v2414
    %v2439 = vsub.f32 0.0, %v2415
    %v2440 = vsub.f32 0.0, %v2416
    %v2441 = vsub.f32 0.0, %v2417
    %v2442 = vsub.f32 0.0, %v2418
    %v2443 = vsel %vm2419, %v2431, %v2407
    %v2444 = vsel %vm2420, %v2432, %v2408
    %v2445 = vsel %vm2421, %v2433, %v2409
    %v2446 = vsel %vm2422, %v2434, %v2410
    %v2447 = vsel %vm2423, %v2435, %v2411
    %v2448 = vsel %vm2424, %v2436, %v2412
    %v2449 = vsel %vm2425, %v2437, %v2413
    %v2450 = vsel %vm2426, %v2438, %v2414
    %v2451 = vsel %vm2427, %v2439, %v2415
    %v2452 = vsel %vm2428, %v2440, %v2416
    %v2453 = vsel %vm2429, %v2441, %v2417
    %v2454 = vsel %vm2430, %v2442, %v2418
    %v2455 = vadd.f32 %v2443, 1.0
    %v2456 = vadd.f32 %v2444, 1.0
    %v2457 = vadd.f32 %v2445, 1.0
    %v2458 = vadd.f32 %v2446, 1.0
    %v2459 = vadd.f32 %v2447, 1.0
    %v2460 = vadd.f32 %v2448, 1.0
    %v2461 = vadd.f32 %v2449, 1.0
    %v2462 = vadd.f32 %v2450, 1.0
    %v2463 = vadd.f32 %v2451, 1.0
    %v2464 = vadd.f32 %v2452, 1.0
    %v2465 = vadd.f32 %v2453, 1.0
    %v2466 = vadd.f32 %v2454, 1.0
    %v2467 = vmul.f32 %v1999, %v2455
    %v2468 = vmul.f32 %v2000, %v2456
    %v2469 = vmul.f32 %v2001, %v2457
    %v2470 = vmul.f32 %v2002, %v2458
    %v2471 = vmul.f32 %v2003, %v2459
    %v2472 = vmul.f32 %v2004, %v2460
    %v2473 = vmul.f32 %v2005, %v2461
    %v2474 = vmul.f32 %v2006, %v2462
    %v2475 = vmul.f32 %v2007, %v2463
    %v2476 = vmul.f32 %v2008, %v2464
    %v2477 = vmul.f32 %v2009, %v2465
    %v2478 = vmul.f32 %v2010, %v2466
    %v2479 = vpack.c.bf16 %v2468, %v2467
    %v2480 = vpack.c.bf16 %v2470, %v2469
    %v2481 = vpack.c.bf16 %v2472, %v2471
    %v2482 = vpack.c.bf16 %v2474, %v2473
    %v2483 = vpack.c.bf16 %v2476, %v2475
    %v2484 = vpack.c.bf16 %v2478, %v2477
    %v2485 = vld [vmem:[%s13] sm:$0xf]
    %v2486 = vld [vmem:[%s13 + $0x4] sm:$0xf]
    %v2487 = vld [vmem:[%s13 + $0x8] sm:$0xf]
    %v2488 = vld [vmem:[%s13 + $0xc] sm:$0xf]
    %v2489 = vld [vmem:[%s13 + $0x10] sm:$0xf]
    %v2490 = vld [vmem:[%s13 + $0x14] sm:$0xf]
    %v2491 = vld [vmem:[%s13 + $0x18] sm:$0xf]
    %v2492 = vld [vmem:[%s13 + $0x1c] sm:$0xf]
    %v2493 = vld [vmem:[%s13 + $0x20] sm:$0xf]
    %v2494 = vld [vmem:[%s13 + $0x24] sm:$0xf]
    %v2495 = vld [vmem:[%s13 + $0x28] sm:$0xf]
    %v2496 = vld [vmem:[%s13 + $0x2c] sm:$0xf]
    %v2497 = vld [vmem:[%s13 + $0x30] sm:$0xf]
    %v2498 = vld [vmem:[%s13 + $0x34] sm:$0xf]
    %v2499 = vld [vmem:[%s13 + $0x38] sm:$0xf]
    %v2500 = vld [vmem:[%s13 + $0x3c] sm:$0xf]
    %v2517 = vunpack.c.l.b16 %v2485
    %v2518 = vunpack.c.l.b16 %v2486
    %v2519 = vunpack.c.l.b16 %v2487
    %v2520 = vunpack.c.l.b16 %v2488
    %v2521 = vunpack.c.l.b16 %v2489
    %v2522 = vunpack.c.l.b16 %v2490
    %v2523 = vunpack.c.l.b16 %v2491
    %v2524 = vunpack.c.l.b16 %v2492
    %v2525 = vunpack.c.l.b16 %v2493
    %v2526 = vunpack.c.l.b16 %v2494
    %v2527 = vunpack.c.l.b16 %v2495
    %v2528 = vunpack.c.l.b16 %v2496
    %v2529 = vunpack.c.l.b16 %v2497
    %v2530 = vunpack.c.l.b16 %v2498
    %v2531 = vunpack.c.l.b16 %v2499
    %v2532 = vunpack.c.l.b16 %v2500
    %v2533 = vpack.c.b16 %v2518, %v2517
    %v2534 = vpack.c.b16 %v2520, %v2519
    %v2535 = vpack.c.b16 %v2522, %v2521
    %v2536 = vpack.c.b16 %v2524, %v2523
    %v2537 = vpack.c.b16 %v2526, %v2525
    %v2538 = vpack.c.b16 %v2528, %v2527
    %v2539 = vpack.c.b16 %v2530, %v2529
    %v2540 = vpack.c.b16 %v2532, %v2531
    %2549 = vmatpush.bf16.msra.mxu0 %v2540
    %2550 = vmatpush.bf16.msra.mxu0 %v2539
    %2551 = vmatpush.bf16.msra.mxu0 %v2538
    %2552 = vmatpush.bf16.msra.mxu0 %v2537
    %2553 = vmatpush.bf16.msra.mxu0 %v2536
    %2554 = vmatpush.bf16.msra.mxu0 %v2535
    %2555 = vmatpush.bf16.msra.mxu0 %v2534
    %2556 = vmatpush.bf16.msra.mxu0 %v2533
    %2557 = vmatmul.bf16.gmra.mxu0 %v2479
    %v2558 = vpop.f32.mrf.mxu0
    %v2559 = vadd.f32 0.0, %v2558
    %v2560 = vpop.f32.mrf.mxu0
    %v2561 = vadd.f32 0.0, %v2560
    %2562 = vmatmul.bf16.gmra.mxu0 %v2480
    %v2563 = vpop.f32.mrf.mxu0
    %v2564 = vadd.f32 0.0, %v2563
    %v2565 = vpop.f32.mrf.mxu0
    %v2566 = vadd.f32 0.0, %v2565
    %2567 = vmatmul.bf16.gmra.mxu0 %v2481
    %v2568 = vpop.f32.mrf.mxu0
    %v2569 = vadd.f32 0.0, %v2568
    %v2570 = vpop.f32.mrf.mxu0
    %v2571 = vadd.f32 0.0, %v2570
    %2572 = vmatmul.bf16.gmra.mxu0 %v2482
    %v2573 = vpop.f32.mrf.mxu0
    %v2574 = vadd.f32 0.0, %v2573
    %v2575 = vpop.f32.mrf.mxu0
    %v2576 = vadd.f32 0.0, %v2575
    %2577 = vmatmul.bf16.gmra.mxu0 %v2483
    %v2578 = vpop.f32.mrf.mxu0
    %v2579 = vadd.f32 0.0, %v2578
    %v2580 = vpop.f32.mrf.mxu0
    %v2581 = vadd.f32 0.0, %v2580
    %2582 = vmatmul.bf16.gmra.mxu0 %v2484
    %v2583 = vpop.f32.mrf.mxu0
    %v2584 = vadd.f32 0.0, %v2583
    %v2585 = vpop.f32.mrf.mxu0
    %v2586 = vadd.f32 0.0, %v2585
    %2587 = vdwg.mxu0
    %v2588 = vadd.f32 %v1608, %v2559
    %v2589 = vadd.f32 %v1609, %v2561
    %v2590 = vadd.f32 %v1610, %v2564
    %v2591 = vadd.f32 %v1611, %v2566
    %v2592 = vadd.f32 %v1612, %v2569
    %v2593 = vadd.f32 %v1613, %v2571
    %v2594 = vadd.f32 %v1614, %v2574
    %v2595 = vadd.f32 %v1615, %v2576
    %v2596 = vadd.f32 %v1616, %v2579
    %v2597 = vadd.f32 %v1617, %v2581
    %v2598 = vadd.f32 %v1618, %v2584
    %v2599 = vadd.f32 %v1619, %v2586
    %v2600 = vld [vmem:[%s14] sm:$0x1]
    %v2602 = vperm.slane %v2600, 0
    %v2604 = vadd.f32 %v2588, %v2602
    %v2605 = vadd.f32 %v2589, %v2602
    %v2606 = vadd.f32 %v2590, %v2602
    %v2607 = vadd.f32 %v2591, %v2602
    %v2608 = vadd.f32 %v2592, %v2602
    %v2609 = vadd.f32 %v2593, %v2602
    %v2610 = vadd.f32 %v2594, %v2602
    %v2611 = vadd.f32 %v2595, %v2602
    %v2612 = vadd.f32 %v2596, %v2602
    %v2613 = vadd.f32 %v2597, %v2602
    %v2614 = vadd.f32 %v2598, %v2602
    %v2615 = vadd.f32 %v2599, %v2602
    %s2616 = scalar_lea.vmem %s3, 1
    %v2617 = vld [vmem:[%s2616] sm:$0x1]
    %s2618 = scalar_lea.vmem %s4, 1
    %v2619 = vld [vmem:[%s2618] sm:$0x1]
    %v2620 = vsel %vm94, %v2604, 0.0
    %2621 = vadd.xlane.f32.xlu0 %v2620
    %v2622 = vpop.xlane.xlu0 %2621
    %v2623 = vsel %vm94, %v2605, 0.0
    %2624 = vadd.xlane.f32.xlu0 %v2623
    %v2625 = vpop.xlane.xlu0 %2624
    %v2626 = vsel %vm94, %v2606, 0.0
    %2627 = vadd.xlane.f32.xlu0 %v2626
    %v2628 = vpop.xlane.xlu0 %2627
    %v2629 = vsel %vm94, %v2607, 0.0
    %2630 = vadd.xlane.f32.xlu0 %v2629
    %v2631 = vpop.xlane.xlu0 %2630
    %v2632 = vsel %vm94, %v2608, 0.0
    %2633 = vadd.xlane.f32.xlu0 %v2632
    %v2634 = vpop.xlane.xlu0 %2633
    %v2635 = vsel %vm94, %v2609, 0.0
    %2636 = vadd.xlane.f32.xlu0 %v2635
    %v2637 = vpop.xlane.xlu0 %2636
    %v2638 = vsel %vm94, %v2610, 0.0
    %2639 = vadd.xlane.f32.xlu0 %v2638
    %v2640 = vpop.xlane.xlu0 %2639
    %v2641 = vsel %vm94, %v2611, 0.0
    %2642 = vadd.xlane.f32.xlu0 %v2641
    %v2643 = vpop.xlane.xlu0 %2642
    %v2644 = vsel %vm94, %v2612, 0.0
    %2645 = vadd.xlane.f32.xlu0 %v2644
    %v2646 = vpop.xlane.xlu0 %2645
    %v2647 = vsel %vm94, %v2613, 0.0
    %2648 = vadd.xlane.f32.xlu0 %v2647
    %v2649 = vpop.xlane.xlu0 %2648
    %v2650 = vsel %vm94, %v2614, 0.0
    %2651 = vadd.xlane.f32.xlu0 %v2650
    %v2652 = vpop.xlane.xlu0 %2651
    %v2653 = vsel %vm94, %v2615, 0.0
    %2654 = vadd.xlane.f32.xlu0 %v2653
    %v2655 = vpop.xlane.xlu0 %2654
    %v2656 = vmul.f32 %v2622, %v137
    %v2657 = vmul.f32 %v2625, %v137
    %v2658 = vmul.f32 %v2628, %v137
    %v2659 = vmul.f32 %v2631, %v137
    %v2660 = vmul.f32 %v2634, %v137
    %v2661 = vmul.f32 %v2637, %v137
    %v2662 = vmul.f32 %v2640, %v137
    %v2663 = vmul.f32 %v2643, %v137
    %v2664 = vmul.f32 %v2646, %v137
    %v2665 = vmul.f32 %v2649, %v137
    %v2666 = vmul.f32 %v2652, %v137
    %v2667 = vmul.f32 %v2655, %v137
    %v2668 = vsub.f32 %v2604, %v2656
    %v2669 = vsub.f32 %v2605, %v2657
    %v2670 = vsub.f32 %v2606, %v2658
    %v2671 = vsub.f32 %v2607, %v2659
    %v2672 = vsub.f32 %v2608, %v2660
    %v2673 = vsub.f32 %v2609, %v2661
    %v2674 = vsub.f32 %v2610, %v2662
    %v2675 = vsub.f32 %v2611, %v2663
    %v2676 = vsub.f32 %v2612, %v2664
    %v2677 = vsub.f32 %v2613, %v2665
    %v2678 = vsub.f32 %v2614, %v2666
    %v2679 = vsub.f32 %v2615, %v2667
    %v2680 = vmul.f32 %v2668, %v2668
    %v2681 = vmul.f32 %v2669, %v2669
    %v2682 = vmul.f32 %v2670, %v2670
    %v2683 = vmul.f32 %v2671, %v2671
    %v2684 = vmul.f32 %v2672, %v2672
    %v2685 = vmul.f32 %v2673, %v2673
    %v2686 = vmul.f32 %v2674, %v2674
    %v2687 = vmul.f32 %v2675, %v2675
    %v2688 = vmul.f32 %v2676, %v2676
    %v2689 = vmul.f32 %v2677, %v2677
    %v2690 = vmul.f32 %v2678, %v2678
    %v2691 = vmul.f32 %v2679, %v2679
    %v2692 = vsel %vm94, %v2680, 0.0
    %2693 = vadd.xlane.f32.xlu0 %v2692
    %v2694 = vpop.xlane.xlu0 %2693
    %v2695 = vsel %vm94, %v2681, 0.0
    %2696 = vadd.xlane.f32.xlu0 %v2695
    %v2697 = vpop.xlane.xlu0 %2696
    %v2698 = vsel %vm94, %v2682, 0.0
    %2699 = vadd.xlane.f32.xlu0 %v2698
    %v2700 = vpop.xlane.xlu0 %2699
    %v2701 = vsel %vm94, %v2683, 0.0
    %2702 = vadd.xlane.f32.xlu0 %v2701
    %v2703 = vpop.xlane.xlu0 %2702
    %v2704 = vsel %vm94, %v2684, 0.0
    %2705 = vadd.xlane.f32.xlu0 %v2704
    %v2706 = vpop.xlane.xlu0 %2705
    %v2707 = vsel %vm94, %v2685, 0.0
    %2708 = vadd.xlane.f32.xlu0 %v2707
    %v2709 = vpop.xlane.xlu0 %2708
    %v2710 = vsel %vm94, %v2686, 0.0
    %2711 = vadd.xlane.f32.xlu0 %v2710
    %v2712 = vpop.xlane.xlu0 %2711
    %v2713 = vsel %vm94, %v2687, 0.0
    %2714 = vadd.xlane.f32.xlu0 %v2713
    %v2715 = vpop.xlane.xlu0 %2714
    %v2716 = vsel %vm94, %v2688, 0.0
    %2717 = vadd.xlane.f32.xlu0 %v2716
    %v2718 = vpop.xlane.xlu0 %2717
    %v2719 = vsel %vm94, %v2689, 0.0
    %2720 = vadd.xlane.f32.xlu0 %v2719
    %v2721 = vpop.xlane.xlu0 %2720
    %v2722 = vsel %vm94, %v2690, 0.0
    %2723 = vadd.xlane.f32.xlu0 %v2722
    %v2724 = vpop.xlane.xlu0 %2723
    %v2725 = vsel %vm94, %v2691, 0.0
    %2726 = vadd.xlane.f32.xlu0 %v2725
    %v2727 = vpop.xlane.xlu0 %2726
    %v2728 = vmul.f32 %v2694, %v137
    %v2729 = vmul.f32 %v2697, %v137
    %v2730 = vmul.f32 %v2700, %v137
    %v2731 = vmul.f32 %v2703, %v137
    %v2732 = vmul.f32 %v2706, %v137
    %v2733 = vmul.f32 %v2709, %v137
    %v2734 = vmul.f32 %v2712, %v137
    %v2735 = vmul.f32 %v2715, %v137
    %v2736 = vmul.f32 %v2718, %v137
    %v2737 = vmul.f32 %v2721, %v137
    %v2738 = vmul.f32 %v2724, %v137
    %v2739 = vmul.f32 %v2727, %v137
    %v2740 = vadd.f32 %v2728, 1e-05
    %v2741 = vadd.f32 %v2729, 1e-05
    %v2742 = vadd.f32 %v2730, 1e-05
    %v2743 = vadd.f32 %v2731, 1e-05
    %v2744 = vadd.f32 %v2732, 1e-05
    %v2745 = vadd.f32 %v2733, 1e-05
    %v2746 = vadd.f32 %v2734, 1e-05
    %v2747 = vadd.f32 %v2735, 1e-05
    %v2748 = vadd.f32 %v2736, 1e-05
    %v2749 = vadd.f32 %v2737, 1e-05
    %v2750 = vadd.f32 %v2738, 1e-05
    %v2751 = vadd.f32 %v2739, 1e-05
    %v2752 = vrsqrt.pop %v2740
    %v2753 = vmul.f32 %v2752, %v2740
    %v2754 = vmul.f32 %v2753, %v2752
    %v2755 = vmul.f32 0.5, %v2754
    %v2756 = vsub.f32 1.5, %v2755
    %v2757 = vmul.f32 %v2752, %v2756
    %vm2758 = vweird.f32 %v2740
    %vm2759 = vweird.f32 %v2752
    %vm2760 = vmor %vm2758, %vm2759
    %v2761 = vsel %vm2760, %v2752, %v2757
    %v2762 = vrsqrt.pop %v2741
    %v2763 = vmul.f32 %v2762, %v2741
    %v2764 = vmul.f32 %v2763, %v2762
    %v2765 = vmul.f32 0.5, %v2764
    %v2766 = vsub.f32 1.5, %v2765
    %v2767 = vmul.f32 %v2762, %v2766
    %vm2768 = vweird.f32 %v2741
    %vm2769 = vweird.f32 %v2762
    %vm2770 = vmor %vm2768, %vm2769
    %v2771 = vsel %vm2770, %v2762, %v2767
    %v2772 = vrsqrt.pop %v2742
    %v2773 = vmul.f32 %v2772, %v2742
    %v2774 = vmul.f32 %v2773, %v2772
    %v2775 = vmul.f32 0.5, %v2774
    %v2776 = vsub.f32 1.5, %v2775
    %v2777 = vmul.f32 %v2772, %v2776
    %vm2778 = vweird.f32 %v2742
    %vm2779 = vweird.f32 %v2772
    %vm2780 = vmor %vm2778, %vm2779
    %v2781 = vsel %vm2780, %v2772, %v2777
    %v2782 = vrsqrt.pop %v2743
    %v2783 = vmul.f32 %v2782, %v2743
    %v2784 = vmul.f32 %v2783, %v2782
    %v2785 = vmul.f32 0.5, %v2784
    %v2786 = vsub.f32 1.5, %v2785
    %v2787 = vmul.f32 %v2782, %v2786
    %vm2788 = vweird.f32 %v2743
    %vm2789 = vweird.f32 %v2782
    %vm2790 = vmor %vm2788, %vm2789
    %v2791 = vsel %vm2790, %v2782, %v2787
    %v2792 = vrsqrt.pop %v2744
    %v2793 = vmul.f32 %v2792, %v2744
    %v2794 = vmul.f32 %v2793, %v2792
    %v2795 = vmul.f32 0.5, %v2794
    %v2796 = vsub.f32 1.5, %v2795
    %v2797 = vmul.f32 %v2792, %v2796
    %vm2798 = vweird.f32 %v2744
    %vm2799 = vweird.f32 %v2792
    %vm2800 = vmor %vm2798, %vm2799
    %v2801 = vsel %vm2800, %v2792, %v2797
    %v2802 = vrsqrt.pop %v2745
    %v2803 = vmul.f32 %v2802, %v2745
    %v2804 = vmul.f32 %v2803, %v2802
    %v2805 = vmul.f32 0.5, %v2804
    %v2806 = vsub.f32 1.5, %v2805
    %v2807 = vmul.f32 %v2802, %v2806
    %vm2808 = vweird.f32 %v2745
    %vm2809 = vweird.f32 %v2802
    %vm2810 = vmor %vm2808, %vm2809
    %v2811 = vsel %vm2810, %v2802, %v2807
    %v2812 = vrsqrt.pop %v2746
    %v2813 = vmul.f32 %v2812, %v2746
    %v2814 = vmul.f32 %v2813, %v2812
    %v2815 = vmul.f32 0.5, %v2814
    %v2816 = vsub.f32 1.5, %v2815
    %v2817 = vmul.f32 %v2812, %v2816
    %vm2818 = vweird.f32 %v2746
    %vm2819 = vweird.f32 %v2812
    %vm2820 = vmor %vm2818, %vm2819
    %v2821 = vsel %vm2820, %v2812, %v2817
    %v2822 = vrsqrt.pop %v2747
    %v2823 = vmul.f32 %v2822, %v2747
    %v2824 = vmul.f32 %v2823, %v2822
    %v2825 = vmul.f32 0.5, %v2824
    %v2826 = vsub.f32 1.5, %v2825
    %v2827 = vmul.f32 %v2822, %v2826
    %vm2828 = vweird.f32 %v2747
    %vm2829 = vweird.f32 %v2822
    %vm2830 = vmor %vm2828, %vm2829
    %v2831 = vsel %vm2830, %v2822, %v2827
    %v2832 = vrsqrt.pop %v2748
    %v2833 = vmul.f32 %v2832, %v2748
    %v2834 = vmul.f32 %v2833, %v2832
    %v2835 = vmul.f32 0.5, %v2834
    %v2836 = vsub.f32 1.5, %v2835
    %v2837 = vmul.f32 %v2832, %v2836
    %vm2838 = vweird.f32 %v2748
    %vm2839 = vweird.f32 %v2832
    %vm2840 = vmor %vm2838, %vm2839
    %v2841 = vsel %vm2840, %v2832, %v2837
    %v2842 = vrsqrt.pop %v2749
    %v2843 = vmul.f32 %v2842, %v2749
    %v2844 = vmul.f32 %v2843, %v2842
    %v2845 = vmul.f32 0.5, %v2844
    %v2846 = vsub.f32 1.5, %v2845
    %v2847 = vmul.f32 %v2842, %v2846
    %vm2848 = vweird.f32 %v2749
    %vm2849 = vweird.f32 %v2842
    %vm2850 = vmor %vm2848, %vm2849
    %v2851 = vsel %vm2850, %v2842, %v2847
    %v2852 = vrsqrt.pop %v2750
    %v2853 = vmul.f32 %v2852, %v2750
    %v2854 = vmul.f32 %v2853, %v2852
    %v2855 = vmul.f32 0.5, %v2854
    %v2856 = vsub.f32 1.5, %v2855
    %v2857 = vmul.f32 %v2852, %v2856
    %vm2858 = vweird.f32 %v2750
    %vm2859 = vweird.f32 %v2852
    %vm2860 = vmor %vm2858, %vm2859
    %v2861 = vsel %vm2860, %v2852, %v2857
    %v2862 = vrsqrt.pop %v2751
    %v2863 = vmul.f32 %v2862, %v2751
    %v2864 = vmul.f32 %v2863, %v2862
    %v2865 = vmul.f32 0.5, %v2864
    %v2866 = vsub.f32 1.5, %v2865
    %v2867 = vmul.f32 %v2862, %v2866
    %vm2868 = vweird.f32 %v2751
    %vm2869 = vweird.f32 %v2862
    %vm2870 = vmor %vm2868, %vm2869
    %v2871 = vsel %vm2870, %v2862, %v2867
    %v2872 = vmul.f32 %v2668, %v2761
    %v2873 = vmul.f32 %v2669, %v2771
    %v2874 = vmul.f32 %v2670, %v2781
    %v2875 = vmul.f32 %v2671, %v2791
    %v2876 = vmul.f32 %v2672, %v2801
    %v2877 = vmul.f32 %v2673, %v2811
    %v2878 = vmul.f32 %v2674, %v2821
    %v2879 = vmul.f32 %v2675, %v2831
    %v2880 = vmul.f32 %v2676, %v2841
    %v2881 = vmul.f32 %v2677, %v2851
    %v2882 = vmul.f32 %v2678, %v2861
    %v2883 = vmul.f32 %v2679, %v2871
    %v2885 = vperm.slane %v2617, 0
    %v2887 = vmul.f32 %v2872, %v2885
    %v2888 = vmul.f32 %v2873, %v2885
    %v2889 = vmul.f32 %v2874, %v2885
    %v2890 = vmul.f32 %v2875, %v2885
    %v2891 = vmul.f32 %v2876, %v2885
    %v2892 = vmul.f32 %v2877, %v2885
    %v2893 = vmul.f32 %v2878, %v2885
    %v2894 = vmul.f32 %v2879, %v2885
    %v2895 = vmul.f32 %v2880, %v2885
    %v2896 = vmul.f32 %v2881, %v2885
    %v2897 = vmul.f32 %v2882, %v2885
    %v2898 = vmul.f32 %v2883, %v2885
    %v2900 = vperm.slane %v2619, 0
    %v2902 = vadd.f32 %v2887, %v2900
    %v2903 = vadd.f32 %v2888, %v2900
    %v2904 = vadd.f32 %v2889, %v2900
    %v2905 = vadd.f32 %v2890, %v2900
    %v2906 = vadd.f32 %v2891, %v2900
    %v2907 = vadd.f32 %v2892, %v2900
    %v2908 = vadd.f32 %v2893, %v2900
    %v2909 = vadd.f32 %v2894, %v2900
    %v2910 = vadd.f32 %v2895, %v2900
    %v2911 = vadd.f32 %v2896, %v2900
    %v2912 = vadd.f32 %v2897, %v2900
    %v2913 = vadd.f32 %v2898, %v2900
    %v2914 = vpack.c.bf16 %v2903, %v2902
    %v2915 = vpack.c.bf16 %v2905, %v2904
    %v2916 = vpack.c.bf16 %v2907, %v2906
    %v2917 = vpack.c.bf16 %v2909, %v2908
    %v2918 = vpack.c.bf16 %v2911, %v2910
    %v2919 = vpack.c.bf16 %v2913, %v2912
    %s2920 = scalar_lea.vmem %s7, 16
    %v2921 = vld [vmem:[%s2920] sm:$0xf]
    %v2922 = vld [vmem:[%s2920 + $0x4] sm:$0xf]
    %v2923 = vld [vmem:[%s2920 + $0x8] sm:$0xf]
    %v2924 = vld [vmem:[%s2920 + $0xc] sm:$0xf]
    %s2925 = scalar_lea.vmem %s8, 1
    %v2926 = vld [vmem:[%s2925] sm:$0x1]
    %v2928 = vperm.slane %v2926, 0
    %v2934 = vunpack.c.l.b16 %v2921
    %v2935 = vunpack.c.l.b16 %v2922
    %v2936 = vunpack.c.l.b16 %v2923
    %v2937 = vunpack.c.l.b16 %v2924
    %v2938 = vpack.c.b16 %v2935, %v2934
    %v2939 = vpack.c.b16 %v2937, %v2936
    %v2943 = vsel %vm94, %v2914, 0
    %v2946 = vsel %vm94, %v2915, 0
    %v2949 = vsel %vm94, %v2916, 0
    %v2952 = vsel %vm94, %v2917, 0
    %v2955 = vsel %vm94, %v2918, 0
    %v2958 = vsel %vm94, %v2919, 0
    %2960 = vmatpush.bf16.msra.mxu0 0
    %2961 = vmatpush.bf16.msra.mxu0 0
    %2962 = vmatpush.bf16.msra.mxu0 0
    %2963 = vmatpush.bf16.msra.mxu0 0
    %2964 = vmatpush.bf16.msra.mxu0 0
    %2965 = vmatpush.bf16.msra.mxu0 0
    %2966 = vmatpush.bf16.msra.mxu0 %v2939
    %2967 = vmatpush.bf16.msra.mxu0 %v2938
    %2968 = vmatmul.bf16.gmra.mxu0 %v2943
    %v2969 = vpop.f32.mrf.mxu0
    %v2970 = vadd.f32 %v2928, %v2969
    %v2971 = vpop.f32.mrf.mxu0
    %v2972 = vadd.f32 %v2928, %v2971
    %2973 = vmatmul.bf16.gmra.mxu0 %v2946
    %v2974 = vpop.f32.mrf.mxu0
    %v2975 = vadd.f32 %v2928, %v2974
    %v2976 = vpop.f32.mrf.mxu0
    %v2977 = vadd.f32 %v2928, %v2976
    %2978 = vmatmul.bf16.gmra.mxu0 %v2949
    %v2979 = vpop.f32.mrf.mxu0
    %v2980 = vadd.f32 %v2928, %v2979
    %v2981 = vpop.f32.mrf.mxu0
    %v2982 = vadd.f32 %v2928, %v2981
    %2983 = vmatmul.bf16.gmra.mxu0 %v2952
    %v2984 = vpop.f32.mrf.mxu0
    %v2985 = vadd.f32 %v2928, %v2984
    %v2986 = vpop.f32.mrf.mxu0
    %v2987 = vadd.f32 %v2928, %v2986
    %2988 = vmatmul.bf16.gmra.mxu0 %v2955
    %v2989 = vpop.f32.mrf.mxu0
    %v2990 = vadd.f32 %v2928, %v2989
    %v2991 = vpop.f32.mrf.mxu0
    %v2992 = vadd.f32 %v2928, %v2991
    %2993 = vmatmul.bf16.gmra.mxu0 %v2958
    %v2994 = vpop.f32.mrf.mxu0
    %v2995 = vadd.f32 %v2928, %v2994
    %v2996 = vpop.f32.mrf.mxu0
    %v2997 = vadd.f32 %v2928, %v2996
    %2998 = vdwg.mxu0
    %v2999 = vpack.c.bf16 %v2972, %v2970
    %v3000 = vpack.c.bf16 %v2977, %v2975
    %v3001 = vpack.c.bf16 %v2982, %v2980
    %v3002 = vpack.c.bf16 %v2987, %v2985
    %v3003 = vpack.c.bf16 %v2992, %v2990
    %v3004 = vpack.c.bf16 %v2997, %v2995
    %3011 = vrot.lane.b32.xlu0 %v2999, 96
    %v3012 = vpop.permute.xlu0 %3011
    %3013 = vrot.lane.b32.xlu0 %v3000, 96
    %v3014 = vpop.permute.xlu0 %3013
    %3015 = vrot.lane.b32.xlu0 %v3001, 96
    %v3016 = vpop.permute.xlu0 %3015
    %3017 = vrot.lane.b32.xlu0 %v3002, 96
    %v3018 = vpop.permute.xlu0 %3017
    %3019 = vrot.lane.b32.xlu0 %v3003, 96
    %v3020 = vpop.permute.xlu0 %3019
    %3021 = vrot.lane.b32.xlu0 %v3004, 96
    %v3022 = vpop.permute.xlu0 %3021
    %v3024 = vsel %vm503, %v2999, 0
    %v3027 = vsel %vm503, %v3000, 0
    %v3030 = vsel %vm503, %v3001, 0
    %v3033 = vsel %vm503, %v3002, 0
    %v3036 = vsel %vm503, %v3003, 0
    %v3039 = vsel %vm503, %v3004, 0
    %v3042 = vsel %vm503, %v3012, 0
    %v3045 = vsel %vm503, %v3014, 0
    %v3048 = vsel %vm503, %v3016, 0
    %v3051 = vsel %vm503, %v3018, 0
    %v3054 = vsel %vm503, %v3020, 0
    %v3057 = vsel %vm503, %v3022, 0
    %3059 = vmatpush.bf16.xpose.msra.mxu0 0
    %3060 = vmatpush.bf16.xpose.msra.mxu0 0
    %3061 = vmatpush.bf16.xpose.msra.mxu0 %v3057
    %3062 = vmatpush.bf16.xpose.msra.mxu0 %v3054
    %3063 = vmatpush.bf16.xpose.msra.mxu0 %v3051
    %3064 = vmatpush.bf16.xpose.msra.mxu0 %v3048
    %3065 = vmatpush.bf16.xpose.msra.mxu0 %v3045
    %3066 = vmatpush.bf16.xpose.msra.mxu0 %v3042
    %3067 = vmatmul.bf16.gmra.mxu0 %v3024
    %v3068 = vpop.f32.mrf.mxu0
    %v3069 = vadd.f32 0.0, %v3068
    %v3070 = vpop.f32.mrf.mxu0
    %v3071 = vadd.f32 0.0, %v3070
    %3072 = vmatmul.bf16.gmra.mxu0 %v3027
    %v3073 = vpop.f32.mrf.mxu0
    %v3074 = vadd.f32 0.0, %v3073
    %v3075 = vpop.f32.mrf.mxu0
    %v3076 = vadd.f32 0.0, %v3075
    %3077 = vmatmul.bf16.gmra.mxu0 %v3030
    %v3078 = vpop.f32.mrf.mxu0
    %v3079 = vadd.f32 0.0, %v3078
    %v3080 = vpop.f32.mrf.mxu0
    %v3081 = vadd.f32 0.0, %v3080
    %3082 = vmatmul.bf16.gmra.mxu0 %v3033
    %v3083 = vpop.f32.mrf.mxu0
    %v3084 = vadd.f32 0.0, %v3083
    %v3085 = vpop.f32.mrf.mxu0
    %v3086 = vadd.f32 0.0, %v3085
    %3087 = vmatmul.bf16.gmra.mxu0 %v3036
    %v3088 = vpop.f32.mrf.mxu0
    %v3089 = vadd.f32 0.0, %v3088
    %v3090 = vpop.f32.mrf.mxu0
    %v3091 = vadd.f32 0.0, %v3090
    %3092 = vmatmul.bf16.gmra.mxu0 %v3039
    %v3093 = vpop.f32.mrf.mxu0
    %v3094 = vadd.f32 0.0, %v3093
    %v3095 = vpop.f32.mrf.mxu0
    %v3096 = vadd.f32 0.0, %v3095
    %3097 = vdwg.mxu0
    %v3098 = vmul.f32 %v3069, 0.25
    %v3099 = vmul.f32 %v3071, 0.25
    %v3100 = vmul.f32 %v3074, 0.25
    %v3101 = vmul.f32 %v3076, 0.25
    %v3102 = vmul.f32 %v3079, 0.25
    %v3103 = vmul.f32 %v3081, 0.25
    %v3104 = vmul.f32 %v3084, 0.25
    %v3105 = vmul.f32 %v3086, 0.25
    %v3106 = vmul.f32 %v3089, 0.25
    %v3107 = vmul.f32 %v3091, 0.25
    %v3108 = vmul.f32 %v3094, 0.25
    %v3109 = vmul.f32 %v3096, 0.25
    %v3110 = vadd.f32 %v3098, %v67
    %v3111 = vadd.f32 %v3099, %v68
    %v3112 = vadd.f32 %v3100, %v69
    %v3113 = vadd.f32 %v3101, %v70
    %v3114 = vadd.f32 %v3102, %v71
    %v3115 = vadd.f32 %v3103, %v72
    %v3116 = vadd.f32 %v3104, %v73
    %v3117 = vadd.f32 %v3105, %v74
    %v3118 = vadd.f32 %v3106, %v75
    %v3119 = vadd.f32 %v3107, %v76
    %v3120 = vadd.f32 %v3108, %v77
    %v3121 = vadd.f32 %v3109, %v78
    %v3122 = vsel %vm603, %v3110, -inf
    %3123 = vmax.xlane.f32.xlu0 %v3122
    %v3124 = vpop.xlane.xlu0 %3123
    %v3125 = vsel %vm603, %v3111, -inf
    %3126 = vmax.xlane.f32.xlu0 %v3125
    %v3127 = vpop.xlane.xlu0 %3126
    %v3128 = vsel %vm603, %v3112, -inf
    %3129 = vmax.xlane.f32.xlu0 %v3128
    %v3130 = vpop.xlane.xlu0 %3129
    %v3131 = vsel %vm603, %v3113, -inf
    %3132 = vmax.xlane.f32.xlu0 %v3131
    %v3133 = vpop.xlane.xlu0 %3132
    %v3134 = vsel %vm603, %v3114, -inf
    %3135 = vmax.xlane.f32.xlu0 %v3134
    %v3136 = vpop.xlane.xlu0 %3135
    %v3137 = vsel %vm603, %v3115, -inf
    %3138 = vmax.xlane.f32.xlu0 %v3137
    %v3139 = vpop.xlane.xlu0 %3138
    %v3140 = vsel %vm603, %v3116, -inf
    %3141 = vmax.xlane.f32.xlu0 %v3140
    %v3142 = vpop.xlane.xlu0 %3141
    %v3143 = vsel %vm603, %v3117, -inf
    %3144 = vmax.xlane.f32.xlu0 %v3143
    %v3145 = vpop.xlane.xlu0 %3144
    %v3146 = vsel %vm603, %v3118, -inf
    %3147 = vmax.xlane.f32.xlu0 %v3146
    %v3148 = vpop.xlane.xlu0 %3147
    %v3149 = vsel %vm603, %v3119, -inf
    %3150 = vmax.xlane.f32.xlu0 %v3149
    %v3151 = vpop.xlane.xlu0 %3150
    %v3152 = vsel %vm603, %v3120, -inf
    %3153 = vmax.xlane.f32.xlu0 %v3152
    %v3154 = vpop.xlane.xlu0 %3153
    %v3155 = vsel %vm603, %v3121, -inf
    %3156 = vmax.xlane.f32.xlu0 %v3155
    %v3157 = vpop.xlane.xlu0 %3156
    %v3158 = vsub.f32 %v3110, %v3124
    %v3159 = vsub.f32 %v3111, %v3127
    %v3160 = vsub.f32 %v3112, %v3130
    %v3161 = vsub.f32 %v3113, %v3133
    %v3162 = vsub.f32 %v3114, %v3136
    %v3163 = vsub.f32 %v3115, %v3139
    %v3164 = vsub.f32 %v3116, %v3142
    %v3165 = vsub.f32 %v3117, %v3145
    %v3166 = vsub.f32 %v3118, %v3148
    %v3167 = vsub.f32 %v3119, %v3151
    %v3168 = vsub.f32 %v3120, %v3154
    %v3169 = vsub.f32 %v3121, %v3157
    %v3170 = vmul.f32 %v3158, 1.442695
    %v3171 = vpow.pop %v3170
    %v3172 = vmul.f32 %v3159, 1.442695
    %v3173 = vpow.pop %v3172
    %v3174 = vmul.f32 %v3160, 1.442695
    %v3175 = vpow.pop %v3174
    %v3176 = vmul.f32 %v3161, 1.442695
    %v3177 = vpow.pop %v3176
    %v3178 = vmul.f32 %v3162, 1.442695
    %v3179 = vpow.pop %v3178
    %v3180 = vmul.f32 %v3163, 1.442695
    %v3181 = vpow.pop %v3180
    %v3182 = vmul.f32 %v3164, 1.442695
    %v3183 = vpow.pop %v3182
    %v3184 = vmul.f32 %v3165, 1.442695
    %v3185 = vpow.pop %v3184
    %v3186 = vmul.f32 %v3166, 1.442695
    %v3187 = vpow.pop %v3186
    %v3188 = vmul.f32 %v3167, 1.442695
    %v3189 = vpow.pop %v3188
    %v3190 = vmul.f32 %v3168, 1.442695
    %v3191 = vpow.pop %v3190
    %v3192 = vmul.f32 %v3169, 1.442695
    %v3193 = vpow.pop %v3192
    %v3194 = vsel %vm603, %v3171, 0.0
    %3195 = vadd.xlane.f32.xlu0 %v3194
    %v3196 = vpop.xlane.xlu0 %3195
    %v3197 = vsel %vm603, %v3173, 0.0
    %3198 = vadd.xlane.f32.xlu0 %v3197
    %v3199 = vpop.xlane.xlu0 %3198
    %v3200 = vsel %vm603, %v3175, 0.0
    %3201 = vadd.xlane.f32.xlu0 %v3200
    %v3202 = vpop.xlane.xlu0 %3201
    %v3203 = vsel %vm603, %v3177, 0.0
    %3204 = vadd.xlane.f32.xlu0 %v3203
    %v3205 = vpop.xlane.xlu0 %3204
    %v3206 = vsel %vm603, %v3179, 0.0
    %3207 = vadd.xlane.f32.xlu0 %v3206
    %v3208 = vpop.xlane.xlu0 %3207
    %v3209 = vsel %vm603, %v3181, 0.0
    %3210 = vadd.xlane.f32.xlu0 %v3209
    %v3211 = vpop.xlane.xlu0 %3210
    %v3212 = vsel %vm603, %v3183, 0.0
    %3213 = vadd.xlane.f32.xlu0 %v3212
    %v3214 = vpop.xlane.xlu0 %3213
    %v3215 = vsel %vm603, %v3185, 0.0
    %3216 = vadd.xlane.f32.xlu0 %v3215
    %v3217 = vpop.xlane.xlu0 %3216
    %v3218 = vsel %vm603, %v3187, 0.0
    %3219 = vadd.xlane.f32.xlu0 %v3218
    %v3220 = vpop.xlane.xlu0 %3219
    %v3221 = vsel %vm603, %v3189, 0.0
    %3222 = vadd.xlane.f32.xlu0 %v3221
    %v3223 = vpop.xlane.xlu0 %3222
    %v3224 = vsel %vm603, %v3191, 0.0
    %3225 = vadd.xlane.f32.xlu0 %v3224
    %v3226 = vpop.xlane.xlu0 %3225
    %v3227 = vsel %vm603, %v3193, 0.0
    %3228 = vadd.xlane.f32.xlu0 %v3227
    %v3229 = vpop.xlane.xlu0 %3228
    %v3230 = vrcp.pop %v3196
    %v3231 = vmul.f32 %v3196, %v3230
    %v3232 = vsub.f32 1.0, %v3231
    %v3233 = vmul.f32 %v3230, %v3232
    %v3234 = vadd.f32 %v3230, %v3233
    %vm3235 = vweird.f32 %v3196
    %vm3236 = vweird.f32 %v3230
    %vm3237 = vmor %vm3235, %vm3236
    %v3238 = vsel %vm3237, %v3230, %v3234
    %v3239 = vand.u32 2147483647, %v3196
    %vm3240 = vcmp.eq.f32.partialorder %v3239, 8.507059e+37
    %v3241 = vand.u32 %v3196, 2147483648
    %v3242 = vor.u32 1.1754944e-38, %v3241
    %v3243 = vsel %vm3240, %v3242, %v3238
    %v3244 = vmul.f32 %v3171, %v3243
    %v3245 = vrcp.pop %v3199
    %v3246 = vmul.f32 %v3199, %v3245
    %v3247 = vsub.f32 1.0, %v3246
    %v3248 = vmul.f32 %v3245, %v3247
    %v3249 = vadd.f32 %v3245, %v3248
    %vm3250 = vweird.f32 %v3199
    %vm3251 = vweird.f32 %v3245
    %vm3252 = vmor %vm3250, %vm3251
    %v3253 = vsel %vm3252, %v3245, %v3249
    %v3254 = vand.u32 2147483647, %v3199
    %vm3255 = vcmp.eq.f32.partialorder %v3254, 8.507059e+37
    %v3256 = vand.u32 %v3199, 2147483648
    %v3257 = vor.u32 1.1754944e-38, %v3256
    %v3258 = vsel %vm3255, %v3257, %v3253
    %v3259 = vmul.f32 %v3173, %v3258
    %v3260 = vrcp.pop %v3202
    %v3261 = vmul.f32 %v3202, %v3260
    %v3262 = vsub.f32 1.0, %v3261
    %v3263 = vmul.f32 %v3260, %v3262
    %v3264 = vadd.f32 %v3260, %v3263
    %vm3265 = vweird.f32 %v3202
    %vm3266 = vweird.f32 %v3260
    %vm3267 = vmor %vm3265, %vm3266
    %v3268 = vsel %vm3267, %v3260, %v3264
    %v3269 = vand.u32 2147483647, %v3202
    %vm3270 = vcmp.eq.f32.partialorder %v3269, 8.507059e+37
    %v3271 = vand.u32 %v3202, 2147483648
    %v3272 = vor.u32 1.1754944e-38, %v3271
    %v3273 = vsel %vm3270, %v3272, %v3268
    %v3274 = vmul.f32 %v3175, %v3273
    %v3275 = vrcp.pop %v3205
    %v3276 = vmul.f32 %v3205, %v3275
    %v3277 = vsub.f32 1.0, %v3276
    %v3278 = vmul.f32 %v3275, %v3277
    %v3279 = vadd.f32 %v3275, %v3278
    %vm3280 = vweird.f32 %v3205
    %vm3281 = vweird.f32 %v3275
    %vm3282 = vmor %vm3280, %vm3281
    %v3283 = vsel %vm3282, %v3275, %v3279
    %v3284 = vand.u32 2147483647, %v3205
    %vm3285 = vcmp.eq.f32.partialorder %v3284, 8.507059e+37
    %v3286 = vand.u32 %v3205, 2147483648
    %v3287 = vor.u32 1.1754944e-38, %v3286
    %v3288 = vsel %vm3285, %v3287, %v3283
    %v3289 = vmul.f32 %v3177, %v3288
    %v3290 = vrcp.pop %v3208
    %v3291 = vmul.f32 %v3208, %v3290
    %v3292 = vsub.f32 1.0, %v3291
    %v3293 = vmul.f32 %v3290, %v3292
    %v3294 = vadd.f32 %v3290, %v3293
    %vm3295 = vweird.f32 %v3208
    %vm3296 = vweird.f32 %v3290
    %vm3297 = vmor %vm3295, %vm3296
    %v3298 = vsel %vm3297, %v3290, %v3294
    %v3299 = vand.u32 2147483647, %v3208
    %vm3300 = vcmp.eq.f32.partialorder %v3299, 8.507059e+37
    %v3301 = vand.u32 %v3208, 2147483648
    %v3302 = vor.u32 1.1754944e-38, %v3301
    %v3303 = vsel %vm3300, %v3302, %v3298
    %v3304 = vmul.f32 %v3179, %v3303
    %v3305 = vrcp.pop %v3211
    %v3306 = vmul.f32 %v3211, %v3305
    %v3307 = vsub.f32 1.0, %v3306
    %v3308 = vmul.f32 %v3305, %v3307
    %v3309 = vadd.f32 %v3305, %v3308
    %vm3310 = vweird.f32 %v3211
    %vm3311 = vweird.f32 %v3305
    %vm3312 = vmor %vm3310, %vm3311
    %v3313 = vsel %vm3312, %v3305, %v3309
    %v3314 = vand.u32 2147483647, %v3211
    %vm3315 = vcmp.eq.f32.partialorder %v3314, 8.507059e+37
    %v3316 = vand.u32 %v3211, 2147483648
    %v3317 = vor.u32 1.1754944e-38, %v3316
    %v3318 = vsel %vm3315, %v3317, %v3313
    %v3319 = vmul.f32 %v3181, %v3318
    %v3320 = vrcp.pop %v3214
    %v3321 = vmul.f32 %v3214, %v3320
    %v3322 = vsub.f32 1.0, %v3321
    %v3323 = vmul.f32 %v3320, %v3322
    %v3324 = vadd.f32 %v3320, %v3323
    %vm3325 = vweird.f32 %v3214
    %vm3326 = vweird.f32 %v3320
    %vm3327 = vmor %vm3325, %vm3326
    %v3328 = vsel %vm3327, %v3320, %v3324
    %v3329 = vand.u32 2147483647, %v3214
    %vm3330 = vcmp.eq.f32.partialorder %v3329, 8.507059e+37
    %v3331 = vand.u32 %v3214, 2147483648
    %v3332 = vor.u32 1.1754944e-38, %v3331
    %v3333 = vsel %vm3330, %v3332, %v3328
    %v3334 = vmul.f32 %v3183, %v3333
    %v3335 = vrcp.pop %v3217
    %v3336 = vmul.f32 %v3217, %v3335
    %v3337 = vsub.f32 1.0, %v3336
    %v3338 = vmul.f32 %v3335, %v3337
    %v3339 = vadd.f32 %v3335, %v3338
    %vm3340 = vweird.f32 %v3217
    %vm3341 = vweird.f32 %v3335
    %vm3342 = vmor %vm3340, %vm3341
    %v3343 = vsel %vm3342, %v3335, %v3339
    %v3344 = vand.u32 2147483647, %v3217
    %vm3345 = vcmp.eq.f32.partialorder %v3344, 8.507059e+37
    %v3346 = vand.u32 %v3217, 2147483648
    %v3347 = vor.u32 1.1754944e-38, %v3346
    %v3348 = vsel %vm3345, %v3347, %v3343
    %v3349 = vmul.f32 %v3185, %v3348
    %v3350 = vrcp.pop %v3220
    %v3351 = vmul.f32 %v3220, %v3350
    %v3352 = vsub.f32 1.0, %v3351
    %v3353 = vmul.f32 %v3350, %v3352
    %v3354 = vadd.f32 %v3350, %v3353
    %vm3355 = vweird.f32 %v3220
    %vm3356 = vweird.f32 %v3350
    %vm3357 = vmor %vm3355, %vm3356
    %v3358 = vsel %vm3357, %v3350, %v3354
    %v3359 = vand.u32 2147483647, %v3220
    %vm3360 = vcmp.eq.f32.partialorder %v3359, 8.507059e+37
    %v3361 = vand.u32 %v3220, 2147483648
    %v3362 = vor.u32 1.1754944e-38, %v3361
    %v3363 = vsel %vm3360, %v3362, %v3358
    %v3364 = vmul.f32 %v3187, %v3363
    %v3365 = vrcp.pop %v3223
    %v3366 = vmul.f32 %v3223, %v3365
    %v3367 = vsub.f32 1.0, %v3366
    %v3368 = vmul.f32 %v3365, %v3367
    %v3369 = vadd.f32 %v3365, %v3368
    %vm3370 = vweird.f32 %v3223
    %vm3371 = vweird.f32 %v3365
    %vm3372 = vmor %vm3370, %vm3371
    %v3373 = vsel %vm3372, %v3365, %v3369
    %v3374 = vand.u32 2147483647, %v3223
    %vm3375 = vcmp.eq.f32.partialorder %v3374, 8.507059e+37
    %v3376 = vand.u32 %v3223, 2147483648
    %v3377 = vor.u32 1.1754944e-38, %v3376
    %v3378 = vsel %vm3375, %v3377, %v3373
    %v3379 = vmul.f32 %v3189, %v3378
    %v3380 = vrcp.pop %v3226
    %v3381 = vmul.f32 %v3226, %v3380
    %v3382 = vsub.f32 1.0, %v3381
    %v3383 = vmul.f32 %v3380, %v3382
    %v3384 = vadd.f32 %v3380, %v3383
    %vm3385 = vweird.f32 %v3226
    %vm3386 = vweird.f32 %v3380
    %vm3387 = vmor %vm3385, %vm3386
    %v3388 = vsel %vm3387, %v3380, %v3384
    %v3389 = vand.u32 2147483647, %v3226
    %vm3390 = vcmp.eq.f32.partialorder %v3389, 8.507059e+37
    %v3391 = vand.u32 %v3226, 2147483648
    %v3392 = vor.u32 1.1754944e-38, %v3391
    %v3393 = vsel %vm3390, %v3392, %v3388
    %v3394 = vmul.f32 %v3191, %v3393
    %v3395 = vrcp.pop %v3229
    %v3396 = vmul.f32 %v3229, %v3395
    %v3397 = vsub.f32 1.0, %v3396
    %v3398 = vmul.f32 %v3395, %v3397
    %v3399 = vadd.f32 %v3395, %v3398
    %vm3400 = vweird.f32 %v3229
    %vm3401 = vweird.f32 %v3395
    %vm3402 = vmor %vm3400, %vm3401
    %v3403 = vsel %vm3402, %v3395, %v3399
    %v3404 = vand.u32 2147483647, %v3229
    %vm3405 = vcmp.eq.f32.partialorder %v3404, 8.507059e+37
    %v3406 = vand.u32 %v3229, 2147483648
    %v3407 = vor.u32 1.1754944e-38, %v3406
    %v3408 = vsel %vm3405, %v3407, %v3403
    %v3409 = vmul.f32 %v3193, %v3408
    %v3410 = vpack.c.bf16 %v3259, %v3244
    %v3411 = vpack.c.bf16 %v3289, %v3274
    %v3412 = vpack.c.bf16 %v3319, %v3304
    %v3413 = vpack.c.bf16 %v3349, %v3334
    %v3414 = vpack.c.bf16 %v3379, %v3364
    %v3415 = vpack.c.bf16 %v3409, %v3394
    %3416 = vrot.lane.b32.xlu0 %v2999, 64
    %v3417 = vpop.permute.xlu0 %3416
    %3418 = vrot.lane.b32.xlu0 %v3000, 64
    %v3419 = vpop.permute.xlu0 %3418
    %3420 = vrot.lane.b32.xlu0 %v3001, 64
    %v3421 = vpop.permute.xlu0 %3420
    %3422 = vrot.lane.b32.xlu0 %v3002, 64
    %v3423 = vpop.permute.xlu0 %3422
    %3424 = vrot.lane.b32.xlu0 %v3003, 64
    %v3425 = vpop.permute.xlu0 %3424
    %3426 = vrot.lane.b32.xlu0 %v3004, 64
    %v3427 = vpop.permute.xlu0 %3426
    %v3435 = vsel %vm603, %v3410, 0
    %v3438 = vsel %vm603, %v3411, 0
    %v3441 = vsel %vm603, %v3412, 0
    %v3444 = vsel %vm603, %v3413, 0
    %v3447 = vsel %vm603, %v3414, 0
    %v3450 = vsel %vm603, %v3415, 0
    %3452 = vmatpush.bf16.msra.mxu0 0
    %3453 = vmatpush.bf16.msra.mxu0 0
    %3454 = vmatpush.bf16.msra.mxu0 %v3427
    %3455 = vmatpush.bf16.msra.mxu0 %v3425
    %3456 = vmatpush.bf16.msra.mxu0 %v3423
    %3457 = vmatpush.bf16.msra.mxu0 %v3421
    %3458 = vmatpush.bf16.msra.mxu0 %v3419
    %3459 = vmatpush.bf16.msra.mxu0 %v3417
    %3460 = vmatmul.bf16.gmra.mxu0 %v3435
    %v3461 = vpop.f32.mrf.mxu0
    %v3462 = vadd.f32 0.0, %v3461
    %v3463 = vpop.f32.mrf.mxu0
    %v3464 = vadd.f32 0.0, %v3463
    %3465 = vmatmul.bf16.gmra.mxu0 %v3438
    %v3466 = vpop.f32.mrf.mxu0
    %v3467 = vadd.f32 0.0, %v3466
    %v3468 = vpop.f32.mrf.mxu0
    %v3469 = vadd.f32 0.0, %v3468
    %3470 = vmatmul.bf16.gmra.mxu0 %v3441
    %v3471 = vpop.f32.mrf.mxu0
    %v3472 = vadd.f32 0.0, %v3471
    %v3473 = vpop.f32.mrf.mxu0
    %v3474 = vadd.f32 0.0, %v3473
    %3475 = vmatmul.bf16.gmra.mxu0 %v3444
    %v3476 = vpop.f32.mrf.mxu0
    %v3477 = vadd.f32 0.0, %v3476
    %v3478 = vpop.f32.mrf.mxu0
    %v3479 = vadd.f32 0.0, %v3478
    %3480 = vmatmul.bf16.gmra.mxu0 %v3447
    %v3481 = vpop.f32.mrf.mxu0
    %v3482 = vadd.f32 0.0, %v3481
    %v3483 = vpop.f32.mrf.mxu0
    %v3484 = vadd.f32 0.0, %v3483
    %3485 = vmatmul.bf16.gmra.mxu0 %v3450
    %v3486 = vpop.f32.mrf.mxu0
    %v3487 = vadd.f32 0.0, %v3486
    %v3488 = vpop.f32.mrf.mxu0
    %v3489 = vadd.f32 0.0, %v3488
    %3490 = vdwg.mxu0
    %3491 = vrot.lane.b32.xlu0 %v2999, 112
    %v3492 = vpop.permute.xlu0 %3491
    %3493 = vrot.lane.b32.xlu0 %v3000, 112
    %v3494 = vpop.permute.xlu0 %3493
    %3495 = vrot.lane.b32.xlu0 %v3001, 112
    %v3496 = vpop.permute.xlu0 %3495
    %3497 = vrot.lane.b32.xlu0 %v3002, 112
    %v3498 = vpop.permute.xlu0 %3497
    %3499 = vrot.lane.b32.xlu0 %v3003, 112
    %v3500 = vpop.permute.xlu0 %3499
    %3501 = vrot.lane.b32.xlu0 %v3004, 112
    %v3502 = vpop.permute.xlu0 %3501
    %3503 = vrot.lane.b32.xlu0 %v2999, 80
    %v3504 = vpop.permute.xlu0 %3503
    %3505 = vrot.lane.b32.xlu0 %v3000, 80
    %v3506 = vpop.permute.xlu0 %3505
    %3507 = vrot.lane.b32.xlu0 %v3001, 80
    %v3508 = vpop.permute.xlu0 %3507
    %3509 = vrot.lane.b32.xlu0 %v3002, 80
    %v3510 = vpop.permute.xlu0 %3509
    %3511 = vrot.lane.b32.xlu0 %v3003, 80
    %v3512 = vpop.permute.xlu0 %3511
    %3513 = vrot.lane.b32.xlu0 %v3004, 80
    %v3514 = vpop.permute.xlu0 %3513
    %v3516 = vsel %vm503, %v3492, 0
    %v3519 = vsel %vm503, %v3494, 0
    %v3522 = vsel %vm503, %v3496, 0
    %v3525 = vsel %vm503, %v3498, 0
    %v3528 = vsel %vm503, %v3500, 0
    %v3531 = vsel %vm503, %v3502, 0
    %v3534 = vsel %vm503, %v3504, 0
    %v3537 = vsel %vm503, %v3506, 0
    %v3540 = vsel %vm503, %v3508, 0
    %v3543 = vsel %vm503, %v3510, 0
    %v3546 = vsel %vm503, %v3512, 0
    %v3549 = vsel %vm503, %v3514, 0
    %3551 = vmatpush.bf16.xpose.msra.mxu0 0
    %3552 = vmatpush.bf16.xpose.msra.mxu0 0
    %3553 = vmatpush.bf16.xpose.msra.mxu0 %v3549
    %3554 = vmatpush.bf16.xpose.msra.mxu0 %v3546
    %3555 = vmatpush.bf16.xpose.msra.mxu0 %v3543
    %3556 = vmatpush.bf16.xpose.msra.mxu0 %v3540
    %3557 = vmatpush.bf16.xpose.msra.mxu0 %v3537
    %3558 = vmatpush.bf16.xpose.msra.mxu0 %v3534
    %3559 = vmatmul.bf16.gmra.mxu0 %v3516
    %v3560 = vpop.f32.mrf.mxu0
    %v3561 = vadd.f32 0.0, %v3560
    %v3562 = vpop.f32.mrf.mxu0
    %v3563 = vadd.f32 0.0, %v3562
    %3564 = vmatmul.bf16.gmra.mxu0 %v3519
    %v3565 = vpop.f32.mrf.mxu0
    %v3566 = vadd.f32 0.0, %v3565
    %v3567 = vpop.f32.mrf.mxu0
    %v3568 = vadd.f32 0.0, %v3567
    %3569 = vmatmul.bf16.gmra.mxu0 %v3522
    %v3570 = vpop.f32.mrf.mxu0
    %v3571 = vadd.f32 0.0, %v3570
    %v3572 = vpop.f32.mrf.mxu0
    %v3573 = vadd.f32 0.0, %v3572
    %3574 = vmatmul.bf16.gmra.mxu0 %v3525
    %v3575 = vpop.f32.mrf.mxu0
    %v3576 = vadd.f32 0.0, %v3575
    %v3577 = vpop.f32.mrf.mxu0
    %v3578 = vadd.f32 0.0, %v3577
    %3579 = vmatmul.bf16.gmra.mxu0 %v3528
    %v3580 = vpop.f32.mrf.mxu0
    %v3581 = vadd.f32 0.0, %v3580
    %v3582 = vpop.f32.mrf.mxu0
    %v3583 = vadd.f32 0.0, %v3582
    %3584 = vmatmul.bf16.gmra.mxu0 %v3531
    %v3585 = vpop.f32.mrf.mxu0
    %v3586 = vadd.f32 0.0, %v3585
    %v3587 = vpop.f32.mrf.mxu0
    %v3588 = vadd.f32 0.0, %v3587
    %3589 = vdwg.mxu0
    %v3590 = vmul.f32 %v3561, 0.25
    %v3591 = vmul.f32 %v3563, 0.25
    %v3592 = vmul.f32 %v3566, 0.25
    %v3593 = vmul.f32 %v3568, 0.25
    %v3594 = vmul.f32 %v3571, 0.25
    %v3595 = vmul.f32 %v3573, 0.25
    %v3596 = vmul.f32 %v3576, 0.25
    %v3597 = vmul.f32 %v3578, 0.25
    %v3598 = vmul.f32 %v3581, 0.25
    %v3599 = vmul.f32 %v3583, 0.25
    %v3600 = vmul.f32 %v3586, 0.25
    %v3601 = vmul.f32 %v3588, 0.25
    %v3602 = vadd.f32 %v3590, %v67
    %v3603 = vadd.f32 %v3591, %v68
    %v3604 = vadd.f32 %v3592, %v69
    %v3605 = vadd.f32 %v3593, %v70
    %v3606 = vadd.f32 %v3594, %v71
    %v3607 = vadd.f32 %v3595, %v72
    %v3608 = vadd.f32 %v3596, %v73
    %v3609 = vadd.f32 %v3597, %v74
    %v3610 = vadd.f32 %v3598, %v75
    %v3611 = vadd.f32 %v3599, %v76
    %v3612 = vadd.f32 %v3600, %v77
    %v3613 = vadd.f32 %v3601, %v78
    %v3614 = vsel %vm603, %v3602, -inf
    %3615 = vmax.xlane.f32.xlu0 %v3614
    %v3616 = vpop.xlane.xlu0 %3615
    %v3617 = vsel %vm603, %v3603, -inf
    %3618 = vmax.xlane.f32.xlu0 %v3617
    %v3619 = vpop.xlane.xlu0 %3618
    %v3620 = vsel %vm603, %v3604, -inf
    %3621 = vmax.xlane.f32.xlu0 %v3620
    %v3622 = vpop.xlane.xlu0 %3621
    %v3623 = vsel %vm603, %v3605, -inf
    %3624 = vmax.xlane.f32.xlu0 %v3623
    %v3625 = vpop.xlane.xlu0 %3624
    %v3626 = vsel %vm603, %v3606, -inf
    %3627 = vmax.xlane.f32.xlu0 %v3626
    %v3628 = vpop.xlane.xlu0 %3627
    %v3629 = vsel %vm603, %v3607, -inf
    %3630 = vmax.xlane.f32.xlu0 %v3629
    %v3631 = vpop.xlane.xlu0 %3630
    %v3632 = vsel %vm603, %v3608, -inf
    %3633 = vmax.xlane.f32.xlu0 %v3632
    %v3634 = vpop.xlane.xlu0 %3633
    %v3635 = vsel %vm603, %v3609, -inf
    %3636 = vmax.xlane.f32.xlu0 %v3635
    %v3637 = vpop.xlane.xlu0 %3636
    %v3638 = vsel %vm603, %v3610, -inf
    %3639 = vmax.xlane.f32.xlu0 %v3638
    %v3640 = vpop.xlane.xlu0 %3639
    %v3641 = vsel %vm603, %v3611, -inf
    %3642 = vmax.xlane.f32.xlu0 %v3641
    %v3643 = vpop.xlane.xlu0 %3642
    %v3644 = vsel %vm603, %v3612, -inf
    %3645 = vmax.xlane.f32.xlu0 %v3644
    %v3646 = vpop.xlane.xlu0 %3645
    %v3647 = vsel %vm603, %v3613, -inf
    %3648 = vmax.xlane.f32.xlu0 %v3647
    %v3649 = vpop.xlane.xlu0 %3648
    %v3650 = vsub.f32 %v3602, %v3616
    %v3651 = vsub.f32 %v3603, %v3619
    %v3652 = vsub.f32 %v3604, %v3622
    %v3653 = vsub.f32 %v3605, %v3625
    %v3654 = vsub.f32 %v3606, %v3628
    %v3655 = vsub.f32 %v3607, %v3631
    %v3656 = vsub.f32 %v3608, %v3634
    %v3657 = vsub.f32 %v3609, %v3637
    %v3658 = vsub.f32 %v3610, %v3640
    %v3659 = vsub.f32 %v3611, %v3643
    %v3660 = vsub.f32 %v3612, %v3646
    %v3661 = vsub.f32 %v3613, %v3649
    %v3662 = vmul.f32 %v3650, 1.442695
    %v3663 = vpow.pop %v3662
    %v3664 = vmul.f32 %v3651, 1.442695
    %v3665 = vpow.pop %v3664
    %v3666 = vmul.f32 %v3652, 1.442695
    %v3667 = vpow.pop %v3666
    %v3668 = vmul.f32 %v3653, 1.442695
    %v3669 = vpow.pop %v3668
    %v3670 = vmul.f32 %v3654, 1.442695
    %v3671 = vpow.pop %v3670
    %v3672 = vmul.f32 %v3655, 1.442695
    %v3673 = vpow.pop %v3672
    %v3674 = vmul.f32 %v3656, 1.442695
    %v3675 = vpow.pop %v3674
    %v3676 = vmul.f32 %v3657, 1.442695
    %v3677 = vpow.pop %v3676
    %v3678 = vmul.f32 %v3658, 1.442695
    %v3679 = vpow.pop %v3678
    %v3680 = vmul.f32 %v3659, 1.442695
    %v3681 = vpow.pop %v3680
    %v3682 = vmul.f32 %v3660, 1.442695
    %v3683 = vpow.pop %v3682
    %v3684 = vmul.f32 %v3661, 1.442695
    %v3685 = vpow.pop %v3684
    %v3686 = vsel %vm603, %v3663, 0.0
    %3687 = vadd.xlane.f32.xlu0 %v3686
    %v3688 = vpop.xlane.xlu0 %3687
    %v3689 = vsel %vm603, %v3665, 0.0
    %3690 = vadd.xlane.f32.xlu0 %v3689
    %v3691 = vpop.xlane.xlu0 %3690
    %v3692 = vsel %vm603, %v3667, 0.0
    %3693 = vadd.xlane.f32.xlu0 %v3692
    %v3694 = vpop.xlane.xlu0 %3693
    %v3695 = vsel %vm603, %v3669, 0.0
    %3696 = vadd.xlane.f32.xlu0 %v3695
    %v3697 = vpop.xlane.xlu0 %3696
    %v3698 = vsel %vm603, %v3671, 0.0
    %3699 = vadd.xlane.f32.xlu0 %v3698
    %v3700 = vpop.xlane.xlu0 %3699
    %v3701 = vsel %vm603, %v3673, 0.0
    %3702 = vadd.xlane.f32.xlu0 %v3701
    %v3703 = vpop.xlane.xlu0 %3702
    %v3704 = vsel %vm603, %v3675, 0.0
    %3705 = vadd.xlane.f32.xlu0 %v3704
    %v3706 = vpop.xlane.xlu0 %3705
    %v3707 = vsel %vm603, %v3677, 0.0
    %3708 = vadd.xlane.f32.xlu0 %v3707
    %v3709 = vpop.xlane.xlu0 %3708
    %v3710 = vsel %vm603, %v3679, 0.0
    %3711 = vadd.xlane.f32.xlu0 %v3710
    %v3712 = vpop.xlane.xlu0 %3711
    %v3713 = vsel %vm603, %v3681, 0.0
    %3714 = vadd.xlane.f32.xlu0 %v3713
    %v3715 = vpop.xlane.xlu0 %3714
    %v3716 = vsel %vm603, %v3683, 0.0
    %3717 = vadd.xlane.f32.xlu0 %v3716
    %v3718 = vpop.xlane.xlu0 %3717
    %v3719 = vsel %vm603, %v3685, 0.0
    %3720 = vadd.xlane.f32.xlu0 %v3719
    %v3721 = vpop.xlane.xlu0 %3720
    %v3722 = vrcp.pop %v3688
    %v3723 = vmul.f32 %v3688, %v3722
    %v3724 = vsub.f32 1.0, %v3723
    %v3725 = vmul.f32 %v3722, %v3724
    %v3726 = vadd.f32 %v3722, %v3725
    %vm3727 = vweird.f32 %v3688
    %vm3728 = vweird.f32 %v3722
    %vm3729 = vmor %vm3727, %vm3728
    %v3730 = vsel %vm3729, %v3722, %v3726
    %v3731 = vand.u32 2147483647, %v3688
    %vm3732 = vcmp.eq.f32.partialorder %v3731, 8.507059e+37
    %v3733 = vand.u32 %v3688, 2147483648
    %v3734 = vor.u32 1.1754944e-38, %v3733
    %v3735 = vsel %vm3732, %v3734, %v3730
    %v3736 = vmul.f32 %v3663, %v3735
    %v3737 = vrcp.pop %v3691
    %v3738 = vmul.f32 %v3691, %v3737
    %v3739 = vsub.f32 1.0, %v3738
    %v3740 = vmul.f32 %v3737, %v3739
    %v3741 = vadd.f32 %v3737, %v3740
    %vm3742 = vweird.f32 %v3691
    %vm3743 = vweird.f32 %v3737
    %vm3744 = vmor %vm3742, %vm3743
    %v3745 = vsel %vm3744, %v3737, %v3741
    %v3746 = vand.u32 2147483647, %v3691
    %vm3747 = vcmp.eq.f32.partialorder %v3746, 8.507059e+37
    %v3748 = vand.u32 %v3691, 2147483648
    %v3749 = vor.u32 1.1754944e-38, %v3748
    %v3750 = vsel %vm3747, %v3749, %v3745
    %v3751 = vmul.f32 %v3665, %v3750
    %v3752 = vrcp.pop %v3694
    %v3753 = vmul.f32 %v3694, %v3752
    %v3754 = vsub.f32 1.0, %v3753
    %v3755 = vmul.f32 %v3752, %v3754
    %v3756 = vadd.f32 %v3752, %v3755
    %vm3757 = vweird.f32 %v3694
    %vm3758 = vweird.f32 %v3752
    %vm3759 = vmor %vm3757, %vm3758
    %v3760 = vsel %vm3759, %v3752, %v3756
    %v3761 = vand.u32 2147483647, %v3694
    %vm3762 = vcmp.eq.f32.partialorder %v3761, 8.507059e+37
    %v3763 = vand.u32 %v3694, 2147483648
    %v3764 = vor.u32 1.1754944e-38, %v3763
    %v3765 = vsel %vm3762, %v3764, %v3760
    %v3766 = vmul.f32 %v3667, %v3765
    %v3767 = vrcp.pop %v3697
    %v3768 = vmul.f32 %v3697, %v3767
    %v3769 = vsub.f32 1.0, %v3768
    %v3770 = vmul.f32 %v3767, %v3769
    %v3771 = vadd.f32 %v3767, %v3770
    %vm3772 = vweird.f32 %v3697
    %vm3773 = vweird.f32 %v3767
    %vm3774 = vmor %vm3772, %vm3773
    %v3775 = vsel %vm3774, %v3767, %v3771
    %v3776 = vand.u32 2147483647, %v3697
    %vm3777 = vcmp.eq.f32.partialorder %v3776, 8.507059e+37
    %v3778 = vand.u32 %v3697, 2147483648
    %v3779 = vor.u32 1.1754944e-38, %v3778
    %v3780 = vsel %vm3777, %v3779, %v3775
    %v3781 = vmul.f32 %v3669, %v3780
    %v3782 = vrcp.pop %v3700
    %v3783 = vmul.f32 %v3700, %v3782
    %v3784 = vsub.f32 1.0, %v3783
    %v3785 = vmul.f32 %v3782, %v3784
    %v3786 = vadd.f32 %v3782, %v3785
    %vm3787 = vweird.f32 %v3700
    %vm3788 = vweird.f32 %v3782
    %vm3789 = vmor %vm3787, %vm3788
    %v3790 = vsel %vm3789, %v3782, %v3786
    %v3791 = vand.u32 2147483647, %v3700
    %vm3792 = vcmp.eq.f32.partialorder %v3791, 8.507059e+37
    %v3793 = vand.u32 %v3700, 2147483648
    %v3794 = vor.u32 1.1754944e-38, %v3793
    %v3795 = vsel %vm3792, %v3794, %v3790
    %v3796 = vmul.f32 %v3671, %v3795
    %v3797 = vrcp.pop %v3703
    %v3798 = vmul.f32 %v3703, %v3797
    %v3799 = vsub.f32 1.0, %v3798
    %v3800 = vmul.f32 %v3797, %v3799
    %v3801 = vadd.f32 %v3797, %v3800
    %vm3802 = vweird.f32 %v3703
    %vm3803 = vweird.f32 %v3797
    %vm3804 = vmor %vm3802, %vm3803
    %v3805 = vsel %vm3804, %v3797, %v3801
    %v3806 = vand.u32 2147483647, %v3703
    %vm3807 = vcmp.eq.f32.partialorder %v3806, 8.507059e+37
    %v3808 = vand.u32 %v3703, 2147483648
    %v3809 = vor.u32 1.1754944e-38, %v3808
    %v3810 = vsel %vm3807, %v3809, %v3805
    %v3811 = vmul.f32 %v3673, %v3810
    %v3812 = vrcp.pop %v3706
    %v3813 = vmul.f32 %v3706, %v3812
    %v3814 = vsub.f32 1.0, %v3813
    %v3815 = vmul.f32 %v3812, %v3814
    %v3816 = vadd.f32 %v3812, %v3815
    %vm3817 = vweird.f32 %v3706
    %vm3818 = vweird.f32 %v3812
    %vm3819 = vmor %vm3817, %vm3818
    %v3820 = vsel %vm3819, %v3812, %v3816
    %v3821 = vand.u32 2147483647, %v3706
    %vm3822 = vcmp.eq.f32.partialorder %v3821, 8.507059e+37
    %v3823 = vand.u32 %v3706, 2147483648
    %v3824 = vor.u32 1.1754944e-38, %v3823
    %v3825 = vsel %vm3822, %v3824, %v3820
    %v3826 = vmul.f32 %v3675, %v3825
    %v3827 = vrcp.pop %v3709
    %v3828 = vmul.f32 %v3709, %v3827
    %v3829 = vsub.f32 1.0, %v3828
    %v3830 = vmul.f32 %v3827, %v3829
    %v3831 = vadd.f32 %v3827, %v3830
    %vm3832 = vweird.f32 %v3709
    %vm3833 = vweird.f32 %v3827
    %vm3834 = vmor %vm3832, %vm3833
    %v3835 = vsel %vm3834, %v3827, %v3831
    %v3836 = vand.u32 2147483647, %v3709
    %vm3837 = vcmp.eq.f32.partialorder %v3836, 8.507059e+37
    %v3838 = vand.u32 %v3709, 2147483648
    %v3839 = vor.u32 1.1754944e-38, %v3838
    %v3840 = vsel %vm3837, %v3839, %v3835
    %v3841 = vmul.f32 %v3677, %v3840
    %v3842 = vrcp.pop %v3712
    %v3843 = vmul.f32 %v3712, %v3842
    %v3844 = vsub.f32 1.0, %v3843
    %v3845 = vmul.f32 %v3842, %v3844
    %v3846 = vadd.f32 %v3842, %v3845
    %vm3847 = vweird.f32 %v3712
    %vm3848 = vweird.f32 %v3842
    %vm3849 = vmor %vm3847, %vm3848
    %v3850 = vsel %vm3849, %v3842, %v3846
    %v3851 = vand.u32 2147483647, %v3712
    %vm3852 = vcmp.eq.f32.partialorder %v3851, 8.507059e+37
    %v3853 = vand.u32 %v3712, 2147483648
    %v3854 = vor.u32 1.1754944e-38, %v3853
    %v3855 = vsel %vm3852, %v3854, %v3850
    %v3856 = vmul.f32 %v3679, %v3855
    %v3857 = vrcp.pop %v3715
    %v3858 = vmul.f32 %v3715, %v3857
    %v3859 = vsub.f32 1.0, %v3858
    %v3860 = vmul.f32 %v3857, %v3859
    %v3861 = vadd.f32 %v3857, %v3860
    %vm3862 = vweird.f32 %v3715
    %vm3863 = vweird.f32 %v3857
    %vm3864 = vmor %vm3862, %vm3863
    %v3865 = vsel %vm3864, %v3857, %v3861
    %v3866 = vand.u32 2147483647, %v3715
    %vm3867 = vcmp.eq.f32.partialorder %v3866, 8.507059e+37
    %v3868 = vand.u32 %v3715, 2147483648
    %v3869 = vor.u32 1.1754944e-38, %v3868
    %v3870 = vsel %vm3867, %v3869, %v3865
    %v3871 = vmul.f32 %v3681, %v3870
    %v3872 = vrcp.pop %v3718
    %v3873 = vmul.f32 %v3718, %v3872
    %v3874 = vsub.f32 1.0, %v3873
    %v3875 = vmul.f32 %v3872, %v3874
    %v3876 = vadd.f32 %v3872, %v3875
    %vm3877 = vweird.f32 %v3718
    %vm3878 = vweird.f32 %v3872
    %vm3879 = vmor %vm3877, %vm3878
    %v3880 = vsel %vm3879, %v3872, %v3876
    %v3881 = vand.u32 2147483647, %v3718
    %vm3882 = vcmp.eq.f32.partialorder %v3881, 8.507059e+37
    %v3883 = vand.u32 %v3718, 2147483648
    %v3884 = vor.u32 1.1754944e-38, %v3883
    %v3885 = vsel %vm3882, %v3884, %v3880
    %v3886 = vmul.f32 %v3683, %v3885
    %v3887 = vrcp.pop %v3721
    %v3888 = vmul.f32 %v3721, %v3887
    %v3889 = vsub.f32 1.0, %v3888
    %v3890 = vmul.f32 %v3887, %v3889
    %v3891 = vadd.f32 %v3887, %v3890
    %vm3892 = vweird.f32 %v3721
    %vm3893 = vweird.f32 %v3887
    %vm3894 = vmor %vm3892, %vm3893
    %v3895 = vsel %vm3894, %v3887, %v3891
    %v3896 = vand.u32 2147483647, %v3721
    %vm3897 = vcmp.eq.f32.partialorder %v3896, 8.507059e+37
    %v3898 = vand.u32 %v3721, 2147483648
    %v3899 = vor.u32 1.1754944e-38, %v3898
    %v3900 = vsel %vm3897, %v3899, %v3895
    %v3901 = vmul.f32 %v3685, %v3900
    %v3902 = vpack.c.bf16 %v3751, %v3736
    %v3903 = vpack.c.bf16 %v3781, %v3766
    %v3904 = vpack.c.bf16 %v3811, %v3796
    %v3905 = vpack.c.bf16 %v3841, %v3826
    %v3906 = vpack.c.bf16 %v3871, %v3856
    %v3907 = vpack.c.bf16 %v3901, %v3886
    %3908 = vrot.lane.b32.xlu0 %v2999, 48
    %v3909 = vpop.permute.xlu0 %3908
    %3910 = vrot.lane.b32.xlu0 %v3000, 48
    %v3911 = vpop.permute.xlu0 %3910
    %3912 = vrot.lane.b32.xlu0 %v3001, 48
    %v3913 = vpop.permute.xlu0 %3912
    %3914 = vrot.lane.b32.xlu0 %v3002, 48
    %v3915 = vpop.permute.xlu0 %3914
    %3916 = vrot.lane.b32.xlu0 %v3003, 48
    %v3917 = vpop.permute.xlu0 %3916
    %3918 = vrot.lane.b32.xlu0 %v3004, 48
    %v3919 = vpop.permute.xlu0 %3918
    %v3927 = vsel %vm603, %v3902, 0
    %v3930 = vsel %vm603, %v3903, 0
    %v3933 = vsel %vm603, %v3904, 0
    %v3936 = vsel %vm603, %v3905, 0
    %v3939 = vsel %vm603, %v3906, 0
    %v3942 = vsel %vm603, %v3907, 0
    %3944 = vmatpush.bf16.msra.mxu0 0
    %3945 = vmatpush.bf16.msra.mxu0 0
    %3946 = vmatpush.bf16.msra.mxu0 %v3919
    %3947 = vmatpush.bf16.msra.mxu0 %v3917
    %3948 = vmatpush.bf16.msra.mxu0 %v3915
    %3949 = vmatpush.bf16.msra.mxu0 %v3913
    %3950 = vmatpush.bf16.msra.mxu0 %v3911
    %3951 = vmatpush.bf16.msra.mxu0 %v3909
    %3952 = vmatmul.bf16.gmra.mxu0 %v3927
    %v3953 = vpop.f32.mrf.mxu0
    %v3954 = vadd.f32 0.0, %v3953
    %v3955 = vpop.f32.mrf.mxu0
    %v3956 = vadd.f32 0.0, %v3955
    %3957 = vmatmul.bf16.gmra.mxu0 %v3930
    %v3958 = vpop.f32.mrf.mxu0
    %v3959 = vadd.f32 0.0, %v3958
    %v3960 = vpop.f32.mrf.mxu0
    %v3961 = vadd.f32 0.0, %v3960
    %3962 = vmatmul.bf16.gmra.mxu0 %v3933
    %v3963 = vpop.f32.mrf.mxu0
    %v3964 = vadd.f32 0.0, %v3963
    %v3965 = vpop.f32.mrf.mxu0
    %v3966 = vadd.f32 0.0, %v3965
    %3967 = vmatmul.bf16.gmra.mxu0 %v3936
    %v3968 = vpop.f32.mrf.mxu0
    %v3969 = vadd.f32 0.0, %v3968
    %v3970 = vpop.f32.mrf.mxu0
    %v3971 = vadd.f32 0.0, %v3970
    %3972 = vmatmul.bf16.gmra.mxu0 %v3939
    %v3973 = vpop.f32.mrf.mxu0
    %v3974 = vadd.f32 0.0, %v3973
    %v3975 = vpop.f32.mrf.mxu0
    %v3976 = vadd.f32 0.0, %v3975
    %3977 = vmatmul.bf16.gmra.mxu0 %v3942
    %v3978 = vpop.f32.mrf.mxu0
    %v3979 = vadd.f32 0.0, %v3978
    %v3980 = vpop.f32.mrf.mxu0
    %v3981 = vadd.f32 0.0, %v3980
    %3982 = vdwg.mxu0
    %3995 = vrot.lane.b32.xlu0 %v3954, 16
    %v3996 = vpop.permute.xlu0 %3995
    %3997 = vrot.lane.b32.xlu0 %v3956, 16
    %v3998 = vpop.permute.xlu0 %3997
    %3999 = vrot.lane.b32.xlu0 %v3959, 16
    %v4000 = vpop.permute.xlu0 %3999
    %4001 = vrot.lane.b32.xlu0 %v3961, 16
    %v4002 = vpop.permute.xlu0 %4001
    %4003 = vrot.lane.b32.xlu0 %v3964, 16
    %v4004 = vpop.permute.xlu0 %4003
    %4005 = vrot.lane.b32.xlu0 %v3966, 16
    %v4006 = vpop.permute.xlu0 %4005
    %4007 = vrot.lane.b32.xlu0 %v3969, 16
    %v4008 = vpop.permute.xlu0 %4007
    %4009 = vrot.lane.b32.xlu0 %v3971, 16
    %v4010 = vpop.permute.xlu0 %4009
    %4011 = vrot.lane.b32.xlu0 %v3974, 16
    %v4012 = vpop.permute.xlu0 %4011
    %4013 = vrot.lane.b32.xlu0 %v3976, 16
    %v4014 = vpop.permute.xlu0 %4013
    %4015 = vrot.lane.b32.xlu0 %v3979, 16
    %v4016 = vpop.permute.xlu0 %4015
    %4017 = vrot.lane.b32.xlu0 %v3981, 16
    %v4018 = vpop.permute.xlu0 %4017
    %v4031 = vsel %vm503, %v3462, %v3996
    %v4032 = vsel %vm503, %v3464, %v3998
    %v4033 = vsel %vm503, %v3467, %v4000
    %v4034 = vsel %vm503, %v3469, %v4002
    %v4035 = vsel %vm503, %v3472, %v4004
    %v4036 = vsel %vm503, %v3474, %v4006
    %v4037 = vsel %vm503, %v3477, %v4008
    %v4038 = vsel %vm503, %v3479, %v4010
    %v4039 = vsel %vm503, %v3482, %v4012
    %v4040 = vsel %vm503, %v3484, %v4014
    %v4041 = vsel %vm503, %v3487, %v4016
    %v4042 = vsel %vm503, %v3489, %v4018
    %v4043 = vpack.c.bf16 %v4032, %v4031
    %v4044 = vpack.c.bf16 %v4034, %v4033
    %v4045 = vpack.c.bf16 %v4036, %v4035
    %v4046 = vpack.c.bf16 %v4038, %v4037
    %v4047 = vpack.c.bf16 %v4040, %v4039
    %v4048 = vpack.c.bf16 %v4042, %v4041
    %s4049 = scalar_lea.vmem %s9, 16
    %v4050 = vld [vmem:[%s4049] sm:$0xf]
    %v4051 = vld [vmem:[%s4049 + $0x4] sm:$0xf]
    %v4052 = vld [vmem:[%s4049 + $0x8] sm:$0xf]
    %v4053 = vld [vmem:[%s4049 + $0xc] sm:$0xf]
    %s4054 = scalar_lea.vmem %s10, 1
    %v4055 = vld [vmem:[%s4054] sm:$0x1]
    %v4057 = vperm.slane %v4055, 0
    %v4063 = vunpack.c.l.b16 %v4050
    %v4064 = vunpack.c.l.b16 %v4051
    %v4065 = vunpack.c.l.b16 %v4052
    %v4066 = vunpack.c.l.b16 %v4053
    %v4067 = vpack.c.b16 %v4064, %v4063
    %v4068 = vpack.c.b16 %v4066, %v4065
    %v4072 = vsel %vm94, %v4043, 0
    %v4075 = vsel %vm94, %v4044, 0
    %v4078 = vsel %vm94, %v4045, 0
    %v4081 = vsel %vm94, %v4046, 0
    %v4084 = vsel %vm94, %v4047, 0
    %v4087 = vsel %vm94, %v4048, 0
    %4089 = vmatpush.bf16.msra.mxu0 0
    %4090 = vmatpush.bf16.msra.mxu0 0
    %4091 = vmatpush.bf16.msra.mxu0 0
    %4092 = vmatpush.bf16.msra.mxu0 0
    %4093 = vmatpush.bf16.msra.mxu0 0
    %4094 = vmatpush.bf16.msra.mxu0 0
    %4095 = vmatpush.bf16.msra.mxu0 %v4068
    %4096 = vmatpush.bf16.msra.mxu0 %v4067
    %4097 = vmatmul.bf16.gmra.mxu0 %v4072
    %v4098 = vpop.f32.mrf.mxu0
    %v4099 = vadd.f32 %v4057, %v4098
    %v4100 = vpop.f32.mrf.mxu0
    %v4101 = vadd.f32 %v4057, %v4100
    %4102 = vmatmul.bf16.gmra.mxu0 %v4075
    %v4103 = vpop.f32.mrf.mxu0
    %v4104 = vadd.f32 %v4057, %v4103
    %v4105 = vpop.f32.mrf.mxu0
    %v4106 = vadd.f32 %v4057, %v4105
    %4107 = vmatmul.bf16.gmra.mxu0 %v4078
    %v4108 = vpop.f32.mrf.mxu0
    %v4109 = vadd.f32 %v4057, %v4108
    %v4110 = vpop.f32.mrf.mxu0
    %v4111 = vadd.f32 %v4057, %v4110
    %4112 = vmatmul.bf16.gmra.mxu0 %v4081
    %v4113 = vpop.f32.mrf.mxu0
    %v4114 = vadd.f32 %v4057, %v4113
    %v4115 = vpop.f32.mrf.mxu0
    %v4116 = vadd.f32 %v4057, %v4115
    %4117 = vmatmul.bf16.gmra.mxu0 %v4084
    %v4118 = vpop.f32.mrf.mxu0
    %v4119 = vadd.f32 %v4057, %v4118
    %v4120 = vpop.f32.mrf.mxu0
    %v4121 = vadd.f32 %v4057, %v4120
    %4122 = vmatmul.bf16.gmra.mxu0 %v4087
    %v4123 = vpop.f32.mrf.mxu0
    %v4124 = vadd.f32 %v4057, %v4123
    %v4125 = vpop.f32.mrf.mxu0
    %v4126 = vadd.f32 %v4057, %v4125
    %4127 = vdwg.mxu0
    %v4128 = vadd.f32 %v2902, %v4099
    %v4129 = vadd.f32 %v2903, %v4101
    %v4130 = vadd.f32 %v2904, %v4104
    %v4131 = vadd.f32 %v2905, %v4106
    %v4132 = vadd.f32 %v2906, %v4109
    %v4133 = vadd.f32 %v2907, %v4111
    %v4134 = vadd.f32 %v2908, %v4114
    %v4135 = vadd.f32 %v2909, %v4116
    %v4136 = vadd.f32 %v2910, %v4119
    %v4137 = vadd.f32 %v2911, %v4121
    %v4138 = vadd.f32 %v2912, %v4124
    %v4139 = vadd.f32 %v2913, %v4126
    %s4140 = scalar_lea.vmem %s5, 1
    %v4141 = vld [vmem:[%s4140] sm:$0x1]
    %s4142 = scalar_lea.vmem %s6, 1
    %v4143 = vld [vmem:[%s4142] sm:$0x1]
    %v4144 = vsel %vm94, %v4128, 0.0
    %4145 = vadd.xlane.f32.xlu0 %v4144
    %v4146 = vpop.xlane.xlu0 %4145
    %v4147 = vsel %vm94, %v4129, 0.0
    %4148 = vadd.xlane.f32.xlu0 %v4147
    %v4149 = vpop.xlane.xlu0 %4148
    %v4150 = vsel %vm94, %v4130, 0.0
    %4151 = vadd.xlane.f32.xlu0 %v4150
    %v4152 = vpop.xlane.xlu0 %4151
    %v4153 = vsel %vm94, %v4131, 0.0
    %4154 = vadd.xlane.f32.xlu0 %v4153
    %v4155 = vpop.xlane.xlu0 %4154
    %v4156 = vsel %vm94, %v4132, 0.0
    %4157 = vadd.xlane.f32.xlu0 %v4156
    %v4158 = vpop.xlane.xlu0 %4157
    %v4159 = vsel %vm94, %v4133, 0.0
    %4160 = vadd.xlane.f32.xlu0 %v4159
    %v4161 = vpop.xlane.xlu0 %4160
    %v4162 = vsel %vm94, %v4134, 0.0
    %4163 = vadd.xlane.f32.xlu0 %v4162
    %v4164 = vpop.xlane.xlu0 %4163
    %v4165 = vsel %vm94, %v4135, 0.0
    %4166 = vadd.xlane.f32.xlu0 %v4165
    %v4167 = vpop.xlane.xlu0 %4166
    %v4168 = vsel %vm94, %v4136, 0.0
    %4169 = vadd.xlane.f32.xlu0 %v4168
    %v4170 = vpop.xlane.xlu0 %4169
    %v4171 = vsel %vm94, %v4137, 0.0
    %4172 = vadd.xlane.f32.xlu0 %v4171
    %v4173 = vpop.xlane.xlu0 %4172
    %v4174 = vsel %vm94, %v4138, 0.0
    %4175 = vadd.xlane.f32.xlu0 %v4174
    %v4176 = vpop.xlane.xlu0 %4175
    %v4177 = vsel %vm94, %v4139, 0.0
    %4178 = vadd.xlane.f32.xlu0 %v4177
    %v4179 = vpop.xlane.xlu0 %4178
    %v4180 = vmul.f32 %v4146, %v137
    %v4181 = vmul.f32 %v4149, %v137
    %v4182 = vmul.f32 %v4152, %v137
    %v4183 = vmul.f32 %v4155, %v137
    %v4184 = vmul.f32 %v4158, %v137
    %v4185 = vmul.f32 %v4161, %v137
    %v4186 = vmul.f32 %v4164, %v137
    %v4187 = vmul.f32 %v4167, %v137
    %v4188 = vmul.f32 %v4170, %v137
    %v4189 = vmul.f32 %v4173, %v137
    %v4190 = vmul.f32 %v4176, %v137
    %v4191 = vmul.f32 %v4179, %v137
    %v4192 = vsub.f32 %v4128, %v4180
    %v4193 = vsub.f32 %v4129, %v4181
    %v4194 = vsub.f32 %v4130, %v4182
    %v4195 = vsub.f32 %v4131, %v4183
    %v4196 = vsub.f32 %v4132, %v4184
    %v4197 = vsub.f32 %v4133, %v4185
    %v4198 = vsub.f32 %v4134, %v4186
    %v4199 = vsub.f32 %v4135, %v4187
    %v4200 = vsub.f32 %v4136, %v4188
    %v4201 = vsub.f32 %v4137, %v4189
    %v4202 = vsub.f32 %v4138, %v4190
    %v4203 = vsub.f32 %v4139, %v4191
    %v4204 = vmul.f32 %v4192, %v4192
    %v4205 = vmul.f32 %v4193, %v4193
    %v4206 = vmul.f32 %v4194, %v4194
    %v4207 = vmul.f32 %v4195, %v4195
    %v4208 = vmul.f32 %v4196, %v4196
    %v4209 = vmul.f32 %v4197, %v4197
    %v4210 = vmul.f32 %v4198, %v4198
    %v4211 = vmul.f32 %v4199, %v4199
    %v4212 = vmul.f32 %v4200, %v4200
    %v4213 = vmul.f32 %v4201, %v4201
    %v4214 = vmul.f32 %v4202, %v4202
    %v4215 = vmul.f32 %v4203, %v4203
    %v4216 = vsel %vm94, %v4204, 0.0
    %4217 = vadd.xlane.f32.xlu0 %v4216
    %v4218 = vpop.xlane.xlu0 %4217
    %v4219 = vsel %vm94, %v4205, 0.0
    %4220 = vadd.xlane.f32.xlu0 %v4219
    %v4221 = vpop.xlane.xlu0 %4220
    %v4222 = vsel %vm94, %v4206, 0.0
    %4223 = vadd.xlane.f32.xlu0 %v4222
    %v4224 = vpop.xlane.xlu0 %4223
    %v4225 = vsel %vm94, %v4207, 0.0
    %4226 = vadd.xlane.f32.xlu0 %v4225
    %v4227 = vpop.xlane.xlu0 %4226
    %v4228 = vsel %vm94, %v4208, 0.0
    %4229 = vadd.xlane.f32.xlu0 %v4228
    %v4230 = vpop.xlane.xlu0 %4229
    %v4231 = vsel %vm94, %v4209, 0.0
    %4232 = vadd.xlane.f32.xlu0 %v4231
    %v4233 = vpop.xlane.xlu0 %4232
    %v4234 = vsel %vm94, %v4210, 0.0
    %4235 = vadd.xlane.f32.xlu0 %v4234
    %v4236 = vpop.xlane.xlu0 %4235
    %v4237 = vsel %vm94, %v4211, 0.0
    %4238 = vadd.xlane.f32.xlu0 %v4237
    %v4239 = vpop.xlane.xlu0 %4238
    %v4240 = vsel %vm94, %v4212, 0.0
    %4241 = vadd.xlane.f32.xlu0 %v4240
    %v4242 = vpop.xlane.xlu0 %4241
    %v4243 = vsel %vm94, %v4213, 0.0
    %4244 = vadd.xlane.f32.xlu0 %v4243
    %v4245 = vpop.xlane.xlu0 %4244
    %v4246 = vsel %vm94, %v4214, 0.0
    %4247 = vadd.xlane.f32.xlu0 %v4246
    %v4248 = vpop.xlane.xlu0 %4247
    %v4249 = vsel %vm94, %v4215, 0.0
    %4250 = vadd.xlane.f32.xlu0 %v4249
    %v4251 = vpop.xlane.xlu0 %4250
    %v4252 = vmul.f32 %v4218, %v137
    %v4253 = vmul.f32 %v4221, %v137
    %v4254 = vmul.f32 %v4224, %v137
    %v4255 = vmul.f32 %v4227, %v137
    %v4256 = vmul.f32 %v4230, %v137
    %v4257 = vmul.f32 %v4233, %v137
    %v4258 = vmul.f32 %v4236, %v137
    %v4259 = vmul.f32 %v4239, %v137
    %v4260 = vmul.f32 %v4242, %v137
    %v4261 = vmul.f32 %v4245, %v137
    %v4262 = vmul.f32 %v4248, %v137
    %v4263 = vmul.f32 %v4251, %v137
    %v4264 = vadd.f32 %v4252, 1e-05
    %v4265 = vadd.f32 %v4253, 1e-05
    %v4266 = vadd.f32 %v4254, 1e-05
    %v4267 = vadd.f32 %v4255, 1e-05
    %v4268 = vadd.f32 %v4256, 1e-05
    %v4269 = vadd.f32 %v4257, 1e-05
    %v4270 = vadd.f32 %v4258, 1e-05
    %v4271 = vadd.f32 %v4259, 1e-05
    %v4272 = vadd.f32 %v4260, 1e-05
    %v4273 = vadd.f32 %v4261, 1e-05
    %v4274 = vadd.f32 %v4262, 1e-05
    %v4275 = vadd.f32 %v4263, 1e-05
    %v4276 = vrsqrt.pop %v4264
    %v4277 = vmul.f32 %v4276, %v4264
    %v4278 = vmul.f32 %v4277, %v4276
    %v4279 = vmul.f32 0.5, %v4278
    %v4280 = vsub.f32 1.5, %v4279
    %v4281 = vmul.f32 %v4276, %v4280
    %vm4282 = vweird.f32 %v4264
    %vm4283 = vweird.f32 %v4276
    %vm4284 = vmor %vm4282, %vm4283
    %v4285 = vsel %vm4284, %v4276, %v4281
    %v4286 = vrsqrt.pop %v4265
    %v4287 = vmul.f32 %v4286, %v4265
    %v4288 = vmul.f32 %v4287, %v4286
    %v4289 = vmul.f32 0.5, %v4288
    %v4290 = vsub.f32 1.5, %v4289
    %v4291 = vmul.f32 %v4286, %v4290
    %vm4292 = vweird.f32 %v4265
    %vm4293 = vweird.f32 %v4286
    %vm4294 = vmor %vm4292, %vm4293
    %v4295 = vsel %vm4294, %v4286, %v4291
    %v4296 = vrsqrt.pop %v4266
    %v4297 = vmul.f32 %v4296, %v4266
    %v4298 = vmul.f32 %v4297, %v4296
    %v4299 = vmul.f32 0.5, %v4298
    %v4300 = vsub.f32 1.5, %v4299
    %v4301 = vmul.f32 %v4296, %v4300
    %vm4302 = vweird.f32 %v4266
    %vm4303 = vweird.f32 %v4296
    %vm4304 = vmor %vm4302, %vm4303
    %v4305 = vsel %vm4304, %v4296, %v4301
    %v4306 = vrsqrt.pop %v4267
    %v4307 = vmul.f32 %v4306, %v4267
    %v4308 = vmul.f32 %v4307, %v4306
    %v4309 = vmul.f32 0.5, %v4308
    %v4310 = vsub.f32 1.5, %v4309
    %v4311 = vmul.f32 %v4306, %v4310
    %vm4312 = vweird.f32 %v4267
    %vm4313 = vweird.f32 %v4306
    %vm4314 = vmor %vm4312, %vm4313
    %v4315 = vsel %vm4314, %v4306, %v4311
    %v4316 = vrsqrt.pop %v4268
    %v4317 = vmul.f32 %v4316, %v4268
    %v4318 = vmul.f32 %v4317, %v4316
    %v4319 = vmul.f32 0.5, %v4318
    %v4320 = vsub.f32 1.5, %v4319
    %v4321 = vmul.f32 %v4316, %v4320
    %vm4322 = vweird.f32 %v4268
    %vm4323 = vweird.f32 %v4316
    %vm4324 = vmor %vm4322, %vm4323
    %v4325 = vsel %vm4324, %v4316, %v4321
    %v4326 = vrsqrt.pop %v4269
    %v4327 = vmul.f32 %v4326, %v4269
    %v4328 = vmul.f32 %v4327, %v4326
    %v4329 = vmul.f32 0.5, %v4328
    %v4330 = vsub.f32 1.5, %v4329
    %v4331 = vmul.f32 %v4326, %v4330
    %vm4332 = vweird.f32 %v4269
    %vm4333 = vweird.f32 %v4326
    %vm4334 = vmor %vm4332, %vm4333
    %v4335 = vsel %vm4334, %v4326, %v4331
    %v4336 = vrsqrt.pop %v4270
    %v4337 = vmul.f32 %v4336, %v4270
    %v4338 = vmul.f32 %v4337, %v4336
    %v4339 = vmul.f32 0.5, %v4338
    %v4340 = vsub.f32 1.5, %v4339
    %v4341 = vmul.f32 %v4336, %v4340
    %vm4342 = vweird.f32 %v4270
    %vm4343 = vweird.f32 %v4336
    %vm4344 = vmor %vm4342, %vm4343
    %v4345 = vsel %vm4344, %v4336, %v4341
    %v4346 = vrsqrt.pop %v4271
    %v4347 = vmul.f32 %v4346, %v4271
    %v4348 = vmul.f32 %v4347, %v4346
    %v4349 = vmul.f32 0.5, %v4348
    %v4350 = vsub.f32 1.5, %v4349
    %v4351 = vmul.f32 %v4346, %v4350
    %vm4352 = vweird.f32 %v4271
    %vm4353 = vweird.f32 %v4346
    %vm4354 = vmor %vm4352, %vm4353
    %v4355 = vsel %vm4354, %v4346, %v4351
    %v4356 = vrsqrt.pop %v4272
    %v4357 = vmul.f32 %v4356, %v4272
    %v4358 = vmul.f32 %v4357, %v4356
    %v4359 = vmul.f32 0.5, %v4358
    %v4360 = vsub.f32 1.5, %v4359
    %v4361 = vmul.f32 %v4356, %v4360
    %vm4362 = vweird.f32 %v4272
    %vm4363 = vweird.f32 %v4356
    %vm4364 = vmor %vm4362, %vm4363
    %v4365 = vsel %vm4364, %v4356, %v4361
    %v4366 = vrsqrt.pop %v4273
    %v4367 = vmul.f32 %v4366, %v4273
    %v4368 = vmul.f32 %v4367, %v4366
    %v4369 = vmul.f32 0.5, %v4368
    %v4370 = vsub.f32 1.5, %v4369
    %v4371 = vmul.f32 %v4366, %v4370
    %vm4372 = vweird.f32 %v4273
    %vm4373 = vweird.f32 %v4366
    %vm4374 = vmor %vm4372, %vm4373
    %v4375 = vsel %vm4374, %v4366, %v4371
    %v4376 = vrsqrt.pop %v4274
    %v4377 = vmul.f32 %v4376, %v4274
    %v4378 = vmul.f32 %v4377, %v4376
    %v4379 = vmul.f32 0.5, %v4378
    %v4380 = vsub.f32 1.5, %v4379
    %v4381 = vmul.f32 %v4376, %v4380
    %vm4382 = vweird.f32 %v4274
    %vm4383 = vweird.f32 %v4376
    %vm4384 = vmor %vm4382, %vm4383
    %v4385 = vsel %vm4384, %v4376, %v4381
    %v4386 = vrsqrt.pop %v4275
    %v4387 = vmul.f32 %v4386, %v4275
    %v4388 = vmul.f32 %v4387, %v4386
    %v4389 = vmul.f32 0.5, %v4388
    %v4390 = vsub.f32 1.5, %v4389
    %v4391 = vmul.f32 %v4386, %v4390
    %vm4392 = vweird.f32 %v4275
    %vm4393 = vweird.f32 %v4386
    %vm4394 = vmor %vm4392, %vm4393
    %v4395 = vsel %vm4394, %v4386, %v4391
    %v4396 = vmul.f32 %v4192, %v4285
    %v4397 = vmul.f32 %v4193, %v4295
    %v4398 = vmul.f32 %v4194, %v4305
    %v4399 = vmul.f32 %v4195, %v4315
    %v4400 = vmul.f32 %v4196, %v4325
    %v4401 = vmul.f32 %v4197, %v4335
    %v4402 = vmul.f32 %v4198, %v4345
    %v4403 = vmul.f32 %v4199, %v4355
    %v4404 = vmul.f32 %v4200, %v4365
    %v4405 = vmul.f32 %v4201, %v4375
    %v4406 = vmul.f32 %v4202, %v4385
    %v4407 = vmul.f32 %v4203, %v4395
    %v4409 = vperm.slane %v4141, 0
    %v4411 = vmul.f32 %v4396, %v4409
    %v4412 = vmul.f32 %v4397, %v4409
    %v4413 = vmul.f32 %v4398, %v4409
    %v4414 = vmul.f32 %v4399, %v4409
    %v4415 = vmul.f32 %v4400, %v4409
    %v4416 = vmul.f32 %v4401, %v4409
    %v4417 = vmul.f32 %v4402, %v4409
    %v4418 = vmul.f32 %v4403, %v4409
    %v4419 = vmul.f32 %v4404, %v4409
    %v4420 = vmul.f32 %v4405, %v4409
    %v4421 = vmul.f32 %v4406, %v4409
    %v4422 = vmul.f32 %v4407, %v4409
    %v4424 = vperm.slane %v4143, 0
    %v4426 = vadd.f32 %v4411, %v4424
    %v4427 = vadd.f32 %v4412, %v4424
    %v4428 = vadd.f32 %v4413, %v4424
    %v4429 = vadd.f32 %v4414, %v4424
    %v4430 = vadd.f32 %v4415, %v4424
    %v4431 = vadd.f32 %v4416, %v4424
    %v4432 = vadd.f32 %v4417, %v4424
    %v4433 = vadd.f32 %v4418, %v4424
    %v4434 = vadd.f32 %v4419, %v4424
    %v4435 = vadd.f32 %v4420, %v4424
    %v4436 = vadd.f32 %v4421, %v4424
    %v4437 = vadd.f32 %v4422, %v4424
    %v4438 = vpack.c.bf16 %v4427, %v4426
    %v4439 = vpack.c.bf16 %v4429, %v4428
    %v4440 = vpack.c.bf16 %v4431, %v4430
    %v4441 = vpack.c.bf16 %v4433, %v4432
    %v4442 = vpack.c.bf16 %v4435, %v4434
    %v4443 = vpack.c.bf16 %v4437, %v4436
    %s4444 = scalar_lea.vmem %s11, 16
    %v4445 = vld [vmem:[%s4444] sm:$0xf]
    %v4446 = vld [vmem:[%s4444 + $0x4] sm:$0xf]
    %v4447 = vld [vmem:[%s4444 + $0x8] sm:$0xf]
    %v4448 = vld [vmem:[%s4444 + $0xc] sm:$0xf]
    %s4449 = scalar_lea.vmem %s12, 1
    %v4450 = vld [vmem:[%s4449] sm:$0x1]
    %v4452 = vperm.slane %v4450, 0
    %v4458 = vunpack.c.l.b16 %v4445
    %v4459 = vunpack.c.l.b16 %v4446
    %v4460 = vunpack.c.l.b16 %v4447
    %v4461 = vunpack.c.l.b16 %v4448
    %v4462 = vpack.c.b16 %v4459, %v4458
    %v4463 = vpack.c.b16 %v4461, %v4460
    %v4467 = vsel %vm94, %v4438, 0
    %v4470 = vsel %vm94, %v4439, 0
    %v4473 = vsel %vm94, %v4440, 0
    %v4476 = vsel %vm94, %v4441, 0
    %v4479 = vsel %vm94, %v4442, 0
    %v4482 = vsel %vm94, %v4443, 0
    %4484 = vmatpush.bf16.msra.mxu0 0
    %4485 = vmatpush.bf16.msra.mxu0 0
    %4486 = vmatpush.bf16.msra.mxu0 0
    %4487 = vmatpush.bf16.msra.mxu0 0
    %4488 = vmatpush.bf16.msra.mxu0 0
    %4489 = vmatpush.bf16.msra.mxu0 0
    %4490 = vmatpush.bf16.msra.mxu0 %v4463
    %4491 = vmatpush.bf16.msra.mxu0 %v4462
    %4492 = vmatmul.bf16.gmra.mxu0 %v4467
    %v4493 = vpop.f32.mrf.mxu0
    %v4494 = vadd.f32 %v4452, %v4493
    %v4495 = vpop.f32.mrf.mxu0
    %v4496 = vadd.f32 %v4452, %v4495
    %4497 = vmatmul.bf16.gmra.mxu0 %v4470
    %v4498 = vpop.f32.mrf.mxu0
    %v4499 = vadd.f32 %v4452, %v4498
    %v4500 = vpop.f32.mrf.mxu0
    %v4501 = vadd.f32 %v4452, %v4500
    %4502 = vmatmul.bf16.gmra.mxu0 %v4473
    %v4503 = vpop.f32.mrf.mxu0
    %v4504 = vadd.f32 %v4452, %v4503
    %v4505 = vpop.f32.mrf.mxu0
    %v4506 = vadd.f32 %v4452, %v4505
    %4507 = vmatmul.bf16.gmra.mxu0 %v4476
    %v4508 = vpop.f32.mrf.mxu0
    %v4509 = vadd.f32 %v4452, %v4508
    %v4510 = vpop.f32.mrf.mxu0
    %v4511 = vadd.f32 %v4452, %v4510
    %4512 = vmatmul.bf16.gmra.mxu0 %v4479
    %v4513 = vpop.f32.mrf.mxu0
    %v4514 = vadd.f32 %v4452, %v4513
    %v4515 = vpop.f32.mrf.mxu0
    %v4516 = vadd.f32 %v4452, %v4515
    %4517 = vmatmul.bf16.gmra.mxu0 %v4482
    %v4518 = vpop.f32.mrf.mxu0
    %v4519 = vadd.f32 %v4452, %v4518
    %v4520 = vpop.f32.mrf.mxu0
    %v4521 = vadd.f32 %v4452, %v4520
    %4522 = vdwg.mxu0
    %v4523 = vmul.f32 %v4494, 0.5
    %v4524 = vmul.f32 %v4496, 0.5
    %v4525 = vmul.f32 %v4499, 0.5
    %v4526 = vmul.f32 %v4501, 0.5
    %v4527 = vmul.f32 %v4504, 0.5
    %v4528 = vmul.f32 %v4506, 0.5
    %v4529 = vmul.f32 %v4509, 0.5
    %v4530 = vmul.f32 %v4511, 0.5
    %v4531 = vmul.f32 %v4514, 0.5
    %v4532 = vmul.f32 %v4516, 0.5
    %v4533 = vmul.f32 %v4519, 0.5
    %v4534 = vmul.f32 %v4521, 0.5
    %v4535 = vmul.f32 %v4494, 0.70710677
    %v4536 = vmul.f32 %v4496, 0.70710677
    %v4537 = vmul.f32 %v4499, 0.70710677
    %v4538 = vmul.f32 %v4501, 0.70710677
    %v4539 = vmul.f32 %v4504, 0.70710677
    %v4540 = vmul.f32 %v4506, 0.70710677
    %v4541 = vmul.f32 %v4509, 0.70710677
    %v4542 = vmul.f32 %v4511, 0.70710677
    %v4543 = vmul.f32 %v4514, 0.70710677
    %v4544 = vmul.f32 %v4516, 0.70710677
    %v4545 = vmul.f32 %v4519, 0.70710677
    %v4546 = vmul.f32 %v4521, 0.70710677
    %v4547 = vand.u32 2147483647, %v4535
    %v4548 = vand.u32 2147483647, %v4536
    %v4549 = vand.u32 2147483647, %v4537
    %v4550 = vand.u32 2147483647, %v4538
    %v4551 = vand.u32 2147483647, %v4539
    %v4552 = vand.u32 2147483647, %v4540
    %v4553 = vand.u32 2147483647, %v4541
    %v4554 = vand.u32 2147483647, %v4542
    %v4555 = vand.u32 2147483647, %v4543
    %v4556 = vand.u32 2147483647, %v4544
    %v4557 = vand.u32 2147483647, %v4545
    %v4558 = vand.u32 2147483647, %v4546
    %v4559 = vmul.f32 %v4547, 0.3275911
    %v4560 = vmul.f32 %v4548, 0.3275911
    %v4561 = vmul.f32 %v4549, 0.3275911
    %v4562 = vmul.f32 %v4550, 0.3275911
    %v4563 = vmul.f32 %v4551, 0.3275911
    %v4564 = vmul.f32 %v4552, 0.3275911
    %v4565 = vmul.f32 %v4553, 0.3275911
    %v4566 = vmul.f32 %v4554, 0.3275911
    %v4567 = vmul.f32 %v4555, 0.3275911
    %v4568 = vmul.f32 %v4556, 0.3275911
    %v4569 = vmul.f32 %v4557, 0.3275911
    %v4570 = vmul.f32 %v4558, 0.3275911
    %v4571 = vadd.f32 %v4559, 1.0
    %v4572 = vadd.f32 %v4560, 1.0
    %v4573 = vadd.f32 %v4561, 1.0
    %v4574 = vadd.f32 %v4562, 1.0
    %v4575 = vadd.f32 %v4563, 1.0
    %v4576 = vadd.f32 %v4564, 1.0
    %v4577 = vadd.f32 %v4565, 1.0
    %v4578 = vadd.f32 %v4566, 1.0
    %v4579 = vadd.f32 %v4567, 1.0
    %v4580 = vadd.f32 %v4568, 1.0
    %v4581 = vadd.f32 %v4569, 1.0
    %v4582 = vadd.f32 %v4570, 1.0
    %v4583 = vrcp.pop %v4571
    %v4584 = vmul.f32 %v4571, %v4583
    %v4585 = vsub.f32 1.0, %v4584
    %v4586 = vmul.f32 %v4583, %v4585
    %v4587 = vadd.f32 %v4583, %v4586
    %vm4588 = vweird.f32 %v4571
    %vm4589 = vweird.f32 %v4583
    %vm4590 = vmor %vm4588, %vm4589
    %v4591 = vsel %vm4590, %v4583, %v4587
    %v4592 = vand.u32 2147483647, %v4571
    %vm4593 = vcmp.eq.f32.partialorder %v4592, 8.507059e+37
    %v4594 = vand.u32 %v4571, 2147483648
    %v4595 = vor.u32 1.1754944e-38, %v4594
    %v4596 = vsel %vm4593, %v4595, %v4591
    %v4597 = vmul.f32 1.0, %v4596
    %v4598 = vrcp.pop %v4572
    %v4599 = vmul.f32 %v4572, %v4598
    %v4600 = vsub.f32 1.0, %v4599
    %v4601 = vmul.f32 %v4598, %v4600
    %v4602 = vadd.f32 %v4598, %v4601
    %vm4603 = vweird.f32 %v4572
    %vm4604 = vweird.f32 %v4598
    %vm4605 = vmor %vm4603, %vm4604
    %v4606 = vsel %vm4605, %v4598, %v4602
    %v4607 = vand.u32 2147483647, %v4572
    %vm4608 = vcmp.eq.f32.partialorder %v4607, 8.507059e+37
    %v4609 = vand.u32 %v4572, 2147483648
    %v4610 = vor.u32 1.1754944e-38, %v4609
    %v4611 = vsel %vm4608, %v4610, %v4606
    %v4612 = vmul.f32 1.0, %v4611
    %v4613 = vrcp.pop %v4573
    %v4614 = vmul.f32 %v4573, %v4613
    %v4615 = vsub.f32 1.0, %v4614
    %v4616 = vmul.f32 %v4613, %v4615
    %v4617 = vadd.f32 %v4613, %v4616
    %vm4618 = vweird.f32 %v4573
    %vm4619 = vweird.f32 %v4613
    %vm4620 = vmor %vm4618, %vm4619
    %v4621 = vsel %vm4620, %v4613, %v4617
    %v4622 = vand.u32 2147483647, %v4573
    %vm4623 = vcmp.eq.f32.partialorder %v4622, 8.507059e+37
    %v4624 = vand.u32 %v4573, 2147483648
    %v4625 = vor.u32 1.1754944e-38, %v4624
    %v4626 = vsel %vm4623, %v4625, %v4621
    %v4627 = vmul.f32 1.0, %v4626
    %v4628 = vrcp.pop %v4574
    %v4629 = vmul.f32 %v4574, %v4628
    %v4630 = vsub.f32 1.0, %v4629
    %v4631 = vmul.f32 %v4628, %v4630
    %v4632 = vadd.f32 %v4628, %v4631
    %vm4633 = vweird.f32 %v4574
    %vm4634 = vweird.f32 %v4628
    %vm4635 = vmor %vm4633, %vm4634
    %v4636 = vsel %vm4635, %v4628, %v4632
    %v4637 = vand.u32 2147483647, %v4574
    %vm4638 = vcmp.eq.f32.partialorder %v4637, 8.507059e+37
    %v4639 = vand.u32 %v4574, 2147483648
    %v4640 = vor.u32 1.1754944e-38, %v4639
    %v4641 = vsel %vm4638, %v4640, %v4636
    %v4642 = vmul.f32 1.0, %v4641
    %v4643 = vrcp.pop %v4575
    %v4644 = vmul.f32 %v4575, %v4643
    %v4645 = vsub.f32 1.0, %v4644
    %v4646 = vmul.f32 %v4643, %v4645
    %v4647 = vadd.f32 %v4643, %v4646
    %vm4648 = vweird.f32 %v4575
    %vm4649 = vweird.f32 %v4643
    %vm4650 = vmor %vm4648, %vm4649
    %v4651 = vsel %vm4650, %v4643, %v4647
    %v4652 = vand.u32 2147483647, %v4575
    %vm4653 = vcmp.eq.f32.partialorder %v4652, 8.507059e+37
    %v4654 = vand.u32 %v4575, 2147483648
    %v4655 = vor.u32 1.1754944e-38, %v4654
    %v4656 = vsel %vm4653, %v4655, %v4651
    %v4657 = vmul.f32 1.0, %v4656
    %v4658 = vrcp.pop %v4576
    %v4659 = vmul.f32 %v4576, %v4658
    %v4660 = vsub.f32 1.0, %v4659
    %v4661 = vmul.f32 %v4658, %v4660
    %v4662 = vadd.f32 %v4658, %v4661
    %vm4663 = vweird.f32 %v4576
    %vm4664 = vweird.f32 %v4658
    %vm4665 = vmor %vm4663, %vm4664
    %v4666 = vsel %vm4665, %v4658, %v4662
    %v4667 = vand.u32 2147483647, %v4576
    %vm4668 = vcmp.eq.f32.partialorder %v4667, 8.507059e+37
    %v4669 = vand.u32 %v4576, 2147483648
    %v4670 = vor.u32 1.1754944e-38, %v4669
    %v4671 = vsel %vm4668, %v4670, %v4666
    %v4672 = vmul.f32 1.0, %v4671
    %v4673 = vrcp.pop %v4577
    %v4674 = vmul.f32 %v4577, %v4673
    %v4675 = vsub.f32 1.0, %v4674
    %v4676 = vmul.f32 %v4673, %v4675
    %v4677 = vadd.f32 %v4673, %v4676
    %vm4678 = vweird.f32 %v4577
    %vm4679 = vweird.f32 %v4673
    %vm4680 = vmor %vm4678, %vm4679
    %v4681 = vsel %vm4680, %v4673, %v4677
    %v4682 = vand.u32 2147483647, %v4577
    %vm4683 = vcmp.eq.f32.partialorder %v4682, 8.507059e+37
    %v4684 = vand.u32 %v4577, 2147483648
    %v4685 = vor.u32 1.1754944e-38, %v4684
    %v4686 = vsel %vm4683, %v4685, %v4681
    %v4687 = vmul.f32 1.0, %v4686
    %v4688 = vrcp.pop %v4578
    %v4689 = vmul.f32 %v4578, %v4688
    %v4690 = vsub.f32 1.0, %v4689
    %v4691 = vmul.f32 %v4688, %v4690
    %v4692 = vadd.f32 %v4688, %v4691
    %vm4693 = vweird.f32 %v4578
    %vm4694 = vweird.f32 %v4688
    %vm4695 = vmor %vm4693, %vm4694
    %v4696 = vsel %vm4695, %v4688, %v4692
    %v4697 = vand.u32 2147483647, %v4578
    %vm4698 = vcmp.eq.f32.partialorder %v4697, 8.507059e+37
    %v4699 = vand.u32 %v4578, 2147483648
    %v4700 = vor.u32 1.1754944e-38, %v4699
    %v4701 = vsel %vm4698, %v4700, %v4696
    %v4702 = vmul.f32 1.0, %v4701
    %v4703 = vrcp.pop %v4579
    %v4704 = vmul.f32 %v4579, %v4703
    %v4705 = vsub.f32 1.0, %v4704
    %v4706 = vmul.f32 %v4703, %v4705
    %v4707 = vadd.f32 %v4703, %v4706
    %vm4708 = vweird.f32 %v4579
    %vm4709 = vweird.f32 %v4703
    %vm4710 = vmor %vm4708, %vm4709
    %v4711 = vsel %vm4710, %v4703, %v4707
    %v4712 = vand.u32 2147483647, %v4579
    %vm4713 = vcmp.eq.f32.partialorder %v4712, 8.507059e+37
    %v4714 = vand.u32 %v4579, 2147483648
    %v4715 = vor.u32 1.1754944e-38, %v4714
    %v4716 = vsel %vm4713, %v4715, %v4711
    %v4717 = vmul.f32 1.0, %v4716
    %v4718 = vrcp.pop %v4580
    %v4719 = vmul.f32 %v4580, %v4718
    %v4720 = vsub.f32 1.0, %v4719
    %v4721 = vmul.f32 %v4718, %v4720
    %v4722 = vadd.f32 %v4718, %v4721
    %vm4723 = vweird.f32 %v4580
    %vm4724 = vweird.f32 %v4718
    %vm4725 = vmor %vm4723, %vm4724
    %v4726 = vsel %vm4725, %v4718, %v4722
    %v4727 = vand.u32 2147483647, %v4580
    %vm4728 = vcmp.eq.f32.partialorder %v4727, 8.507059e+37
    %v4729 = vand.u32 %v4580, 2147483648
    %v4730 = vor.u32 1.1754944e-38, %v4729
    %v4731 = vsel %vm4728, %v4730, %v4726
    %v4732 = vmul.f32 1.0, %v4731
    %v4733 = vrcp.pop %v4581
    %v4734 = vmul.f32 %v4581, %v4733
    %v4735 = vsub.f32 1.0, %v4734
    %v4736 = vmul.f32 %v4733, %v4735
    %v4737 = vadd.f32 %v4733, %v4736
    %vm4738 = vweird.f32 %v4581
    %vm4739 = vweird.f32 %v4733
    %vm4740 = vmor %vm4738, %vm4739
    %v4741 = vsel %vm4740, %v4733, %v4737
    %v4742 = vand.u32 2147483647, %v4581
    %vm4743 = vcmp.eq.f32.partialorder %v4742, 8.507059e+37
    %v4744 = vand.u32 %v4581, 2147483648
    %v4745 = vor.u32 1.1754944e-38, %v4744
    %v4746 = vsel %vm4743, %v4745, %v4741
    %v4747 = vmul.f32 1.0, %v4746
    %v4748 = vrcp.pop %v4582
    %v4749 = vmul.f32 %v4582, %v4748
    %v4750 = vsub.f32 1.0, %v4749
    %v4751 = vmul.f32 %v4748, %v4750
    %v4752 = vadd.f32 %v4748, %v4751
    %vm4753 = vweird.f32 %v4582
    %vm4754 = vweird.f32 %v4748
    %vm4755 = vmor %vm4753, %vm4754
    %v4756 = vsel %vm4755, %v4748, %v4752
    %v4757 = vand.u32 2147483647, %v4582
    %vm4758 = vcmp.eq.f32.partialorder %v4757, 8.507059e+37
    %v4759 = vand.u32 %v4582, 2147483648
    %v4760 = vor.u32 1.1754944e-38, %v4759
    %v4761 = vsel %vm4758, %v4760, %v4756
    %v4762 = vmul.f32 1.0, %v4761
    %v4763 = vmul.f32 %v4597, 1.0614054
    %v4764 = vmul.f32 %v4612, 1.0614054
    %v4765 = vmul.f32 %v4627, 1.0614054
    %v4766 = vmul.f32 %v4642, 1.0614054
    %v4767 = vmul.f32 %v4657, 1.0614054
    %v4768 = vmul.f32 %v4672, 1.0614054
    %v4769 = vmul.f32 %v4687, 1.0614054
    %v4770 = vmul.f32 %v4702, 1.0614054
    %v4771 = vmul.f32 %v4717, 1.0614054
    %v4772 = vmul.f32 %v4732, 1.0614054
    %v4773 = vmul.f32 %v4747, 1.0614054
    %v4774 = vmul.f32 %v4762, 1.0614054
    %v4775 = vadd.f32 %v4763, -1.4531521
    %v4776 = vadd.f32 %v4764, -1.4531521
    %v4777 = vadd.f32 %v4765, -1.4531521
    %v4778 = vadd.f32 %v4766, -1.4531521
    %v4779 = vadd.f32 %v4767, -1.4531521
    %v4780 = vadd.f32 %v4768, -1.4531521
    %v4781 = vadd.f32 %v4769, -1.4531521
    %v4782 = vadd.f32 %v4770, -1.4531521
    %v4783 = vadd.f32 %v4771, -1.4531521
    %v4784 = vadd.f32 %v4772, -1.4531521
    %v4785 = vadd.f32 %v4773, -1.4531521
    %v4786 = vadd.f32 %v4774, -1.4531521
    %v4787 = vmul.f32 %v4775, %v4597
    %v4788 = vmul.f32 %v4776, %v4612
    %v4789 = vmul.f32 %v4777, %v4627
    %v4790 = vmul.f32 %v4778, %v4642
    %v4791 = vmul.f32 %v4779, %v4657
    %v4792 = vmul.f32 %v4780, %v4672
    %v4793 = vmul.f32 %v4781, %v4687
    %v4794 = vmul.f32 %v4782, %v4702
    %v4795 = vmul.f32 %v4783, %v4717
    %v4796 = vmul.f32 %v4784, %v4732
    %v4797 = vmul.f32 %v4785, %v4747
    %v4798 = vmul.f32 %v4786, %v4762
    %v4799 = vadd.f32 %v4787, 1.4214138
    %v4800 = vadd.f32 %v4788, 1.4214138
    %v4801 = vadd.f32 %v4789, 1.4214138
    %v4802 = vadd.f32 %v4790, 1.4214138
    %v4803 = vadd.f32 %v4791, 1.4214138
    %v4804 = vadd.f32 %v4792, 1.4214138
    %v4805 = vadd.f32 %v4793, 1.4214138
    %v4806 = vadd.f32 %v4794, 1.4214138
    %v4807 = vadd.f32 %v4795, 1.4214138
    %v4808 = vadd.f32 %v4796, 1.4214138
    %v4809 = vadd.f32 %v4797, 1.4214138
    %v4810 = vadd.f32 %v4798, 1.4214138
    %v4811 = vmul.f32 %v4799, %v4597
    %v4812 = vmul.f32 %v4800, %v4612
    %v4813 = vmul.f32 %v4801, %v4627
    %v4814 = vmul.f32 %v4802, %v4642
    %v4815 = vmul.f32 %v4803, %v4657
    %v4816 = vmul.f32 %v4804, %v4672
    %v4817 = vmul.f32 %v4805, %v4687
    %v4818 = vmul.f32 %v4806, %v4702
    %v4819 = vmul.f32 %v4807, %v4717
    %v4820 = vmul.f32 %v4808, %v4732
    %v4821 = vmul.f32 %v4809, %v4747
    %v4822 = vmul.f32 %v4810, %v4762
    %v4823 = vadd.f32 %v4811, -0.28449672
    %v4824 = vadd.f32 %v4812, -0.28449672
    %v4825 = vadd.f32 %v4813, -0.28449672
    %v4826 = vadd.f32 %v4814, -0.28449672
    %v4827 = vadd.f32 %v4815, -0.28449672
    %v4828 = vadd.f32 %v4816, -0.28449672
    %v4829 = vadd.f32 %v4817, -0.28449672
    %v4830 = vadd.f32 %v4818, -0.28449672
    %v4831 = vadd.f32 %v4819, -0.28449672
    %v4832 = vadd.f32 %v4820, -0.28449672
    %v4833 = vadd.f32 %v4821, -0.28449672
    %v4834 = vadd.f32 %v4822, -0.28449672
    %v4835 = vmul.f32 %v4823, %v4597
    %v4836 = vmul.f32 %v4824, %v4612
    %v4837 = vmul.f32 %v4825, %v4627
    %v4838 = vmul.f32 %v4826, %v4642
    %v4839 = vmul.f32 %v4827, %v4657
    %v4840 = vmul.f32 %v4828, %v4672
    %v4841 = vmul.f32 %v4829, %v4687
    %v4842 = vmul.f32 %v4830, %v4702
    %v4843 = vmul.f32 %v4831, %v4717
    %v4844 = vmul.f32 %v4832, %v4732
    %v4845 = vmul.f32 %v4833, %v4747
    %v4846 = vmul.f32 %v4834, %v4762
    %v4847 = vadd.f32 %v4835, 0.2548296
    %v4848 = vadd.f32 %v4836, 0.2548296
    %v4849 = vadd.f32 %v4837, 0.2548296
    %v4850 = vadd.f32 %v4838, 0.2548296
    %v4851 = vadd.f32 %v4839, 0.2548296
    %v4852 = vadd.f32 %v4840, 0.2548296
    %v4853 = vadd.f32 %v4841, 0.2548296
    %v4854 = vadd.f32 %v4842, 0.2548296
    %v4855 = vadd.f32 %v4843, 0.2548296
    %v4856 = vadd.f32 %v4844, 0.2548296
    %v4857 = vadd.f32 %v4845, 0.2548296
    %v4858 = vadd.f32 %v4846, 0.2548296
    %v4859 = vmul.f32 %v4847, %v4597
    %v4860 = vmul.f32 %v4848, %v4612
    %v4861 = vmul.f32 %v4849, %v4627
    %v4862 = vmul.f32 %v4850, %v4642
    %v4863 = vmul.f32 %v4851, %v4657
    %v4864 = vmul.f32 %v4852, %v4672
    %v4865 = vmul.f32 %v4853, %v4687
    %v4866 = vmul.f32 %v4854, %v4702
    %v4867 = vmul.f32 %v4855, %v4717
    %v4868 = vmul.f32 %v4856, %v4732
    %v4869 = vmul.f32 %v4857, %v4747
    %v4870 = vmul.f32 %v4858, %v4762
    %v4871 = vsub.f32 0.0, %v4547
    %v4872 = vsub.f32 0.0, %v4548
    %v4873 = vsub.f32 0.0, %v4549
    %v4874 = vsub.f32 0.0, %v4550
    %v4875 = vsub.f32 0.0, %v4551
    %v4876 = vsub.f32 0.0, %v4552
    %v4877 = vsub.f32 0.0, %v4553
    %v4878 = vsub.f32 0.0, %v4554
    %v4879 = vsub.f32 0.0, %v4555
    %v4880 = vsub.f32 0.0, %v4556
    %v4881 = vsub.f32 0.0, %v4557
    %v4882 = vsub.f32 0.0, %v4558
    %v4883 = vmul.f32 %v4871, %v4547
    %v4884 = vmul.f32 %v4872, %v4548
    %v4885 = vmul.f32 %v4873, %v4549
    %v4886 = vmul.f32 %v4874, %v4550
    %v4887 = vmul.f32 %v4875, %v4551
    %v4888 = vmul.f32 %v4876, %v4552
    %v4889 = vmul.f32 %v4877, %v4553
    %v4890 = vmul.f32 %v4878, %v4554
    %v4891 = vmul.f32 %v4879, %v4555
    %v4892 = vmul.f32 %v4880, %v4556
    %v4893 = vmul.f32 %v4881, %v4557
    %v4894 = vmul.f32 %v4882, %v4558
    %v4895 = vmul.f32 %v4883, 1.442695
    %v4896 = vpow.pop %v4895
    %v4897 = vmul.f32 %v4884, 1.442695
    %v4898 = vpow.pop %v4897
    %v4899 = vmul.f32 %v4885, 1.442695
    %v4900 = vpow.pop %v4899
    %v4901 = vmul.f32 %v4886, 1.442695
    %v4902 = vpow.pop %v4901
    %v4903 = vmul.f32 %v4887, 1.442695
    %v4904 = vpow.pop %v4903
    %v4905 = vmul.f32 %v4888, 1.442695
    %v4906 = vpow.pop %v4905
    %v4907 = vmul.f32 %v4889, 1.442695
    %v4908 = vpow.pop %v4907
    %v4909 = vmul.f32 %v4890, 1.442695
    %v4910 = vpow.pop %v4909
    %v4911 = vmul.f32 %v4891, 1.442695
    %v4912 = vpow.pop %v4911
    %v4913 = vmul.f32 %v4892, 1.442695
    %v4914 = vpow.pop %v4913
    %v4915 = vmul.f32 %v4893, 1.442695
    %v4916 = vpow.pop %v4915
    %v4917 = vmul.f32 %v4894, 1.442695
    %v4918 = vpow.pop %v4917
    %v4919 = vmul.f32 %v4859, %v4896
    %v4920 = vmul.f32 %v4860, %v4898
    %v4921 = vmul.f32 %v4861, %v4900
    %v4922 = vmul.f32 %v4862, %v4902
    %v4923 = vmul.f32 %v4863, %v4904
    %v4924 = vmul.f32 %v4864, %v4906
    %v4925 = vmul.f32 %v4865, %v4908
    %v4926 = vmul.f32 %v4866, %v4910
    %v4927 = vmul.f32 %v4867, %v4912
    %v4928 = vmul.f32 %v4868, %v4914
    %v4929 = vmul.f32 %v4869, %v4916
    %v4930 = vmul.f32 %v4870, %v4918
    %v4931 = vsub.f32 1.0, %v4919
    %v4932 = vsub.f32 1.0, %v4920
    %v4933 = vsub.f32 1.0, %v4921
    %v4934 = vsub.f32 1.0, %v4922
    %v4935 = vsub.f32 1.0, %v4923
    %v4936 = vsub.f32 1.0, %v4924
    %v4937 = vsub.f32 1.0, %v4925
    %v4938 = vsub.f32 1.0, %v4926
    %v4939 = vsub.f32 1.0, %v4927
    %v4940 = vsub.f32 1.0, %v4928
    %v4941 = vsub.f32 1.0, %v4929
    %v4942 = vsub.f32 1.0, %v4930
    %vm4943 = vcmp.lt.f32.partialorder %v4535, 0.0
    %vm4944 = vcmp.lt.f32.partialorder %v4536, 0.0
    %vm4945 = vcmp.lt.f32.partialorder %v4537, 0.0
    %vm4946 = vcmp.lt.f32.partialorder %v4538, 0.0
    %vm4947 = vcmp.lt.f32.partialorder %v4539, 0.0
    %vm4948 = vcmp.lt.f32.partialorder %v4540, 0.0
    %vm4949 = vcmp.lt.f32.partialorder %v4541, 0.0
    %vm4950 = vcmp.lt.f32.partialorder %v4542, 0.0
    %vm4951 = vcmp.lt.f32.partialorder %v4543, 0.0
    %vm4952 = vcmp.lt.f32.partialorder %v4544, 0.0
    %vm4953 = vcmp.lt.f32.partialorder %v4545, 0.0
    %vm4954 = vcmp.lt.f32.partialorder %v4546, 0.0
    %v4955 = vsub.f32 0.0, %v4931
    %v4956 = vsub.f32 0.0, %v4932
    %v4957 = vsub.f32 0.0, %v4933
    %v4958 = vsub.f32 0.0, %v4934
    %v4959 = vsub.f32 0.0, %v4935
    %v4960 = vsub.f32 0.0, %v4936
    %v4961 = vsub.f32 0.0, %v4937
    %v4962 = vsub.f32 0.0, %v4938
    %v4963 = vsub.f32 0.0, %v4939
    %v4964 = vsub.f32 0.0, %v4940
    %v4965 = vsub.f32 0.0, %v4941
    %v4966 = vsub.f32 0.0, %v4942
    %v4967 = vsel %vm4943, %v4955, %v4931
    %v4968 = vsel %vm4944, %v4956, %v4932
    %v4969 = vsel %vm4945, %v4957, %v4933
    %v4970 = vsel %vm4946, %v4958, %v4934
    %v4971 = vsel %vm4947, %v4959, %v4935
    %v4972 = vsel %vm4948, %v4960, %v4936
    %v4973 = vsel %vm4949, %v4961, %v4937
    %v4974 = vsel %vm4950, %v4962, %v4938
    %v4975 = vsel %vm4951, %v4963, %v4939
    %v4976 = vsel %vm4952, %v4964, %v4940
    %v4977 = vsel %vm4953, %v4965, %v4941
    %v4978 = vsel %vm4954, %v4966, %v4942
    %v4979 = vadd.f32 %v4967, 1.0
    %v4980 = vadd.f32 %v4968, 1.0
    %v4981 = vadd.f32 %v4969, 1.0
    %v4982 = vadd.f32 %v4970, 1.0
    %v4983 = vadd.f32 %v4971, 1.0
    %v4984 = vadd.f32 %v4972, 1.0
    %v4985 = vadd.f32 %v4973, 1.0
    %v4986 = vadd.f32 %v4974, 1.0
    %v4987 = vadd.f32 %v4975, 1.0
    %v4988 = vadd.f32 %v4976, 1.0
    %v4989 = vadd.f32 %v4977, 1.0
    %v4990 = vadd.f32 %v4978, 1.0
    %v4991 = vmul.f32 %v4523, %v4979
    %v4992 = vmul.f32 %v4524, %v4980
    %v4993 = vmul.f32 %v4525, %v4981
    %v4994 = vmul.f32 %v4526, %v4982
    %v4995 = vmul.f32 %v4527, %v4983
    %v4996 = vmul.f32 %v4528, %v4984
    %v4997 = vmul.f32 %v4529, %v4985
    %v4998 = vmul.f32 %v4530, %v4986
    %v4999 = vmul.f32 %v4531, %v4987
    %v5000 = vmul.f32 %v4532, %v4988
    %v5001 = vmul.f32 %v4533, %v4989
    %v5002 = vmul.f32 %v4534, %v4990
    %v5003 = vpack.c.bf16 %v4992, %v4991
    %v5004 = vpack.c.bf16 %v4994, %v4993
    %v5005 = vpack.c.bf16 %v4996, %v4995
    %v5006 = vpack.c.bf16 %v4998, %v4997
    %v5007 = vpack.c.bf16 %v5000, %v4999
    %v5008 = vpack.c.bf16 %v5002, %v5001
    %s5009 = scalar_lea.vmem %s13, 64
    %v5010 = vld [vmem:[%s5009] sm:$0xf]
    %v5011 = vld [vmem:[%s5009 + $0x4] sm:$0xf]
    %v5012 = vld [vmem:[%s5009 + $0x8] sm:$0xf]
    %v5013 = vld [vmem:[%s5009 + $0xc] sm:$0xf]
    %v5014 = vld [vmem:[%s5009 + $0x10] sm:$0xf]
    %v5015 = vld [vmem:[%s5009 + $0x14] sm:$0xf]
    %v5016 = vld [vmem:[%s5009 + $0x18] sm:$0xf]
    %v5017 = vld [vmem:[%s5009 + $0x1c] sm:$0xf]
    %v5018 = vld [vmem:[%s5009 + $0x20] sm:$0xf]
    %v5019 = vld [vmem:[%s5009 + $0x24] sm:$0xf]
    %v5020 = vld [vmem:[%s5009 + $0x28] sm:$0xf]
    %v5021 = vld [vmem:[%s5009 + $0x2c] sm:$0xf]
    %v5022 = vld [vmem:[%s5009 + $0x30] sm:$0xf]
    %v5023 = vld [vmem:[%s5009 + $0x34] sm:$0xf]
    %v5024 = vld [vmem:[%s5009 + $0x38] sm:$0xf]
    %v5025 = vld [vmem:[%s5009 + $0x3c] sm:$0xf]
    %v5042 = vunpack.c.l.b16 %v5010
    %v5043 = vunpack.c.l.b16 %v5011
    %v5044 = vunpack.c.l.b16 %v5012
    %v5045 = vunpack.c.l.b16 %v5013
    %v5046 = vunpack.c.l.b16 %v5014
    %v5047 = vunpack.c.l.b16 %v5015
    %v5048 = vunpack.c.l.b16 %v5016
    %v5049 = vunpack.c.l.b16 %v5017
    %v5050 = vunpack.c.l.b16 %v5018
    %v5051 = vunpack.c.l.b16 %v5019
    %v5052 = vunpack.c.l.b16 %v5020
    %v5053 = vunpack.c.l.b16 %v5021
    %v5054 = vunpack.c.l.b16 %v5022
    %v5055 = vunpack.c.l.b16 %v5023
    %v5056 = vunpack.c.l.b16 %v5024
    %v5057 = vunpack.c.l.b16 %v5025
    %v5058 = vpack.c.b16 %v5043, %v5042
    %v5059 = vpack.c.b16 %v5045, %v5044
    %v5060 = vpack.c.b16 %v5047, %v5046
    %v5061 = vpack.c.b16 %v5049, %v5048
    %v5062 = vpack.c.b16 %v5051, %v5050
    %v5063 = vpack.c.b16 %v5053, %v5052
    %v5064 = vpack.c.b16 %v5055, %v5054
    %v5065 = vpack.c.b16 %v5057, %v5056
    %5074 = vmatpush.bf16.msra.mxu0 %v5065
    %5075 = vmatpush.bf16.msra.mxu0 %v5064
    %5076 = vmatpush.bf16.msra.mxu0 %v5063
    %5077 = vmatpush.bf16.msra.mxu0 %v5062
    %5078 = vmatpush.bf16.msra.mxu0 %v5061
    %5079 = vmatpush.bf16.msra.mxu0 %v5060
    %5080 = vmatpush.bf16.msra.mxu0 %v5059
    %5081 = vmatpush.bf16.msra.mxu0 %v5058
    %5082 = vmatmul.bf16.gmra.mxu0 %v5003
    %v5083 = vpop.f32.mrf.mxu0
    %v5084 = vadd.f32 0.0, %v5083
    %v5085 = vpop.f32.mrf.mxu0
    %v5086 = vadd.f32 0.0, %v5085
    %5087 = vmatmul.bf16.gmra.mxu0 %v5004
    %v5088 = vpop.f32.mrf.mxu0
    %v5089 = vadd.f32 0.0, %v5088
    %v5090 = vpop.f32.mrf.mxu0
    %v5091 = vadd.f32 0.0, %v5090
    %5092 = vmatmul.bf16.gmra.mxu0 %v5005
    %v5093 = vpop.f32.mrf.mxu0
    %v5094 = vadd.f32 0.0, %v5093
    %v5095 = vpop.f32.mrf.mxu0
    %v5096 = vadd.f32 0.0, %v5095
    %5097 = vmatmul.bf16.gmra.mxu0 %v5006
    %v5098 = vpop.f32.mrf.mxu0
    %v5099 = vadd.f32 0.0, %v5098
    %v5100 = vpop.f32.mrf.mxu0
    %v5101 = vadd.f32 0.0, %v5100
    %5102 = vmatmul.bf16.gmra.mxu0 %v5007
    %v5103 = vpop.f32.mrf.mxu0
    %v5104 = vadd.f32 0.0, %v5103
    %v5105 = vpop.f32.mrf.mxu0
    %v5106 = vadd.f32 0.0, %v5105
    %5107 = vmatmul.bf16.gmra.mxu0 %v5008
    %v5108 = vpop.f32.mrf.mxu0
    %v5109 = vadd.f32 0.0, %v5108
    %v5110 = vpop.f32.mrf.mxu0
    %v5111 = vadd.f32 0.0, %v5110
    %5112 = vdwg.mxu0
    %v5113 = vadd.f32 %v4128, %v5084
    %v5114 = vadd.f32 %v4129, %v5086
    %v5115 = vadd.f32 %v4130, %v5089
    %v5116 = vadd.f32 %v4131, %v5091
    %v5117 = vadd.f32 %v4132, %v5094
    %v5118 = vadd.f32 %v4133, %v5096
    %v5119 = vadd.f32 %v4134, %v5099
    %v5120 = vadd.f32 %v4135, %v5101
    %v5121 = vadd.f32 %v4136, %v5104
    %v5122 = vadd.f32 %v4137, %v5106
    %v5123 = vadd.f32 %v4138, %v5109
    %v5124 = vadd.f32 %v4139, %v5111
    %s5125 = scalar_lea.vmem %s14, 1
    %v5126 = vld [vmem:[%s5125] sm:$0x1]
    %v5128 = vperm.slane %v5126, 0
    %v5130 = vadd.f32 %v5113, %v5128
    %v5131 = vadd.f32 %v5114, %v5128
    %v5132 = vadd.f32 %v5115, %v5128
    %v5133 = vadd.f32 %v5116, %v5128
    %v5134 = vadd.f32 %v5117, %v5128
    %v5135 = vadd.f32 %v5118, %v5128
    %v5136 = vadd.f32 %v5119, %v5128
    %v5137 = vadd.f32 %v5120, %v5128
    %v5138 = vadd.f32 %v5121, %v5128
    %v5139 = vadd.f32 %v5122, %v5128
    %v5140 = vadd.f32 %v5123, %v5128
    %v5141 = vadd.f32 %v5124, %v5128
    %v5142 = vld [vmem:[%s15] sm:$0x1]
    %v5143 = vld [vmem:[%s16] sm:$0x1]
    %v5144 = vsel %vm94, %v5130, 0.0
    %5145 = vadd.xlane.f32.xlu0 %v5144
    %v5146 = vpop.xlane.xlu0 %5145
    %v5147 = vsel %vm94, %v5131, 0.0
    %5148 = vadd.xlane.f32.xlu0 %v5147
    %v5149 = vpop.xlane.xlu0 %5148
    %v5150 = vsel %vm94, %v5132, 0.0
    %5151 = vadd.xlane.f32.xlu0 %v5150
    %v5152 = vpop.xlane.xlu0 %5151
    %v5153 = vsel %vm94, %v5133, 0.0
    %5154 = vadd.xlane.f32.xlu0 %v5153
    %v5155 = vpop.xlane.xlu0 %5154
    %v5156 = vsel %vm94, %v5134, 0.0
    %5157 = vadd.xlane.f32.xlu0 %v5156
    %v5158 = vpop.xlane.xlu0 %5157
    %v5159 = vsel %vm94, %v5135, 0.0
    %5160 = vadd.xlane.f32.xlu0 %v5159
    %v5161 = vpop.xlane.xlu0 %5160
    %v5162 = vsel %vm94, %v5136, 0.0
    %5163 = vadd.xlane.f32.xlu0 %v5162
    %v5164 = vpop.xlane.xlu0 %5163
    %v5165 = vsel %vm94, %v5137, 0.0
    %5166 = vadd.xlane.f32.xlu0 %v5165
    %v5167 = vpop.xlane.xlu0 %5166
    %v5168 = vsel %vm94, %v5138, 0.0
    %5169 = vadd.xlane.f32.xlu0 %v5168
    %v5170 = vpop.xlane.xlu0 %5169
    %v5171 = vsel %vm94, %v5139, 0.0
    %5172 = vadd.xlane.f32.xlu0 %v5171
    %v5173 = vpop.xlane.xlu0 %5172
    %v5174 = vsel %vm94, %v5140, 0.0
    %5175 = vadd.xlane.f32.xlu0 %v5174
    %v5176 = vpop.xlane.xlu0 %5175
    %v5177 = vsel %vm94, %v5141, 0.0
    %5178 = vadd.xlane.f32.xlu0 %v5177
    %v5179 = vpop.xlane.xlu0 %5178
    %v5180 = vmul.f32 %v5146, %v137
    %v5181 = vmul.f32 %v5149, %v137
    %v5182 = vmul.f32 %v5152, %v137
    %v5183 = vmul.f32 %v5155, %v137
    %v5184 = vmul.f32 %v5158, %v137
    %v5185 = vmul.f32 %v5161, %v137
    %v5186 = vmul.f32 %v5164, %v137
    %v5187 = vmul.f32 %v5167, %v137
    %v5188 = vmul.f32 %v5170, %v137
    %v5189 = vmul.f32 %v5173, %v137
    %v5190 = vmul.f32 %v5176, %v137
    %v5191 = vmul.f32 %v5179, %v137
    %v5192 = vsub.f32 %v5130, %v5180
    %v5193 = vsub.f32 %v5131, %v5181
    %v5194 = vsub.f32 %v5132, %v5182
    %v5195 = vsub.f32 %v5133, %v5183
    %v5196 = vsub.f32 %v5134, %v5184
    %v5197 = vsub.f32 %v5135, %v5185
    %v5198 = vsub.f32 %v5136, %v5186
    %v5199 = vsub.f32 %v5137, %v5187
    %v5200 = vsub.f32 %v5138, %v5188
    %v5201 = vsub.f32 %v5139, %v5189
    %v5202 = vsub.f32 %v5140, %v5190
    %v5203 = vsub.f32 %v5141, %v5191
    %v5204 = vmul.f32 %v5192, %v5192
    %v5205 = vmul.f32 %v5193, %v5193
    %v5206 = vmul.f32 %v5194, %v5194
    %v5207 = vmul.f32 %v5195, %v5195
    %v5208 = vmul.f32 %v5196, %v5196
    %v5209 = vmul.f32 %v5197, %v5197
    %v5210 = vmul.f32 %v5198, %v5198
    %v5211 = vmul.f32 %v5199, %v5199
    %v5212 = vmul.f32 %v5200, %v5200
    %v5213 = vmul.f32 %v5201, %v5201
    %v5214 = vmul.f32 %v5202, %v5202
    %v5215 = vmul.f32 %v5203, %v5203
    %v5216 = vsel %vm94, %v5204, 0.0
    %5217 = vadd.xlane.f32.xlu0 %v5216
    %v5218 = vpop.xlane.xlu0 %5217
    %v5219 = vsel %vm94, %v5205, 0.0
    %5220 = vadd.xlane.f32.xlu0 %v5219
    %v5221 = vpop.xlane.xlu0 %5220
    %v5222 = vsel %vm94, %v5206, 0.0
    %5223 = vadd.xlane.f32.xlu0 %v5222
    %v5224 = vpop.xlane.xlu0 %5223
    %v5225 = vsel %vm94, %v5207, 0.0
    %5226 = vadd.xlane.f32.xlu0 %v5225
    %v5227 = vpop.xlane.xlu0 %5226
    %v5228 = vsel %vm94, %v5208, 0.0
    %5229 = vadd.xlane.f32.xlu0 %v5228
    %v5230 = vpop.xlane.xlu0 %5229
    %v5231 = vsel %vm94, %v5209, 0.0
    %5232 = vadd.xlane.f32.xlu0 %v5231
    %v5233 = vpop.xlane.xlu0 %5232
    %v5234 = vsel %vm94, %v5210, 0.0
    %5235 = vadd.xlane.f32.xlu0 %v5234
    %v5236 = vpop.xlane.xlu0 %5235
    %v5237 = vsel %vm94, %v5211, 0.0
    %5238 = vadd.xlane.f32.xlu0 %v5237
    %v5239 = vpop.xlane.xlu0 %5238
    %v5240 = vsel %vm94, %v5212, 0.0
    %5241 = vadd.xlane.f32.xlu0 %v5240
    %v5242 = vpop.xlane.xlu0 %5241
    %v5243 = vsel %vm94, %v5213, 0.0
    %5244 = vadd.xlane.f32.xlu0 %v5243
    %v5245 = vpop.xlane.xlu0 %5244
    %v5246 = vsel %vm94, %v5214, 0.0
    %5247 = vadd.xlane.f32.xlu0 %v5246
    %v5248 = vpop.xlane.xlu0 %5247
    %v5249 = vsel %vm94, %v5215, 0.0
    %5250 = vadd.xlane.f32.xlu0 %v5249
    %v5251 = vpop.xlane.xlu0 %5250
    %v5252 = vmul.f32 %v5218, %v137
    %v5253 = vmul.f32 %v5221, %v137
    %v5254 = vmul.f32 %v5224, %v137
    %v5255 = vmul.f32 %v5227, %v137
    %v5256 = vmul.f32 %v5230, %v137
    %v5257 = vmul.f32 %v5233, %v137
    %v5258 = vmul.f32 %v5236, %v137
    %v5259 = vmul.f32 %v5239, %v137
    %v5260 = vmul.f32 %v5242, %v137
    %v5261 = vmul.f32 %v5245, %v137
    %v5262 = vmul.f32 %v5248, %v137
    %v5263 = vmul.f32 %v5251, %v137
    %v5264 = vadd.f32 %v5252, 1e-05
    %v5265 = vadd.f32 %v5253, 1e-05
    %v5266 = vadd.f32 %v5254, 1e-05
    %v5267 = vadd.f32 %v5255, 1e-05
    %v5268 = vadd.f32 %v5256, 1e-05
    %v5269 = vadd.f32 %v5257, 1e-05
    %v5270 = vadd.f32 %v5258, 1e-05
    %v5271 = vadd.f32 %v5259, 1e-05
    %v5272 = vadd.f32 %v5260, 1e-05
    %v5273 = vadd.f32 %v5261, 1e-05
    %v5274 = vadd.f32 %v5262, 1e-05
    %v5275 = vadd.f32 %v5263, 1e-05
    %v5276 = vrsqrt.pop %v5264
    %v5277 = vmul.f32 %v5276, %v5264
    %v5278 = vmul.f32 %v5277, %v5276
    %v5279 = vmul.f32 0.5, %v5278
    %v5280 = vsub.f32 1.5, %v5279
    %v5281 = vmul.f32 %v5276, %v5280
    %vm5282 = vweird.f32 %v5264
    %vm5283 = vweird.f32 %v5276
    %vm5284 = vmor %vm5282, %vm5283
    %v5285 = vsel %vm5284, %v5276, %v5281
    %v5286 = vrsqrt.pop %v5265
    %v5287 = vmul.f32 %v5286, %v5265
    %v5288 = vmul.f32 %v5287, %v5286
    %v5289 = vmul.f32 0.5, %v5288
    %v5290 = vsub.f32 1.5, %v5289
    %v5291 = vmul.f32 %v5286, %v5290
    %vm5292 = vweird.f32 %v5265
    %vm5293 = vweird.f32 %v5286
    %vm5294 = vmor %vm5292, %vm5293
    %v5295 = vsel %vm5294, %v5286, %v5291
    %v5296 = vrsqrt.pop %v5266
    %v5297 = vmul.f32 %v5296, %v5266
    %v5298 = vmul.f32 %v5297, %v5296
    %v5299 = vmul.f32 0.5, %v5298
    %v5300 = vsub.f32 1.5, %v5299
    %v5301 = vmul.f32 %v5296, %v5300
    %vm5302 = vweird.f32 %v5266
    %vm5303 = vweird.f32 %v5296
    %vm5304 = vmor %vm5302, %vm5303
    %v5305 = vsel %vm5304, %v5296, %v5301
    %v5306 = vrsqrt.pop %v5267
    %v5307 = vmul.f32 %v5306, %v5267
    %v5308 = vmul.f32 %v5307, %v5306
    %v5309 = vmul.f32 0.5, %v5308
    %v5310 = vsub.f32 1.5, %v5309
    %v5311 = vmul.f32 %v5306, %v5310
    %vm5312 = vweird.f32 %v5267
    %vm5313 = vweird.f32 %v5306
    %vm5314 = vmor %vm5312, %vm5313
    %v5315 = vsel %vm5314, %v5306, %v5311
    %v5316 = vrsqrt.pop %v5268
    %v5317 = vmul.f32 %v5316, %v5268
    %v5318 = vmul.f32 %v5317, %v5316
    %v5319 = vmul.f32 0.5, %v5318
    %v5320 = vsub.f32 1.5, %v5319
    %v5321 = vmul.f32 %v5316, %v5320
    %vm5322 = vweird.f32 %v5268
    %vm5323 = vweird.f32 %v5316
    %vm5324 = vmor %vm5322, %vm5323
    %v5325 = vsel %vm5324, %v5316, %v5321
    %v5326 = vrsqrt.pop %v5269
    %v5327 = vmul.f32 %v5326, %v5269
    %v5328 = vmul.f32 %v5327, %v5326
    %v5329 = vmul.f32 0.5, %v5328
    %v5330 = vsub.f32 1.5, %v5329
    %v5331 = vmul.f32 %v5326, %v5330
    %vm5332 = vweird.f32 %v5269
    %vm5333 = vweird.f32 %v5326
    %vm5334 = vmor %vm5332, %vm5333
    %v5335 = vsel %vm5334, %v5326, %v5331
    %v5336 = vrsqrt.pop %v5270
    %v5337 = vmul.f32 %v5336, %v5270
    %v5338 = vmul.f32 %v5337, %v5336
    %v5339 = vmul.f32 0.5, %v5338
    %v5340 = vsub.f32 1.5, %v5339
    %v5341 = vmul.f32 %v5336, %v5340
    %vm5342 = vweird.f32 %v5270
    %vm5343 = vweird.f32 %v5336
    %vm5344 = vmor %vm5342, %vm5343
    %v5345 = vsel %vm5344, %v5336, %v5341
    %v5346 = vrsqrt.pop %v5271
    %v5347 = vmul.f32 %v5346, %v5271
    %v5348 = vmul.f32 %v5347, %v5346
    %v5349 = vmul.f32 0.5, %v5348
    %v5350 = vsub.f32 1.5, %v5349
    %v5351 = vmul.f32 %v5346, %v5350
    %vm5352 = vweird.f32 %v5271
    %vm5353 = vweird.f32 %v5346
    %vm5354 = vmor %vm5352, %vm5353
    %v5355 = vsel %vm5354, %v5346, %v5351
    %v5356 = vrsqrt.pop %v5272
    %v5357 = vmul.f32 %v5356, %v5272
    %v5358 = vmul.f32 %v5357, %v5356
    %v5359 = vmul.f32 0.5, %v5358
    %v5360 = vsub.f32 1.5, %v5359
    %v5361 = vmul.f32 %v5356, %v5360
    %vm5362 = vweird.f32 %v5272
    %vm5363 = vweird.f32 %v5356
    %vm5364 = vmor %vm5362, %vm5363
    %v5365 = vsel %vm5364, %v5356, %v5361
    %v5366 = vrsqrt.pop %v5273
    %v5367 = vmul.f32 %v5366, %v5273
    %v5368 = vmul.f32 %v5367, %v5366
    %v5369 = vmul.f32 0.5, %v5368
    %v5370 = vsub.f32 1.5, %v5369
    %v5371 = vmul.f32 %v5366, %v5370
    %vm5372 = vweird.f32 %v5273
    %vm5373 = vweird.f32 %v5366
    %vm5374 = vmor %vm5372, %vm5373
    %v5375 = vsel %vm5374, %v5366, %v5371
    %v5376 = vrsqrt.pop %v5274
    %v5377 = vmul.f32 %v5376, %v5274
    %v5378 = vmul.f32 %v5377, %v5376
    %v5379 = vmul.f32 0.5, %v5378
    %v5380 = vsub.f32 1.5, %v5379
    %v5381 = vmul.f32 %v5376, %v5380
    %vm5382 = vweird.f32 %v5274
    %vm5383 = vweird.f32 %v5376
    %vm5384 = vmor %vm5382, %vm5383
    %v5385 = vsel %vm5384, %v5376, %v5381
    %v5386 = vrsqrt.pop %v5275
    %v5387 = vmul.f32 %v5386, %v5275
    %v5388 = vmul.f32 %v5387, %v5386
    %v5389 = vmul.f32 0.5, %v5388
    %v5390 = vsub.f32 1.5, %v5389
    %v5391 = vmul.f32 %v5386, %v5390
    %vm5392 = vweird.f32 %v5275
    %vm5393 = vweird.f32 %v5386
    %vm5394 = vmor %vm5392, %vm5393
    %v5395 = vsel %vm5394, %v5386, %v5391
    %v5396 = vmul.f32 %v5192, %v5285
    %v5397 = vmul.f32 %v5193, %v5295
    %v5398 = vmul.f32 %v5194, %v5305
    %v5399 = vmul.f32 %v5195, %v5315
    %v5400 = vmul.f32 %v5196, %v5325
    %v5401 = vmul.f32 %v5197, %v5335
    %v5402 = vmul.f32 %v5198, %v5345
    %v5403 = vmul.f32 %v5199, %v5355
    %v5404 = vmul.f32 %v5200, %v5365
    %v5405 = vmul.f32 %v5201, %v5375
    %v5406 = vmul.f32 %v5202, %v5385
    %v5407 = vmul.f32 %v5203, %v5395
    %v5409 = vperm.slane %v5142, 0
    %v5411 = vmul.f32 %v5396, %v5409
    %v5412 = vmul.f32 %v5397, %v5409
    %v5413 = vmul.f32 %v5398, %v5409
    %v5414 = vmul.f32 %v5399, %v5409
    %v5415 = vmul.f32 %v5400, %v5409
    %v5416 = vmul.f32 %v5401, %v5409
    %v5417 = vmul.f32 %v5402, %v5409
    %v5418 = vmul.f32 %v5403, %v5409
    %v5419 = vmul.f32 %v5404, %v5409
    %v5420 = vmul.f32 %v5405, %v5409
    %v5421 = vmul.f32 %v5406, %v5409
    %v5422 = vmul.f32 %v5407, %v5409
    %v5424 = vperm.slane %v5143, 0
    %v5426 = vadd.f32 %v5411, %v5424
    %v5427 = vadd.f32 %v5412, %v5424
    %v5428 = vadd.f32 %v5413, %v5424
    %v5429 = vadd.f32 %v5414, %v5424
    %v5430 = vadd.f32 %v5415, %v5424
    %v5431 = vadd.f32 %v5416, %v5424
    %v5432 = vadd.f32 %v5417, %v5424
    %v5433 = vadd.f32 %v5418, %v5424
    %v5434 = vadd.f32 %v5419, %v5424
    %v5435 = vadd.f32 %v5420, %v5424
    %v5436 = vadd.f32 %v5421, %v5424
    %v5437 = vadd.f32 %v5422, %v5424
    %v5438 = vpack.c.bf16 %v5427, %v5426
    %v5439 = vpack.c.bf16 %v5429, %v5428
    %v5440 = vpack.c.bf16 %v5431, %v5430
    %v5441 = vpack.c.bf16 %v5433, %v5432
    %v5442 = vpack.c.bf16 %v5435, %v5434
    %v5443 = vpack.c.bf16 %v5437, %v5436
    %v5444 = vld [vmem:[%s17] sm:$0xf]
    %v5445 = vld [vmem:[%s17 + $0x4] sm:$0xf]
    %v5446 = vld [vmem:[%s17 + $0x8] sm:$0xf]
    %v5447 = vld [vmem:[%s17 + $0xc] sm:$0xf]
    %v5448 = vld [vmem:[%s18] sm:$0x1]
    %v5450 = vperm.slane %v5448, 0
    %v5456 = vunpack.c.l.b16 %v5444
    %v5457 = vunpack.c.l.b16 %v5445
    %v5458 = vunpack.c.l.b16 %v5446
    %v5459 = vunpack.c.l.b16 %v5447
    %v5460 = vpack.c.b16 %v5457, %v5456
    %v5461 = vpack.c.b16 %v5459, %v5458
    %v5465 = vsel %vm94, %v5438, 0
    %v5468 = vsel %vm94, %v5439, 0
    %v5471 = vsel %vm94, %v5440, 0
    %v5474 = vsel %vm94, %v5441, 0
    %v5477 = vsel %vm94, %v5442, 0
    %v5480 = vsel %vm94, %v5443, 0
    %5482 = vmatpush.bf16.msra.mxu0 0
    %5483 = vmatpush.bf16.msra.mxu0 0
    %5484 = vmatpush.bf16.msra.mxu0 0
    %5485 = vmatpush.bf16.msra.mxu0 0
    %5486 = vmatpush.bf16.msra.mxu0 0
    %5487 = vmatpush.bf16.msra.mxu0 0
    %5488 = vmatpush.bf16.msra.mxu0 %v5461
    %5489 = vmatpush.bf16.msra.mxu0 %v5460
    %5490 = vmatmul.bf16.gmra.mxu0 %v5465
    %v5491 = vpop.f32.mrf.mxu0
    %v5492 = vadd.f32 %v5450, %v5491
    %v5493 = vpop.f32.mrf.mxu0
    %v5494 = vadd.f32 %v5450, %v5493
    %5495 = vmatmul.bf16.gmra.mxu0 %v5468
    %v5496 = vpop.f32.mrf.mxu0
    %v5497 = vadd.f32 %v5450, %v5496
    %v5498 = vpop.f32.mrf.mxu0
    %v5499 = vadd.f32 %v5450, %v5498
    %5500 = vmatmul.bf16.gmra.mxu0 %v5471
    %v5501 = vpop.f32.mrf.mxu0
    %v5502 = vadd.f32 %v5450, %v5501
    %v5503 = vpop.f32.mrf.mxu0
    %v5504 = vadd.f32 %v5450, %v5503
    %5505 = vmatmul.bf16.gmra.mxu0 %v5474
    %v5506 = vpop.f32.mrf.mxu0
    %v5507 = vadd.f32 %v5450, %v5506
    %v5508 = vpop.f32.mrf.mxu0
    %v5509 = vadd.f32 %v5450, %v5508
    %5510 = vmatmul.bf16.gmra.mxu0 %v5477
    %v5511 = vpop.f32.mrf.mxu0
    %v5512 = vadd.f32 %v5450, %v5511
    %v5513 = vpop.f32.mrf.mxu0
    %v5514 = vadd.f32 %v5450, %v5513
    %5515 = vmatmul.bf16.gmra.mxu0 %v5480
    %v5516 = vpop.f32.mrf.mxu0
    %v5517 = vadd.f32 %v5450, %v5516
    %v5518 = vpop.f32.mrf.mxu0
    %v5519 = vadd.f32 %v5450, %v5518
    %5520 = vdwg.mxu0
    %v5522 = vsel %vm603, %v79, 0
    %5524 = vmatpush.msra.mxu0 0.0
    %5525 = vmatpush.msra.mxu0 0.0
    %5526 = vmatpush.msra.mxu0 0.0
    %5527 = vmatpush.msra.mxu0 0.0
    %5528 = vmatpush.msra.mxu0 %v5519
    %5529 = vmatpush.msra.mxu0 %v5517
    %5530 = vmatpush.msra.mxu0 %v5514
    %5531 = vmatpush.msra.mxu0 %v5512
    %5532 = vmatpush.msra.mxu0 %v5509
    %5533 = vmatpush.msra.mxu0 %v5507
    %5534 = vmatpush.msra.mxu0 %v5504
    %5535 = vmatpush.msra.mxu0 %v5502
    %5536 = vmatpush.msra.mxu0 %v5499
    %5537 = vmatpush.msra.mxu0 %v5497
    %5538 = vmatpush.msra.mxu0 %v5494
    %5539 = vmatpush.msra.mxu0 %v5492
    %5540 = vmatmul.f32.gmra.mxu0 %v5522
    %v5541 = vpop.f32.mrf.mxu0
    %v5542 = vadd.f32 0.0, %v5541
    %5543 = vdwg.mxu0
    %vm5544 = vcmask 64512
    %5545 = vst.msk [vmem:[#allocation2] sm:$0xff] %vm5544, %v5542
    %s5546 = scalar_lea.vmem %s0, 96
    %v5547 = vld [vmem:[%s5546] sm:$0xff]
    %v5548 = vld [vmem:[%s5546 + $0x8] sm:$0xff]
    %v5549 = vld [vmem:[%s5546 + $0x10] sm:$0xff]
    %v5550 = vld [vmem:[%s5546 + $0x18] sm:$0xff]
    %v5551 = vld [vmem:[%s5546 + $0x20] sm:$0xff]
    %v5552 = vld [vmem:[%s5546 + $0x28] sm:$0xff]
    %v5553 = vld [vmem:[%s5546 + $0x30] sm:$0xff]
    %v5554 = vld [vmem:[%s5546 + $0x38] sm:$0xff]
    %v5555 = vld [vmem:[%s5546 + $0x40] sm:$0xff]
    %v5556 = vld [vmem:[%s5546 + $0x48] sm:$0xff]
    %v5557 = vld [vmem:[%s5546 + $0x50] sm:$0xff]
    %v5558 = vld [vmem:[%s5546 + $0x58] sm:$0xff]
    %s5559 = scalar_lea.vmem %s3, 2
    %v5560 = vld [vmem:[%s5559] sm:$0x1]
    %s5561 = scalar_lea.vmem %s4, 2
    %v5562 = vld [vmem:[%s5561] sm:$0x1]
    %v5563 = vsel %vm94, %v5547, 0.0
    %5564 = vadd.xlane.f32.xlu0 %v5563
    %v5565 = vpop.xlane.xlu0 %5564
    %v5566 = vsel %vm94, %v5548, 0.0
    %5567 = vadd.xlane.f32.xlu0 %v5566
    %v5568 = vpop.xlane.xlu0 %5567
    %v5569 = vsel %vm94, %v5549, 0.0
    %5570 = vadd.xlane.f32.xlu0 %v5569
    %v5571 = vpop.xlane.xlu0 %5570
    %v5572 = vsel %vm94, %v5550, 0.0
    %5573 = vadd.xlane.f32.xlu0 %v5572
    %v5574 = vpop.xlane.xlu0 %5573
    %v5575 = vsel %vm94, %v5551, 0.0
    %5576 = vadd.xlane.f32.xlu0 %v5575
    %v5577 = vpop.xlane.xlu0 %5576
    %v5578 = vsel %vm94, %v5552, 0.0
    %5579 = vadd.xlane.f32.xlu0 %v5578
    %v5580 = vpop.xlane.xlu0 %5579
    %v5581 = vsel %vm94, %v5553, 0.0
    %5582 = vadd.xlane.f32.xlu0 %v5581
    %v5583 = vpop.xlane.xlu0 %5582
    %v5584 = vsel %vm94, %v5554, 0.0
    %5585 = vadd.xlane.f32.xlu0 %v5584
    %v5586 = vpop.xlane.xlu0 %5585
    %v5587 = vsel %vm94, %v5555, 0.0
    %5588 = vadd.xlane.f32.xlu0 %v5587
    %v5589 = vpop.xlane.xlu0 %5588
    %v5590 = vsel %vm94, %v5556, 0.0
    %5591 = vadd.xlane.f32.xlu0 %v5590
    %v5592 = vpop.xlane.xlu0 %5591
    %v5593 = vsel %vm94, %v5557, 0.0
    %5594 = vadd.xlane.f32.xlu0 %v5593
    %v5595 = vpop.xlane.xlu0 %5594
    %v5596 = vsel %vm94, %v5558, 0.0
    %5597 = vadd.xlane.f32.xlu0 %v5596
    %v5598 = vpop.xlane.xlu0 %5597
    %v5599 = vmul.f32 %v5565, %v137
    %v5600 = vmul.f32 %v5568, %v137
    %v5601 = vmul.f32 %v5571, %v137
    %v5602 = vmul.f32 %v5574, %v137
    %v5603 = vmul.f32 %v5577, %v137
    %v5604 = vmul.f32 %v5580, %v137
    %v5605 = vmul.f32 %v5583, %v137
    %v5606 = vmul.f32 %v5586, %v137
    %v5607 = vmul.f32 %v5589, %v137
    %v5608 = vmul.f32 %v5592, %v137
    %v5609 = vmul.f32 %v5595, %v137
    %v5610 = vmul.f32 %v5598, %v137
    %v5611 = vsub.f32 %v5547, %v5599
    %v5612 = vsub.f32 %v5548, %v5600
    %v5613 = vsub.f32 %v5549, %v5601
    %v5614 = vsub.f32 %v5550, %v5602
    %v5615 = vsub.f32 %v5551, %v5603
    %v5616 = vsub.f32 %v5552, %v5604
    %v5617 = vsub.f32 %v5553, %v5605
    %v5618 = vsub.f32 %v5554, %v5606
    %v5619 = vsub.f32 %v5555, %v5607
    %v5620 = vsub.f32 %v5556, %v5608
    %v5621 = vsub.f32 %v5557, %v5609
    %v5622 = vsub.f32 %v5558, %v5610
    %v5623 = vmul.f32 %v5611, %v5611
    %v5624 = vmul.f32 %v5612, %v5612
    %v5625 = vmul.f32 %v5613, %v5613
    %v5626 = vmul.f32 %v5614, %v5614
    %v5627 = vmul.f32 %v5615, %v5615
    %v5628 = vmul.f32 %v5616, %v5616
    %v5629 = vmul.f32 %v5617, %v5617
    %v5630 = vmul.f32 %v5618, %v5618
    %v5631 = vmul.f32 %v5619, %v5619
    %v5632 = vmul.f32 %v5620, %v5620
    %v5633 = vmul.f32 %v5621, %v5621
    %v5634 = vmul.f32 %v5622, %v5622
    %v5635 = vsel %vm94, %v5623, 0.0
    %5636 = vadd.xlane.f32.xlu0 %v5635
    %v5637 = vpop.xlane.xlu0 %5636
    %v5638 = vsel %vm94, %v5624, 0.0
    %5639 = vadd.xlane.f32.xlu0 %v5638
    %v5640 = vpop.xlane.xlu0 %5639
    %v5641 = vsel %vm94, %v5625, 0.0
    %5642 = vadd.xlane.f32.xlu0 %v5641
    %v5643 = vpop.xlane.xlu0 %5642
    %v5644 = vsel %vm94, %v5626, 0.0
    %5645 = vadd.xlane.f32.xlu0 %v5644
    %v5646 = vpop.xlane.xlu0 %5645
    %v5647 = vsel %vm94, %v5627, 0.0
    %5648 = vadd.xlane.f32.xlu0 %v5647
    %v5649 = vpop.xlane.xlu0 %5648
    %v5650 = vsel %vm94, %v5628, 0.0
    %5651 = vadd.xlane.f32.xlu0 %v5650
    %v5652 = vpop.xlane.xlu0 %5651
    %v5653 = vsel %vm94, %v5629, 0.0
    %5654 = vadd.xlane.f32.xlu0 %v5653
    %v5655 = vpop.xlane.xlu0 %5654
    %v5656 = vsel %vm94, %v5630, 0.0
    %5657 = vadd.xlane.f32.xlu0 %v5656
    %v5658 = vpop.xlane.xlu0 %5657
    %v5659 = vsel %vm94, %v5631, 0.0
    %5660 = vadd.xlane.f32.xlu0 %v5659
    %v5661 = vpop.xlane.xlu0 %5660
    %v5662 = vsel %vm94, %v5632, 0.0
    %5663 = vadd.xlane.f32.xlu0 %v5662
    %v5664 = vpop.xlane.xlu0 %5663
    %v5665 = vsel %vm94, %v5633, 0.0
    %5666 = vadd.xlane.f32.xlu0 %v5665
    %v5667 = vpop.xlane.xlu0 %5666
    %v5668 = vsel %vm94, %v5634, 0.0
    %5669 = vadd.xlane.f32.xlu0 %v5668
    %v5670 = vpop.xlane.xlu0 %5669
    %v5671 = vmul.f32 %v5637, %v137
    %v5672 = vmul.f32 %v5640, %v137
    %v5673 = vmul.f32 %v5643, %v137
    %v5674 = vmul.f32 %v5646, %v137
    %v5675 = vmul.f32 %v5649, %v137
    %v5676 = vmul.f32 %v5652, %v137
    %v5677 = vmul.f32 %v5655, %v137
    %v5678 = vmul.f32 %v5658, %v137
    %v5679 = vmul.f32 %v5661, %v137
    %v5680 = vmul.f32 %v5664, %v137
    %v5681 = vmul.f32 %v5667, %v137
    %v5682 = vmul.f32 %v5670, %v137
    %v5683 = vadd.f32 %v5671, 1e-05
    %v5684 = vadd.f32 %v5672, 1e-05
    %v5685 = vadd.f32 %v5673, 1e-05
    %v5686 = vadd.f32 %v5674, 1e-05
    %v5687 = vadd.f32 %v5675, 1e-05
    %v5688 = vadd.f32 %v5676, 1e-05
    %v5689 = vadd.f32 %v5677, 1e-05
    %v5690 = vadd.f32 %v5678, 1e-05
    %v5691 = vadd.f32 %v5679, 1e-05
    %v5692 = vadd.f32 %v5680, 1e-05
    %v5693 = vadd.f32 %v5681, 1e-05
    %v5694 = vadd.f32 %v5682, 1e-05
    %v5695 = vrsqrt.pop %v5683
    %v5696 = vmul.f32 %v5695, %v5683
    %v5697 = vmul.f32 %v5696, %v5695
    %v5698 = vmul.f32 0.5, %v5697
    %v5699 = vsub.f32 1.5, %v5698
    %v5700 = vmul.f32 %v5695, %v5699
    %vm5701 = vweird.f32 %v5683
    %vm5702 = vweird.f32 %v5695
    %vm5703 = vmor %vm5701, %vm5702
    %v5704 = vsel %vm5703, %v5695, %v5700
    %v5705 = vrsqrt.pop %v5684
    %v5706 = vmul.f32 %v5705, %v5684
    %v5707 = vmul.f32 %v5706, %v5705
    %v5708 = vmul.f32 0.5, %v5707
    %v5709 = vsub.f32 1.5, %v5708
    %v5710 = vmul.f32 %v5705, %v5709
    %vm5711 = vweird.f32 %v5684
    %vm5712 = vweird.f32 %v5705
    %vm5713 = vmor %vm5711, %vm5712
    %v5714 = vsel %vm5713, %v5705, %v5710
    %v5715 = vrsqrt.pop %v5685
    %v5716 = vmul.f32 %v5715, %v5685
    %v5717 = vmul.f32 %v5716, %v5715
    %v5718 = vmul.f32 0.5, %v5717
    %v5719 = vsub.f32 1.5, %v5718
    %v5720 = vmul.f32 %v5715, %v5719
    %vm5721 = vweird.f32 %v5685
    %vm5722 = vweird.f32 %v5715
    %vm5723 = vmor %vm5721, %vm5722
    %v5724 = vsel %vm5723, %v5715, %v5720
    %v5725 = vrsqrt.pop %v5686
    %v5726 = vmul.f32 %v5725, %v5686
    %v5727 = vmul.f32 %v5726, %v5725
    %v5728 = vmul.f32 0.5, %v5727
    %v5729 = vsub.f32 1.5, %v5728
    %v5730 = vmul.f32 %v5725, %v5729
    %vm5731 = vweird.f32 %v5686
    %vm5732 = vweird.f32 %v5725
    %vm5733 = vmor %vm5731, %vm5732
    %v5734 = vsel %vm5733, %v5725, %v5730
    %v5735 = vrsqrt.pop %v5687
    %v5736 = vmul.f32 %v5735, %v5687
    %v5737 = vmul.f32 %v5736, %v5735
    %v5738 = vmul.f32 0.5, %v5737
    %v5739 = vsub.f32 1.5, %v5738
    %v5740 = vmul.f32 %v5735, %v5739
    %vm5741 = vweird.f32 %v5687
    %vm5742 = vweird.f32 %v5735
    %vm5743 = vmor %vm5741, %vm5742
    %v5744 = vsel %vm5743, %v5735, %v5740
    %v5745 = vrsqrt.pop %v5688
    %v5746 = vmul.f32 %v5745, %v5688
    %v5747 = vmul.f32 %v5746, %v5745
    %v5748 = vmul.f32 0.5, %v5747
    %v5749 = vsub.f32 1.5, %v5748
    %v5750 = vmul.f32 %v5745, %v5749
    %vm5751 = vweird.f32 %v5688
    %vm5752 = vweird.f32 %v5745
    %vm5753 = vmor %vm5751, %vm5752
    %v5754 = vsel %vm5753, %v5745, %v5750
    %v5755 = vrsqrt.pop %v5689
    %v5756 = vmul.f32 %v5755, %v5689
    %v5757 = vmul.f32 %v5756, %v5755
    %v5758 = vmul.f32 0.5, %v5757
    %v5759 = vsub.f32 1.5, %v5758
    %v5760 = vmul.f32 %v5755, %v5759
    %vm5761 = vweird.f32 %v5689
    %vm5762 = vweird.f32 %v5755
    %vm5763 = vmor %vm5761, %vm5762
    %v5764 = vsel %vm5763, %v5755, %v5760
    %v5765 = vrsqrt.pop %v5690
    %v5766 = vmul.f32 %v5765, %v5690
    %v5767 = vmul.f32 %v5766, %v5765
    %v5768 = vmul.f32 0.5, %v5767
    %v5769 = vsub.f32 1.5, %v5768
    %v5770 = vmul.f32 %v5765, %v5769
    %vm5771 = vweird.f32 %v5690
    %vm5772 = vweird.f32 %v5765
    %vm5773 = vmor %vm5771, %vm5772
    %v5774 = vsel %vm5773, %v5765, %v5770
    %v5775 = vrsqrt.pop %v5691
    %v5776 = vmul.f32 %v5775, %v5691
    %v5777 = vmul.f32 %v5776, %v5775
    %v5778 = vmul.f32 0.5, %v5777
    %v5779 = vsub.f32 1.5, %v5778
    %v5780 = vmul.f32 %v5775, %v5779
    %vm5781 = vweird.f32 %v5691
    %vm5782 = vweird.f32 %v5775
    %vm5783 = vmor %vm5781, %vm5782
    %v5784 = vsel %vm5783, %v5775, %v5780
    %v5785 = vrsqrt.pop %v5692
    %v5786 = vmul.f32 %v5785, %v5692
    %v5787 = vmul.f32 %v5786, %v5785
    %v5788 = vmul.f32 0.5, %v5787
    %v5789 = vsub.f32 1.5, %v5788
    %v5790 = vmul.f32 %v5785, %v5789
    %vm5791 = vweird.f32 %v5692
    %vm5792 = vweird.f32 %v5785
    %vm5793 = vmor %vm5791, %vm5792
    %v5794 = vsel %vm5793, %v5785, %v5790
    %v5795 = vrsqrt.pop %v5693
    %v5796 = vmul.f32 %v5795, %v5693
    %v5797 = vmul.f32 %v5796, %v5795
    %v5798 = vmul.f32 0.5, %v5797
    %v5799 = vsub.f32 1.5, %v5798
    %v5800 = vmul.f32 %v5795, %v5799
    %vm5801 = vweird.f32 %v5693
    %vm5802 = vweird.f32 %v5795
    %vm5803 = vmor %vm5801, %vm5802
    %v5804 = vsel %vm5803, %v5795, %v5800
    %v5805 = vrsqrt.pop %v5694
    %v5806 = vmul.f32 %v5805, %v5694
    %v5807 = vmul.f32 %v5806, %v5805
    %v5808 = vmul.f32 0.5, %v5807
    %v5809 = vsub.f32 1.5, %v5808
    %v5810 = vmul.f32 %v5805, %v5809
    %vm5811 = vweird.f32 %v5694
    %vm5812 = vweird.f32 %v5805
    %vm5813 = vmor %vm5811, %vm5812
    %v5814 = vsel %vm5813, %v5805, %v5810
    %v5815 = vmul.f32 %v5611, %v5704
    %v5816 = vmul.f32 %v5612, %v5714
    %v5817 = vmul.f32 %v5613, %v5724
    %v5818 = vmul.f32 %v5614, %v5734
    %v5819 = vmul.f32 %v5615, %v5744
    %v5820 = vmul.f32 %v5616, %v5754
    %v5821 = vmul.f32 %v5617, %v5764
    %v5822 = vmul.f32 %v5618, %v5774
    %v5823 = vmul.f32 %v5619, %v5784
    %v5824 = vmul.f32 %v5620, %v5794
    %v5825 = vmul.f32 %v5621, %v5804
    %v5826 = vmul.f32 %v5622, %v5814
    %v5828 = vperm.slane %v5560, 0
    %v5830 = vmul.f32 %v5815, %v5828
    %v5831 = vmul.f32 %v5816, %v5828
    %v5832 = vmul.f32 %v5817, %v5828
    %v5833 = vmul.f32 %v5818, %v5828
    %v5834 = vmul.f32 %v5819, %v5828
    %v5835 = vmul.f32 %v5820, %v5828
    %v5836 = vmul.f32 %v5821, %v5828
    %v5837 = vmul.f32 %v5822, %v5828
    %v5838 = vmul.f32 %v5823, %v5828
    %v5839 = vmul.f32 %v5824, %v5828
    %v5840 = vmul.f32 %v5825, %v5828
    %v5841 = vmul.f32 %v5826, %v5828
    %v5843 = vperm.slane %v5562, 0
    %v5845 = vadd.f32 %v5830, %v5843
    %v5846 = vadd.f32 %v5831, %v5843
    %v5847 = vadd.f32 %v5832, %v5843
    %v5848 = vadd.f32 %v5833, %v5843
    %v5849 = vadd.f32 %v5834, %v5843
    %v5850 = vadd.f32 %v5835, %v5843
    %v5851 = vadd.f32 %v5836, %v5843
    %v5852 = vadd.f32 %v5837, %v5843
    %v5853 = vadd.f32 %v5838, %v5843
    %v5854 = vadd.f32 %v5839, %v5843
    %v5855 = vadd.f32 %v5840, %v5843
    %v5856 = vadd.f32 %v5841, %v5843
    %v5857 = vpack.c.bf16 %v5846, %v5845
    %v5858 = vpack.c.bf16 %v5848, %v5847
    %v5859 = vpack.c.bf16 %v5850, %v5849
    %v5860 = vpack.c.bf16 %v5852, %v5851
    %v5861 = vpack.c.bf16 %v5854, %v5853
    %v5862 = vpack.c.bf16 %v5856, %v5855
    %s5863 = scalar_lea.vmem %s7, 32
    %v5864 = vld [vmem:[%s5863] sm:$0xf]
    %v5865 = vld [vmem:[%s5863 + $0x4] sm:$0xf]
    %v5866 = vld [vmem:[%s5863 + $0x8] sm:$0xf]
    %v5867 = vld [vmem:[%s5863 + $0xc] sm:$0xf]
    %s5868 = scalar_lea.vmem %s8, 2
    %v5869 = vld [vmem:[%s5868] sm:$0x1]
    %v5871 = vperm.slane %v5869, 0
    %v5877 = vunpack.c.l.b16 %v5864
    %v5878 = vunpack.c.l.b16 %v5865
    %v5879 = vunpack.c.l.b16 %v5866
    %v5880 = vunpack.c.l.b16 %v5867
    %v5881 = vpack.c.b16 %v5878, %v5877
    %v5882 = vpack.c.b16 %v5880, %v5879
    %v5886 = vsel %vm94, %v5857, 0
    %v5889 = vsel %vm94, %v5858, 0
    %v5892 = vsel %vm94, %v5859, 0
    %v5895 = vsel %vm94, %v5860, 0
    %v5898 = vsel %vm94, %v5861, 0
    %v5901 = vsel %vm94, %v5862, 0
    %5903 = vmatpush.bf16.msra.mxu0 0
    %5904 = vmatpush.bf16.msra.mxu0 0
    %5905 = vmatpush.bf16.msra.mxu0 0
    %5906 = vmatpush.bf16.msra.mxu0 0
    %5907 = vmatpush.bf16.msra.mxu0 0
    %5908 = vmatpush.bf16.msra.mxu0 0
    %5909 = vmatpush.bf16.msra.mxu0 %v5882
    %5910 = vmatpush.bf16.msra.mxu0 %v5881
    %5911 = vmatmul.bf16.gmra.mxu0 %v5886
    %v5912 = vpop.f32.mrf.mxu0
    %v5913 = vadd.f32 %v5871, %v5912
    %v5914 = vpop.f32.mrf.mxu0
    %v5915 = vadd.f32 %v5871, %v5914
    %5916 = vmatmul.bf16.gmra.mxu0 %v5889
    %v5917 = vpop.f32.mrf.mxu0
    %v5918 = vadd.f32 %v5871, %v5917
    %v5919 = vpop.f32.mrf.mxu0
    %v5920 = vadd.f32 %v5871, %v5919
    %5921 = vmatmul.bf16.gmra.mxu0 %v5892
    %v5922 = vpop.f32.mrf.mxu0
    %v5923 = vadd.f32 %v5871, %v5922
    %v5924 = vpop.f32.mrf.mxu0
    %v5925 = vadd.f32 %v5871, %v5924
    %5926 = vmatmul.bf16.gmra.mxu0 %v5895
    %v5927 = vpop.f32.mrf.mxu0
    %v5928 = vadd.f32 %v5871, %v5927
    %v5929 = vpop.f32.mrf.mxu0
    %v5930 = vadd.f32 %v5871, %v5929
    %5931 = vmatmul.bf16.gmra.mxu0 %v5898
    %v5932 = vpop.f32.mrf.mxu0
    %v5933 = vadd.f32 %v5871, %v5932
    %v5934 = vpop.f32.mrf.mxu0
    %v5935 = vadd.f32 %v5871, %v5934
    %5936 = vmatmul.bf16.gmra.mxu0 %v5901
    %v5937 = vpop.f32.mrf.mxu0
    %v5938 = vadd.f32 %v5871, %v5937
    %v5939 = vpop.f32.mrf.mxu0
    %v5940 = vadd.f32 %v5871, %v5939
    %5941 = vdwg.mxu0
    %v5942 = vpack.c.bf16 %v5915, %v5913
    %v5943 = vpack.c.bf16 %v5920, %v5918
    %v5944 = vpack.c.bf16 %v5925, %v5923
    %v5945 = vpack.c.bf16 %v5930, %v5928
    %v5946 = vpack.c.bf16 %v5935, %v5933
    %v5947 = vpack.c.bf16 %v5940, %v5938
    %5954 = vrot.lane.b32.xlu0 %v5942, 96
    %v5955 = vpop.permute.xlu0 %5954
    %5956 = vrot.lane.b32.xlu0 %v5943, 96
    %v5957 = vpop.permute.xlu0 %5956
    %5958 = vrot.lane.b32.xlu0 %v5944, 96
    %v5959 = vpop.permute.xlu0 %5958
    %5960 = vrot.lane.b32.xlu0 %v5945, 96
    %v5961 = vpop.permute.xlu0 %5960
    %5962 = vrot.lane.b32.xlu0 %v5946, 96
    %v5963 = vpop.permute.xlu0 %5962
    %5964 = vrot.lane.b32.xlu0 %v5947, 96
    %v5965 = vpop.permute.xlu0 %5964
    %v5967 = vsel %vm503, %v5942, 0
    %v5970 = vsel %vm503, %v5943, 0
    %v5973 = vsel %vm503, %v5944, 0
    %v5976 = vsel %vm503, %v5945, 0
    %v5979 = vsel %vm503, %v5946, 0
    %v5982 = vsel %vm503, %v5947, 0
    %v5985 = vsel %vm503, %v5955, 0
    %v5988 = vsel %vm503, %v5957, 0
    %v5991 = vsel %vm503, %v5959, 0
    %v5994 = vsel %vm503, %v5961, 0
    %v5997 = vsel %vm503, %v5963, 0
    %v6000 = vsel %vm503, %v5965, 0
    %6002 = vmatpush.bf16.xpose.msra.mxu0 0
    %6003 = vmatpush.bf16.xpose.msra.mxu0 0
    %6004 = vmatpush.bf16.xpose.msra.mxu0 %v6000
    %6005 = vmatpush.bf16.xpose.msra.mxu0 %v5997
    %6006 = vmatpush.bf16.xpose.msra.mxu0 %v5994
    %6007 = vmatpush.bf16.xpose.msra.mxu0 %v5991
    %6008 = vmatpush.bf16.xpose.msra.mxu0 %v5988
    %6009 = vmatpush.bf16.xpose.msra.mxu0 %v5985
    %6010 = vmatmul.bf16.gmra.mxu0 %v5967
    %v6011 = vpop.f32.mrf.mxu0
    %v6012 = vadd.f32 0.0, %v6011
    %v6013 = vpop.f32.mrf.mxu0
    %v6014 = vadd.f32 0.0, %v6013
    %6015 = vmatmul.bf16.gmra.mxu0 %v5970
    %v6016 = vpop.f32.mrf.mxu0
    %v6017 = vadd.f32 0.0, %v6016
    %v6018 = vpop.f32.mrf.mxu0
    %v6019 = vadd.f32 0.0, %v6018
    %6020 = vmatmul.bf16.gmra.mxu0 %v5973
    %v6021 = vpop.f32.mrf.mxu0
    %v6022 = vadd.f32 0.0, %v6021
    %v6023 = vpop.f32.mrf.mxu0
    %v6024 = vadd.f32 0.0, %v6023
    %6025 = vmatmul.bf16.gmra.mxu0 %v5976
    %v6026 = vpop.f32.mrf.mxu0
    %v6027 = vadd.f32 0.0, %v6026
    %v6028 = vpop.f32.mrf.mxu0
    %v6029 = vadd.f32 0.0, %v6028
    %6030 = vmatmul.bf16.gmra.mxu0 %v5979
    %v6031 = vpop.f32.mrf.mxu0
    %v6032 = vadd.f32 0.0, %v6031
    %v6033 = vpop.f32.mrf.mxu0
    %v6034 = vadd.f32 0.0, %v6033
    %6035 = vmatmul.bf16.gmra.mxu0 %v5982
    %v6036 = vpop.f32.mrf.mxu0
    %v6037 = vadd.f32 0.0, %v6036
    %v6038 = vpop.f32.mrf.mxu0
    %v6039 = vadd.f32 0.0, %v6038
    %6040 = vdwg.mxu0
    %v6041 = vmul.f32 %v6012, 0.25
    %v6042 = vmul.f32 %v6014, 0.25
    %v6043 = vmul.f32 %v6017, 0.25
    %v6044 = vmul.f32 %v6019, 0.25
    %v6045 = vmul.f32 %v6022, 0.25
    %v6046 = vmul.f32 %v6024, 0.25
    %v6047 = vmul.f32 %v6027, 0.25
    %v6048 = vmul.f32 %v6029, 0.25
    %v6049 = vmul.f32 %v6032, 0.25
    %v6050 = vmul.f32 %v6034, 0.25
    %v6051 = vmul.f32 %v6037, 0.25
    %v6052 = vmul.f32 %v6039, 0.25
    %v6053 = vadd.f32 %v6041, %v67
    %v6054 = vadd.f32 %v6042, %v68
    %v6055 = vadd.f32 %v6043, %v69
    %v6056 = vadd.f32 %v6044, %v70
    %v6057 = vadd.f32 %v6045, %v71
    %v6058 = vadd.f32 %v6046, %v72
    %v6059 = vadd.f32 %v6047, %v73
    %v6060 = vadd.f32 %v6048, %v74
    %v6061 = vadd.f32 %v6049, %v75
    %v6062 = vadd.f32 %v6050, %v76
    %v6063 = vadd.f32 %v6051, %v77
    %v6064 = vadd.f32 %v6052, %v78
    %v6065 = vsel %vm603, %v6053, -inf
    %6066 = vmax.xlane.f32.xlu0 %v6065
    %v6067 = vpop.xlane.xlu0 %6066
    %v6068 = vsel %vm603, %v6054, -inf
    %6069 = vmax.xlane.f32.xlu0 %v6068
    %v6070 = vpop.xlane.xlu0 %6069
    %v6071 = vsel %vm603, %v6055, -inf
    %6072 = vmax.xlane.f32.xlu0 %v6071
    %v6073 = vpop.xlane.xlu0 %6072
    %v6074 = vsel %vm603, %v6056, -inf
    %6075 = vmax.xlane.f32.xlu0 %v6074
    %v6076 = vpop.xlane.xlu0 %6075
    %v6077 = vsel %vm603, %v6057, -inf
    %6078 = vmax.xlane.f32.xlu0 %v6077
    %v6079 = vpop.xlane.xlu0 %6078
    %v6080 = vsel %vm603, %v6058, -inf
    %6081 = vmax.xlane.f32.xlu0 %v6080
    %v6082 = vpop.xlane.xlu0 %6081
    %v6083 = vsel %vm603, %v6059, -inf
    %6084 = vmax.xlane.f32.xlu0 %v6083
    %v6085 = vpop.xlane.xlu0 %6084
    %v6086 = vsel %vm603, %v6060, -inf
    %6087 = vmax.xlane.f32.xlu0 %v6086
    %v6088 = vpop.xlane.xlu0 %6087
    %v6089 = vsel %vm603, %v6061, -inf
    %6090 = vmax.xlane.f32.xlu0 %v6089
    %v6091 = vpop.xlane.xlu0 %6090
    %v6092 = vsel %vm603, %v6062, -inf
    %6093 = vmax.xlane.f32.xlu0 %v6092
    %v6094 = vpop.xlane.xlu0 %6093
    %v6095 = vsel %vm603, %v6063, -inf
    %6096 = vmax.xlane.f32.xlu0 %v6095
    %v6097 = vpop.xlane.xlu0 %6096
    %v6098 = vsel %vm603, %v6064, -inf
    %6099 = vmax.xlane.f32.xlu0 %v6098
    %v6100 = vpop.xlane.xlu0 %6099
    %v6101 = vsub.f32 %v6053, %v6067
    %v6102 = vsub.f32 %v6054, %v6070
    %v6103 = vsub.f32 %v6055, %v6073
    %v6104 = vsub.f32 %v6056, %v6076
    %v6105 = vsub.f32 %v6057, %v6079
    %v6106 = vsub.f32 %v6058, %v6082
    %v6107 = vsub.f32 %v6059, %v6085
    %v6108 = vsub.f32 %v6060, %v6088
    %v6109 = vsub.f32 %v6061, %v6091
    %v6110 = vsub.f32 %v6062, %v6094
    %v6111 = vsub.f32 %v6063, %v6097
    %v6112 = vsub.f32 %v6064, %v6100
    %v6113 = vmul.f32 %v6101, 1.442695
    %v6114 = vpow.pop %v6113
    %v6115 = vmul.f32 %v6102, 1.442695
    %v6116 = vpow.pop %v6115
    %v6117 = vmul.f32 %v6103, 1.442695
    %v6118 = vpow.pop %v6117
    %v6119 = vmul.f32 %v6104, 1.442695
    %v6120 = vpow.pop %v6119
    %v6121 = vmul.f32 %v6105, 1.442695
    %v6122 = vpow.pop %v6121
    %v6123 = vmul.f32 %v6106, 1.442695
    %v6124 = vpow.pop %v6123
    %v6125 = vmul.f32 %v6107, 1.442695
    %v6126 = vpow.pop %v6125
    %v6127 = vmul.f32 %v6108, 1.442695
    %v6128 = vpow.pop %v6127
    %v6129 = vmul.f32 %v6109, 1.442695
    %v6130 = vpow.pop %v6129
    %v6131 = vmul.f32 %v6110, 1.442695
    %v6132 = vpow.pop %v6131
    %v6133 = vmul.f32 %v6111, 1.442695
    %v6134 = vpow.pop %v6133
    %v6135 = vmul.f32 %v6112, 1.442695
    %v6136 = vpow.pop %v6135
    %v6137 = vsel %vm603, %v6114, 0.0
    %6138 = vadd.xlane.f32.xlu0 %v6137
    %v6139 = vpop.xlane.xlu0 %6138
    %v6140 = vsel %vm603, %v6116, 0.0
    %6141 = vadd.xlane.f32.xlu0 %v6140
    %v6142 = vpop.xlane.xlu0 %6141
    %v6143 = vsel %vm603, %v6118, 0.0
    %6144 = vadd.xlane.f32.xlu0 %v6143
    %v6145 = vpop.xlane.xlu0 %6144
    %v6146 = vsel %vm603, %v6120, 0.0
    %6147 = vadd.xlane.f32.xlu0 %v6146
    %v6148 = vpop.xlane.xlu0 %6147
    %v6149 = vsel %vm603, %v6122, 0.0
    %6150 = vadd.xlane.f32.xlu0 %v6149
    %v6151 = vpop.xlane.xlu0 %6150
    %v6152 = vsel %vm603, %v6124, 0.0
    %6153 = vadd.xlane.f32.xlu0 %v6152
    %v6154 = vpop.xlane.xlu0 %6153
    %v6155 = vsel %vm603, %v6126, 0.0
    %6156 = vadd.xlane.f32.xlu0 %v6155
    %v6157 = vpop.xlane.xlu0 %6156
    %v6158 = vsel %vm603, %v6128, 0.0
    %6159 = vadd.xlane.f32.xlu0 %v6158
    %v6160 = vpop.xlane.xlu0 %6159
    %v6161 = vsel %vm603, %v6130, 0.0
    %6162 = vadd.xlane.f32.xlu0 %v6161
    %v6163 = vpop.xlane.xlu0 %6162
    %v6164 = vsel %vm603, %v6132, 0.0
    %6165 = vadd.xlane.f32.xlu0 %v6164
    %v6166 = vpop.xlane.xlu0 %6165
    %v6167 = vsel %vm603, %v6134, 0.0
    %6168 = vadd.xlane.f32.xlu0 %v6167
    %v6169 = vpop.xlane.xlu0 %6168
    %v6170 = vsel %vm603, %v6136, 0.0
    %6171 = vadd.xlane.f32.xlu0 %v6170
    %v6172 = vpop.xlane.xlu0 %6171
    %v6173 = vrcp.pop %v6139
    %v6174 = vmul.f32 %v6139, %v6173
    %v6175 = vsub.f32 1.0, %v6174
    %v6176 = vmul.f32 %v6173, %v6175
    %v6177 = vadd.f32 %v6173, %v6176
    %vm6178 = vweird.f32 %v6139
    %vm6179 = vweird.f32 %v6173
    %vm6180 = vmor %vm6178, %vm6179
    %v6181 = vsel %vm6180, %v6173, %v6177
    %v6182 = vand.u32 2147483647, %v6139
    %vm6183 = vcmp.eq.f32.partialorder %v6182, 8.507059e+37
    %v6184 = vand.u32 %v6139, 2147483648
    %v6185 = vor.u32 1.1754944e-38, %v6184
    %v6186 = vsel %vm6183, %v6185, %v6181
    %v6187 = vmul.f32 %v6114, %v6186
    %v6188 = vrcp.pop %v6142
    %v6189 = vmul.f32 %v6142, %v6188
    %v6190 = vsub.f32 1.0, %v6189
    %v6191 = vmul.f32 %v6188, %v6190
    %v6192 = vadd.f32 %v6188, %v6191
    %vm6193 = vweird.f32 %v6142
    %vm6194 = vweird.f32 %v6188
    %vm6195 = vmor %vm6193, %vm6194
    %v6196 = vsel %vm6195, %v6188, %v6192
    %v6197 = vand.u32 2147483647, %v6142
    %vm6198 = vcmp.eq.f32.partialorder %v6197, 8.507059e+37
    %v6199 = vand.u32 %v6142, 2147483648
    %v6200 = vor.u32 1.1754944e-38, %v6199
    %v6201 = vsel %vm6198, %v6200, %v6196
    %v6202 = vmul.f32 %v6116, %v6201
    %v6203 = vrcp.pop %v6145
    %v6204 = vmul.f32 %v6145, %v6203
    %v6205 = vsub.f32 1.0, %v6204
    %v6206 = vmul.f32 %v6203, %v6205
    %v6207 = vadd.f32 %v6203, %v6206
    %vm6208 = vweird.f32 %v6145
    %vm6209 = vweird.f32 %v6203
    %vm6210 = vmor %vm6208, %vm6209
    %v6211 = vsel %vm6210, %v6203, %v6207
    %v6212 = vand.u32 2147483647, %v6145
    %vm6213 = vcmp.eq.f32.partialorder %v6212, 8.507059e+37
    %v6214 = vand.u32 %v6145, 2147483648
    %v6215 = vor.u32 1.1754944e-38, %v6214
    %v6216 = vsel %vm6213, %v6215, %v6211
    %v6217 = vmul.f32 %v6118, %v6216
    %v6218 = vrcp.pop %v6148
    %v6219 = vmul.f32 %v6148, %v6218
    %v6220 = vsub.f32 1.0, %v6219
    %v6221 = vmul.f32 %v6218, %v6220
    %v6222 = vadd.f32 %v6218, %v6221
    %vm6223 = vweird.f32 %v6148
    %vm6224 = vweird.f32 %v6218
    %vm6225 = vmor %vm6223, %vm6224
    %v6226 = vsel %vm6225, %v6218, %v6222
    %v6227 = vand.u32 2147483647, %v6148
    %vm6228 = vcmp.eq.f32.partialorder %v6227, 8.507059e+37
    %v6229 = vand.u32 %v6148, 2147483648
    %v6230 = vor.u32 1.1754944e-38, %v6229
    %v6231 = vsel %vm6228, %v6230, %v6226
    %v6232 = vmul.f32 %v6120, %v6231
    %v6233 = vrcp.pop %v6151
    %v6234 = vmul.f32 %v6151, %v6233
    %v6235 = vsub.f32 1.0, %v6234
    %v6236 = vmul.f32 %v6233, %v6235
    %v6237 = vadd.f32 %v6233, %v6236
    %vm6238 = vweird.f32 %v6151
    %vm6239 = vweird.f32 %v6233
    %vm6240 = vmor %vm6238, %vm6239
    %v6241 = vsel %vm6240, %v6233, %v6237
    %v6242 = vand.u32 2147483647, %v6151
    %vm6243 = vcmp.eq.f32.partialorder %v6242, 8.507059e+37
    %v6244 = vand.u32 %v6151, 2147483648
    %v6245 = vor.u32 1.1754944e-38, %v6244
    %v6246 = vsel %vm6243, %v6245, %v6241
    %v6247 = vmul.f32 %v6122, %v6246
    %v6248 = vrcp.pop %v6154
    %v6249 = vmul.f32 %v6154, %v6248
    %v6250 = vsub.f32 1.0, %v6249
    %v6251 = vmul.f32 %v6248, %v6250
    %v6252 = vadd.f32 %v6248, %v6251
    %vm6253 = vweird.f32 %v6154
    %vm6254 = vweird.f32 %v6248
    %vm6255 = vmor %vm6253, %vm6254
    %v6256 = vsel %vm6255, %v6248, %v6252
    %v6257 = vand.u32 2147483647, %v6154
    %vm6258 = vcmp.eq.f32.partialorder %v6257, 8.507059e+37
    %v6259 = vand.u32 %v6154, 2147483648
    %v6260 = vor.u32 1.1754944e-38, %v6259
    %v6261 = vsel %vm6258, %v6260, %v6256
    %v6262 = vmul.f32 %v6124, %v6261
    %v6263 = vrcp.pop %v6157
    %v6264 = vmul.f32 %v6157, %v6263
    %v6265 = vsub.f32 1.0, %v6264
    %v6266 = vmul.f32 %v6263, %v6265
    %v6267 = vadd.f32 %v6263, %v6266
    %vm6268 = vweird.f32 %v6157
    %vm6269 = vweird.f32 %v6263
    %vm6270 = vmor %vm6268, %vm6269
    %v6271 = vsel %vm6270, %v6263, %v6267
    %v6272 = vand.u32 2147483647, %v6157
    %vm6273 = vcmp.eq.f32.partialorder %v6272, 8.507059e+37
    %v6274 = vand.u32 %v6157, 2147483648
    %v6275 = vor.u32 1.1754944e-38, %v6274
    %v6276 = vsel %vm6273, %v6275, %v6271
    %v6277 = vmul.f32 %v6126, %v6276
    %v6278 = vrcp.pop %v6160
    %v6279 = vmul.f32 %v6160, %v6278
    %v6280 = vsub.f32 1.0, %v6279
    %v6281 = vmul.f32 %v6278, %v6280
    %v6282 = vadd.f32 %v6278, %v6281
    %vm6283 = vweird.f32 %v6160
    %vm6284 = vweird.f32 %v6278
    %vm6285 = vmor %vm6283, %vm6284
    %v6286 = vsel %vm6285, %v6278, %v6282
    %v6287 = vand.u32 2147483647, %v6160
    %vm6288 = vcmp.eq.f32.partialorder %v6287, 8.507059e+37
    %v6289 = vand.u32 %v6160, 2147483648
    %v6290 = vor.u32 1.1754944e-38, %v6289
    %v6291 = vsel %vm6288, %v6290, %v6286
    %v6292 = vmul.f32 %v6128, %v6291
    %v6293 = vrcp.pop %v6163
    %v6294 = vmul.f32 %v6163, %v6293
    %v6295 = vsub.f32 1.0, %v6294
    %v6296 = vmul.f32 %v6293, %v6295
    %v6297 = vadd.f32 %v6293, %v6296
    %vm6298 = vweird.f32 %v6163
    %vm6299 = vweird.f32 %v6293
    %vm6300 = vmor %vm6298, %vm6299
    %v6301 = vsel %vm6300, %v6293, %v6297
    %v6302 = vand.u32 2147483647, %v6163
    %vm6303 = vcmp.eq.f32.partialorder %v6302, 8.507059e+37
    %v6304 = vand.u32 %v6163, 2147483648
    %v6305 = vor.u32 1.1754944e-38, %v6304
    %v6306 = vsel %vm6303, %v6305, %v6301
    %v6307 = vmul.f32 %v6130, %v6306
    %v6308 = vrcp.pop %v6166
    %v6309 = vmul.f32 %v6166, %v6308
    %v6310 = vsub.f32 1.0, %v6309
    %v6311 = vmul.f32 %v6308, %v6310
    %v6312 = vadd.f32 %v6308, %v6311
    %vm6313 = vweird.f32 %v6166
    %vm6314 = vweird.f32 %v6308
    %vm6315 = vmor %vm6313, %vm6314
    %v6316 = vsel %vm6315, %v6308, %v6312
    %v6317 = vand.u32 2147483647, %v6166
    %vm6318 = vcmp.eq.f32.partialorder %v6317, 8.507059e+37
    %v6319 = vand.u32 %v6166, 2147483648
    %v6320 = vor.u32 1.1754944e-38, %v6319
    %v6321 = vsel %vm6318, %v6320, %v6316
    %v6322 = vmul.f32 %v6132, %v6321
    %v6323 = vrcp.pop %v6169
    %v6324 = vmul.f32 %v6169, %v6323
    %v6325 = vsub.f32 1.0, %v6324
    %v6326 = vmul.f32 %v6323, %v6325
    %v6327 = vadd.f32 %v6323, %v6326
    %vm6328 = vweird.f32 %v6169
    %vm6329 = vweird.f32 %v6323
    %vm6330 = vmor %vm6328, %vm6329
    %v6331 = vsel %vm6330, %v6323, %v6327
    %v6332 = vand.u32 2147483647, %v6169
    %vm6333 = vcmp.eq.f32.partialorder %v6332, 8.507059e+37
    %v6334 = vand.u32 %v6169, 2147483648
    %v6335 = vor.u32 1.1754944e-38, %v6334
    %v6336 = vsel %vm6333, %v6335, %v6331
    %v6337 = vmul.f32 %v6134, %v6336
    %v6338 = vrcp.pop %v6172
    %v6339 = vmul.f32 %v6172, %v6338
    %v6340 = vsub.f32 1.0, %v6339
    %v6341 = vmul.f32 %v6338, %v6340
    %v6342 = vadd.f32 %v6338, %v6341
    %vm6343 = vweird.f32 %v6172
    %vm6344 = vweird.f32 %v6338
    %vm6345 = vmor %vm6343, %vm6344
    %v6346 = vsel %vm6345, %v6338, %v6342
    %v6347 = vand.u32 2147483647, %v6172
    %vm6348 = vcmp.eq.f32.partialorder %v6347, 8.507059e+37
    %v6349 = vand.u32 %v6172, 2147483648
    %v6350 = vor.u32 1.1754944e-38, %v6349
    %v6351 = vsel %vm6348, %v6350, %v6346
    %v6352 = vmul.f32 %v6136, %v6351
    %v6353 = vpack.c.bf16 %v6202, %v6187
    %v6354 = vpack.c.bf16 %v6232, %v6217
    %v6355 = vpack.c.bf16 %v6262, %v6247
    %v6356 = vpack.c.bf16 %v6292, %v6277
    %v6357 = vpack.c.bf16 %v6322, %v6307
    %v6358 = vpack.c.bf16 %v6352, %v6337
    %6359 = vrot.lane.b32.xlu0 %v5942, 64
    %v6360 = vpop.permute.xlu0 %6359
    %6361 = vrot.lane.b32.xlu0 %v5943, 64
    %v6362 = vpop.permute.xlu0 %6361
    %6363 = vrot.lane.b32.xlu0 %v5944, 64
    %v6364 = vpop.permute.xlu0 %6363
    %6365 = vrot.lane.b32.xlu0 %v5945, 64
    %v6366 = vpop.permute.xlu0 %6365
    %6367 = vrot.lane.b32.xlu0 %v5946, 64
    %v6368 = vpop.permute.xlu0 %6367
    %6369 = vrot.lane.b32.xlu0 %v5947, 64
    %v6370 = vpop.permute.xlu0 %6369
    %v6378 = vsel %vm603, %v6353, 0
    %v6381 = vsel %vm603, %v6354, 0
    %v6384 = vsel %vm603, %v6355, 0
    %v6387 = vsel %vm603, %v6356, 0
    %v6390 = vsel %vm603, %v6357, 0
    %v6393 = vsel %vm603, %v6358, 0
    %6395 = vmatpush.bf16.msra.mxu0 0
    %6396 = vmatpush.bf16.msra.mxu0 0
    %6397 = vmatpush.bf16.msra.mxu0 %v6370
    %6398 = vmatpush.bf16.msra.mxu0 %v6368
    %6399 = vmatpush.bf16.msra.mxu0 %v6366
    %6400 = vmatpush.bf16.msra.mxu0 %v6364
    %6401 = vmatpush.bf16.msra.mxu0 %v6362
    %6402 = vmatpush.bf16.msra.mxu0 %v6360
    %6403 = vmatmul.bf16.gmra.mxu0 %v6378
    %v6404 = vpop.f32.mrf.mxu0
    %v6405 = vadd.f32 0.0, %v6404
    %v6406 = vpop.f32.mrf.mxu0
    %v6407 = vadd.f32 0.0, %v6406
    %6408 = vmatmul.bf16.gmra.mxu0 %v6381
    %v6409 = vpop.f32.mrf.mxu0
    %v6410 = vadd.f32 0.0, %v6409
    %v6411 = vpop.f32.mrf.mxu0
    %v6412 = vadd.f32 0.0, %v6411
    %6413 = vmatmul.bf16.gmra.mxu0 %v6384
    %v6414 = vpop.f32.mrf.mxu0
    %v6415 = vadd.f32 0.0, %v6414
    %v6416 = vpop.f32.mrf.mxu0
    %v6417 = vadd.f32 0.0, %v6416
    %6418 = vmatmul.bf16.gmra.mxu0 %v6387
    %v6419 = vpop.f32.mrf.mxu0
    %v6420 = vadd.f32 0.0, %v6419
    %v6421 = vpop.f32.mrf.mxu0
    %v6422 = vadd.f32 0.0, %v6421
    %6423 = vmatmul.bf16.gmra.mxu0 %v6390
    %v6424 = vpop.f32.mrf.mxu0
    %v6425 = vadd.f32 0.0, %v6424
    %v6426 = vpop.f32.mrf.mxu0
    %v6427 = vadd.f32 0.0, %v6426
    %6428 = vmatmul.bf16.gmra.mxu0 %v6393
    %v6429 = vpop.f32.mrf.mxu0
    %v6430 = vadd.f32 0.0, %v6429
    %v6431 = vpop.f32.mrf.mxu0
    %v6432 = vadd.f32 0.0, %v6431
    %6433 = vdwg.mxu0
    %6434 = vrot.lane.b32.xlu0 %v5942, 112
    %v6435 = vpop.permute.xlu0 %6434
    %6436 = vrot.lane.b32.xlu0 %v5943, 112
    %v6437 = vpop.permute.xlu0 %6436
    %6438 = vrot.lane.b32.xlu0 %v5944, 112
    %v6439 = vpop.permute.xlu0 %6438
    %6440 = vrot.lane.b32.xlu0 %v5945, 112
    %v6441 = vpop.permute.xlu0 %6440
    %6442 = vrot.lane.b32.xlu0 %v5946, 112
    %v6443 = vpop.permute.xlu0 %6442
    %6444 = vrot.lane.b32.xlu0 %v5947, 112
    %v6445 = vpop.permute.xlu0 %6444
    %6446 = vrot.lane.b32.xlu0 %v5942, 80
    %v6447 = vpop.permute.xlu0 %6446
    %6448 = vrot.lane.b32.xlu0 %v5943, 80
    %v6449 = vpop.permute.xlu0 %6448
    %6450 = vrot.lane.b32.xlu0 %v5944, 80
    %v6451 = vpop.permute.xlu0 %6450
    %6452 = vrot.lane.b32.xlu0 %v5945, 80
    %v6453 = vpop.permute.xlu0 %6452
    %6454 = vrot.lane.b32.xlu0 %v5946, 80
    %v6455 = vpop.permute.xlu0 %6454
    %6456 = vrot.lane.b32.xlu0 %v5947, 80
    %v6457 = vpop.permute.xlu0 %6456
    %v6459 = vsel %vm503, %v6435, 0
    %v6462 = vsel %vm503, %v6437, 0
    %v6465 = vsel %vm503, %v6439, 0
    %v6468 = vsel %vm503, %v6441, 0
    %v6471 = vsel %vm503, %v6443, 0
    %v6474 = vsel %vm503, %v6445, 0
    %v6477 = vsel %vm503, %v6447, 0
    %v6480 = vsel %vm503, %v6449, 0
    %v6483 = vsel %vm503, %v6451, 0
    %v6486 = vsel %vm503, %v6453, 0
    %v6489 = vsel %vm503, %v6455, 0
    %v6492 = vsel %vm503, %v6457, 0
    %6494 = vmatpush.bf16.xpose.msra.mxu0 0
    %6495 = vmatpush.bf16.xpose.msra.mxu0 0
    %6496 = vmatpush.bf16.xpose.msra.mxu0 %v6492
    %6497 = vmatpush.bf16.xpose.msra.mxu0 %v6489
    %6498 = vmatpush.bf16.xpose.msra.mxu0 %v6486
    %6499 = vmatpush.bf16.xpose.msra.mxu0 %v6483
    %6500 = vmatpush.bf16.xpose.msra.mxu0 %v6480
    %6501 = vmatpush.bf16.xpose.msra.mxu0 %v6477
    %6502 = vmatmul.bf16.gmra.mxu0 %v6459
    %v6503 = vpop.f32.mrf.mxu0
    %v6504 = vadd.f32 0.0, %v6503
    %v6505 = vpop.f32.mrf.mxu0
    %v6506 = vadd.f32 0.0, %v6505
    %6507 = vmatmul.bf16.gmra.mxu0 %v6462
    %v6508 = vpop.f32.mrf.mxu0
    %v6509 = vadd.f32 0.0, %v6508
    %v6510 = vpop.f32.mrf.mxu0
    %v6511 = vadd.f32 0.0, %v6510
    %6512 = vmatmul.bf16.gmra.mxu0 %v6465
    %v6513 = vpop.f32.mrf.mxu0
    %v6514 = vadd.f32 0.0, %v6513
    %v6515 = vpop.f32.mrf.mxu0
    %v6516 = vadd.f32 0.0, %v6515
    %6517 = vmatmul.bf16.gmra.mxu0 %v6468
    %v6518 = vpop.f32.mrf.mxu0
    %v6519 = vadd.f32 0.0, %v6518
    %v6520 = vpop.f32.mrf.mxu0
    %v6521 = vadd.f32 0.0, %v6520
    %6522 = vmatmul.bf16.gmra.mxu0 %v6471
    %v6523 = vpop.f32.mrf.mxu0
    %v6524 = vadd.f32 0.0, %v6523
    %v6525 = vpop.f32.mrf.mxu0
    %v6526 = vadd.f32 0.0, %v6525
    %6527 = vmatmul.bf16.gmra.mxu0 %v6474
    %v6528 = vpop.f32.mrf.mxu0
    %v6529 = vadd.f32 0.0, %v6528
    %v6530 = vpop.f32.mrf.mxu0
    %v6531 = vadd.f32 0.0, %v6530
    %6532 = vdwg.mxu0
    %v6533 = vmul.f32 %v6504, 0.25
    %v6534 = vmul.f32 %v6506, 0.25
    %v6535 = vmul.f32 %v6509, 0.25
    %v6536 = vmul.f32 %v6511, 0.25
    %v6537 = vmul.f32 %v6514, 0.25
    %v6538 = vmul.f32 %v6516, 0.25
    %v6539 = vmul.f32 %v6519, 0.25
    %v6540 = vmul.f32 %v6521, 0.25
    %v6541 = vmul.f32 %v6524, 0.25
    %v6542 = vmul.f32 %v6526, 0.25
    %v6543 = vmul.f32 %v6529, 0.25
    %v6544 = vmul.f32 %v6531, 0.25
    %v6545 = vadd.f32 %v6533, %v67
    %v6546 = vadd.f32 %v6534, %v68
    %v6547 = vadd.f32 %v6535, %v69
    %v6548 = vadd.f32 %v6536, %v70
    %v6549 = vadd.f32 %v6537, %v71
    %v6550 = vadd.f32 %v6538, %v72
    %v6551 = vadd.f32 %v6539, %v73
    %v6552 = vadd.f32 %v6540, %v74
    %v6553 = vadd.f32 %v6541, %v75
    %v6554 = vadd.f32 %v6542, %v76
    %v6555 = vadd.f32 %v6543, %v77
    %v6556 = vadd.f32 %v6544, %v78
    %v6557 = vsel %vm603, %v6545, -inf
    %6558 = vmax.xlane.f32.xlu0 %v6557
    %v6559 = vpop.xlane.xlu0 %6558
    %v6560 = vsel %vm603, %v6546, -inf
    %6561 = vmax.xlane.f32.xlu0 %v6560
    %v6562 = vpop.xlane.xlu0 %6561
    %v6563 = vsel %vm603, %v6547, -inf
    %6564 = vmax.xlane.f32.xlu0 %v6563
    %v6565 = vpop.xlane.xlu0 %6564
    %v6566 = vsel %vm603, %v6548, -inf
    %6567 = vmax.xlane.f32.xlu0 %v6566
    %v6568 = vpop.xlane.xlu0 %6567
    %v6569 = vsel %vm603, %v6549, -inf
    %6570 = vmax.xlane.f32.xlu0 %v6569
    %v6571 = vpop.xlane.xlu0 %6570
    %v6572 = vsel %vm603, %v6550, -inf
    %6573 = vmax.xlane.f32.xlu0 %v6572
    %v6574 = vpop.xlane.xlu0 %6573
    %v6575 = vsel %vm603, %v6551, -inf
    %6576 = vmax.xlane.f32.xlu0 %v6575
    %v6577 = vpop.xlane.xlu0 %6576
    %v6578 = vsel %vm603, %v6552, -inf
    %6579 = vmax.xlane.f32.xlu0 %v6578
    %v6580 = vpop.xlane.xlu0 %6579
    %v6581 = vsel %vm603, %v6553, -inf
    %6582 = vmax.xlane.f32.xlu0 %v6581
    %v6583 = vpop.xlane.xlu0 %6582
    %v6584 = vsel %vm603, %v6554, -inf
    %6585 = vmax.xlane.f32.xlu0 %v6584
    %v6586 = vpop.xlane.xlu0 %6585
    %v6587 = vsel %vm603, %v6555, -inf
    %6588 = vmax.xlane.f32.xlu0 %v6587
    %v6589 = vpop.xlane.xlu0 %6588
    %v6590 = vsel %vm603, %v6556, -inf
    %6591 = vmax.xlane.f32.xlu0 %v6590
    %v6592 = vpop.xlane.xlu0 %6591
    %v6593 = vsub.f32 %v6545, %v6559
    %v6594 = vsub.f32 %v6546, %v6562
    %v6595 = vsub.f32 %v6547, %v6565
    %v6596 = vsub.f32 %v6548, %v6568
    %v6597 = vsub.f32 %v6549, %v6571
    %v6598 = vsub.f32 %v6550, %v6574
    %v6599 = vsub.f32 %v6551, %v6577
    %v6600 = vsub.f32 %v6552, %v6580
    %v6601 = vsub.f32 %v6553, %v6583
    %v6602 = vsub.f32 %v6554, %v6586
    %v6603 = vsub.f32 %v6555, %v6589
    %v6604 = vsub.f32 %v6556, %v6592
    %v6605 = vmul.f32 %v6593, 1.442695
    %v6606 = vpow.pop %v6605
    %v6607 = vmul.f32 %v6594, 1.442695
    %v6608 = vpow.pop %v6607
    %v6609 = vmul.f32 %v6595, 1.442695
    %v6610 = vpow.pop %v6609
    %v6611 = vmul.f32 %v6596, 1.442695
    %v6612 = vpow.pop %v6611
    %v6613 = vmul.f32 %v6597, 1.442695
    %v6614 = vpow.pop %v6613
    %v6615 = vmul.f32 %v6598, 1.442695
    %v6616 = vpow.pop %v6615
    %v6617 = vmul.f32 %v6599, 1.442695
    %v6618 = vpow.pop %v6617
    %v6619 = vmul.f32 %v6600, 1.442695
    %v6620 = vpow.pop %v6619
    %v6621 = vmul.f32 %v6601, 1.442695
    %v6622 = vpow.pop %v6621
    %v6623 = vmul.f32 %v6602, 1.442695
    %v6624 = vpow.pop %v6623
    %v6625 = vmul.f32 %v6603, 1.442695
    %v6626 = vpow.pop %v6625
    %v6627 = vmul.f32 %v6604, 1.442695
    %v6628 = vpow.pop %v6627
    %v6629 = vsel %vm603, %v6606, 0.0
    %6630 = vadd.xlane.f32.xlu0 %v6629
    %v6631 = vpop.xlane.xlu0 %6630
    %v6632 = vsel %vm603, %v6608, 0.0
    %6633 = vadd.xlane.f32.xlu0 %v6632
    %v6634 = vpop.xlane.xlu0 %6633
    %v6635 = vsel %vm603, %v6610, 0.0
    %6636 = vadd.xlane.f32.xlu0 %v6635
    %v6637 = vpop.xlane.xlu0 %6636
    %v6638 = vsel %vm603, %v6612, 0.0
    %6639 = vadd.xlane.f32.xlu0 %v6638
    %v6640 = vpop.xlane.xlu0 %6639
    %v6641 = vsel %vm603, %v6614, 0.0
    %6642 = vadd.xlane.f32.xlu0 %v6641
    %v6643 = vpop.xlane.xlu0 %6642
    %v6644 = vsel %vm603, %v6616, 0.0
    %6645 = vadd.xlane.f32.xlu0 %v6644
    %v6646 = vpop.xlane.xlu0 %6645
    %v6647 = vsel %vm603, %v6618, 0.0
    %6648 = vadd.xlane.f32.xlu0 %v6647
    %v6649 = vpop.xlane.xlu0 %6648
    %v6650 = vsel %vm603, %v6620, 0.0
    %6651 = vadd.xlane.f32.xlu0 %v6650
    %v6652 = vpop.xlane.xlu0 %6651
    %v6653 = vsel %vm603, %v6622, 0.0
    %6654 = vadd.xlane.f32.xlu0 %v6653
    %v6655 = vpop.xlane.xlu0 %6654
    %v6656 = vsel %vm603, %v6624, 0.0
    %6657 = vadd.xlane.f32.xlu0 %v6656
    %v6658 = vpop.xlane.xlu0 %6657
    %v6659 = vsel %vm603, %v6626, 0.0
    %6660 = vadd.xlane.f32.xlu0 %v6659
    %v6661 = vpop.xlane.xlu0 %6660
    %v6662 = vsel %vm603, %v6628, 0.0
    %6663 = vadd.xlane.f32.xlu0 %v6662
    %v6664 = vpop.xlane.xlu0 %6663
    %v6665 = vrcp.pop %v6631
    %v6666 = vmul.f32 %v6631, %v6665
    %v6667 = vsub.f32 1.0, %v6666
    %v6668 = vmul.f32 %v6665, %v6667
    %v6669 = vadd.f32 %v6665, %v6668
    %vm6670 = vweird.f32 %v6631
    %vm6671 = vweird.f32 %v6665
    %vm6672 = vmor %vm6670, %vm6671
    %v6673 = vsel %vm6672, %v6665, %v6669
    %v6674 = vand.u32 2147483647, %v6631
    %vm6675 = vcmp.eq.f32.partialorder %v6674, 8.507059e+37
    %v6676 = vand.u32 %v6631, 2147483648
    %v6677 = vor.u32 1.1754944e-38, %v6676
    %v6678 = vsel %vm6675, %v6677, %v6673
    %v6679 = vmul.f32 %v6606, %v6678
    %v6680 = vrcp.pop %v6634
    %v6681 = vmul.f32 %v6634, %v6680
    %v6682 = vsub.f32 1.0, %v6681
    %v6683 = vmul.f32 %v6680, %v6682
    %v6684 = vadd.f32 %v6680, %v6683
    %vm6685 = vweird.f32 %v6634
    %vm6686 = vweird.f32 %v6680
    %vm6687 = vmor %vm6685, %vm6686
    %v6688 = vsel %vm6687, %v6680, %v6684
    %v6689 = vand.u32 2147483647, %v6634
    %vm6690 = vcmp.eq.f32.partialorder %v6689, 8.507059e+37
    %v6691 = vand.u32 %v6634, 2147483648
    %v6692 = vor.u32 1.1754944e-38, %v6691
    %v6693 = vsel %vm6690, %v6692, %v6688
    %v6694 = vmul.f32 %v6608, %v6693
    %v6695 = vrcp.pop %v6637
    %v6696 = vmul.f32 %v6637, %v6695
    %v6697 = vsub.f32 1.0, %v6696
    %v6698 = vmul.f32 %v6695, %v6697
    %v6699 = vadd.f32 %v6695, %v6698
    %vm6700 = vweird.f32 %v6637
    %vm6701 = vweird.f32 %v6695
    %vm6702 = vmor %vm6700, %vm6701
    %v6703 = vsel %vm6702, %v6695, %v6699
    %v6704 = vand.u32 2147483647, %v6637
    %vm6705 = vcmp.eq.f32.partialorder %v6704, 8.507059e+37
    %v6706 = vand.u32 %v6637, 2147483648
    %v6707 = vor.u32 1.1754944e-38, %v6706
    %v6708 = vsel %vm6705, %v6707, %v6703
    %v6709 = vmul.f32 %v6610, %v6708
    %v6710 = vrcp.pop %v6640
    %v6711 = vmul.f32 %v6640, %v6710
    %v6712 = vsub.f32 1.0, %v6711
    %v6713 = vmul.f32 %v6710, %v6712
    %v6714 = vadd.f32 %v6710, %v6713
    %vm6715 = vweird.f32 %v6640
    %vm6716 = vweird.f32 %v6710
    %vm6717 = vmor %vm6715, %vm6716
    %v6718 = vsel %vm6717, %v6710, %v6714
    %v6719 = vand.u32 2147483647, %v6640
    %vm6720 = vcmp.eq.f32.partialorder %v6719, 8.507059e+37
    %v6721 = vand.u32 %v6640, 2147483648
    %v6722 = vor.u32 1.1754944e-38, %v6721
    %v6723 = vsel %vm6720, %v6722, %v6718
    %v6724 = vmul.f32 %v6612, %v6723
    %v6725 = vrcp.pop %v6643
    %v6726 = vmul.f32 %v6643, %v6725
    %v6727 = vsub.f32 1.0, %v6726
    %v6728 = vmul.f32 %v6725, %v6727
    %v6729 = vadd.f32 %v6725, %v6728
    %vm6730 = vweird.f32 %v6643
    %vm6731 = vweird.f32 %v6725
    %vm6732 = vmor %vm6730, %vm6731
    %v6733 = vsel %vm6732, %v6725, %v6729
    %v6734 = vand.u32 2147483647, %v6643
    %vm6735 = vcmp.eq.f32.partialorder %v6734, 8.507059e+37
    %v6736 = vand.u32 %v6643, 2147483648
    %v6737 = vor.u32 1.1754944e-38, %v6736
    %v6738 = vsel %vm6735, %v6737, %v6733
    %v6739 = vmul.f32 %v6614, %v6738
    %v6740 = vrcp.pop %v6646
    %v6741 = vmul.f32 %v6646, %v6740
    %v6742 = vsub.f32 1.0, %v6741
    %v6743 = vmul.f32 %v6740, %v6742
    %v6744 = vadd.f32 %v6740, %v6743
    %vm6745 = vweird.f32 %v6646
    %vm6746 = vweird.f32 %v6740
    %vm6747 = vmor %vm6745, %vm6746
    %v6748 = vsel %vm6747, %v6740, %v6744
    %v6749 = vand.u32 2147483647, %v6646
    %vm6750 = vcmp.eq.f32.partialorder %v6749, 8.507059e+37
    %v6751 = vand.u32 %v6646, 2147483648
    %v6752 = vor.u32 1.1754944e-38, %v6751
    %v6753 = vsel %vm6750, %v6752, %v6748
    %v6754 = vmul.f32 %v6616, %v6753
    %v6755 = vrcp.pop %v6649
    %v6756 = vmul.f32 %v6649, %v6755
    %v6757 = vsub.f32 1.0, %v6756
    %v6758 = vmul.f32 %v6755, %v6757
    %v6759 = vadd.f32 %v6755, %v6758
    %vm6760 = vweird.f32 %v6649
    %vm6761 = vweird.f32 %v6755
    %vm6762 = vmor %vm6760, %vm6761
    %v6763 = vsel %vm6762, %v6755, %v6759
    %v6764 = vand.u32 2147483647, %v6649
    %vm6765 = vcmp.eq.f32.partialorder %v6764, 8.507059e+37
    %v6766 = vand.u32 %v6649, 2147483648
    %v6767 = vor.u32 1.1754944e-38, %v6766
    %v6768 = vsel %vm6765, %v6767, %v6763
    %v6769 = vmul.f32 %v6618, %v6768
    %v6770 = vrcp.pop %v6652
    %v6771 = vmul.f32 %v6652, %v6770
    %v6772 = vsub.f32 1.0, %v6771
    %v6773 = vmul.f32 %v6770, %v6772
    %v6774 = vadd.f32 %v6770, %v6773
    %vm6775 = vweird.f32 %v6652
    %vm6776 = vweird.f32 %v6770
    %vm6777 = vmor %vm6775, %vm6776
    %v6778 = vsel %vm6777, %v6770, %v6774
    %v6779 = vand.u32 2147483647, %v6652
    %vm6780 = vcmp.eq.f32.partialorder %v6779, 8.507059e+37
    %v6781 = vand.u32 %v6652, 2147483648
    %v6782 = vor.u32 1.1754944e-38, %v6781
    %v6783 = vsel %vm6780, %v6782, %v6778
    %v6784 = vmul.f32 %v6620, %v6783
    %v6785 = vrcp.pop %v6655
    %v6786 = vmul.f32 %v6655, %v6785
    %v6787 = vsub.f32 1.0, %v6786
    %v6788 = vmul.f32 %v6785, %v6787
    %v6789 = vadd.f32 %v6785, %v6788
    %vm6790 = vweird.f32 %v6655
    %vm6791 = vweird.f32 %v6785
    %vm6792 = vmor %vm6790, %vm6791
    %v6793 = vsel %vm6792, %v6785, %v6789
    %v6794 = vand.u32 2147483647, %v6655
    %vm6795 = vcmp.eq.f32.partialorder %v6794, 8.507059e+37
    %v6796 = vand.u32 %v6655, 2147483648
    %v6797 = vor.u32 1.1754944e-38, %v6796
    %v6798 = vsel %vm6795, %v6797, %v6793
    %v6799 = vmul.f32 %v6622, %v6798
    %v6800 = vrcp.pop %v6658
    %v6801 = vmul.f32 %v6658, %v6800
    %v6802 = vsub.f32 1.0, %v6801
    %v6803 = vmul.f32 %v6800, %v6802
    %v6804 = vadd.f32 %v6800, %v6803
    %vm6805 = vweird.f32 %v6658
    %vm6806 = vweird.f32 %v6800
    %vm6807 = vmor %vm6805, %vm6806
    %v6808 = vsel %vm6807, %v6800, %v6804
    %v6809 = vand.u32 2147483647, %v6658
    %vm6810 = vcmp.eq.f32.partialorder %v6809, 8.507059e+37
    %v6811 = vand.u32 %v6658, 2147483648
    %v6812 = vor.u32 1.1754944e-38, %v6811
    %v6813 = vsel %vm6810, %v6812, %v6808
    %v6814 = vmul.f32 %v6624, %v6813
    %v6815 = vrcp.pop %v6661
    %v6816 = vmul.f32 %v6661, %v6815
    %v6817 = vsub.f32 1.0, %v6816
    %v6818 = vmul.f32 %v6815, %v6817
    %v6819 = vadd.f32 %v6815, %v6818
    %vm6820 = vweird.f32 %v6661
    %vm6821 = vweird.f32 %v6815
    %vm6822 = vmor %vm6820, %vm6821
    %v6823 = vsel %vm6822, %v6815, %v6819
    %v6824 = vand.u32 2147483647, %v6661
    %vm6825 = vcmp.eq.f32.partialorder %v6824, 8.507059e+37
    %v6826 = vand.u32 %v6661, 2147483648
    %v6827 = vor.u32 1.1754944e-38, %v6826
    %v6828 = vsel %vm6825, %v6827, %v6823
    %v6829 = vmul.f32 %v6626, %v6828
    %v6830 = vrcp.pop %v6664
    %v6831 = vmul.f32 %v6664, %v6830
    %v6832 = vsub.f32 1.0, %v6831
    %v6833 = vmul.f32 %v6830, %v6832
    %v6834 = vadd.f32 %v6830, %v6833
    %vm6835 = vweird.f32 %v6664
    %vm6836 = vweird.f32 %v6830
    %vm6837 = vmor %vm6835, %vm6836
    %v6838 = vsel %vm6837, %v6830, %v6834
    %v6839 = vand.u32 2147483647, %v6664
    %vm6840 = vcmp.eq.f32.partialorder %v6839, 8.507059e+37
    %v6841 = vand.u32 %v6664, 2147483648
    %v6842 = vor.u32 1.1754944e-38, %v6841
    %v6843 = vsel %vm6840, %v6842, %v6838
    %v6844 = vmul.f32 %v6628, %v6843
    %v6845 = vpack.c.bf16 %v6694, %v6679
    %v6846 = vpack.c.bf16 %v6724, %v6709
    %v6847 = vpack.c.bf16 %v6754, %v6739
    %v6848 = vpack.c.bf16 %v6784, %v6769
    %v6849 = vpack.c.bf16 %v6814, %v6799
    %v6850 = vpack.c.bf16 %v6844, %v6829
    %6851 = vrot.lane.b32.xlu0 %v5942, 48
    %v6852 = vpop.permute.xlu0 %6851
    %6853 = vrot.lane.b32.xlu0 %v5943, 48
    %v6854 = vpop.permute.xlu0 %6853
    %6855 = vrot.lane.b32.xlu0 %v5944, 48
    %v6856 = vpop.permute.xlu0 %6855
    %6857 = vrot.lane.b32.xlu0 %v5945, 48
    %v6858 = vpop.permute.xlu0 %6857
    %6859 = vrot.lane.b32.xlu0 %v5946, 48
    %v6860 = vpop.permute.xlu0 %6859
    %6861 = vrot.lane.b32.xlu0 %v5947, 48
    %v6862 = vpop.permute.xlu0 %6861
    %v6870 = vsel %vm603, %v6845, 0
    %v6873 = vsel %vm603, %v6846, 0
    %v6876 = vsel %vm603, %v6847, 0
    %v6879 = vsel %vm603, %v6848, 0
    %v6882 = vsel %vm603, %v6849, 0
    %v6885 = vsel %vm603, %v6850, 0
    %6887 = vmatpush.bf16.msra.mxu0 0
    %6888 = vmatpush.bf16.msra.mxu0 0
    %6889 = vmatpush.bf16.msra.mxu0 %v6862
    %6890 = vmatpush.bf16.msra.mxu0 %v6860
    %6891 = vmatpush.bf16.msra.mxu0 %v6858
    %6892 = vmatpush.bf16.msra.mxu0 %v6856
    %6893 = vmatpush.bf16.msra.mxu0 %v6854
    %6894 = vmatpush.bf16.msra.mxu0 %v6852
    %6895 = vmatmul.bf16.gmra.mxu0 %v6870
    %v6896 = vpop.f32.mrf.mxu0
    %v6897 = vadd.f32 0.0, %v6896
    %v6898 = vpop.f32.mrf.mxu0
    %v6899 = vadd.f32 0.0, %v6898
    %6900 = vmatmul.bf16.gmra.mxu0 %v6873
    %v6901 = vpop.f32.mrf.mxu0
    %v6902 = vadd.f32 0.0, %v6901
    %v6903 = vpop.f32.mrf.mxu0
    %v6904 = vadd.f32 0.0, %v6903
    %6905 = vmatmul.bf16.gmra.mxu0 %v6876
    %v6906 = vpop.f32.mrf.mxu0
    %v6907 = vadd.f32 0.0, %v6906
    %v6908 = vpop.f32.mrf.mxu0
    %v6909 = vadd.f32 0.0, %v6908
    %6910 = vmatmul.bf16.gmra.mxu0 %v6879
    %v6911 = vpop.f32.mrf.mxu0
    %v6912 = vadd.f32 0.0, %v6911
    %v6913 = vpop.f32.mrf.mxu0
    %v6914 = vadd.f32 0.0, %v6913
    %6915 = vmatmul.bf16.gmra.mxu0 %v6882
    %v6916 = vpop.f32.mrf.mxu0
    %v6917 = vadd.f32 0.0, %v6916
    %v6918 = vpop.f32.mrf.mxu0
    %v6919 = vadd.f32 0.0, %v6918
    %6920 = vmatmul.bf16.gmra.mxu0 %v6885
    %v6921 = vpop.f32.mrf.mxu0
    %v6922 = vadd.f32 0.0, %v6921
    %v6923 = vpop.f32.mrf.mxu0
    %v6924 = vadd.f32 0.0, %v6923
    %6925 = vdwg.mxu0
    %6938 = vrot.lane.b32.xlu0 %v6897, 16
    %v6939 = vpop.permute.xlu0 %6938
    %6940 = vrot.lane.b32.xlu0 %v6899, 16
    %v6941 = vpop.permute.xlu0 %6940
    %6942 = vrot.lane.b32.xlu0 %v6902, 16
    %v6943 = vpop.permute.xlu0 %6942
    %6944 = vrot.lane.b32.xlu0 %v6904, 16
    %v6945 = vpop.permute.xlu0 %6944
    %6946 = vrot.lane.b32.xlu0 %v6907, 16
    %v6947 = vpop.permute.xlu0 %6946
    %6948 = vrot.lane.b32.xlu0 %v6909, 16
    %v6949 = vpop.permute.xlu0 %6948
    %6950 = vrot.lane.b32.xlu0 %v6912, 16
    %v6951 = vpop.permute.xlu0 %6950
    %6952 = vrot.lane.b32.xlu0 %v6914, 16
    %v6953 = vpop.permute.xlu0 %6952
    %6954 = vrot.lane.b32.xlu0 %v6917, 16
    %v6955 = vpop.permute.xlu0 %6954
    %6956 = vrot.lane.b32.xlu0 %v6919, 16
    %v6957 = vpop.permute.xlu0 %6956
    %6958 = vrot.lane.b32.xlu0 %v6922, 16
    %v6959 = vpop.permute.xlu0 %6958
    %6960 = vrot.lane.b32.xlu0 %v6924, 16
    %v6961 = vpop.permute.xlu0 %6960
    %v6974 = vsel %vm503, %v6405, %v6939
    %v6975 = vsel %vm503, %v6407, %v6941
    %v6976 = vsel %vm503, %v6410, %v6943
    %v6977 = vsel %vm503, %v6412, %v6945
    %v6978 = vsel %vm503, %v6415, %v6947
    %v6979 = vsel %vm503, %v6417, %v6949
    %v6980 = vsel %vm503, %v6420, %v6951
    %v6981 = vsel %vm503, %v6422, %v6953
    %v6982 = vsel %vm503, %v6425, %v6955
    %v6983 = vsel %vm503, %v6427, %v6957
    %v6984 = vsel %vm503, %v6430, %v6959
    %v6985 = vsel %vm503, %v6432, %v6961
    %v6986 = vpack.c.bf16 %v6975, %v6974
    %v6987 = vpack.c.bf16 %v6977, %v6976
    %v6988 = vpack.c.bf16 %v6979, %v6978
    %v6989 = vpack.c.bf16 %v6981, %v6980
    %v6990 = vpack.c.bf16 %v6983, %v6982
    %v6991 = vpack.c.bf16 %v6985, %v6984
    %s6992 = scalar_lea.vmem %s9, 32
    %v6993 = vld [vmem:[%s6992] sm:$0xf]
    %v6994 = vld [vmem:[%s6992 + $0x4] sm:$0xf]
    %v6995 = vld [vmem:[%s6992 + $0x8] sm:$0xf]
    %v6996 = vld [vmem:[%s6992 + $0xc] sm:$0xf]
    %s6997 = scalar_lea.vmem %s10, 2
    %v6998 = vld [vmem:[%s6997] sm:$0x1]
    %v7000 = vperm.slane %v6998, 0
    %v7006 = vunpack.c.l.b16 %v6993
    %v7007 = vunpack.c.l.b16 %v6994
    %v7008 = vunpack.c.l.b16 %v6995
    %v7009 = vunpack.c.l.b16 %v6996
    %v7010 = vpack.c.b16 %v7007, %v7006
    %v7011 = vpack.c.b16 %v7009, %v7008
    %v7015 = vsel %vm94, %v6986, 0
    %v7018 = vsel %vm94, %v6987, 0
    %v7021 = vsel %vm94, %v6988, 0
    %v7024 = vsel %vm94, %v6989, 0
    %v7027 = vsel %vm94, %v6990, 0
    %v7030 = vsel %vm94, %v6991, 0
    %7032 = vmatpush.bf16.msra.mxu0 0
    %7033 = vmatpush.bf16.msra.mxu0 0
    %7034 = vmatpush.bf16.msra.mxu0 0
    %7035 = vmatpush.bf16.msra.mxu0 0
    %7036 = vmatpush.bf16.msra.mxu0 0
    %7037 = vmatpush.bf16.msra.mxu0 0
    %7038 = vmatpush.bf16.msra.mxu0 %v7011
    %7039 = vmatpush.bf16.msra.mxu0 %v7010
    %7040 = vmatmul.bf16.gmra.mxu0 %v7015
    %v7041 = vpop.f32.mrf.mxu0
    %v7042 = vadd.f32 %v7000, %v7041
    %v7043 = vpop.f32.mrf.mxu0
    %v7044 = vadd.f32 %v7000, %v7043
    %7045 = vmatmul.bf16.gmra.mxu0 %v7018
    %v7046 = vpop.f32.mrf.mxu0
    %v7047 = vadd.f32 %v7000, %v7046
    %v7048 = vpop.f32.mrf.mxu0
    %v7049 = vadd.f32 %v7000, %v7048
    %7050 = vmatmul.bf16.gmra.mxu0 %v7021
    %v7051 = vpop.f32.mrf.mxu0
    %v7052 = vadd.f32 %v7000, %v7051
    %v7053 = vpop.f32.mrf.mxu0
    %v7054 = vadd.f32 %v7000, %v7053
    %7055 = vmatmul.bf16.gmra.mxu0 %v7024
    %v7056 = vpop.f32.mrf.mxu0
    %v7057 = vadd.f32 %v7000, %v7056
    %v7058 = vpop.f32.mrf.mxu0
    %v7059 = vadd.f32 %v7000, %v7058
    %7060 = vmatmul.bf16.gmra.mxu0 %v7027
    %v7061 = vpop.f32.mrf.mxu0
    %v7062 = vadd.f32 %v7000, %v7061
    %v7063 = vpop.f32.mrf.mxu0
    %v7064 = vadd.f32 %v7000, %v7063
    %7065 = vmatmul.bf16.gmra.mxu0 %v7030
    %v7066 = vpop.f32.mrf.mxu0
    %v7067 = vadd.f32 %v7000, %v7066
    %v7068 = vpop.f32.mrf.mxu0
    %v7069 = vadd.f32 %v7000, %v7068
    %7070 = vdwg.mxu0
    %v7071 = vadd.f32 %v5845, %v7042
    %v7072 = vadd.f32 %v5846, %v7044
    %v7073 = vadd.f32 %v5847, %v7047
    %v7074 = vadd.f32 %v5848, %v7049
    %v7075 = vadd.f32 %v5849, %v7052
    %v7076 = vadd.f32 %v5850, %v7054
    %v7077 = vadd.f32 %v5851, %v7057
    %v7078 = vadd.f32 %v5852, %v7059
    %v7079 = vadd.f32 %v5853, %v7062
    %v7080 = vadd.f32 %v5854, %v7064
    %v7081 = vadd.f32 %v5855, %v7067
    %v7082 = vadd.f32 %v5856, %v7069
    %s7083 = scalar_lea.vmem %s5, 2
    %v7084 = vld [vmem:[%s7083] sm:$0x1]
    %s7085 = scalar_lea.vmem %s6, 2
    %v7086 = vld [vmem:[%s7085] sm:$0x1]
    %v7087 = vsel %vm94, %v7071, 0.0
    %7088 = vadd.xlane.f32.xlu0 %v7087
    %v7089 = vpop.xlane.xlu0 %7088
    %v7090 = vsel %vm94, %v7072, 0.0
    %7091 = vadd.xlane.f32.xlu0 %v7090
    %v7092 = vpop.xlane.xlu0 %7091
    %v7093 = vsel %vm94, %v7073, 0.0
    %7094 = vadd.xlane.f32.xlu0 %v7093
    %v7095 = vpop.xlane.xlu0 %7094
    %v7096 = vsel %vm94, %v7074, 0.0
    %7097 = vadd.xlane.f32.xlu0 %v7096
    %v7098 = vpop.xlane.xlu0 %7097
    %v7099 = vsel %vm94, %v7075, 0.0
    %7100 = vadd.xlane.f32.xlu0 %v7099
    %v7101 = vpop.xlane.xlu0 %7100
    %v7102 = vsel %vm94, %v7076, 0.0
    %7103 = vadd.xlane.f32.xlu0 %v7102
    %v7104 = vpop.xlane.xlu0 %7103
    %v7105 = vsel %vm94, %v7077, 0.0
    %7106 = vadd.xlane.f32.xlu0 %v7105
    %v7107 = vpop.xlane.xlu0 %7106
    %v7108 = vsel %vm94, %v7078, 0.0
    %7109 = vadd.xlane.f32.xlu0 %v7108
    %v7110 = vpop.xlane.xlu0 %7109
    %v7111 = vsel %vm94, %v7079, 0.0
    %7112 = vadd.xlane.f32.xlu0 %v7111
    %v7113 = vpop.xlane.xlu0 %7112
    %v7114 = vsel %vm94, %v7080, 0.0
    %7115 = vadd.xlane.f32.xlu0 %v7114
    %v7116 = vpop.xlane.xlu0 %7115
    %v7117 = vsel %vm94, %v7081, 0.0
    %7118 = vadd.xlane.f32.xlu0 %v7117
    %v7119 = vpop.xlane.xlu0 %7118
    %v7120 = vsel %vm94, %v7082, 0.0
    %7121 = vadd.xlane.f32.xlu0 %v7120
    %v7122 = vpop.xlane.xlu0 %7121
    %v7123 = vmul.f32 %v7089, %v137
    %v7124 = vmul.f32 %v7092, %v137
    %v7125 = vmul.f32 %v7095, %v137
    %v7126 = vmul.f32 %v7098, %v137
    %v7127 = vmul.f32 %v7101, %v137
    %v7128 = vmul.f32 %v7104, %v137
    %v7129 = vmul.f32 %v7107, %v137
    %v7130 = vmul.f32 %v7110, %v137
    %v7131 = vmul.f32 %v7113, %v137
    %v7132 = vmul.f32 %v7116, %v137
    %v7133 = vmul.f32 %v7119, %v137
    %v7134 = vmul.f32 %v7122, %v137
    %v7135 = vsub.f32 %v7071, %v7123
    %v7136 = vsub.f32 %v7072, %v7124
    %v7137 = vsub.f32 %v7073, %v7125
    %v7138 = vsub.f32 %v7074, %v7126
    %v7139 = vsub.f32 %v7075, %v7127
    %v7140 = vsub.f32 %v7076, %v7128
    %v7141 = vsub.f32 %v7077, %v7129
    %v7142 = vsub.f32 %v7078, %v7130
    %v7143 = vsub.f32 %v7079, %v7131
    %v7144 = vsub.f32 %v7080, %v7132
    %v7145 = vsub.f32 %v7081, %v7133
    %v7146 = vsub.f32 %v7082, %v7134
    %v7147 = vmul.f32 %v7135, %v7135
    %v7148 = vmul.f32 %v7136, %v7136
    %v7149 = vmul.f32 %v7137, %v7137
    %v7150 = vmul.f32 %v7138, %v7138
    %v7151 = vmul.f32 %v7139, %v7139
    %v7152 = vmul.f32 %v7140, %v7140
    %v7153 = vmul.f32 %v7141, %v7141
    %v7154 = vmul.f32 %v7142, %v7142
    %v7155 = vmul.f32 %v7143, %v7143
    %v7156 = vmul.f32 %v7144, %v7144
    %v7157 = vmul.f32 %v7145, %v7145
    %v7158 = vmul.f32 %v7146, %v7146
    %v7159 = vsel %vm94, %v7147, 0.0
    %7160 = vadd.xlane.f32.xlu0 %v7159
    %v7161 = vpop.xlane.xlu0 %7160
    %v7162 = vsel %vm94, %v7148, 0.0
    %7163 = vadd.xlane.f32.xlu0 %v7162
    %v7164 = vpop.xlane.xlu0 %7163
    %v7165 = vsel %vm94, %v7149, 0.0
    %7166 = vadd.xlane.f32.xlu0 %v7165
    %v7167 = vpop.xlane.xlu0 %7166
    %v7168 = vsel %vm94, %v7150, 0.0
    %7169 = vadd.xlane.f32.xlu0 %v7168
    %v7170 = vpop.xlane.xlu0 %7169
    %v7171 = vsel %vm94, %v7151, 0.0
    %7172 = vadd.xlane.f32.xlu0 %v7171
    %v7173 = vpop.xlane.xlu0 %7172
    %v7174 = vsel %vm94, %v7152, 0.0
    %7175 = vadd.xlane.f32.xlu0 %v7174
    %v7176 = vpop.xlane.xlu0 %7175
    %v7177 = vsel %vm94, %v7153, 0.0
    %7178 = vadd.xlane.f32.xlu0 %v7177
    %v7179 = vpop.xlane.xlu0 %7178
    %v7180 = vsel %vm94, %v7154, 0.0
    %7181 = vadd.xlane.f32.xlu0 %v7180
    %v7182 = vpop.xlane.xlu0 %7181
    %v7183 = vsel %vm94, %v7155, 0.0
    %7184 = vadd.xlane.f32.xlu0 %v7183
    %v7185 = vpop.xlane.xlu0 %7184
    %v7186 = vsel %vm94, %v7156, 0.0
    %7187 = vadd.xlane.f32.xlu0 %v7186
    %v7188 = vpop.xlane.xlu0 %7187
    %v7189 = vsel %vm94, %v7157, 0.0
    %7190 = vadd.xlane.f32.xlu0 %v7189
    %v7191 = vpop.xlane.xlu0 %7190
    %v7192 = vsel %vm94, %v7158, 0.0
    %7193 = vadd.xlane.f32.xlu0 %v7192
    %v7194 = vpop.xlane.xlu0 %7193
    %v7195 = vmul.f32 %v7161, %v137
    %v7196 = vmul.f32 %v7164, %v137
    %v7197 = vmul.f32 %v7167, %v137
    %v7198 = vmul.f32 %v7170, %v137
    %v7199 = vmul.f32 %v7173, %v137
    %v7200 = vmul.f32 %v7176, %v137
    %v7201 = vmul.f32 %v7179, %v137
    %v7202 = vmul.f32 %v7182, %v137
    %v7203 = vmul.f32 %v7185, %v137
    %v7204 = vmul.f32 %v7188, %v137
    %v7205 = vmul.f32 %v7191, %v137
    %v7206 = vmul.f32 %v7194, %v137
    %v7207 = vadd.f32 %v7195, 1e-05
    %v7208 = vadd.f32 %v7196, 1e-05
    %v7209 = vadd.f32 %v7197, 1e-05
    %v7210 = vadd.f32 %v7198, 1e-05
    %v7211 = vadd.f32 %v7199, 1e-05
    %v7212 = vadd.f32 %v7200, 1e-05
    %v7213 = vadd.f32 %v7201, 1e-05
    %v7214 = vadd.f32 %v7202, 1e-05
    %v7215 = vadd.f32 %v7203, 1e-05
    %v7216 = vadd.f32 %v7204, 1e-05
    %v7217 = vadd.f32 %v7205, 1e-05
    %v7218 = vadd.f32 %v7206, 1e-05
    %v7219 = vrsqrt.pop %v7207
    %v7220 = vmul.f32 %v7219, %v7207
    %v7221 = vmul.f32 %v7220, %v7219
    %v7222 = vmul.f32 0.5, %v7221
    %v7223 = vsub.f32 1.5, %v7222
    %v7224 = vmul.f32 %v7219, %v7223
    %vm7225 = vweird.f32 %v7207
    %vm7226 = vweird.f32 %v7219
    %vm7227 = vmor %vm7225, %vm7226
    %v7228 = vsel %vm7227, %v7219, %v7224
    %v7229 = vrsqrt.pop %v7208
    %v7230 = vmul.f32 %v7229, %v7208
    %v7231 = vmul.f32 %v7230, %v7229
    %v7232 = vmul.f32 0.5, %v7231
    %v7233 = vsub.f32 1.5, %v7232
    %v7234 = vmul.f32 %v7229, %v7233
    %vm7235 = vweird.f32 %v7208
    %vm7236 = vweird.f32 %v7229
    %vm7237 = vmor %vm7235, %vm7236
    %v7238 = vsel %vm7237, %v7229, %v7234
    %v7239 = vrsqrt.pop %v7209
    %v7240 = vmul.f32 %v7239, %v7209
    %v7241 = vmul.f32 %v7240, %v7239
    %v7242 = vmul.f32 0.5, %v7241
    %v7243 = vsub.f32 1.5, %v7242
    %v7244 = vmul.f32 %v7239, %v7243
    %vm7245 = vweird.f32 %v7209
    %vm7246 = vweird.f32 %v7239
    %vm7247 = vmor %vm7245, %vm7246
    %v7248 = vsel %vm7247, %v7239, %v7244
    %v7249 = vrsqrt.pop %v7210
    %v7250 = vmul.f32 %v7249, %v7210
    %v7251 = vmul.f32 %v7250, %v7249
    %v7252 = vmul.f32 0.5, %v7251
    %v7253 = vsub.f32 1.5, %v7252
    %v7254 = vmul.f32 %v7249, %v7253
    %vm7255 = vweird.f32 %v7210
    %vm7256 = vweird.f32 %v7249
    %vm7257 = vmor %vm7255, %vm7256
    %v7258 = vsel %vm7257, %v7249, %v7254
    %v7259 = vrsqrt.pop %v7211
    %v7260 = vmul.f32 %v7259, %v7211
    %v7261 = vmul.f32 %v7260, %v7259
    %v7262 = vmul.f32 0.5, %v7261
    %v7263 = vsub.f32 1.5, %v7262
    %v7264 = vmul.f32 %v7259, %v7263
    %vm7265 = vweird.f32 %v7211
    %vm7266 = vweird.f32 %v7259
    %vm7267 = vmor %vm7265, %vm7266
    %v7268 = vsel %vm7267, %v7259, %v7264
    %v7269 = vrsqrt.pop %v7212
    %v7270 = vmul.f32 %v7269, %v7212
    %v7271 = vmul.f32 %v7270, %v7269
    %v7272 = vmul.f32 0.5, %v7271
    %v7273 = vsub.f32 1.5, %v7272
    %v7274 = vmul.f32 %v7269, %v7273
    %vm7275 = vweird.f32 %v7212
    %vm7276 = vweird.f32 %v7269
    %vm7277 = vmor %vm7275, %vm7276
    %v7278 = vsel %vm7277, %v7269, %v7274
    %v7279 = vrsqrt.pop %v7213
    %v7280 = vmul.f32 %v7279, %v7213
    %v7281 = vmul.f32 %v7280, %v7279
    %v7282 = vmul.f32 0.5, %v7281
    %v7283 = vsub.f32 1.5, %v7282
    %v7284 = vmul.f32 %v7279, %v7283
    %vm7285 = vweird.f32 %v7213
    %vm7286 = vweird.f32 %v7279
    %vm7287 = vmor %vm7285, %vm7286
    %v7288 = vsel %vm7287, %v7279, %v7284
    %v7289 = vrsqrt.pop %v7214
    %v7290 = vmul.f32 %v7289, %v7214
    %v7291 = vmul.f32 %v7290, %v7289
    %v7292 = vmul.f32 0.5, %v7291
    %v7293 = vsub.f32 1.5, %v7292
    %v7294 = vmul.f32 %v7289, %v7293
    %vm7295 = vweird.f32 %v7214
    %vm7296 = vweird.f32 %v7289
    %vm7297 = vmor %vm7295, %vm7296
    %v7298 = vsel %vm7297, %v7289, %v7294
    %v7299 = vrsqrt.pop %v7215
    %v7300 = vmul.f32 %v7299, %v7215
    %v7301 = vmul.f32 %v7300, %v7299
    %v7302 = vmul.f32 0.5, %v7301
    %v7303 = vsub.f32 1.5, %v7302
    %v7304 = vmul.f32 %v7299, %v7303
    %vm7305 = vweird.f32 %v7215
    %vm7306 = vweird.f32 %v7299
    %vm7307 = vmor %vm7305, %vm7306
    %v7308 = vsel %vm7307, %v7299, %v7304
    %v7309 = vrsqrt.pop %v7216
    %v7310 = vmul.f32 %v7309, %v7216
    %v7311 = vmul.f32 %v7310, %v7309
    %v7312 = vmul.f32 0.5, %v7311
    %v7313 = vsub.f32 1.5, %v7312
    %v7314 = vmul.f32 %v7309, %v7313
    %vm7315 = vweird.f32 %v7216
    %vm7316 = vweird.f32 %v7309
    %vm7317 = vmor %vm7315, %vm7316
    %v7318 = vsel %vm7317, %v7309, %v7314
    %v7319 = vrsqrt.pop %v7217
    %v7320 = vmul.f32 %v7319, %v7217
    %v7321 = vmul.f32 %v7320, %v7319
    %v7322 = vmul.f32 0.5, %v7321
    %v7323 = vsub.f32 1.5, %v7322
    %v7324 = vmul.f32 %v7319, %v7323
    %vm7325 = vweird.f32 %v7217
    %vm7326 = vweird.f32 %v7319
    %vm7327 = vmor %vm7325, %vm7326
    %v7328 = vsel %vm7327, %v7319, %v7324
    %v7329 = vrsqrt.pop %v7218
    %v7330 = vmul.f32 %v7329, %v7218
    %v7331 = vmul.f32 %v7330, %v7329
    %v7332 = vmul.f32 0.5, %v7331
    %v7333 = vsub.f32 1.5, %v7332
    %v7334 = vmul.f32 %v7329, %v7333
    %vm7335 = vweird.f32 %v7218
    %vm7336 = vweird.f32 %v7329
    %vm7337 = vmor %vm7335, %vm7336
    %v7338 = vsel %vm7337, %v7329, %v7334
    %v7339 = vmul.f32 %v7135, %v7228
    %v7340 = vmul.f32 %v7136, %v7238
    %v7341 = vmul.f32 %v7137, %v7248
    %v7342 = vmul.f32 %v7138, %v7258
    %v7343 = vmul.f32 %v7139, %v7268
    %v7344 = vmul.f32 %v7140, %v7278
    %v7345 = vmul.f32 %v7141, %v7288
    %v7346 = vmul.f32 %v7142, %v7298
    %v7347 = vmul.f32 %v7143, %v7308
    %v7348 = vmul.f32 %v7144, %v7318
    %v7349 = vmul.f32 %v7145, %v7328
    %v7350 = vmul.f32 %v7146, %v7338
    %v7352 = vperm.slane %v7084, 0
    %v7354 = vmul.f32 %v7339, %v7352
    %v7355 = vmul.f32 %v7340, %v7352
    %v7356 = vmul.f32 %v7341, %v7352
    %v7357 = vmul.f32 %v7342, %v7352
    %v7358 = vmul.f32 %v7343, %v7352
    %v7359 = vmul.f32 %v7344, %v7352
    %v7360 = vmul.f32 %v7345, %v7352
    %v7361 = vmul.f32 %v7346, %v7352
    %v7362 = vmul.f32 %v7347, %v7352
    %v7363 = vmul.f32 %v7348, %v7352
    %v7364 = vmul.f32 %v7349, %v7352
    %v7365 = vmul.f32 %v7350, %v7352
    %v7367 = vperm.slane %v7086, 0
    %v7369 = vadd.f32 %v7354, %v7367
    %v7370 = vadd.f32 %v7355, %v7367
    %v7371 = vadd.f32 %v7356, %v7367
    %v7372 = vadd.f32 %v7357, %v7367
    %v7373 = vadd.f32 %v7358, %v7367
    %v7374 = vadd.f32 %v7359, %v7367
    %v7375 = vadd.f32 %v7360, %v7367
    %v7376 = vadd.f32 %v7361, %v7367
    %v7377 = vadd.f32 %v7362, %v7367
    %v7378 = vadd.f32 %v7363, %v7367
    %v7379 = vadd.f32 %v7364, %v7367
    %v7380 = vadd.f32 %v7365, %v7367
    %v7381 = vpack.c.bf16 %v7370, %v7369
    %v7382 = vpack.c.bf16 %v7372, %v7371
    %v7383 = vpack.c.bf16 %v7374, %v7373
    %v7384 = vpack.c.bf16 %v7376, %v7375
    %v7385 = vpack.c.bf16 %v7378, %v7377
    %v7386 = vpack.c.bf16 %v7380, %v7379
    %s7387 = scalar_lea.vmem %s11, 32
    %v7388 = vld [vmem:[%s7387] sm:$0xf]
    %v7389 = vld [vmem:[%s7387 + $0x4] sm:$0xf]
    %v7390 = vld [vmem:[%s7387 + $0x8] sm:$0xf]
    %v7391 = vld [vmem:[%s7387 + $0xc] sm:$0xf]
    %s7392 = scalar_lea.vmem %s12, 2
    %v7393 = vld [vmem:[%s7392] sm:$0x1]
    %v7395 = vperm.slane %v7393, 0
    %v7401 = vunpack.c.l.b16 %v7388
    %v7402 = vunpack.c.l.b16 %v7389
    %v7403 = vunpack.c.l.b16 %v7390
    %v7404 = vunpack.c.l.b16 %v7391
    %v7405 = vpack.c.b16 %v7402, %v7401
    %v7406 = vpack.c.b16 %v7404, %v7403
    %v7410 = vsel %vm94, %v7381, 0
    %v7413 = vsel %vm94, %v7382, 0
    %v7416 = vsel %vm94, %v7383, 0
    %v7419 = vsel %vm94, %v7384, 0
    %v7422 = vsel %vm94, %v7385, 0
    %v7425 = vsel %vm94, %v7386, 0
    %7427 = vmatpush.bf16.msra.mxu0 0
    %7428 = vmatpush.bf16.msra.mxu0 0
    %7429 = vmatpush.bf16.msra.mxu0 0
    %7430 = vmatpush.bf16.msra.mxu0 0
    %7431 = vmatpush.bf16.msra.mxu0 0
    %7432 = vmatpush.bf16.msra.mxu0 0
    %7433 = vmatpush.bf16.msra.mxu0 %v7406
    %7434 = vmatpush.bf16.msra.mxu0 %v7405
    %7435 = vmatmul.bf16.gmra.mxu0 %v7410
    %v7436 = vpop.f32.mrf.mxu0
    %v7437 = vadd.f32 %v7395, %v7436
    %v7438 = vpop.f32.mrf.mxu0
    %v7439 = vadd.f32 %v7395, %v7438
    %7440 = vmatmul.bf16.gmra.mxu0 %v7413
    %v7441 = vpop.f32.mrf.mxu0
    %v7442 = vadd.f32 %v7395, %v7441
    %v7443 = vpop.f32.mrf.mxu0
    %v7444 = vadd.f32 %v7395, %v7443
    %7445 = vmatmul.bf16.gmra.mxu0 %v7416
    %v7446 = vpop.f32.mrf.mxu0
    %v7447 = vadd.f32 %v7395, %v7446
    %v7448 = vpop.f32.mrf.mxu0
    %v7449 = vadd.f32 %v7395, %v7448
    %7450 = vmatmul.bf16.gmra.mxu0 %v7419
    %v7451 = vpop.f32.mrf.mxu0
    %v7452 = vadd.f32 %v7395, %v7451
    %v7453 = vpop.f32.mrf.mxu0
    %v7454 = vadd.f32 %v7395, %v7453
    %7455 = vmatmul.bf16.gmra.mxu0 %v7422
    %v7456 = vpop.f32.mrf.mxu0
    %v7457 = vadd.f32 %v7395, %v7456
    %v7458 = vpop.f32.mrf.mxu0
    %v7459 = vadd.f32 %v7395, %v7458
    %7460 = vmatmul.bf16.gmra.mxu0 %v7425
    %v7461 = vpop.f32.mrf.mxu0
    %v7462 = vadd.f32 %v7395, %v7461
    %v7463 = vpop.f32.mrf.mxu0
    %v7464 = vadd.f32 %v7395, %v7463
    %7465 = vdwg.mxu0
    %v7466 = vmul.f32 %v7437, 0.5
    %v7467 = vmul.f32 %v7439, 0.5
    %v7468 = vmul.f32 %v7442, 0.5
    %v7469 = vmul.f32 %v7444, 0.5
    %v7470 = vmul.f32 %v7447, 0.5
    %v7471 = vmul.f32 %v7449, 0.5
    %v7472 = vmul.f32 %v7452, 0.5
    %v7473 = vmul.f32 %v7454, 0.5
    %v7474 = vmul.f32 %v7457, 0.5
    %v7475 = vmul.f32 %v7459, 0.5
    %v7476 = vmul.f32 %v7462, 0.5
    %v7477 = vmul.f32 %v7464, 0.5
    %v7478 = vmul.f32 %v7437, 0.70710677
    %v7479 = vmul.f32 %v7439, 0.70710677
    %v7480 = vmul.f32 %v7442, 0.70710677
    %v7481 = vmul.f32 %v7444, 0.70710677
    %v7482 = vmul.f32 %v7447, 0.70710677
    %v7483 = vmul.f32 %v7449, 0.70710677
    %v7484 = vmul.f32 %v7452, 0.70710677
    %v7485 = vmul.f32 %v7454, 0.70710677
    %v7486 = vmul.f32 %v7457, 0.70710677
    %v7487 = vmul.f32 %v7459, 0.70710677
    %v7488 = vmul.f32 %v7462, 0.70710677
    %v7489 = vmul.f32 %v7464, 0.70710677
    %v7490 = vand.u32 2147483647, %v7478
    %v7491 = vand.u32 2147483647, %v7479
    %v7492 = vand.u32 2147483647, %v7480
    %v7493 = vand.u32 2147483647, %v7481
    %v7494 = vand.u32 2147483647, %v7482
    %v7495 = vand.u32 2147483647, %v7483
    %v7496 = vand.u32 2147483647, %v7484
    %v7497 = vand.u32 2147483647, %v7485
    %v7498 = vand.u32 2147483647, %v7486
    %v7499 = vand.u32 2147483647, %v7487
    %v7500 = vand.u32 2147483647, %v7488
    %v7501 = vand.u32 2147483647, %v7489
    %v7502 = vmul.f32 %v7490, 0.3275911
    %v7503 = vmul.f32 %v7491, 0.3275911
    %v7504 = vmul.f32 %v7492, 0.3275911
    %v7505 = vmul.f32 %v7493, 0.3275911
    %v7506 = vmul.f32 %v7494, 0.3275911
    %v7507 = vmul.f32 %v7495, 0.3275911
    %v7508 = vmul.f32 %v7496, 0.3275911
    %v7509 = vmul.f32 %v7497, 0.3275911
    %v7510 = vmul.f32 %v7498, 0.3275911
    %v7511 = vmul.f32 %v7499, 0.3275911
    %v7512 = vmul.f32 %v7500, 0.3275911
    %v7513 = vmul.f32 %v7501, 0.3275911
    %v7514 = vadd.f32 %v7502, 1.0
    %v7515 = vadd.f32 %v7503, 1.0
    %v7516 = vadd.f32 %v7504, 1.0
    %v7517 = vadd.f32 %v7505, 1.0
    %v7518 = vadd.f32 %v7506, 1.0
    %v7519 = vadd.f32 %v7507, 1.0
    %v7520 = vadd.f32 %v7508, 1.0
    %v7521 = vadd.f32 %v7509, 1.0
    %v7522 = vadd.f32 %v7510, 1.0
    %v7523 = vadd.f32 %v7511, 1.0
    %v7524 = vadd.f32 %v7512, 1.0
    %v7525 = vadd.f32 %v7513, 1.0
    %v7526 = vrcp.pop %v7514
    %v7527 = vmul.f32 %v7514, %v7526
    %v7528 = vsub.f32 1.0, %v7527
    %v7529 = vmul.f32 %v7526, %v7528
    %v7530 = vadd.f32 %v7526, %v7529
    %vm7531 = vweird.f32 %v7514
    %vm7532 = vweird.f32 %v7526
    %vm7533 = vmor %vm7531, %vm7532
    %v7534 = vsel %vm7533, %v7526, %v7530
    %v7535 = vand.u32 2147483647, %v7514
    %vm7536 = vcmp.eq.f32.partialorder %v7535, 8.507059e+37
    %v7537 = vand.u32 %v7514, 2147483648
    %v7538 = vor.u32 1.1754944e-38, %v7537
    %v7539 = vsel %vm7536, %v7538, %v7534
    %v7540 = vmul.f32 1.0, %v7539
    %v7541 = vrcp.pop %v7515
    %v7542 = vmul.f32 %v7515, %v7541
    %v7543 = vsub.f32 1.0, %v7542
    %v7544 = vmul.f32 %v7541, %v7543
    %v7545 = vadd.f32 %v7541, %v7544
    %vm7546 = vweird.f32 %v7515
    %vm7547 = vweird.f32 %v7541
    %vm7548 = vmor %vm7546, %vm7547
    %v7549 = vsel %vm7548, %v7541, %v7545
    %v7550 = vand.u32 2147483647, %v7515
    %vm7551 = vcmp.eq.f32.partialorder %v7550, 8.507059e+37
    %v7552 = vand.u32 %v7515, 2147483648
    %v7553 = vor.u32 1.1754944e-38, %v7552
    %v7554 = vsel %vm7551, %v7553, %v7549
    %v7555 = vmul.f32 1.0, %v7554
    %v7556 = vrcp.pop %v7516
    %v7557 = vmul.f32 %v7516, %v7556
    %v7558 = vsub.f32 1.0, %v7557
    %v7559 = vmul.f32 %v7556, %v7558
    %v7560 = vadd.f32 %v7556, %v7559
    %vm7561 = vweird.f32 %v7516
    %vm7562 = vweird.f32 %v7556
    %vm7563 = vmor %vm7561, %vm7562
    %v7564 = vsel %vm7563, %v7556, %v7560
    %v7565 = vand.u32 2147483647, %v7516
    %vm7566 = vcmp.eq.f32.partialorder %v7565, 8.507059e+37
    %v7567 = vand.u32 %v7516, 2147483648
    %v7568 = vor.u32 1.1754944e-38, %v7567
    %v7569 = vsel %vm7566, %v7568, %v7564
    %v7570 = vmul.f32 1.0, %v7569
    %v7571 = vrcp.pop %v7517
    %v7572 = vmul.f32 %v7517, %v7571
    %v7573 = vsub.f32 1.0, %v7572
    %v7574 = vmul.f32 %v7571, %v7573
    %v7575 = vadd.f32 %v7571, %v7574
    %vm7576 = vweird.f32 %v7517
    %vm7577 = vweird.f32 %v7571
    %vm7578 = vmor %vm7576, %vm7577
    %v7579 = vsel %vm7578, %v7571, %v7575
    %v7580 = vand.u32 2147483647, %v7517
    %vm7581 = vcmp.eq.f32.partialorder %v7580, 8.507059e+37
    %v7582 = vand.u32 %v7517, 2147483648
    %v7583 = vor.u32 1.1754944e-38, %v7582
    %v7584 = vsel %vm7581, %v7583, %v7579
    %v7585 = vmul.f32 1.0, %v7584
    %v7586 = vrcp.pop %v7518
    %v7587 = vmul.f32 %v7518, %v7586
    %v7588 = vsub.f32 1.0, %v7587
    %v7589 = vmul.f32 %v7586, %v7588
    %v7590 = vadd.f32 %v7586, %v7589
    %vm7591 = vweird.f32 %v7518
    %vm7592 = vweird.f32 %v7586
    %vm7593 = vmor %vm7591, %vm7592
    %v7594 = vsel %vm7593, %v7586, %v7590
    %v7595 = vand.u32 2147483647, %v7518
    %vm7596 = vcmp.eq.f32.partialorder %v7595, 8.507059e+37
    %v7597 = vand.u32 %v7518, 2147483648
    %v7598 = vor.u32 1.1754944e-38, %v7597
    %v7599 = vsel %vm7596, %v7598, %v7594
    %v7600 = vmul.f32 1.0, %v7599
    %v7601 = vrcp.pop %v7519
    %v7602 = vmul.f32 %v7519, %v7601
    %v7603 = vsub.f32 1.0, %v7602
    %v7604 = vmul.f32 %v7601, %v7603
    %v7605 = vadd.f32 %v7601, %v7604
    %vm7606 = vweird.f32 %v7519
    %vm7607 = vweird.f32 %v7601
    %vm7608 = vmor %vm7606, %vm7607
    %v7609 = vsel %vm7608, %v7601, %v7605
    %v7610 = vand.u32 2147483647, %v7519
    %vm7611 = vcmp.eq.f32.partialorder %v7610, 8.507059e+37
    %v7612 = vand.u32 %v7519, 2147483648
    %v7613 = vor.u32 1.1754944e-38, %v7612
    %v7614 = vsel %vm7611, %v7613, %v7609
    %v7615 = vmul.f32 1.0, %v7614
    %v7616 = vrcp.pop %v7520
    %v7617 = vmul.f32 %v7520, %v7616
    %v7618 = vsub.f32 1.0, %v7617
    %v7619 = vmul.f32 %v7616, %v7618
    %v7620 = vadd.f32 %v7616, %v7619
    %vm7621 = vweird.f32 %v7520
    %vm7622 = vweird.f32 %v7616
    %vm7623 = vmor %vm7621, %vm7622
    %v7624 = vsel %vm7623, %v7616, %v7620
    %v7625 = vand.u32 2147483647, %v7520
    %vm7626 = vcmp.eq.f32.partialorder %v7625, 8.507059e+37
    %v7627 = vand.u32 %v7520, 2147483648
    %v7628 = vor.u32 1.1754944e-38, %v7627
    %v7629 = vsel %vm7626, %v7628, %v7624
    %v7630 = vmul.f32 1.0, %v7629
    %v7631 = vrcp.pop %v7521
    %v7632 = vmul.f32 %v7521, %v7631
    %v7633 = vsub.f32 1.0, %v7632
    %v7634 = vmul.f32 %v7631, %v7633
    %v7635 = vadd.f32 %v7631, %v7634
    %vm7636 = vweird.f32 %v7521
    %vm7637 = vweird.f32 %v7631
    %vm7638 = vmor %vm7636, %vm7637
    %v7639 = vsel %vm7638, %v7631, %v7635
    %v7640 = vand.u32 2147483647, %v7521
    %vm7641 = vcmp.eq.f32.partialorder %v7640, 8.507059e+37
    %v7642 = vand.u32 %v7521, 2147483648
    %v7643 = vor.u32 1.1754944e-38, %v7642
    %v7644 = vsel %vm7641, %v7643, %v7639
    %v7645 = vmul.f32 1.0, %v7644
    %v7646 = vrcp.pop %v7522
    %v7647 = vmul.f32 %v7522, %v7646
    %v7648 = vsub.f32 1.0, %v7647
    %v7649 = vmul.f32 %v7646, %v7648
    %v7650 = vadd.f32 %v7646, %v7649
    %vm7651 = vweird.f32 %v7522
    %vm7652 = vweird.f32 %v7646
    %vm7653 = vmor %vm7651, %vm7652
    %v7654 = vsel %vm7653, %v7646, %v7650
    %v7655 = vand.u32 2147483647, %v7522
    %vm7656 = vcmp.eq.f32.partialorder %v7655, 8.507059e+37
    %v7657 = vand.u32 %v7522, 2147483648
    %v7658 = vor.u32 1.1754944e-38, %v7657
    %v7659 = vsel %vm7656, %v7658, %v7654
    %v7660 = vmul.f32 1.0, %v7659
    %v7661 = vrcp.pop %v7523
    %v7662 = vmul.f32 %v7523, %v7661
    %v7663 = vsub.f32 1.0, %v7662
    %v7664 = vmul.f32 %v7661, %v7663
    %v7665 = vadd.f32 %v7661, %v7664
    %vm7666 = vweird.f32 %v7523
    %vm7667 = vweird.f32 %v7661
    %vm7668 = vmor %vm7666, %vm7667
    %v7669 = vsel %vm7668, %v7661, %v7665
    %v7670 = vand.u32 2147483647, %v7523
    %vm7671 = vcmp.eq.f32.partialorder %v7670, 8.507059e+37
    %v7672 = vand.u32 %v7523, 2147483648
    %v7673 = vor.u32 1.1754944e-38, %v7672
    %v7674 = vsel %vm7671, %v7673, %v7669
    %v7675 = vmul.f32 1.0, %v7674
    %v7676 = vrcp.pop %v7524
    %v7677 = vmul.f32 %v7524, %v7676
    %v7678 = vsub.f32 1.0, %v7677
    %v7679 = vmul.f32 %v7676, %v7678
    %v7680 = vadd.f32 %v7676, %v7679
    %vm7681 = vweird.f32 %v7524
    %vm7682 = vweird.f32 %v7676
    %vm7683 = vmor %vm7681, %vm7682
    %v7684 = vsel %vm7683, %v7676, %v7680
    %v7685 = vand.u32 2147483647, %v7524
    %vm7686 = vcmp.eq.f32.partialorder %v7685, 8.507059e+37
    %v7687 = vand.u32 %v7524, 2147483648
    %v7688 = vor.u32 1.1754944e-38, %v7687
    %v7689 = vsel %vm7686, %v7688, %v7684
    %v7690 = vmul.f32 1.0, %v7689
    %v7691 = vrcp.pop %v7525
    %v7692 = vmul.f32 %v7525, %v7691
    %v7693 = vsub.f32 1.0, %v7692
    %v7694 = vmul.f32 %v7691, %v7693
    %v7695 = vadd.f32 %v7691, %v7694
    %vm7696 = vweird.f32 %v7525
    %vm7697 = vweird.f32 %v7691
    %vm7698 = vmor %vm7696, %vm7697
    %v7699 = vsel %vm7698, %v7691, %v7695
    %v7700 = vand.u32 2147483647, %v7525
    %vm7701 = vcmp.eq.f32.partialorder %v7700, 8.507059e+37
    %v7702 = vand.u32 %v7525, 2147483648
    %v7703 = vor.u32 1.1754944e-38, %v7702
    %v7704 = vsel %vm7701, %v7703, %v7699
    %v7705 = vmul.f32 1.0, %v7704
    %v7706 = vmul.f32 %v7540, 1.0614054
    %v7707 = vmul.f32 %v7555, 1.0614054
    %v7708 = vmul.f32 %v7570, 1.0614054
    %v7709 = vmul.f32 %v7585, 1.0614054
    %v7710 = vmul.f32 %v7600, 1.0614054
    %v7711 = vmul.f32 %v7615, 1.0614054
    %v7712 = vmul.f32 %v7630, 1.0614054
    %v7713 = vmul.f32 %v7645, 1.0614054
    %v7714 = vmul.f32 %v7660, 1.0614054
    %v7715 = vmul.f32 %v7675, 1.0614054
    %v7716 = vmul.f32 %v7690, 1.0614054
    %v7717 = vmul.f32 %v7705, 1.0614054
    %v7718 = vadd.f32 %v7706, -1.4531521
    %v7719 = vadd.f32 %v7707, -1.4531521
    %v7720 = vadd.f32 %v7708, -1.4531521
    %v7721 = vadd.f32 %v7709, -1.4531521
    %v7722 = vadd.f32 %v7710, -1.4531521
    %v7723 = vadd.f32 %v7711, -1.4531521
    %v7724 = vadd.f32 %v7712, -1.4531521
    %v7725 = vadd.f32 %v7713, -1.4531521
    %v7726 = vadd.f32 %v7714, -1.4531521
    %v7727 = vadd.f32 %v7715, -1.4531521
    %v7728 = vadd.f32 %v7716, -1.4531521
    %v7729 = vadd.f32 %v7717, -1.4531521
    %v7730 = vmul.f32 %v7718, %v7540
    %v7731 = vmul.f32 %v7719, %v7555
    %v7732 = vmul.f32 %v7720, %v7570
    %v7733 = vmul.f32 %v7721, %v7585
    %v7734 = vmul.f32 %v7722, %v7600
    %v7735 = vmul.f32 %v7723, %v7615
    %v7736 = vmul.f32 %v7724, %v7630
    %v7737 = vmul.f32 %v7725, %v7645
    %v7738 = vmul.f32 %v7726, %v7660
    %v7739 = vmul.f32 %v7727, %v7675
    %v7740 = vmul.f32 %v7728, %v7690
    %v7741 = vmul.f32 %v7729, %v7705
    %v7742 = vadd.f32 %v7730, 1.4214138
    %v7743 = vadd.f32 %v7731, 1.4214138
    %v7744 = vadd.f32 %v7732, 1.4214138
    %v7745 = vadd.f32 %v7733, 1.4214138
    %v7746 = vadd.f32 %v7734, 1.4214138
    %v7747 = vadd.f32 %v7735, 1.4214138
    %v7748 = vadd.f32 %v7736, 1.4214138
    %v7749 = vadd.f32 %v7737, 1.4214138
    %v7750 = vadd.f32 %v7738, 1.4214138
    %v7751 = vadd.f32 %v7739, 1.4214138
    %v7752 = vadd.f32 %v7740, 1.4214138
    %v7753 = vadd.f32 %v7741, 1.4214138
    %v7754 = vmul.f32 %v7742, %v7540
    %v7755 = vmul.f32 %v7743, %v7555
    %v7756 = vmul.f32 %v7744, %v7570
    %v7757 = vmul.f32 %v7745, %v7585
    %v7758 = vmul.f32 %v7746, %v7600
    %v7759 = vmul.f32 %v7747, %v7615
    %v7760 = vmul.f32 %v7748, %v7630
    %v7761 = vmul.f32 %v7749, %v7645
    %v7762 = vmul.f32 %v7750, %v7660
    %v7763 = vmul.f32 %v7751, %v7675
    %v7764 = vmul.f32 %v7752, %v7690
    %v7765 = vmul.f32 %v7753, %v7705
    %v7766 = vadd.f32 %v7754, -0.28449672
    %v7767 = vadd.f32 %v7755, -0.28449672
    %v7768 = vadd.f32 %v7756, -0.28449672
    %v7769 = vadd.f32 %v7757, -0.28449672
    %v7770 = vadd.f32 %v7758, -0.28449672
    %v7771 = vadd.f32 %v7759, -0.28449672
    %v7772 = vadd.f32 %v7760, -0.28449672
    %v7773 = vadd.f32 %v7761, -0.28449672
    %v7774 = vadd.f32 %v7762, -0.28449672
    %v7775 = vadd.f32 %v7763, -0.28449672
    %v7776 = vadd.f32 %v7764, -0.28449672
    %v7777 = vadd.f32 %v7765, -0.28449672
    %v7778 = vmul.f32 %v7766, %v7540
    %v7779 = vmul.f32 %v7767, %v7555
    %v7780 = vmul.f32 %v7768, %v7570
    %v7781 = vmul.f32 %v7769, %v7585
    %v7782 = vmul.f32 %v7770, %v7600
    %v7783 = vmul.f32 %v7771, %v7615
    %v7784 = vmul.f32 %v7772, %v7630
    %v7785 = vmul.f32 %v7773, %v7645
    %v7786 = vmul.f32 %v7774, %v7660
    %v7787 = vmul.f32 %v7775, %v7675
    %v7788 = vmul.f32 %v7776, %v7690
    %v7789 = vmul.f32 %v7777, %v7705
    %v7790 = vadd.f32 %v7778, 0.2548296
    %v7791 = vadd.f32 %v7779, 0.2548296
    %v7792 = vadd.f32 %v7780, 0.2548296
    %v7793 = vadd.f32 %v7781, 0.2548296
    %v7794 = vadd.f32 %v7782, 0.2548296
    %v7795 = vadd.f32 %v7783, 0.2548296
    %v7796 = vadd.f32 %v7784, 0.2548296
    %v7797 = vadd.f32 %v7785, 0.2548296
    %v7798 = vadd.f32 %v7786, 0.2548296
    %v7799 = vadd.f32 %v7787, 0.2548296
    %v7800 = vadd.f32 %v7788, 0.2548296
    %v7801 = vadd.f32 %v7789, 0.2548296
    %v7802 = vmul.f32 %v7790, %v7540
    %v7803 = vmul.f32 %v7791, %v7555
    %v7804 = vmul.f32 %v7792, %v7570
    %v7805 = vmul.f32 %v7793, %v7585
    %v7806 = vmul.f32 %v7794, %v7600
    %v7807 = vmul.f32 %v7795, %v7615
    %v7808 = vmul.f32 %v7796, %v7630
    %v7809 = vmul.f32 %v7797, %v7645
    %v7810 = vmul.f32 %v7798, %v7660
    %v7811 = vmul.f32 %v7799, %v7675
    %v7812 = vmul.f32 %v7800, %v7690
    %v7813 = vmul.f32 %v7801, %v7705
    %v7814 = vsub.f32 0.0, %v7490
    %v7815 = vsub.f32 0.0, %v7491
    %v7816 = vsub.f32 0.0, %v7492
    %v7817 = vsub.f32 0.0, %v7493
    %v7818 = vsub.f32 0.0, %v7494
    %v7819 = vsub.f32 0.0, %v7495
    %v7820 = vsub.f32 0.0, %v7496
    %v7821 = vsub.f32 0.0, %v7497
    %v7822 = vsub.f32 0.0, %v7498
    %v7823 = vsub.f32 0.0, %v7499
    %v7824 = vsub.f32 0.0, %v7500
    %v7825 = vsub.f32 0.0, %v7501
    %v7826 = vmul.f32 %v7814, %v7490
    %v7827 = vmul.f32 %v7815, %v7491
    %v7828 = vmul.f32 %v7816, %v7492
    %v7829 = vmul.f32 %v7817, %v7493
    %v7830 = vmul.f32 %v7818, %v7494
    %v7831 = vmul.f32 %v7819, %v7495
    %v7832 = vmul.f32 %v7820, %v7496
    %v7833 = vmul.f32 %v7821, %v7497
    %v7834 = vmul.f32 %v7822, %v7498
    %v7835 = vmul.f32 %v7823, %v7499
    %v7836 = vmul.f32 %v7824, %v7500
    %v7837 = vmul.f32 %v7825, %v7501
    %v7838 = vmul.f32 %v7826, 1.442695
    %v7839 = vpow.pop %v7838
    %v7840 = vmul.f32 %v7827, 1.442695
    %v7841 = vpow.pop %v7840
    %v7842 = vmul.f32 %v7828, 1.442695
    %v7843 = vpow.pop %v7842
    %v7844 = vmul.f32 %v7829, 1.442695
    %v7845 = vpow.pop %v7844
    %v7846 = vmul.f32 %v7830, 1.442695
    %v7847 = vpow.pop %v7846
    %v7848 = vmul.f32 %v7831, 1.442695
    %v7849 = vpow.pop %v7848
    %v7850 = vmul.f32 %v7832, 1.442695
    %v7851 = vpow.pop %v7850
    %v7852 = vmul.f32 %v7833, 1.442695
    %v7853 = vpow.pop %v7852
    %v7854 = vmul.f32 %v7834, 1.442695
    %v7855 = vpow.pop %v7854
    %v7856 = vmul.f32 %v7835, 1.442695
    %v7857 = vpow.pop %v7856
    %v7858 = vmul.f32 %v7836, 1.442695
    %v7859 = vpow.pop %v7858
    %v7860 = vmul.f32 %v7837, 1.442695
    %v7861 = vpow.pop %v7860
    %v7862 = vmul.f32 %v7802, %v7839
    %v7863 = vmul.f32 %v7803, %v7841
    %v7864 = vmul.f32 %v7804, %v7843
    %v7865 = vmul.f32 %v7805, %v7845
    %v7866 = vmul.f32 %v7806, %v7847
    %v7867 = vmul.f32 %v7807, %v7849
    %v7868 = vmul.f32 %v7808, %v7851
    %v7869 = vmul.f32 %v7809, %v7853
    %v7870 = vmul.f32 %v7810, %v7855
    %v7871 = vmul.f32 %v7811, %v7857
    %v7872 = vmul.f32 %v7812, %v7859
    %v7873 = vmul.f32 %v7813, %v7861
    %v7874 = vsub.f32 1.0, %v7862
    %v7875 = vsub.f32 1.0, %v7863
    %v7876 = vsub.f32 1.0, %v7864
    %v7877 = vsub.f32 1.0, %v7865
    %v7878 = vsub.f32 1.0, %v7866
    %v7879 = vsub.f32 1.0, %v7867
    %v7880 = vsub.f32 1.0, %v7868
    %v7881 = vsub.f32 1.0, %v7869
    %v7882 = vsub.f32 1.0, %v7870
    %v7883 = vsub.f32 1.0, %v7871
    %v7884 = vsub.f32 1.0, %v7872
    %v7885 = vsub.f32 1.0, %v7873
    %vm7886 = vcmp.lt.f32.partialorder %v7478, 0.0
    %vm7887 = vcmp.lt.f32.partialorder %v7479, 0.0
    %vm7888 = vcmp.lt.f32.partialorder %v7480, 0.0
    %vm7889 = vcmp.lt.f32.partialorder %v7481, 0.0
    %vm7890 = vcmp.lt.f32.partialorder %v7482, 0.0
    %vm7891 = vcmp.lt.f32.partialorder %v7483, 0.0
    %vm7892 = vcmp.lt.f32.partialorder %v7484, 0.0
    %vm7893 = vcmp.lt.f32.partialorder %v7485, 0.0
    %vm7894 = vcmp.lt.f32.partialorder %v7486, 0.0
    %vm7895 = vcmp.lt.f32.partialorder %v7487, 0.0
    %vm7896 = vcmp.lt.f32.partialorder %v7488, 0.0
    %vm7897 = vcmp.lt.f32.partialorder %v7489, 0.0
    %v7898 = vsub.f32 0.0, %v7874
    %v7899 = vsub.f32 0.0, %v7875
    %v7900 = vsub.f32 0.0, %v7876
    %v7901 = vsub.f32 0.0, %v7877
    %v7902 = vsub.f32 0.0, %v7878
    %v7903 = vsub.f32 0.0, %v7879
    %v7904 = vsub.f32 0.0, %v7880
    %v7905 = vsub.f32 0.0, %v7881
    %v7906 = vsub.f32 0.0, %v7882
    %v7907 = vsub.f32 0.0, %v7883
    %v7908 = vsub.f32 0.0, %v7884
    %v7909 = vsub.f32 0.0, %v7885
    %v7910 = vsel %vm7886, %v7898, %v7874
    %v7911 = vsel %vm7887, %v7899, %v7875
    %v7912 = vsel %vm7888, %v7900, %v7876
    %v7913 = vsel %vm7889, %v7901, %v7877
    %v7914 = vsel %vm7890, %v7902, %v7878
    %v7915 = vsel %vm7891, %v7903, %v7879
    %v7916 = vsel %vm7892, %v7904, %v7880
    %v7917 = vsel %vm7893, %v7905, %v7881
    %v7918 = vsel %vm7894, %v7906, %v7882
    %v7919 = vsel %vm7895, %v7907, %v7883
    %v7920 = vsel %vm7896, %v7908, %v7884
    %v7921 = vsel %vm7897, %v7909, %v7885
    %v7922 = vadd.f32 %v7910, 1.0
    %v7923 = vadd.f32 %v7911, 1.0
    %v7924 = vadd.f32 %v7912, 1.0
    %v7925 = vadd.f32 %v7913, 1.0
    %v7926 = vadd.f32 %v7914, 1.0
    %v7927 = vadd.f32 %v7915, 1.0
    %v7928 = vadd.f32 %v7916, 1.0
    %v7929 = vadd.f32 %v7917, 1.0
    %v7930 = vadd.f32 %v7918, 1.0
    %v7931 = vadd.f32 %v7919, 1.0
    %v7932 = vadd.f32 %v7920, 1.0
    %v7933 = vadd.f32 %v7921, 1.0
    %v7934 = vmul.f32 %v7466, %v7922
    %v7935 = vmul.f32 %v7467, %v7923
    %v7936 = vmul.f32 %v7468, %v7924
    %v7937 = vmul.f32 %v7469, %v7925
    %v7938 = vmul.f32 %v7470, %v7926
    %v7939 = vmul.f32 %v7471, %v7927
    %v7940 = vmul.f32 %v7472, %v7928
    %v7941 = vmul.f32 %v7473, %v7929
    %v7942 = vmul.f32 %v7474, %v7930
    %v7943 = vmul.f32 %v7475, %v7931
    %v7944 = vmul.f32 %v7476, %v7932
    %v7945 = vmul.f32 %v7477, %v7933
    %v7946 = vpack.c.bf16 %v7935, %v7934
    %v7947 = vpack.c.bf16 %v7937, %v7936
    %v7948 = vpack.c.bf16 %v7939, %v7938
    %v7949 = vpack.c.bf16 %v7941, %v7940
    %v7950 = vpack.c.bf16 %v7943, %v7942
    %v7951 = vpack.c.bf16 %v7945, %v7944
    %s7952 = scalar_lea.vmem %s13, 128
    %v7953 = vld [vmem:[%s7952] sm:$0xf]
    %v7954 = vld [vmem:[%s7952 + $0x4] sm:$0xf]
    %v7955 = vld [vmem:[%s7952 + $0x8] sm:$0xf]
    %v7956 = vld [vmem:[%s7952 + $0xc] sm:$0xf]
    %v7957 = vld [vmem:[%s7952 + $0x10] sm:$0xf]
    %v7958 = vld [vmem:[%s7952 + $0x14] sm:$0xf]
    %v7959 = vld [vmem:[%s7952 + $0x18] sm:$0xf]
    %v7960 = vld [vmem:[%s7952 + $0x1c] sm:$0xf]
    %v7961 = vld [vmem:[%s7952 + $0x20] sm:$0xf]
    %v7962 = vld [vmem:[%s7952 + $0x24] sm:$0xf]
    %v7963 = vld [vmem:[%s7952 + $0x28] sm:$0xf]
    %v7964 = vld [vmem:[%s7952 + $0x2c] sm:$0xf]
    %v7965 = vld [vmem:[%s7952 + $0x30] sm:$0xf]
    %v7966 = vld [vmem:[%s7952 + $0x34] sm:$0xf]
    %v7967 = vld [vmem:[%s7952 + $0x38] sm:$0xf]
    %v7968 = vld [vmem:[%s7952 + $0x3c] sm:$0xf]
    %v7985 = vunpack.c.l.b16 %v7953
    %v7986 = vunpack.c.l.b16 %v7954
    %v7987 = vunpack.c.l.b16 %v7955
    %v7988 = vunpack.c.l.b16 %v7956
    %v7989 = vunpack.c.l.b16 %v7957
    %v7990 = vunpack.c.l.b16 %v7958
    %v7991 = vunpack.c.l.b16 %v7959
    %v7992 = vunpack.c.l.b16 %v7960
    %v7993 = vunpack.c.l.b16 %v7961
    %v7994 = vunpack.c.l.b16 %v7962
    %v7995 = vunpack.c.l.b16 %v7963
    %v7996 = vunpack.c.l.b16 %v7964
    %v7997 = vunpack.c.l.b16 %v7965
    %v7998 = vunpack.c.l.b16 %v7966
    %v7999 = vunpack.c.l.b16 %v7967
    %v8000 = vunpack.c.l.b16 %v7968
    %v8001 = vpack.c.b16 %v7986, %v7985
    %v8002 = vpack.c.b16 %v7988, %v7987
    %v8003 = vpack.c.b16 %v7990, %v7989
    %v8004 = vpack.c.b16 %v7992, %v7991
    %v8005 = vpack.c.b16 %v7994, %v7993
    %v8006 = vpack.c.b16 %v7996, %v7995
    %v8007 = vpack.c.b16 %v7998, %v7997
    %v8008 = vpack.c.b16 %v8000, %v7999
    %8017 = vmatpush.bf16.msra.mxu0 %v8008
    %8018 = vmatpush.bf16.msra.mxu0 %v8007
    %8019 = vmatpush.bf16.msra.mxu0 %v8006
    %8020 = vmatpush.bf16.msra.mxu0 %v8005
    %8021 = vmatpush.bf16.msra.mxu0 %v8004
    %8022 = vmatpush.bf16.msra.mxu0 %v8003
    %8023 = vmatpush.bf16.msra.mxu0 %v8002
    %8024 = vmatpush.bf16.msra.mxu0 %v8001
    %8025 = vmatmul.bf16.gmra.mxu0 %v7946
    %v8026 = vpop.f32.mrf.mxu0
    %v8027 = vadd.f32 0.0, %v8026
    %v8028 = vpop.f32.mrf.mxu0
    %v8029 = vadd.f32 0.0, %v8028
    %8030 = vmatmul.bf16.gmra.mxu0 %v7947
    %v8031 = vpop.f32.mrf.mxu0
    %v8032 = vadd.f32 0.0, %v8031
    %v8033 = vpop.f32.mrf.mxu0
    %v8034 = vadd.f32 0.0, %v8033
    %8035 = vmatmul.bf16.gmra.mxu0 %v7948
    %v8036 = vpop.f32.mrf.mxu0
    %v8037 = vadd.f32 0.0, %v8036
    %v8038 = vpop.f32.mrf.mxu0
    %v8039 = vadd.f32 0.0, %v8038
    %8040 = vmatmul.bf16.gmra.mxu0 %v7949
    %v8041 = vpop.f32.mrf.mxu0
    %v8042 = vadd.f32 0.0, %v8041
    %v8043 = vpop.f32.mrf.mxu0
    %v8044 = vadd.f32 0.0, %v8043
    %8045 = vmatmul.bf16.gmra.mxu0 %v7950
    %v8046 = vpop.f32.mrf.mxu0
    %v8047 = vadd.f32 0.0, %v8046
    %v8048 = vpop.f32.mrf.mxu0
    %v8049 = vadd.f32 0.0, %v8048
    %8050 = vmatmul.bf16.gmra.mxu0 %v7951
    %v8051 = vpop.f32.mrf.mxu0
    %v8052 = vadd.f32 0.0, %v8051
    %v8053 = vpop.f32.mrf.mxu0
    %v8054 = vadd.f32 0.0, %v8053
    %8055 = vdwg.mxu0
    %v8056 = vadd.f32 %v7071, %v8027
    %v8057 = vadd.f32 %v7072, %v8029
    %v8058 = vadd.f32 %v7073, %v8032
    %v8059 = vadd.f32 %v7074, %v8034
    %v8060 = vadd.f32 %v7075, %v8037
    %v8061 = vadd.f32 %v7076, %v8039
    %v8062 = vadd.f32 %v7077, %v8042
    %v8063 = vadd.f32 %v7078, %v8044
    %v8064 = vadd.f32 %v7079, %v8047
    %v8065 = vadd.f32 %v7080, %v8049
    %v8066 = vadd.f32 %v7081, %v8052
    %v8067 = vadd.f32 %v7082, %v8054
    %s8068 = scalar_lea.vmem %s14, 2
    %v8069 = vld [vmem:[%s8068] sm:$0x1]
    %v8071 = vperm.slane %v8069, 0
    %v8073 = vadd.f32 %v8056, %v8071
    %v8074 = vadd.f32 %v8057, %v8071
    %v8075 = vadd.f32 %v8058, %v8071
    %v8076 = vadd.f32 %v8059, %v8071
    %v8077 = vadd.f32 %v8060, %v8071
    %v8078 = vadd.f32 %v8061, %v8071
    %v8079 = vadd.f32 %v8062, %v8071
    %v8080 = vadd.f32 %v8063, %v8071
    %v8081 = vadd.f32 %v8064, %v8071
    %v8082 = vadd.f32 %v8065, %v8071
    %v8083 = vadd.f32 %v8066, %v8071
    %v8084 = vadd.f32 %v8067, %v8071
    %s8085 = scalar_lea.vmem %s3, 3
    %v8086 = vld [vmem:[%s8085] sm:$0x1]
    %s8087 = scalar_lea.vmem %s4, 3
    %v8088 = vld [vmem:[%s8087] sm:$0x1]
    %v8089 = vsel %vm94, %v8073, 0.0
    %8090 = vadd.xlane.f32.xlu0 %v8089
    %v8091 = vpop.xlane.xlu0 %8090
    %v8092 = vsel %vm94, %v8074, 0.0
    %8093 = vadd.xlane.f32.xlu0 %v8092
    %v8094 = vpop.xlane.xlu0 %8093
    %v8095 = vsel %vm94, %v8075, 0.0
    %8096 = vadd.xlane.f32.xlu0 %v8095
    %v8097 = vpop.xlane.xlu0 %8096
    %v8098 = vsel %vm94, %v8076, 0.0
    %8099 = vadd.xlane.f32.xlu0 %v8098
    %v8100 = vpop.xlane.xlu0 %8099
    %v8101 = vsel %vm94, %v8077, 0.0
    %8102 = vadd.xlane.f32.xlu0 %v8101
    %v8103 = vpop.xlane.xlu0 %8102
    %v8104 = vsel %vm94, %v8078, 0.0
    %8105 = vadd.xlane.f32.xlu0 %v8104
    %v8106 = vpop.xlane.xlu0 %8105
    %v8107 = vsel %vm94, %v8079, 0.0
    %8108 = vadd.xlane.f32.xlu0 %v8107
    %v8109 = vpop.xlane.xlu0 %8108
    %v8110 = vsel %vm94, %v8080, 0.0
    %8111 = vadd.xlane.f32.xlu0 %v8110
    %v8112 = vpop.xlane.xlu0 %8111
    %v8113 = vsel %vm94, %v8081, 0.0
    %8114 = vadd.xlane.f32.xlu0 %v8113
    %v8115 = vpop.xlane.xlu0 %8114
    %v8116 = vsel %vm94, %v8082, 0.0
    %8117 = vadd.xlane.f32.xlu0 %v8116
    %v8118 = vpop.xlane.xlu0 %8117
    %v8119 = vsel %vm94, %v8083, 0.0
    %8120 = vadd.xlane.f32.xlu0 %v8119
    %v8121 = vpop.xlane.xlu0 %8120
    %v8122 = vsel %vm94, %v8084, 0.0
    %8123 = vadd.xlane.f32.xlu0 %v8122
    %v8124 = vpop.xlane.xlu0 %8123
    %v8125 = vmul.f32 %v8091, %v137
    %v8126 = vmul.f32 %v8094, %v137
    %v8127 = vmul.f32 %v8097, %v137
    %v8128 = vmul.f32 %v8100, %v137
    %v8129 = vmul.f32 %v8103, %v137
    %v8130 = vmul.f32 %v8106, %v137
    %v8131 = vmul.f32 %v8109, %v137
    %v8132 = vmul.f32 %v8112, %v137
    %v8133 = vmul.f32 %v8115, %v137
    %v8134 = vmul.f32 %v8118, %v137
    %v8135 = vmul.f32 %v8121, %v137
    %v8136 = vmul.f32 %v8124, %v137
    %v8137 = vsub.f32 %v8073, %v8125
    %v8138 = vsub.f32 %v8074, %v8126
    %v8139 = vsub.f32 %v8075, %v8127
    %v8140 = vsub.f32 %v8076, %v8128
    %v8141 = vsub.f32 %v8077, %v8129
    %v8142 = vsub.f32 %v8078, %v8130
    %v8143 = vsub.f32 %v8079, %v8131
    %v8144 = vsub.f32 %v8080, %v8132
    %v8145 = vsub.f32 %v8081, %v8133
    %v8146 = vsub.f32 %v8082, %v8134
    %v8147 = vsub.f32 %v8083, %v8135
    %v8148 = vsub.f32 %v8084, %v8136
    %v8149 = vmul.f32 %v8137, %v8137
    %v8150 = vmul.f32 %v8138, %v8138
    %v8151 = vmul.f32 %v8139, %v8139
    %v8152 = vmul.f32 %v8140, %v8140
    %v8153 = vmul.f32 %v8141, %v8141
    %v8154 = vmul.f32 %v8142, %v8142
    %v8155 = vmul.f32 %v8143, %v8143
    %v8156 = vmul.f32 %v8144, %v8144
    %v8157 = vmul.f32 %v8145, %v8145
    %v8158 = vmul.f32 %v8146, %v8146
    %v8159 = vmul.f32 %v8147, %v8147
    %v8160 = vmul.f32 %v8148, %v8148
    %v8161 = vsel %vm94, %v8149, 0.0
    %8162 = vadd.xlane.f32.xlu0 %v8161
    %v8163 = vpop.xlane.xlu0 %8162
    %v8164 = vsel %vm94, %v8150, 0.0
    %8165 = vadd.xlane.f32.xlu0 %v8164
    %v8166 = vpop.xlane.xlu0 %8165
    %v8167 = vsel %vm94, %v8151, 0.0
    %8168 = vadd.xlane.f32.xlu0 %v8167
    %v8169 = vpop.xlane.xlu0 %8168
    %v8170 = vsel %vm94, %v8152, 0.0
    %8171 = vadd.xlane.f32.xlu0 %v8170
    %v8172 = vpop.xlane.xlu0 %8171
    %v8173 = vsel %vm94, %v8153, 0.0
    %8174 = vadd.xlane.f32.xlu0 %v8173
    %v8175 = vpop.xlane.xlu0 %8174
    %v8176 = vsel %vm94, %v8154, 0.0
    %8177 = vadd.xlane.f32.xlu0 %v8176
    %v8178 = vpop.xlane.xlu0 %8177
    %v8179 = vsel %vm94, %v8155, 0.0
    %8180 = vadd.xlane.f32.xlu0 %v8179
    %v8181 = vpop.xlane.xlu0 %8180
    %v8182 = vsel %vm94, %v8156, 0.0
    %8183 = vadd.xlane.f32.xlu0 %v8182
    %v8184 = vpop.xlane.xlu0 %8183
    %v8185 = vsel %vm94, %v8157, 0.0
    %8186 = vadd.xlane.f32.xlu0 %v8185
    %v8187 = vpop.xlane.xlu0 %8186
    %v8188 = vsel %vm94, %v8158, 0.0
    %8189 = vadd.xlane.f32.xlu0 %v8188
    %v8190 = vpop.xlane.xlu0 %8189
    %v8191 = vsel %vm94, %v8159, 0.0
    %8192 = vadd.xlane.f32.xlu0 %v8191
    %v8193 = vpop.xlane.xlu0 %8192
    %v8194 = vsel %vm94, %v8160, 0.0
    %8195 = vadd.xlane.f32.xlu0 %v8194
    %v8196 = vpop.xlane.xlu0 %8195
    %v8197 = vmul.f32 %v8163, %v137
    %v8198 = vmul.f32 %v8166, %v137
    %v8199 = vmul.f32 %v8169, %v137
    %v8200 = vmul.f32 %v8172, %v137
    %v8201 = vmul.f32 %v8175, %v137
    %v8202 = vmul.f32 %v8178, %v137
    %v8203 = vmul.f32 %v8181, %v137
    %v8204 = vmul.f32 %v8184, %v137
    %v8205 = vmul.f32 %v8187, %v137
    %v8206 = vmul.f32 %v8190, %v137
    %v8207 = vmul.f32 %v8193, %v137
    %v8208 = vmul.f32 %v8196, %v137
    %v8209 = vadd.f32 %v8197, 1e-05
    %v8210 = vadd.f32 %v8198, 1e-05
    %v8211 = vadd.f32 %v8199, 1e-05
    %v8212 = vadd.f32 %v8200, 1e-05
    %v8213 = vadd.f32 %v8201, 1e-05
    %v8214 = vadd.f32 %v8202, 1e-05
    %v8215 = vadd.f32 %v8203, 1e-05
    %v8216 = vadd.f32 %v8204, 1e-05
    %v8217 = vadd.f32 %v8205, 1e-05
    %v8218 = vadd.f32 %v8206, 1e-05
    %v8219 = vadd.f32 %v8207, 1e-05
    %v8220 = vadd.f32 %v8208, 1e-05
    %v8221 = vrsqrt.pop %v8209
    %v8222 = vmul.f32 %v8221, %v8209
    %v8223 = vmul.f32 %v8222, %v8221
    %v8224 = vmul.f32 0.5, %v8223
    %v8225 = vsub.f32 1.5, %v8224
    %v8226 = vmul.f32 %v8221, %v8225
    %vm8227 = vweird.f32 %v8209
    %vm8228 = vweird.f32 %v8221
    %vm8229 = vmor %vm8227, %vm8228
    %v8230 = vsel %vm8229, %v8221, %v8226
    %v8231 = vrsqrt.pop %v8210
    %v8232 = vmul.f32 %v8231, %v8210
    %v8233 = vmul.f32 %v8232, %v8231
    %v8234 = vmul.f32 0.5, %v8233
    %v8235 = vsub.f32 1.5, %v8234
    %v8236 = vmul.f32 %v8231, %v8235
    %vm8237 = vweird.f32 %v8210
    %vm8238 = vweird.f32 %v8231
    %vm8239 = vmor %vm8237, %vm8238
    %v8240 = vsel %vm8239, %v8231, %v8236
    %v8241 = vrsqrt.pop %v8211
    %v8242 = vmul.f32 %v8241, %v8211
    %v8243 = vmul.f32 %v8242, %v8241
    %v8244 = vmul.f32 0.5, %v8243
    %v8245 = vsub.f32 1.5, %v8244
    %v8246 = vmul.f32 %v8241, %v8245
    %vm8247 = vweird.f32 %v8211
    %vm8248 = vweird.f32 %v8241
    %vm8249 = vmor %vm8247, %vm8248
    %v8250 = vsel %vm8249, %v8241, %v8246
    %v8251 = vrsqrt.pop %v8212
    %v8252 = vmul.f32 %v8251, %v8212
    %v8253 = vmul.f32 %v8252, %v8251
    %v8254 = vmul.f32 0.5, %v8253
    %v8255 = vsub.f32 1.5, %v8254
    %v8256 = vmul.f32 %v8251, %v8255
    %vm8257 = vweird.f32 %v8212
    %vm8258 = vweird.f32 %v8251
    %vm8259 = vmor %vm8257, %vm8258
    %v8260 = vsel %vm8259, %v8251, %v8256
    %v8261 = vrsqrt.pop %v8213
    %v8262 = vmul.f32 %v8261, %v8213
    %v8263 = vmul.f32 %v8262, %v8261
    %v8264 = vmul.f32 0.5, %v8263
    %v8265 = vsub.f32 1.5, %v8264
    %v8266 = vmul.f32 %v8261, %v8265
    %vm8267 = vweird.f32 %v8213
    %vm8268 = vweird.f32 %v8261
    %vm8269 = vmor %vm8267, %vm8268
    %v8270 = vsel %vm8269, %v8261, %v8266
    %v8271 = vrsqrt.pop %v8214
    %v8272 = vmul.f32 %v8271, %v8214
    %v8273 = vmul.f32 %v8272, %v8271
    %v8274 = vmul.f32 0.5, %v8273
    %v8275 = vsub.f32 1.5, %v8274
    %v8276 = vmul.f32 %v8271, %v8275
    %vm8277 = vweird.f32 %v8214
    %vm8278 = vweird.f32 %v8271
    %vm8279 = vmor %vm8277, %vm8278
    %v8280 = vsel %vm8279, %v8271, %v8276
    %v8281 = vrsqrt.pop %v8215
    %v8282 = vmul.f32 %v8281, %v8215
    %v8283 = vmul.f32 %v8282, %v8281
    %v8284 = vmul.f32 0.5, %v8283
    %v8285 = vsub.f32 1.5, %v8284
    %v8286 = vmul.f32 %v8281, %v8285
    %vm8287 = vweird.f32 %v8215
    %vm8288 = vweird.f32 %v8281
    %vm8289 = vmor %vm8287, %vm8288
    %v8290 = vsel %vm8289, %v8281, %v8286
    %v8291 = vrsqrt.pop %v8216
    %v8292 = vmul.f32 %v8291, %v8216
    %v8293 = vmul.f32 %v8292, %v8291
    %v8294 = vmul.f32 0.5, %v8293
    %v8295 = vsub.f32 1.5, %v8294
    %v8296 = vmul.f32 %v8291, %v8295
    %vm8297 = vweird.f32 %v8216
    %vm8298 = vweird.f32 %v8291
    %vm8299 = vmor %vm8297, %vm8298
    %v8300 = vsel %vm8299, %v8291, %v8296
    %v8301 = vrsqrt.pop %v8217
    %v8302 = vmul.f32 %v8301, %v8217
    %v8303 = vmul.f32 %v8302, %v8301
    %v8304 = vmul.f32 0.5, %v8303
    %v8305 = vsub.f32 1.5, %v8304
    %v8306 = vmul.f32 %v8301, %v8305
    %vm8307 = vweird.f32 %v8217
    %vm8308 = vweird.f32 %v8301
    %vm8309 = vmor %vm8307, %vm8308
    %v8310 = vsel %vm8309, %v8301, %v8306
    %v8311 = vrsqrt.pop %v8218
    %v8312 = vmul.f32 %v8311, %v8218
    %v8313 = vmul.f32 %v8312, %v8311
    %v8314 = vmul.f32 0.5, %v8313
    %v8315 = vsub.f32 1.5, %v8314
    %v8316 = vmul.f32 %v8311, %v8315
    %vm8317 = vweird.f32 %v8218
    %vm8318 = vweird.f32 %v8311
    %vm8319 = vmor %vm8317, %vm8318
    %v8320 = vsel %vm8319, %v8311, %v8316
    %v8321 = vrsqrt.pop %v8219
    %v8322 = vmul.f32 %v8321, %v8219
    %v8323 = vmul.f32 %v8322, %v8321
    %v8324 = vmul.f32 0.5, %v8323
    %v8325 = vsub.f32 1.5, %v8324
    %v8326 = vmul.f32 %v8321, %v8325
    %vm8327 = vweird.f32 %v8219
    %vm8328 = vweird.f32 %v8321
    %vm8329 = vmor %vm8327, %vm8328
    %v8330 = vsel %vm8329, %v8321, %v8326
    %v8331 = vrsqrt.pop %v8220
    %v8332 = vmul.f32 %v8331, %v8220
    %v8333 = vmul.f32 %v8332, %v8331
    %v8334 = vmul.f32 0.5, %v8333
    %v8335 = vsub.f32 1.5, %v8334
    %v8336 = vmul.f32 %v8331, %v8335
    %vm8337 = vweird.f32 %v8220
    %vm8338 = vweird.f32 %v8331
    %vm8339 = vmor %vm8337, %vm8338
    %v8340 = vsel %vm8339, %v8331, %v8336
    %v8341 = vmul.f32 %v8137, %v8230
    %v8342 = vmul.f32 %v8138, %v8240
    %v8343 = vmul.f32 %v8139, %v8250
    %v8344 = vmul.f32 %v8140, %v8260
    %v8345 = vmul.f32 %v8141, %v8270
    %v8346 = vmul.f32 %v8142, %v8280
    %v8347 = vmul.f32 %v8143, %v8290
    %v8348 = vmul.f32 %v8144, %v8300
    %v8349 = vmul.f32 %v8145, %v8310
    %v8350 = vmul.f32 %v8146, %v8320
    %v8351 = vmul.f32 %v8147, %v8330
    %v8352 = vmul.f32 %v8148, %v8340
    %v8354 = vperm.slane %v8086, 0
    %v8356 = vmul.f32 %v8341, %v8354
    %v8357 = vmul.f32 %v8342, %v8354
    %v8358 = vmul.f32 %v8343, %v8354
    %v8359 = vmul.f32 %v8344, %v8354
    %v8360 = vmul.f32 %v8345, %v8354
    %v8361 = vmul.f32 %v8346, %v8354
    %v8362 = vmul.f32 %v8347, %v8354
    %v8363 = vmul.f32 %v8348, %v8354
    %v8364 = vmul.f32 %v8349, %v8354
    %v8365 = vmul.f32 %v8350, %v8354
    %v8366 = vmul.f32 %v8351, %v8354
    %v8367 = vmul.f32 %v8352, %v8354
    %v8369 = vperm.slane %v8088, 0
    %v8371 = vadd.f32 %v8356, %v8369
    %v8372 = vadd.f32 %v8357, %v8369
    %v8373 = vadd.f32 %v8358, %v8369
    %v8374 = vadd.f32 %v8359, %v8369
    %v8375 = vadd.f32 %v8360, %v8369
    %v8376 = vadd.f32 %v8361, %v8369
    %v8377 = vadd.f32 %v8362, %v8369
    %v8378 = vadd.f32 %v8363, %v8369
    %v8379 = vadd.f32 %v8364, %v8369
    %v8380 = vadd.f32 %v8365, %v8369
    %v8381 = vadd.f32 %v8366, %v8369
    %v8382 = vadd.f32 %v8367, %v8369
    %v8383 = vpack.c.bf16 %v8372, %v8371
    %v8384 = vpack.c.bf16 %v8374, %v8373
    %v8385 = vpack.c.bf16 %v8376, %v8375
    %v8386 = vpack.c.bf16 %v8378, %v8377
    %v8387 = vpack.c.bf16 %v8380, %v8379
    %v8388 = vpack.c.bf16 %v8382, %v8381
    %s8389 = scalar_lea.vmem %s7, 48
    %v8390 = vld [vmem:[%s8389] sm:$0xf]
    %v8391 = vld [vmem:[%s8389 + $0x4] sm:$0xf]
    %v8392 = vld [vmem:[%s8389 + $0x8] sm:$0xf]
    %v8393 = vld [vmem:[%s8389 + $0xc] sm:$0xf]
    %s8394 = scalar_lea.vmem %s8, 3
    %v8395 = vld [vmem:[%s8394] sm:$0x1]
    %v8397 = vperm.slane %v8395, 0
    %v8403 = vunpack.c.l.b16 %v8390
    %v8404 = vunpack.c.l.b16 %v8391
    %v8405 = vunpack.c.l.b16 %v8392
    %v8406 = vunpack.c.l.b16 %v8393
    %v8407 = vpack.c.b16 %v8404, %v8403
    %v8408 = vpack.c.b16 %v8406, %v8405
    %v8412 = vsel %vm94, %v8383, 0
    %v8415 = vsel %vm94, %v8384, 0
    %v8418 = vsel %vm94, %v8385, 0
    %v8421 = vsel %vm94, %v8386, 0
    %v8424 = vsel %vm94, %v8387, 0
    %v8427 = vsel %vm94, %v8388, 0
    %8429 = vmatpush.bf16.msra.mxu0 0
    %8430 = vmatpush.bf16.msra.mxu0 0
    %8431 = vmatpush.bf16.msra.mxu0 0
    %8432 = vmatpush.bf16.msra.mxu0 0
    %8433 = vmatpush.bf16.msra.mxu0 0
    %8434 = vmatpush.bf16.msra.mxu0 0
    %8435 = vmatpush.bf16.msra.mxu0 %v8408
    %8436 = vmatpush.bf16.msra.mxu0 %v8407
    %8437 = vmatmul.bf16.gmra.mxu0 %v8412
    %v8438 = vpop.f32.mrf.mxu0
    %v8439 = vadd.f32 %v8397, %v8438
    %v8440 = vpop.f32.mrf.mxu0
    %v8441 = vadd.f32 %v8397, %v8440
    %8442 = vmatmul.bf16.gmra.mxu0 %v8415
    %v8443 = vpop.f32.mrf.mxu0
    %v8444 = vadd.f32 %v8397, %v8443
    %v8445 = vpop.f32.mrf.mxu0
    %v8446 = vadd.f32 %v8397, %v8445
    %8447 = vmatmul.bf16.gmra.mxu0 %v8418
    %v8448 = vpop.f32.mrf.mxu0
    %v8449 = vadd.f32 %v8397, %v8448
    %v8450 = vpop.f32.mrf.mxu0
    %v8451 = vadd.f32 %v8397, %v8450
    %8452 = vmatmul.bf16.gmra.mxu0 %v8421
    %v8453 = vpop.f32.mrf.mxu0
    %v8454 = vadd.f32 %v8397, %v8453
    %v8455 = vpop.f32.mrf.mxu0
    %v8456 = vadd.f32 %v8397, %v8455
    %8457 = vmatmul.bf16.gmra.mxu0 %v8424
    %v8458 = vpop.f32.mrf.mxu0
    %v8459 = vadd.f32 %v8397, %v8458
    %v8460 = vpop.f32.mrf.mxu0
    %v8461 = vadd.f32 %v8397, %v8460
    %8462 = vmatmul.bf16.gmra.mxu0 %v8427
    %v8463 = vpop.f32.mrf.mxu0
    %v8464 = vadd.f32 %v8397, %v8463
    %v8465 = vpop.f32.mrf.mxu0
    %v8466 = vadd.f32 %v8397, %v8465
    %8467 = vdwg.mxu0
    %v8468 = vpack.c.bf16 %v8441, %v8439
    %v8469 = vpack.c.bf16 %v8446, %v8444
    %v8470 = vpack.c.bf16 %v8451, %v8449
    %v8471 = vpack.c.bf16 %v8456, %v8454
    %v8472 = vpack.c.bf16 %v8461, %v8459
    %v8473 = vpack.c.bf16 %v8466, %v8464
    %8480 = vrot.lane.b32.xlu0 %v8468, 96
    %v8481 = vpop.permute.xlu0 %8480
    %8482 = vrot.lane.b32.xlu0 %v8469, 96
    %v8483 = vpop.permute.xlu0 %8482
    %8484 = vrot.lane.b32.xlu0 %v8470, 96
    %v8485 = vpop.permute.xlu0 %8484
    %8486 = vrot.lane.b32.xlu0 %v8471, 96
    %v8487 = vpop.permute.xlu0 %8486
    %8488 = vrot.lane.b32.xlu0 %v8472, 96
    %v8489 = vpop.permute.xlu0 %8488
    %8490 = vrot.lane.b32.xlu0 %v8473, 96
    %v8491 = vpop.permute.xlu0 %8490
    %v8493 = vsel %vm503, %v8468, 0
    %v8496 = vsel %vm503, %v8469, 0
    %v8499 = vsel %vm503, %v8470, 0
    %v8502 = vsel %vm503, %v8471, 0
    %v8505 = vsel %vm503, %v8472, 0
    %v8508 = vsel %vm503, %v8473, 0
    %v8511 = vsel %vm503, %v8481, 0
    %v8514 = vsel %vm503, %v8483, 0
    %v8517 = vsel %vm503, %v8485, 0
    %v8520 = vsel %vm503, %v8487, 0
    %v8523 = vsel %vm503, %v8489, 0
    %v8526 = vsel %vm503, %v8491, 0
    %8528 = vmatpush.bf16.xpose.msra.mxu0 0
    %8529 = vmatpush.bf16.xpose.msra.mxu0 0
    %8530 = vmatpush.bf16.xpose.msra.mxu0 %v8526
    %8531 = vmatpush.bf16.xpose.msra.mxu0 %v8523
    %8532 = vmatpush.bf16.xpose.msra.mxu0 %v8520
    %8533 = vmatpush.bf16.xpose.msra.mxu0 %v8517
    %8534 = vmatpush.bf16.xpose.msra.mxu0 %v8514
    %8535 = vmatpush.bf16.xpose.msra.mxu0 %v8511
    %8536 = vmatmul.bf16.gmra.mxu0 %v8493
    %v8537 = vpop.f32.mrf.mxu0
    %v8538 = vadd.f32 0.0, %v8537
    %v8539 = vpop.f32.mrf.mxu0
    %v8540 = vadd.f32 0.0, %v8539
    %8541 = vmatmul.bf16.gmra.mxu0 %v8496
    %v8542 = vpop.f32.mrf.mxu0
    %v8543 = vadd.f32 0.0, %v8542
    %v8544 = vpop.f32.mrf.mxu0
    %v8545 = vadd.f32 0.0, %v8544
    %8546 = vmatmul.bf16.gmra.mxu0 %v8499
    %v8547 = vpop.f32.mrf.mxu0
    %v8548 = vadd.f32 0.0, %v8547
    %v8549 = vpop.f32.mrf.mxu0
    %v8550 = vadd.f32 0.0, %v8549
    %8551 = vmatmul.bf16.gmra.mxu0 %v8502
    %v8552 = vpop.f32.mrf.mxu0
    %v8553 = vadd.f32 0.0, %v8552
    %v8554 = vpop.f32.mrf.mxu0
    %v8555 = vadd.f32 0.0, %v8554
    %8556 = vmatmul.bf16.gmra.mxu0 %v8505
    %v8557 = vpop.f32.mrf.mxu0
    %v8558 = vadd.f32 0.0, %v8557
    %v8559 = vpop.f32.mrf.mxu0
    %v8560 = vadd.f32 0.0, %v8559
    %8561 = vmatmul.bf16.gmra.mxu0 %v8508
    %v8562 = vpop.f32.mrf.mxu0
    %v8563 = vadd.f32 0.0, %v8562
    %v8564 = vpop.f32.mrf.mxu0
    %v8565 = vadd.f32 0.0, %v8564
    %8566 = vdwg.mxu0
    %v8567 = vmul.f32 %v8538, 0.25
    %v8568 = vmul.f32 %v8540, 0.25
    %v8569 = vmul.f32 %v8543, 0.25
    %v8570 = vmul.f32 %v8545, 0.25
    %v8571 = vmul.f32 %v8548, 0.25
    %v8572 = vmul.f32 %v8550, 0.25
    %v8573 = vmul.f32 %v8553, 0.25
    %v8574 = vmul.f32 %v8555, 0.25
    %v8575 = vmul.f32 %v8558, 0.25
    %v8576 = vmul.f32 %v8560, 0.25
    %v8577 = vmul.f32 %v8563, 0.25
    %v8578 = vmul.f32 %v8565, 0.25
    %v8579 = vadd.f32 %v8567, %v67
    %v8580 = vadd.f32 %v8568, %v68
    %v8581 = vadd.f32 %v8569, %v69
    %v8582 = vadd.f32 %v8570, %v70
    %v8583 = vadd.f32 %v8571, %v71
    %v8584 = vadd.f32 %v8572, %v72
    %v8585 = vadd.f32 %v8573, %v73
    %v8586 = vadd.f32 %v8574, %v74
    %v8587 = vadd.f32 %v8575, %v75
    %v8588 = vadd.f32 %v8576, %v76
    %v8589 = vadd.f32 %v8577, %v77
    %v8590 = vadd.f32 %v8578, %v78
    %v8591 = vsel %vm603, %v8579, -inf
    %8592 = vmax.xlane.f32.xlu0 %v8591
    %v8593 = vpop.xlane.xlu0 %8592
    %v8594 = vsel %vm603, %v8580, -inf
    %8595 = vmax.xlane.f32.xlu0 %v8594
    %v8596 = vpop.xlane.xlu0 %8595
    %v8597 = vsel %vm603, %v8581, -inf
    %8598 = vmax.xlane.f32.xlu0 %v8597
    %v8599 = vpop.xlane.xlu0 %8598
    %v8600 = vsel %vm603, %v8582, -inf
    %8601 = vmax.xlane.f32.xlu0 %v8600
    %v8602 = vpop.xlane.xlu0 %8601
    %v8603 = vsel %vm603, %v8583, -inf
    %8604 = vmax.xlane.f32.xlu0 %v8603
    %v8605 = vpop.xlane.xlu0 %8604
    %v8606 = vsel %vm603, %v8584, -inf
    %8607 = vmax.xlane.f32.xlu0 %v8606
    %v8608 = vpop.xlane.xlu0 %8607
    %v8609 = vsel %vm603, %v8585, -inf
    %8610 = vmax.xlane.f32.xlu0 %v8609
    %v8611 = vpop.xlane.xlu0 %8610
    %v8612 = vsel %vm603, %v8586, -inf
    %8613 = vmax.xlane.f32.xlu0 %v8612
    %v8614 = vpop.xlane.xlu0 %8613
    %v8615 = vsel %vm603, %v8587, -inf
    %8616 = vmax.xlane.f32.xlu0 %v8615
    %v8617 = vpop.xlane.xlu0 %8616
    %v8618 = vsel %vm603, %v8588, -inf
    %8619 = vmax.xlane.f32.xlu0 %v8618
    %v8620 = vpop.xlane.xlu0 %8619
    %v8621 = vsel %vm603, %v8589, -inf
    %8622 = vmax.xlane.f32.xlu0 %v8621
    %v8623 = vpop.xlane.xlu0 %8622
    %v8624 = vsel %vm603, %v8590, -inf
    %8625 = vmax.xlane.f32.xlu0 %v8624
    %v8626 = vpop.xlane.xlu0 %8625
    %v8627 = vsub.f32 %v8579, %v8593
    %v8628 = vsub.f32 %v8580, %v8596
    %v8629 = vsub.f32 %v8581, %v8599
    %v8630 = vsub.f32 %v8582, %v8602
    %v8631 = vsub.f32 %v8583, %v8605
    %v8632 = vsub.f32 %v8584, %v8608
    %v8633 = vsub.f32 %v8585, %v8611
    %v8634 = vsub.f32 %v8586, %v8614
    %v8635 = vsub.f32 %v8587, %v8617
    %v8636 = vsub.f32 %v8588, %v8620
    %v8637 = vsub.f32 %v8589, %v8623
    %v8638 = vsub.f32 %v8590, %v8626
    %v8639 = vmul.f32 %v8627, 1.442695
    %v8640 = vpow.pop %v8639
    %v8641 = vmul.f32 %v8628, 1.442695
    %v8642 = vpow.pop %v8641
    %v8643 = vmul.f32 %v8629, 1.442695
    %v8644 = vpow.pop %v8643
    %v8645 = vmul.f32 %v8630, 1.442695
    %v8646 = vpow.pop %v8645
    %v8647 = vmul.f32 %v8631, 1.442695
    %v8648 = vpow.pop %v8647
    %v8649 = vmul.f32 %v8632, 1.442695
    %v8650 = vpow.pop %v8649
    %v8651 = vmul.f32 %v8633, 1.442695
    %v8652 = vpow.pop %v8651
    %v8653 = vmul.f32 %v8634, 1.442695
    %v8654 = vpow.pop %v8653
    %v8655 = vmul.f32 %v8635, 1.442695
    %v8656 = vpow.pop %v8655
    %v8657 = vmul.f32 %v8636, 1.442695
    %v8658 = vpow.pop %v8657
    %v8659 = vmul.f32 %v8637, 1.442695
    %v8660 = vpow.pop %v8659
    %v8661 = vmul.f32 %v8638, 1.442695
    %v8662 = vpow.pop %v8661
    %v8663 = vsel %vm603, %v8640, 0.0
    %8664 = vadd.xlane.f32.xlu0 %v8663
    %v8665 = vpop.xlane.xlu0 %8664
    %v8666 = vsel %vm603, %v8642, 0.0
    %8667 = vadd.xlane.f32.xlu0 %v8666
    %v8668 = vpop.xlane.xlu0 %8667
    %v8669 = vsel %vm603, %v8644, 0.0
    %8670 = vadd.xlane.f32.xlu0 %v8669
    %v8671 = vpop.xlane.xlu0 %8670
    %v8672 = vsel %vm603, %v8646, 0.0
    %8673 = vadd.xlane.f32.xlu0 %v8672
    %v8674 = vpop.xlane.xlu0 %8673
    %v8675 = vsel %vm603, %v8648, 0.0
    %8676 = vadd.xlane.f32.xlu0 %v8675
    %v8677 = vpop.xlane.xlu0 %8676
    %v8678 = vsel %vm603, %v8650, 0.0
    %8679 = vadd.xlane.f32.xlu0 %v8678
    %v8680 = vpop.xlane.xlu0 %8679
    %v8681 = vsel %vm603, %v8652, 0.0
    %8682 = vadd.xlane.f32.xlu0 %v8681
    %v8683 = vpop.xlane.xlu0 %8682
    %v8684 = vsel %vm603, %v8654, 0.0
    %8685 = vadd.xlane.f32.xlu0 %v8684
    %v8686 = vpop.xlane.xlu0 %8685
    %v8687 = vsel %vm603, %v8656, 0.0
    %8688 = vadd.xlane.f32.xlu0 %v8687
    %v8689 = vpop.xlane.xlu0 %8688
    %v8690 = vsel %vm603, %v8658, 0.0
    %8691 = vadd.xlane.f32.xlu0 %v8690
    %v8692 = vpop.xlane.xlu0 %8691
    %v8693 = vsel %vm603, %v8660, 0.0
    %8694 = vadd.xlane.f32.xlu0 %v8693
    %v8695 = vpop.xlane.xlu0 %8694
    %v8696 = vsel %vm603, %v8662, 0.0
    %8697 = vadd.xlane.f32.xlu0 %v8696
    %v8698 = vpop.xlane.xlu0 %8697
    %v8699 = vrcp.pop %v8665
    %v8700 = vmul.f32 %v8665, %v8699
    %v8701 = vsub.f32 1.0, %v8700
    %v8702 = vmul.f32 %v8699, %v8701
    %v8703 = vadd.f32 %v8699, %v8702
    %vm8704 = vweird.f32 %v8665
    %vm8705 = vweird.f32 %v8699
    %vm8706 = vmor %vm8704, %vm8705
    %v8707 = vsel %vm8706, %v8699, %v8703
    %v8708 = vand.u32 2147483647, %v8665
    %vm8709 = vcmp.eq.f32.partialorder %v8708, 8.507059e+37
    %v8710 = vand.u32 %v8665, 2147483648
    %v8711 = vor.u32 1.1754944e-38, %v8710
    %v8712 = vsel %vm8709, %v8711, %v8707
    %v8713 = vmul.f32 %v8640, %v8712
    %v8714 = vrcp.pop %v8668
    %v8715 = vmul.f32 %v8668, %v8714
    %v8716 = vsub.f32 1.0, %v8715
    %v8717 = vmul.f32 %v8714, %v8716
    %v8718 = vadd.f32 %v8714, %v8717
    %vm8719 = vweird.f32 %v8668
    %vm8720 = vweird.f32 %v8714
    %vm8721 = vmor %vm8719, %vm8720
    %v8722 = vsel %vm8721, %v8714, %v8718
    %v8723 = vand.u32 2147483647, %v8668
    %vm8724 = vcmp.eq.f32.partialorder %v8723, 8.507059e+37
    %v8725 = vand.u32 %v8668, 2147483648
    %v8726 = vor.u32 1.1754944e-38, %v8725
    %v8727 = vsel %vm8724, %v8726, %v8722
    %v8728 = vmul.f32 %v8642, %v8727
    %v8729 = vrcp.pop %v8671
    %v8730 = vmul.f32 %v8671, %v8729
    %v8731 = vsub.f32 1.0, %v8730
    %v8732 = vmul.f32 %v8729, %v8731
    %v8733 = vadd.f32 %v8729, %v8732
    %vm8734 = vweird.f32 %v8671
    %vm8735 = vweird.f32 %v8729
    %vm8736 = vmor %vm8734, %vm8735
    %v8737 = vsel %vm8736, %v8729, %v8733
    %v8738 = vand.u32 2147483647, %v8671
    %vm8739 = vcmp.eq.f32.partialorder %v8738, 8.507059e+37
    %v8740 = vand.u32 %v8671, 2147483648
    %v8741 = vor.u32 1.1754944e-38, %v8740
    %v8742 = vsel %vm8739, %v8741, %v8737
    %v8743 = vmul.f32 %v8644, %v8742
    %v8744 = vrcp.pop %v8674
    %v8745 = vmul.f32 %v8674, %v8744
    %v8746 = vsub.f32 1.0, %v8745
    %v8747 = vmul.f32 %v8744, %v8746
    %v8748 = vadd.f32 %v8744, %v8747
    %vm8749 = vweird.f32 %v8674
    %vm8750 = vweird.f32 %v8744
    %vm8751 = vmor %vm8749, %vm8750
    %v8752 = vsel %vm8751, %v8744, %v8748
    %v8753 = vand.u32 2147483647, %v8674
    %vm8754 = vcmp.eq.f32.partialorder %v8753, 8.507059e+37
    %v8755 = vand.u32 %v8674, 2147483648
    %v8756 = vor.u32 1.1754944e-38, %v8755
    %v8757 = vsel %vm8754, %v8756, %v8752
    %v8758 = vmul.f32 %v8646, %v8757
    %v8759 = vrcp.pop %v8677
    %v8760 = vmul.f32 %v8677, %v8759
    %v8761 = vsub.f32 1.0, %v8760
    %v8762 = vmul.f32 %v8759, %v8761
    %v8763 = vadd.f32 %v8759, %v8762
    %vm8764 = vweird.f32 %v8677
    %vm8765 = vweird.f32 %v8759
    %vm8766 = vmor %vm8764, %vm8765
    %v8767 = vsel %vm8766, %v8759, %v8763
    %v8768 = vand.u32 2147483647, %v8677
    %vm8769 = vcmp.eq.f32.partialorder %v8768, 8.507059e+37
    %v8770 = vand.u32 %v8677, 2147483648
    %v8771 = vor.u32 1.1754944e-38, %v8770
    %v8772 = vsel %vm8769, %v8771, %v8767
    %v8773 = vmul.f32 %v8648, %v8772
    %v8774 = vrcp.pop %v8680
    %v8775 = vmul.f32 %v8680, %v8774
    %v8776 = vsub.f32 1.0, %v8775
    %v8777 = vmul.f32 %v8774, %v8776
    %v8778 = vadd.f32 %v8774, %v8777
    %vm8779 = vweird.f32 %v8680
    %vm8780 = vweird.f32 %v8774
    %vm8781 = vmor %vm8779, %vm8780
    %v8782 = vsel %vm8781, %v8774, %v8778
    %v8783 = vand.u32 2147483647, %v8680
    %vm8784 = vcmp.eq.f32.partialorder %v8783, 8.507059e+37
    %v8785 = vand.u32 %v8680, 2147483648
    %v8786 = vor.u32 1.1754944e-38, %v8785
    %v8787 = vsel %vm8784, %v8786, %v8782
    %v8788 = vmul.f32 %v8650, %v8787
    %v8789 = vrcp.pop %v8683
    %v8790 = vmul.f32 %v8683, %v8789
    %v8791 = vsub.f32 1.0, %v8790
    %v8792 = vmul.f32 %v8789, %v8791
    %v8793 = vadd.f32 %v8789, %v8792
    %vm8794 = vweird.f32 %v8683
    %vm8795 = vweird.f32 %v8789
    %vm8796 = vmor %vm8794, %vm8795
    %v8797 = vsel %vm8796, %v8789, %v8793
    %v8798 = vand.u32 2147483647, %v8683
    %vm8799 = vcmp.eq.f32.partialorder %v8798, 8.507059e+37
    %v8800 = vand.u32 %v8683, 2147483648
    %v8801 = vor.u32 1.1754944e-38, %v8800
    %v8802 = vsel %vm8799, %v8801, %v8797
    %v8803 = vmul.f32 %v8652, %v8802
    %v8804 = vrcp.pop %v8686
    %v8805 = vmul.f32 %v8686, %v8804
    %v8806 = vsub.f32 1.0, %v8805
    %v8807 = vmul.f32 %v8804, %v8806
    %v8808 = vadd.f32 %v8804, %v8807
    %vm8809 = vweird.f32 %v8686
    %vm8810 = vweird.f32 %v8804
    %vm8811 = vmor %vm8809, %vm8810
    %v8812 = vsel %vm8811, %v8804, %v8808
    %v8813 = vand.u32 2147483647, %v8686
    %vm8814 = vcmp.eq.f32.partialorder %v8813, 8.507059e+37
    %v8815 = vand.u32 %v8686, 2147483648
    %v8816 = vor.u32 1.1754944e-38, %v8815
    %v8817 = vsel %vm8814, %v8816, %v8812
    %v8818 = vmul.f32 %v8654, %v8817
    %v8819 = vrcp.pop %v8689
    %v8820 = vmul.f32 %v8689, %v8819
    %v8821 = vsub.f32 1.0, %v8820
    %v8822 = vmul.f32 %v8819, %v8821
    %v8823 = vadd.f32 %v8819, %v8822
    %vm8824 = vweird.f32 %v8689
    %vm8825 = vweird.f32 %v8819
    %vm8826 = vmor %vm8824, %vm8825
    %v8827 = vsel %vm8826, %v8819, %v8823
    %v8828 = vand.u32 2147483647, %v8689
    %vm8829 = vcmp.eq.f32.partialorder %v8828, 8.507059e+37
    %v8830 = vand.u32 %v8689, 2147483648
    %v8831 = vor.u32 1.1754944e-38, %v8830
    %v8832 = vsel %vm8829, %v8831, %v8827
    %v8833 = vmul.f32 %v8656, %v8832
    %v8834 = vrcp.pop %v8692
    %v8835 = vmul.f32 %v8692, %v8834
    %v8836 = vsub.f32 1.0, %v8835
    %v8837 = vmul.f32 %v8834, %v8836
    %v8838 = vadd.f32 %v8834, %v8837
    %vm8839 = vweird.f32 %v8692
    %vm8840 = vweird.f32 %v8834
    %vm8841 = vmor %vm8839, %vm8840
    %v8842 = vsel %vm8841, %v8834, %v8838
    %v8843 = vand.u32 2147483647, %v8692
    %vm8844 = vcmp.eq.f32.partialorder %v8843, 8.507059e+37
    %v8845 = vand.u32 %v8692, 2147483648
    %v8846 = vor.u32 1.1754944e-38, %v8845
    %v8847 = vsel %vm8844, %v8846, %v8842
    %v8848 = vmul.f32 %v8658, %v8847
    %v8849 = vrcp.pop %v8695
    %v8850 = vmul.f32 %v8695, %v8849
    %v8851 = vsub.f32 1.0, %v8850
    %v8852 = vmul.f32 %v8849, %v8851
    %v8853 = vadd.f32 %v8849, %v8852
    %vm8854 = vweird.f32 %v8695
    %vm8855 = vweird.f32 %v8849
    %vm8856 = vmor %vm8854, %vm8855
    %v8857 = vsel %vm8856, %v8849, %v8853
    %v8858 = vand.u32 2147483647, %v8695
    %vm8859 = vcmp.eq.f32.partialorder %v8858, 8.507059e+37
    %v8860 = vand.u32 %v8695, 2147483648
    %v8861 = vor.u32 1.1754944e-38, %v8860
    %v8862 = vsel %vm8859, %v8861, %v8857
    %v8863 = vmul.f32 %v8660, %v8862
    %v8864 = vrcp.pop %v8698
    %v8865 = vmul.f32 %v8698, %v8864
    %v8866 = vsub.f32 1.0, %v8865
    %v8867 = vmul.f32 %v8864, %v8866
    %v8868 = vadd.f32 %v8864, %v8867
    %vm8869 = vweird.f32 %v8698
    %vm8870 = vweird.f32 %v8864
    %vm8871 = vmor %vm8869, %vm8870
    %v8872 = vsel %vm8871, %v8864, %v8868
    %v8873 = vand.u32 2147483647, %v8698
    %vm8874 = vcmp.eq.f32.partialorder %v8873, 8.507059e+37
    %v8875 = vand.u32 %v8698, 2147483648
    %v8876 = vor.u32 1.1754944e-38, %v8875
    %v8877 = vsel %vm8874, %v8876, %v8872
    %v8878 = vmul.f32 %v8662, %v8877
    %v8879 = vpack.c.bf16 %v8728, %v8713
    %v8880 = vpack.c.bf16 %v8758, %v8743
    %v8881 = vpack.c.bf16 %v8788, %v8773
    %v8882 = vpack.c.bf16 %v8818, %v8803
    %v8883 = vpack.c.bf16 %v8848, %v8833
    %v8884 = vpack.c.bf16 %v8878, %v8863
    %8885 = vrot.lane.b32.xlu0 %v8468, 64
    %v8886 = vpop.permute.xlu0 %8885
    %8887 = vrot.lane.b32.xlu0 %v8469, 64
    %v8888 = vpop.permute.xlu0 %8887
    %8889 = vrot.lane.b32.xlu0 %v8470, 64
    %v8890 = vpop.permute.xlu0 %8889
    %8891 = vrot.lane.b32.xlu0 %v8471, 64
    %v8892 = vpop.permute.xlu0 %8891
    %8893 = vrot.lane.b32.xlu0 %v8472, 64
    %v8894 = vpop.permute.xlu0 %8893
    %8895 = vrot.lane.b32.xlu0 %v8473, 64
    %v8896 = vpop.permute.xlu0 %8895
    %v8904 = vsel %vm603, %v8879, 0
    %v8907 = vsel %vm603, %v8880, 0
    %v8910 = vsel %vm603, %v8881, 0
    %v8913 = vsel %vm603, %v8882, 0
    %v8916 = vsel %vm603, %v8883, 0
    %v8919 = vsel %vm603, %v8884, 0
    %8921 = vmatpush.bf16.msra.mxu0 0
    %8922 = vmatpush.bf16.msra.mxu0 0
    %8923 = vmatpush.bf16.msra.mxu0 %v8896
    %8924 = vmatpush.bf16.msra.mxu0 %v8894
    %8925 = vmatpush.bf16.msra.mxu0 %v8892
    %8926 = vmatpush.bf16.msra.mxu0 %v8890
    %8927 = vmatpush.bf16.msra.mxu0 %v8888
    %8928 = vmatpush.bf16.msra.mxu0 %v8886
    %8929 = vmatmul.bf16.gmra.mxu0 %v8904
    %v8930 = vpop.f32.mrf.mxu0
    %v8931 = vadd.f32 0.0, %v8930
    %v8932 = vpop.f32.mrf.mxu0
    %v8933 = vadd.f32 0.0, %v8932
    %8934 = vmatmul.bf16.gmra.mxu0 %v8907
    %v8935 = vpop.f32.mrf.mxu0
    %v8936 = vadd.f32 0.0, %v8935
    %v8937 = vpop.f32.mrf.mxu0
    %v8938 = vadd.f32 0.0, %v8937
    %8939 = vmatmul.bf16.gmra.mxu0 %v8910
    %v8940 = vpop.f32.mrf.mxu0
    %v8941 = vadd.f32 0.0, %v8940
    %v8942 = vpop.f32.mrf.mxu0
    %v8943 = vadd.f32 0.0, %v8942
    %8944 = vmatmul.bf16.gmra.mxu0 %v8913
    %v8945 = vpop.f32.mrf.mxu0
    %v8946 = vadd.f32 0.0, %v8945
    %v8947 = vpop.f32.mrf.mxu0
    %v8948 = vadd.f32 0.0, %v8947
    %8949 = vmatmul.bf16.gmra.mxu0 %v8916
    %v8950 = vpop.f32.mrf.mxu0
    %v8951 = vadd.f32 0.0, %v8950
    %v8952 = vpop.f32.mrf.mxu0
    %v8953 = vadd.f32 0.0, %v8952
    %8954 = vmatmul.bf16.gmra.mxu0 %v8919
    %v8955 = vpop.f32.mrf.mxu0
    %v8956 = vadd.f32 0.0, %v8955
    %v8957 = vpop.f32.mrf.mxu0
    %v8958 = vadd.f32 0.0, %v8957
    %8959 = vdwg.mxu0
    %8960 = vrot.lane.b32.xlu0 %v8468, 112
    %v8961 = vpop.permute.xlu0 %8960
    %8962 = vrot.lane.b32.xlu0 %v8469, 112
    %v8963 = vpop.permute.xlu0 %8962
    %8964 = vrot.lane.b32.xlu0 %v8470, 112
    %v8965 = vpop.permute.xlu0 %8964
    %8966 = vrot.lane.b32.xlu0 %v8471, 112
    %v8967 = vpop.permute.xlu0 %8966
    %8968 = vrot.lane.b32.xlu0 %v8472, 112
    %v8969 = vpop.permute.xlu0 %8968
    %8970 = vrot.lane.b32.xlu0 %v8473, 112
    %v8971 = vpop.permute.xlu0 %8970
    %8972 = vrot.lane.b32.xlu0 %v8468, 80
    %v8973 = vpop.permute.xlu0 %8972
    %8974 = vrot.lane.b32.xlu0 %v8469, 80
    %v8975 = vpop.permute.xlu0 %8974
    %8976 = vrot.lane.b32.xlu0 %v8470, 80
    %v8977 = vpop.permute.xlu0 %8976
    %8978 = vrot.lane.b32.xlu0 %v8471, 80
    %v8979 = vpop.permute.xlu0 %8978
    %8980 = vrot.lane.b32.xlu0 %v8472, 80
    %v8981 = vpop.permute.xlu0 %8980
    %8982 = vrot.lane.b32.xlu0 %v8473, 80
    %v8983 = vpop.permute.xlu0 %8982
    %v8985 = vsel %vm503, %v8961, 0
    %v8988 = vsel %vm503, %v8963, 0
    %v8991 = vsel %vm503, %v8965, 0
    %v8994 = vsel %vm503, %v8967, 0
    %v8997 = vsel %vm503, %v8969, 0
    %v9000 = vsel %vm503, %v8971, 0
    %v9003 = vsel %vm503, %v8973, 0
    %v9006 = vsel %vm503, %v8975, 0
    %v9009 = vsel %vm503, %v8977, 0
    %v9012 = vsel %vm503, %v8979, 0
    %v9015 = vsel %vm503, %v8981, 0
    %v9018 = vsel %vm503, %v8983, 0
    %9020 = vmatpush.bf16.xpose.msra.mxu0 0
    %9021 = vmatpush.bf16.xpose.msra.mxu0 0
    %9022 = vmatpush.bf16.xpose.msra.mxu0 %v9018
    %9023 = vmatpush.bf16.xpose.msra.mxu0 %v9015
    %9024 = vmatpush.bf16.xpose.msra.mxu0 %v9012
    %9025 = vmatpush.bf16.xpose.msra.mxu0 %v9009
    %9026 = vmatpush.bf16.xpose.msra.mxu0 %v9006
    %9027 = vmatpush.bf16.xpose.msra.mxu0 %v9003
    %9028 = vmatmul.bf16.gmra.mxu0 %v8985
    %v9029 = vpop.f32.mrf.mxu0
    %v9030 = vadd.f32 0.0, %v9029
    %v9031 = vpop.f32.mrf.mxu0
    %v9032 = vadd.f32 0.0, %v9031
    %9033 = vmatmul.bf16.gmra.mxu0 %v8988
    %v9034 = vpop.f32.mrf.mxu0
    %v9035 = vadd.f32 0.0, %v9034
    %v9036 = vpop.f32.mrf.mxu0
    %v9037 = vadd.f32 0.0, %v9036
    %9038 = vmatmul.bf16.gmra.mxu0 %v8991
    %v9039 = vpop.f32.mrf.mxu0
    %v9040 = vadd.f32 0.0, %v9039
    %v9041 = vpop.f32.mrf.mxu0
    %v9042 = vadd.f32 0.0, %v9041
    %9043 = vmatmul.bf16.gmra.mxu0 %v8994
    %v9044 = vpop.f32.mrf.mxu0
    %v9045 = vadd.f32 0.0, %v9044
    %v9046 = vpop.f32.mrf.mxu0
    %v9047 = vadd.f32 0.0, %v9046
    %9048 = vmatmul.bf16.gmra.mxu0 %v8997
    %v9049 = vpop.f32.mrf.mxu0
    %v9050 = vadd.f32 0.0, %v9049
    %v9051 = vpop.f32.mrf.mxu0
    %v9052 = vadd.f32 0.0, %v9051
    %9053 = vmatmul.bf16.gmra.mxu0 %v9000
    %v9054 = vpop.f32.mrf.mxu0
    %v9055 = vadd.f32 0.0, %v9054
    %v9056 = vpop.f32.mrf.mxu0
    %v9057 = vadd.f32 0.0, %v9056
    %9058 = vdwg.mxu0
    %v9059 = vmul.f32 %v9030, 0.25
    %v9060 = vmul.f32 %v9032, 0.25
    %v9061 = vmul.f32 %v9035, 0.25
    %v9062 = vmul.f32 %v9037, 0.25
    %v9063 = vmul.f32 %v9040, 0.25
    %v9064 = vmul.f32 %v9042, 0.25
    %v9065 = vmul.f32 %v9045, 0.25
    %v9066 = vmul.f32 %v9047, 0.25
    %v9067 = vmul.f32 %v9050, 0.25
    %v9068 = vmul.f32 %v9052, 0.25
    %v9069 = vmul.f32 %v9055, 0.25
    %v9070 = vmul.f32 %v9057, 0.25
    %v9071 = vadd.f32 %v9059, %v67
    %v9072 = vadd.f32 %v9060, %v68
    %v9073 = vadd.f32 %v9061, %v69
    %v9074 = vadd.f32 %v9062, %v70
    %v9075 = vadd.f32 %v9063, %v71
    %v9076 = vadd.f32 %v9064, %v72
    %v9077 = vadd.f32 %v9065, %v73
    %v9078 = vadd.f32 %v9066, %v74
    %v9079 = vadd.f32 %v9067, %v75
    %v9080 = vadd.f32 %v9068, %v76
    %v9081 = vadd.f32 %v9069, %v77
    %v9082 = vadd.f32 %v9070, %v78
    %v9083 = vsel %vm603, %v9071, -inf
    %9084 = vmax.xlane.f32.xlu0 %v9083
    %v9085 = vpop.xlane.xlu0 %9084
    %v9086 = vsel %vm603, %v9072, -inf
    %9087 = vmax.xlane.f32.xlu0 %v9086
    %v9088 = vpop.xlane.xlu0 %9087
    %v9089 = vsel %vm603, %v9073, -inf
    %9090 = vmax.xlane.f32.xlu0 %v9089
    %v9091 = vpop.xlane.xlu0 %9090
    %v9092 = vsel %vm603, %v9074, -inf
    %9093 = vmax.xlane.f32.xlu0 %v9092
    %v9094 = vpop.xlane.xlu0 %9093
    %v9095 = vsel %vm603, %v9075, -inf
    %9096 = vmax.xlane.f32.xlu0 %v9095
    %v9097 = vpop.xlane.xlu0 %9096
    %v9098 = vsel %vm603, %v9076, -inf
    %9099 = vmax.xlane.f32.xlu0 %v9098
    %v9100 = vpop.xlane.xlu0 %9099
    %v9101 = vsel %vm603, %v9077, -inf
    %9102 = vmax.xlane.f32.xlu0 %v9101
    %v9103 = vpop.xlane.xlu0 %9102
    %v9104 = vsel %vm603, %v9078, -inf
    %9105 = vmax.xlane.f32.xlu0 %v9104
    %v9106 = vpop.xlane.xlu0 %9105
    %v9107 = vsel %vm603, %v9079, -inf
    %9108 = vmax.xlane.f32.xlu0 %v9107
    %v9109 = vpop.xlane.xlu0 %9108
    %v9110 = vsel %vm603, %v9080, -inf
    %9111 = vmax.xlane.f32.xlu0 %v9110
    %v9112 = vpop.xlane.xlu0 %9111
    %v9113 = vsel %vm603, %v9081, -inf
    %9114 = vmax.xlane.f32.xlu0 %v9113
    %v9115 = vpop.xlane.xlu0 %9114
    %v9116 = vsel %vm603, %v9082, -inf
    %9117 = vmax.xlane.f32.xlu0 %v9116
    %v9118 = vpop.xlane.xlu0 %9117
    %v9119 = vsub.f32 %v9071, %v9085
    %v9120 = vsub.f32 %v9072, %v9088
    %v9121 = vsub.f32 %v9073, %v9091
    %v9122 = vsub.f32 %v9074, %v9094
    %v9123 = vsub.f32 %v9075, %v9097
    %v9124 = vsub.f32 %v9076, %v9100
    %v9125 = vsub.f32 %v9077, %v9103
    %v9126 = vsub.f32 %v9078, %v9106
    %v9127 = vsub.f32 %v9079, %v9109
    %v9128 = vsub.f32 %v9080, %v9112
    %v9129 = vsub.f32 %v9081, %v9115
    %v9130 = vsub.f32 %v9082, %v9118
    %v9131 = vmul.f32 %v9119, 1.442695
    %v9132 = vpow.pop %v9131
    %v9133 = vmul.f32 %v9120, 1.442695
    %v9134 = vpow.pop %v9133
    %v9135 = vmul.f32 %v9121, 1.442695
    %v9136 = vpow.pop %v9135
    %v9137 = vmul.f32 %v9122, 1.442695
    %v9138 = vpow.pop %v9137
    %v9139 = vmul.f32 %v9123, 1.442695
    %v9140 = vpow.pop %v9139
    %v9141 = vmul.f32 %v9124, 1.442695
    %v9142 = vpow.pop %v9141
    %v9143 = vmul.f32 %v9125, 1.442695
    %v9144 = vpow.pop %v9143
    %v9145 = vmul.f32 %v9126, 1.442695
    %v9146 = vpow.pop %v9145
    %v9147 = vmul.f32 %v9127, 1.442695
    %v9148 = vpow.pop %v9147
    %v9149 = vmul.f32 %v9128, 1.442695
    %v9150 = vpow.pop %v9149
    %v9151 = vmul.f32 %v9129, 1.442695
    %v9152 = vpow.pop %v9151
    %v9153 = vmul.f32 %v9130, 1.442695
    %v9154 = vpow.pop %v9153
    %v9155 = vsel %vm603, %v9132, 0.0
    %9156 = vadd.xlane.f32.xlu0 %v9155
    %v9157 = vpop.xlane.xlu0 %9156
    %v9158 = vsel %vm603, %v9134, 0.0
    %9159 = vadd.xlane.f32.xlu0 %v9158
    %v9160 = vpop.xlane.xlu0 %9159
    %v9161 = vsel %vm603, %v9136, 0.0
    %9162 = vadd.xlane.f32.xlu0 %v9161
    %v9163 = vpop.xlane.xlu0 %9162
    %v9164 = vsel %vm603, %v9138, 0.0
    %9165 = vadd.xlane.f32.xlu0 %v9164
    %v9166 = vpop.xlane.xlu0 %9165
    %v9167 = vsel %vm603, %v9140, 0.0
    %9168 = vadd.xlane.f32.xlu0 %v9167
    %v9169 = vpop.xlane.xlu0 %9168
    %v9170 = vsel %vm603, %v9142, 0.0
    %9171 = vadd.xlane.f32.xlu0 %v9170
    %v9172 = vpop.xlane.xlu0 %9171
    %v9173 = vsel %vm603, %v9144, 0.0
    %9174 = vadd.xlane.f32.xlu0 %v9173
    %v9175 = vpop.xlane.xlu0 %9174
    %v9176 = vsel %vm603, %v9146, 0.0
    %9177 = vadd.xlane.f32.xlu0 %v9176
    %v9178 = vpop.xlane.xlu0 %9177
    %v9179 = vsel %vm603, %v9148, 0.0
    %9180 = vadd.xlane.f32.xlu0 %v9179
    %v9181 = vpop.xlane.xlu0 %9180
    %v9182 = vsel %vm603, %v9150, 0.0
    %9183 = vadd.xlane.f32.xlu0 %v9182
    %v9184 = vpop.xlane.xlu0 %9183
    %v9185 = vsel %vm603, %v9152, 0.0
    %9186 = vadd.xlane.f32.xlu0 %v9185
    %v9187 = vpop.xlane.xlu0 %9186
    %v9188 = vsel %vm603, %v9154, 0.0
    %9189 = vadd.xlane.f32.xlu0 %v9188
    %v9190 = vpop.xlane.xlu0 %9189
    %v9191 = vrcp.pop %v9157
    %v9192 = vmul.f32 %v9157, %v9191
    %v9193 = vsub.f32 1.0, %v9192
    %v9194 = vmul.f32 %v9191, %v9193
    %v9195 = vadd.f32 %v9191, %v9194
    %vm9196 = vweird.f32 %v9157
    %vm9197 = vweird.f32 %v9191
    %vm9198 = vmor %vm9196, %vm9197
    %v9199 = vsel %vm9198, %v9191, %v9195
    %v9200 = vand.u32 2147483647, %v9157
    %vm9201 = vcmp.eq.f32.partialorder %v9200, 8.507059e+37
    %v9202 = vand.u32 %v9157, 2147483648
    %v9203 = vor.u32 1.1754944e-38, %v9202
    %v9204 = vsel %vm9201, %v9203, %v9199
    %v9205 = vmul.f32 %v9132, %v9204
    %v9206 = vrcp.pop %v9160
    %v9207 = vmul.f32 %v9160, %v9206
    %v9208 = vsub.f32 1.0, %v9207
    %v9209 = vmul.f32 %v9206, %v9208
    %v9210 = vadd.f32 %v9206, %v9209
    %vm9211 = vweird.f32 %v9160
    %vm9212 = vweird.f32 %v9206
    %vm9213 = vmor %vm9211, %vm9212
    %v9214 = vsel %vm9213, %v9206, %v9210
    %v9215 = vand.u32 2147483647, %v9160
    %vm9216 = vcmp.eq.f32.partialorder %v9215, 8.507059e+37
    %v9217 = vand.u32 %v9160, 2147483648
    %v9218 = vor.u32 1.1754944e-38, %v9217
    %v9219 = vsel %vm9216, %v9218, %v9214
    %v9220 = vmul.f32 %v9134, %v9219
    %v9221 = vrcp.pop %v9163
    %v9222 = vmul.f32 %v9163, %v9221
    %v9223 = vsub.f32 1.0, %v9222
    %v9224 = vmul.f32 %v9221, %v9223
    %v9225 = vadd.f32 %v9221, %v9224
    %vm9226 = vweird.f32 %v9163
    %vm9227 = vweird.f32 %v9221
    %vm9228 = vmor %vm9226, %vm9227
    %v9229 = vsel %vm9228, %v9221, %v9225
    %v9230 = vand.u32 2147483647, %v9163
    %vm9231 = vcmp.eq.f32.partialorder %v9230, 8.507059e+37
    %v9232 = vand.u32 %v9163, 2147483648
    %v9233 = vor.u32 1.1754944e-38, %v9232
    %v9234 = vsel %vm9231, %v9233, %v9229
    %v9235 = vmul.f32 %v9136, %v9234
    %v9236 = vrcp.pop %v9166
    %v9237 = vmul.f32 %v9166, %v9236
    %v9238 = vsub.f32 1.0, %v9237
    %v9239 = vmul.f32 %v9236, %v9238
    %v9240 = vadd.f32 %v9236, %v9239
    %vm9241 = vweird.f32 %v9166
    %vm9242 = vweird.f32 %v9236
    %vm9243 = vmor %vm9241, %vm9242
    %v9244 = vsel %vm9243, %v9236, %v9240
    %v9245 = vand.u32 2147483647, %v9166
    %vm9246 = vcmp.eq.f32.partialorder %v9245, 8.507059e+37
    %v9247 = vand.u32 %v9166, 2147483648
    %v9248 = vor.u32 1.1754944e-38, %v9247
    %v9249 = vsel %vm9246, %v9248, %v9244
    %v9250 = vmul.f32 %v9138, %v9249
    %v9251 = vrcp.pop %v9169
    %v9252 = vmul.f32 %v9169, %v9251
    %v9253 = vsub.f32 1.0, %v9252
    %v9254 = vmul.f32 %v9251, %v9253
    %v9255 = vadd.f32 %v9251, %v9254
    %vm9256 = vweird.f32 %v9169
    %vm9257 = vweird.f32 %v9251
    %vm9258 = vmor %vm9256, %vm9257
    %v9259 = vsel %vm9258, %v9251, %v9255
    %v9260 = vand.u32 2147483647, %v9169
    %vm9261 = vcmp.eq.f32.partialorder %v9260, 8.507059e+37
    %v9262 = vand.u32 %v9169, 2147483648
    %v9263 = vor.u32 1.1754944e-38, %v9262
    %v9264 = vsel %vm9261, %v9263, %v9259
    %v9265 = vmul.f32 %v9140, %v9264
    %v9266 = vrcp.pop %v9172
    %v9267 = vmul.f32 %v9172, %v9266
    %v9268 = vsub.f32 1.0, %v9267
    %v9269 = vmul.f32 %v9266, %v9268
    %v9270 = vadd.f32 %v9266, %v9269
    %vm9271 = vweird.f32 %v9172
    %vm9272 = vweird.f32 %v9266
    %vm9273 = vmor %vm9271, %vm9272
    %v9274 = vsel %vm9273, %v9266, %v9270
    %v9275 = vand.u32 2147483647, %v9172
    %vm9276 = vcmp.eq.f32.partialorder %v9275, 8.507059e+37
    %v9277 = vand.u32 %v9172, 2147483648
    %v9278 = vor.u32 1.1754944e-38, %v9277
    %v9279 = vsel %vm9276, %v9278, %v9274
    %v9280 = vmul.f32 %v9142, %v9279
    %v9281 = vrcp.pop %v9175
    %v9282 = vmul.f32 %v9175, %v9281
    %v9283 = vsub.f32 1.0, %v9282
    %v9284 = vmul.f32 %v9281, %v9283
    %v9285 = vadd.f32 %v9281, %v9284
    %vm9286 = vweird.f32 %v9175
    %vm9287 = vweird.f32 %v9281
    %vm9288 = vmor %vm9286, %vm9287
    %v9289 = vsel %vm9288, %v9281, %v9285
    %v9290 = vand.u32 2147483647, %v9175
    %vm9291 = vcmp.eq.f32.partialorder %v9290, 8.507059e+37
    %v9292 = vand.u32 %v9175, 2147483648
    %v9293 = vor.u32 1.1754944e-38, %v9292
    %v9294 = vsel %vm9291, %v9293, %v9289
    %v9295 = vmul.f32 %v9144, %v9294
    %v9296 = vrcp.pop %v9178
    %v9297 = vmul.f32 %v9178, %v9296
    %v9298 = vsub.f32 1.0, %v9297
    %v9299 = vmul.f32 %v9296, %v9298
    %v9300 = vadd.f32 %v9296, %v9299
    %vm9301 = vweird.f32 %v9178
    %vm9302 = vweird.f32 %v9296
    %vm9303 = vmor %vm9301, %vm9302
    %v9304 = vsel %vm9303, %v9296, %v9300
    %v9305 = vand.u32 2147483647, %v9178
    %vm9306 = vcmp.eq.f32.partialorder %v9305, 8.507059e+37
    %v9307 = vand.u32 %v9178, 2147483648
    %v9308 = vor.u32 1.1754944e-38, %v9307
    %v9309 = vsel %vm9306, %v9308, %v9304
    %v9310 = vmul.f32 %v9146, %v9309
    %v9311 = vrcp.pop %v9181
    %v9312 = vmul.f32 %v9181, %v9311
    %v9313 = vsub.f32 1.0, %v9312
    %v9314 = vmul.f32 %v9311, %v9313
    %v9315 = vadd.f32 %v9311, %v9314
    %vm9316 = vweird.f32 %v9181
    %vm9317 = vweird.f32 %v9311
    %vm9318 = vmor %vm9316, %vm9317
    %v9319 = vsel %vm9318, %v9311, %v9315
    %v9320 = vand.u32 2147483647, %v9181
    %vm9321 = vcmp.eq.f32.partialorder %v9320, 8.507059e+37
    %v9322 = vand.u32 %v9181, 2147483648
    %v9323 = vor.u32 1.1754944e-38, %v9322
    %v9324 = vsel %vm9321, %v9323, %v9319
    %v9325 = vmul.f32 %v9148, %v9324
    %v9326 = vrcp.pop %v9184
    %v9327 = vmul.f32 %v9184, %v9326
    %v9328 = vsub.f32 1.0, %v9327
    %v9329 = vmul.f32 %v9326, %v9328
    %v9330 = vadd.f32 %v9326, %v9329
    %vm9331 = vweird.f32 %v9184
    %vm9332 = vweird.f32 %v9326
    %vm9333 = vmor %vm9331, %vm9332
    %v9334 = vsel %vm9333, %v9326, %v9330
    %v9335 = vand.u32 2147483647, %v9184
    %vm9336 = vcmp.eq.f32.partialorder %v9335, 8.507059e+37
    %v9337 = vand.u32 %v9184, 2147483648
    %v9338 = vor.u32 1.1754944e-38, %v9337
    %v9339 = vsel %vm9336, %v9338, %v9334
    %v9340 = vmul.f32 %v9150, %v9339
    %v9341 = vrcp.pop %v9187
    %v9342 = vmul.f32 %v9187, %v9341
    %v9343 = vsub.f32 1.0, %v9342
    %v9344 = vmul.f32 %v9341, %v9343
    %v9345 = vadd.f32 %v9341, %v9344
    %vm9346 = vweird.f32 %v9187
    %vm9347 = vweird.f32 %v9341
    %vm9348 = vmor %vm9346, %vm9347
    %v9349 = vsel %vm9348, %v9341, %v9345
    %v9350 = vand.u32 2147483647, %v9187
    %vm9351 = vcmp.eq.f32.partialorder %v9350, 8.507059e+37
    %v9352 = vand.u32 %v9187, 2147483648
    %v9353 = vor.u32 1.1754944e-38, %v9352
    %v9354 = vsel %vm9351, %v9353, %v9349
    %v9355 = vmul.f32 %v9152, %v9354
    %v9356 = vrcp.pop %v9190
    %v9357 = vmul.f32 %v9190, %v9356
    %v9358 = vsub.f32 1.0, %v9357
    %v9359 = vmul.f32 %v9356, %v9358
    %v9360 = vadd.f32 %v9356, %v9359
    %vm9361 = vweird.f32 %v9190
    %vm9362 = vweird.f32 %v9356
    %vm9363 = vmor %vm9361, %vm9362
    %v9364 = vsel %vm9363, %v9356, %v9360
    %v9365 = vand.u32 2147483647, %v9190
    %vm9366 = vcmp.eq.f32.partialorder %v9365, 8.507059e+37
    %v9367 = vand.u32 %v9190, 2147483648
    %v9368 = vor.u32 1.1754944e-38, %v9367
    %v9369 = vsel %vm9366, %v9368, %v9364
    %v9370 = vmul.f32 %v9154, %v9369
    %v9371 = vpack.c.bf16 %v9220, %v9205
    %v9372 = vpack.c.bf16 %v9250, %v9235
    %v9373 = vpack.c.bf16 %v9280, %v9265
    %v9374 = vpack.c.bf16 %v9310, %v9295
    %v9375 = vpack.c.bf16 %v9340, %v9325
    %v9376 = vpack.c.bf16 %v9370, %v9355
    %9377 = vrot.lane.b32.xlu0 %v8468, 48
    %v9378 = vpop.permute.xlu0 %9377
    %9379 = vrot.lane.b32.xlu0 %v8469, 48
    %v9380 = vpop.permute.xlu0 %9379
    %9381 = vrot.lane.b32.xlu0 %v8470, 48
    %v9382 = vpop.permute.xlu0 %9381
    %9383 = vrot.lane.b32.xlu0 %v8471, 48
    %v9384 = vpop.permute.xlu0 %9383
    %9385 = vrot.lane.b32.xlu0 %v8472, 48
    %v9386 = vpop.permute.xlu0 %9385
    %9387 = vrot.lane.b32.xlu0 %v8473, 48
    %v9388 = vpop.permute.xlu0 %9387
    %v9396 = vsel %vm603, %v9371, 0
    %v9399 = vsel %vm603, %v9372, 0
    %v9402 = vsel %vm603, %v9373, 0
    %v9405 = vsel %vm603, %v9374, 0
    %v9408 = vsel %vm603, %v9375, 0
    %v9411 = vsel %vm603, %v9376, 0
    %9413 = vmatpush.bf16.msra.mxu0 0
    %9414 = vmatpush.bf16.msra.mxu0 0
    %9415 = vmatpush.bf16.msra.mxu0 %v9388
    %9416 = vmatpush.bf16.msra.mxu0 %v9386
    %9417 = vmatpush.bf16.msra.mxu0 %v9384
    %9418 = vmatpush.bf16.msra.mxu0 %v9382
    %9419 = vmatpush.bf16.msra.mxu0 %v9380
    %9420 = vmatpush.bf16.msra.mxu0 %v9378
    %9421 = vmatmul.bf16.gmra.mxu0 %v9396
    %v9422 = vpop.f32.mrf.mxu0
    %v9423 = vadd.f32 0.0, %v9422
    %v9424 = vpop.f32.mrf.mxu0
    %v9425 = vadd.f32 0.0, %v9424
    %9426 = vmatmul.bf16.gmra.mxu0 %v9399
    %v9427 = vpop.f32.mrf.mxu0
    %v9428 = vadd.f32 0.0, %v9427
    %v9429 = vpop.f32.mrf.mxu0
    %v9430 = vadd.f32 0.0, %v9429
    %9431 = vmatmul.bf16.gmra.mxu0 %v9402
    %v9432 = vpop.f32.mrf.mxu0
    %v9433 = vadd.f32 0.0, %v9432
    %v9434 = vpop.f32.mrf.mxu0
    %v9435 = vadd.f32 0.0, %v9434
    %9436 = vmatmul.bf16.gmra.mxu0 %v9405
    %v9437 = vpop.f32.mrf.mxu0
    %v9438 = vadd.f32 0.0, %v9437
    %v9439 = vpop.f32.mrf.mxu0
    %v9440 = vadd.f32 0.0, %v9439
    %9441 = vmatmul.bf16.gmra.mxu0 %v9408
    %v9442 = vpop.f32.mrf.mxu0
    %v9443 = vadd.f32 0.0, %v9442
    %v9444 = vpop.f32.mrf.mxu0
    %v9445 = vadd.f32 0.0, %v9444
    %9446 = vmatmul.bf16.gmra.mxu0 %v9411
    %v9447 = vpop.f32.mrf.mxu0
    %v9448 = vadd.f32 0.0, %v9447
    %v9449 = vpop.f32.mrf.mxu0
    %v9450 = vadd.f32 0.0, %v9449
    %9451 = vdwg.mxu0
    %9464 = vrot.lane.b32.xlu0 %v9423, 16
    %v9465 = vpop.permute.xlu0 %9464
    %9466 = vrot.lane.b32.xlu0 %v9425, 16
    %v9467 = vpop.permute.xlu0 %9466
    %9468 = vrot.lane.b32.xlu0 %v9428, 16
    %v9469 = vpop.permute.xlu0 %9468
    %9470 = vrot.lane.b32.xlu0 %v9430, 16
    %v9471 = vpop.permute.xlu0 %9470
    %9472 = vrot.lane.b32.xlu0 %v9433, 16
    %v9473 = vpop.permute.xlu0 %9472
    %9474 = vrot.lane.b32.xlu0 %v9435, 16
    %v9475 = vpop.permute.xlu0 %9474
    %9476 = vrot.lane.b32.xlu0 %v9438, 16
    %v9477 = vpop.permute.xlu0 %9476
    %9478 = vrot.lane.b32.xlu0 %v9440, 16
    %v9479 = vpop.permute.xlu0 %9478
    %9480 = vrot.lane.b32.xlu0 %v9443, 16
    %v9481 = vpop.permute.xlu0 %9480
    %9482 = vrot.lane.b32.xlu0 %v9445, 16
    %v9483 = vpop.permute.xlu0 %9482
    %9484 = vrot.lane.b32.xlu0 %v9448, 16
    %v9485 = vpop.permute.xlu0 %9484
    %9486 = vrot.lane.b32.xlu0 %v9450, 16
    %v9487 = vpop.permute.xlu0 %9486
    %v9500 = vsel %vm503, %v8931, %v9465
    %v9501 = vsel %vm503, %v8933, %v9467
    %v9502 = vsel %vm503, %v8936, %v9469
    %v9503 = vsel %vm503, %v8938, %v9471
    %v9504 = vsel %vm503, %v8941, %v9473
    %v9505 = vsel %vm503, %v8943, %v9475
    %v9506 = vsel %vm503, %v8946, %v9477
    %v9507 = vsel %vm503, %v8948, %v9479
    %v9508 = vsel %vm503, %v8951, %v9481
    %v9509 = vsel %vm503, %v8953, %v9483
    %v9510 = vsel %vm503, %v8956, %v9485
    %v9511 = vsel %vm503, %v8958, %v9487
    %v9512 = vpack.c.bf16 %v9501, %v9500
    %v9513 = vpack.c.bf16 %v9503, %v9502
    %v9514 = vpack.c.bf16 %v9505, %v9504
    %v9515 = vpack.c.bf16 %v9507, %v9506
    %v9516 = vpack.c.bf16 %v9509, %v9508
    %v9517 = vpack.c.bf16 %v9511, %v9510
    %s9518 = scalar_lea.vmem %s9, 48
    %v9519 = vld [vmem:[%s9518] sm:$0xf]
    %v9520 = vld [vmem:[%s9518 + $0x4] sm:$0xf]
    %v9521 = vld [vmem:[%s9518 + $0x8] sm:$0xf]
    %v9522 = vld [vmem:[%s9518 + $0xc] sm:$0xf]
    %s9523 = scalar_lea.vmem %s10, 3
    %v9524 = vld [vmem:[%s9523] sm:$0x1]
    %v9526 = vperm.slane %v9524, 0
    %v9532 = vunpack.c.l.b16 %v9519
    %v9533 = vunpack.c.l.b16 %v9520
    %v9534 = vunpack.c.l.b16 %v9521
    %v9535 = vunpack.c.l.b16 %v9522
    %v9536 = vpack.c.b16 %v9533, %v9532
    %v9537 = vpack.c.b16 %v9535, %v9534
    %v9541 = vsel %vm94, %v9512, 0
    %v9544 = vsel %vm94, %v9513, 0
    %v9547 = vsel %vm94, %v9514, 0
    %v9550 = vsel %vm94, %v9515, 0
    %v9553 = vsel %vm94, %v9516, 0
    %v9556 = vsel %vm94, %v9517, 0
    %9558 = vmatpush.bf16.msra.mxu0 0
    %9559 = vmatpush.bf16.msra.mxu0 0
    %9560 = vmatpush.bf16.msra.mxu0 0
    %9561 = vmatpush.bf16.msra.mxu0 0
    %9562 = vmatpush.bf16.msra.mxu0 0
    %9563 = vmatpush.bf16.msra.mxu0 0
    %9564 = vmatpush.bf16.msra.mxu0 %v9537
    %9565 = vmatpush.bf16.msra.mxu0 %v9536
    %9566 = vmatmul.bf16.gmra.mxu0 %v9541
    %v9567 = vpop.f32.mrf.mxu0
    %v9568 = vadd.f32 %v9526, %v9567
    %v9569 = vpop.f32.mrf.mxu0
    %v9570 = vadd.f32 %v9526, %v9569
    %9571 = vmatmul.bf16.gmra.mxu0 %v9544
    %v9572 = vpop.f32.mrf.mxu0
    %v9573 = vadd.f32 %v9526, %v9572
    %v9574 = vpop.f32.mrf.mxu0
    %v9575 = vadd.f32 %v9526, %v9574
    %9576 = vmatmul.bf16.gmra.mxu0 %v9547
    %v9577 = vpop.f32.mrf.mxu0
    %v9578 = vadd.f32 %v9526, %v9577
    %v9579 = vpop.f32.mrf.mxu0
    %v9580 = vadd.f32 %v9526, %v9579
    %9581 = vmatmul.bf16.gmra.mxu0 %v9550
    %v9582 = vpop.f32.mrf.mxu0
    %v9583 = vadd.f32 %v9526, %v9582
    %v9584 = vpop.f32.mrf.mxu0
    %v9585 = vadd.f32 %v9526, %v9584
    %9586 = vmatmul.bf16.gmra.mxu0 %v9553
    %v9587 = vpop.f32.mrf.mxu0
    %v9588 = vadd.f32 %v9526, %v9587
    %v9589 = vpop.f32.mrf.mxu0
    %v9590 = vadd.f32 %v9526, %v9589
    %9591 = vmatmul.bf16.gmra.mxu0 %v9556
    %v9592 = vpop.f32.mrf.mxu0
    %v9593 = vadd.f32 %v9526, %v9592
    %v9594 = vpop.f32.mrf.mxu0
    %v9595 = vadd.f32 %v9526, %v9594
    %9596 = vdwg.mxu0
    %v9597 = vadd.f32 %v8371, %v9568
    %v9598 = vadd.f32 %v8372, %v9570
    %v9599 = vadd.f32 %v8373, %v9573
    %v9600 = vadd.f32 %v8374, %v9575
    %v9601 = vadd.f32 %v8375, %v9578
    %v9602 = vadd.f32 %v8376, %v9580
    %v9603 = vadd.f32 %v8377, %v9583
    %v9604 = vadd.f32 %v8378, %v9585
    %v9605 = vadd.f32 %v8379, %v9588
    %v9606 = vadd.f32 %v8380, %v9590
    %v9607 = vadd.f32 %v8381, %v9593
    %v9608 = vadd.f32 %v8382, %v9595
    %s9609 = scalar_lea.vmem %s5, 3
    %v9610 = vld [vmem:[%s9609] sm:$0x1]
    %s9611 = scalar_lea.vmem %s6, 3
    %v9612 = vld [vmem:[%s9611] sm:$0x1]
    %v9613 = vsel %vm94, %v9597, 0.0
    %9614 = vadd.xlane.f32.xlu0 %v9613
    %v9615 = vpop.xlane.xlu0 %9614
    %v9616 = vsel %vm94, %v9598, 0.0
    %9617 = vadd.xlane.f32.xlu0 %v9616
    %v9618 = vpop.xlane.xlu0 %9617
    %v9619 = vsel %vm94, %v9599, 0.0
    %9620 = vadd.xlane.f32.xlu0 %v9619
    %v9621 = vpop.xlane.xlu0 %9620
    %v9622 = vsel %vm94, %v9600, 0.0
    %9623 = vadd.xlane.f32.xlu0 %v9622
    %v9624 = vpop.xlane.xlu0 %9623
    %v9625 = vsel %vm94, %v9601, 0.0
    %9626 = vadd.xlane.f32.xlu0 %v9625
    %v9627 = vpop.xlane.xlu0 %9626
    %v9628 = vsel %vm94, %v9602, 0.0
    %9629 = vadd.xlane.f32.xlu0 %v9628
    %v9630 = vpop.xlane.xlu0 %9629
    %v9631 = vsel %vm94, %v9603, 0.0
    %9632 = vadd.xlane.f32.xlu0 %v9631
    %v9633 = vpop.xlane.xlu0 %9632
    %v9634 = vsel %vm94, %v9604, 0.0
    %9635 = vadd.xlane.f32.xlu0 %v9634
    %v9636 = vpop.xlane.xlu0 %9635
    %v9637 = vsel %vm94, %v9605, 0.0
    %9638 = vadd.xlane.f32.xlu0 %v9637
    %v9639 = vpop.xlane.xlu0 %9638
    %v9640 = vsel %vm94, %v9606, 0.0
    %9641 = vadd.xlane.f32.xlu0 %v9640
    %v9642 = vpop.xlane.xlu0 %9641
    %v9643 = vsel %vm94, %v9607, 0.0
    %9644 = vadd.xlane.f32.xlu0 %v9643
    %v9645 = vpop.xlane.xlu0 %9644
    %v9646 = vsel %vm94, %v9608, 0.0
    %9647 = vadd.xlane.f32.xlu0 %v9646
    %v9648 = vpop.xlane.xlu0 %9647
    %v9649 = vmul.f32 %v9615, %v137
    %v9650 = vmul.f32 %v9618, %v137
    %v9651 = vmul.f32 %v9621, %v137
    %v9652 = vmul.f32 %v9624, %v137
    %v9653 = vmul.f32 %v9627, %v137
    %v9654 = vmul.f32 %v9630, %v137
    %v9655 = vmul.f32 %v9633, %v137
    %v9656 = vmul.f32 %v9636, %v137
    %v9657 = vmul.f32 %v9639, %v137
    %v9658 = vmul.f32 %v9642, %v137
    %v9659 = vmul.f32 %v9645, %v137
    %v9660 = vmul.f32 %v9648, %v137
    %v9661 = vsub.f32 %v9597, %v9649
    %v9662 = vsub.f32 %v9598, %v9650
    %v9663 = vsub.f32 %v9599, %v9651
    %v9664 = vsub.f32 %v9600, %v9652
    %v9665 = vsub.f32 %v9601, %v9653
    %v9666 = vsub.f32 %v9602, %v9654
    %v9667 = vsub.f32 %v9603, %v9655
    %v9668 = vsub.f32 %v9604, %v9656
    %v9669 = vsub.f32 %v9605, %v9657
    %v9670 = vsub.f32 %v9606, %v9658
    %v9671 = vsub.f32 %v9607, %v9659
    %v9672 = vsub.f32 %v9608, %v9660
    %v9673 = vmul.f32 %v9661, %v9661
    %v9674 = vmul.f32 %v9662, %v9662
    %v9675 = vmul.f32 %v9663, %v9663
    %v9676 = vmul.f32 %v9664, %v9664
    %v9677 = vmul.f32 %v9665, %v9665
    %v9678 = vmul.f32 %v9666, %v9666
    %v9679 = vmul.f32 %v9667, %v9667
    %v9680 = vmul.f32 %v9668, %v9668
    %v9681 = vmul.f32 %v9669, %v9669
    %v9682 = vmul.f32 %v9670, %v9670
    %v9683 = vmul.f32 %v9671, %v9671
    %v9684 = vmul.f32 %v9672, %v9672
    %v9685 = vsel %vm94, %v9673, 0.0
    %9686 = vadd.xlane.f32.xlu0 %v9685
    %v9687 = vpop.xlane.xlu0 %9686
    %v9688 = vsel %vm94, %v9674, 0.0
    %9689 = vadd.xlane.f32.xlu0 %v9688
    %v9690 = vpop.xlane.xlu0 %9689
    %v9691 = vsel %vm94, %v9675, 0.0
    %9692 = vadd.xlane.f32.xlu0 %v9691
    %v9693 = vpop.xlane.xlu0 %9692
    %v9694 = vsel %vm94, %v9676, 0.0
    %9695 = vadd.xlane.f32.xlu0 %v9694
    %v9696 = vpop.xlane.xlu0 %9695
    %v9697 = vsel %vm94, %v9677, 0.0
    %9698 = vadd.xlane.f32.xlu0 %v9697
    %v9699 = vpop.xlane.xlu0 %9698
    %v9700 = vsel %vm94, %v9678, 0.0
    %9701 = vadd.xlane.f32.xlu0 %v9700
    %v9702 = vpop.xlane.xlu0 %9701
    %v9703 = vsel %vm94, %v9679, 0.0
    %9704 = vadd.xlane.f32.xlu0 %v9703
    %v9705 = vpop.xlane.xlu0 %9704
    %v9706 = vsel %vm94, %v9680, 0.0
    %9707 = vadd.xlane.f32.xlu0 %v9706
    %v9708 = vpop.xlane.xlu0 %9707
    %v9709 = vsel %vm94, %v9681, 0.0
    %9710 = vadd.xlane.f32.xlu0 %v9709
    %v9711 = vpop.xlane.xlu0 %9710
    %v9712 = vsel %vm94, %v9682, 0.0
    %9713 = vadd.xlane.f32.xlu0 %v9712
    %v9714 = vpop.xlane.xlu0 %9713
    %v9715 = vsel %vm94, %v9683, 0.0
    %9716 = vadd.xlane.f32.xlu0 %v9715
    %v9717 = vpop.xlane.xlu0 %9716
    %v9718 = vsel %vm94, %v9684, 0.0
    %9719 = vadd.xlane.f32.xlu0 %v9718
    %v9720 = vpop.xlane.xlu0 %9719
    %v9721 = vmul.f32 %v9687, %v137
    %v9722 = vmul.f32 %v9690, %v137
    %v9723 = vmul.f32 %v9693, %v137
    %v9724 = vmul.f32 %v9696, %v137
    %v9725 = vmul.f32 %v9699, %v137
    %v9726 = vmul.f32 %v9702, %v137
    %v9727 = vmul.f32 %v9705, %v137
    %v9728 = vmul.f32 %v9708, %v137
    %v9729 = vmul.f32 %v9711, %v137
    %v9730 = vmul.f32 %v9714, %v137
    %v9731 = vmul.f32 %v9717, %v137
    %v9732 = vmul.f32 %v9720, %v137
    %v9733 = vadd.f32 %v9721, 1e-05
    %v9734 = vadd.f32 %v9722, 1e-05
    %v9735 = vadd.f32 %v9723, 1e-05
    %v9736 = vadd.f32 %v9724, 1e-05
    %v9737 = vadd.f32 %v9725, 1e-05
    %v9738 = vadd.f32 %v9726, 1e-05
    %v9739 = vadd.f32 %v9727, 1e-05
    %v9740 = vadd.f32 %v9728, 1e-05
    %v9741 = vadd.f32 %v9729, 1e-05
    %v9742 = vadd.f32 %v9730, 1e-05
    %v9743 = vadd.f32 %v9731, 1e-05
    %v9744 = vadd.f32 %v9732, 1e-05
    %v9745 = vrsqrt.pop %v9733
    %v9746 = vmul.f32 %v9745, %v9733
    %v9747 = vmul.f32 %v9746, %v9745
    %v9748 = vmul.f32 0.5, %v9747
    %v9749 = vsub.f32 1.5, %v9748
    %v9750 = vmul.f32 %v9745, %v9749
    %vm9751 = vweird.f32 %v9733
    %vm9752 = vweird.f32 %v9745
    %vm9753 = vmor %vm9751, %vm9752
    %v9754 = vsel %vm9753, %v9745, %v9750
    %v9755 = vrsqrt.pop %v9734
    %v9756 = vmul.f32 %v9755, %v9734
    %v9757 = vmul.f32 %v9756, %v9755
    %v9758 = vmul.f32 0.5, %v9757
    %v9759 = vsub.f32 1.5, %v9758
    %v9760 = vmul.f32 %v9755, %v9759
    %vm9761 = vweird.f32 %v9734
    %vm9762 = vweird.f32 %v9755
    %vm9763 = vmor %vm9761, %vm9762
    %v9764 = vsel %vm9763, %v9755, %v9760
    %v9765 = vrsqrt.pop %v9735
    %v9766 = vmul.f32 %v9765, %v9735
    %v9767 = vmul.f32 %v9766, %v9765
    %v9768 = vmul.f32 0.5, %v9767
    %v9769 = vsub.f32 1.5, %v9768
    %v9770 = vmul.f32 %v9765, %v9769
    %vm9771 = vweird.f32 %v9735
    %vm9772 = vweird.f32 %v9765
    %vm9773 = vmor %vm9771, %vm9772
    %v9774 = vsel %vm9773, %v9765, %v9770
    %v9775 = vrsqrt.pop %v9736
    %v9776 = vmul.f32 %v9775, %v9736
    %v9777 = vmul.f32 %v9776, %v9775
    %v9778 = vmul.f32 0.5, %v9777
    %v9779 = vsub.f32 1.5, %v9778
    %v9780 = vmul.f32 %v9775, %v9779
    %vm9781 = vweird.f32 %v9736
    %vm9782 = vweird.f32 %v9775
    %vm9783 = vmor %vm9781, %vm9782
    %v9784 = vsel %vm9783, %v9775, %v9780
    %v9785 = vrsqrt.pop %v9737
    %v9786 = vmul.f32 %v9785, %v9737
    %v9787 = vmul.f32 %v9786, %v9785
    %v9788 = vmul.f32 0.5, %v9787
    %v9789 = vsub.f32 1.5, %v9788
    %v9790 = vmul.f32 %v9785, %v9789
    %vm9791 = vweird.f32 %v9737
    %vm9792 = vweird.f32 %v9785
    %vm9793 = vmor %vm9791, %vm9792
    %v9794 = vsel %vm9793, %v9785, %v9790
    %v9795 = vrsqrt.pop %v9738
    %v9796 = vmul.f32 %v9795, %v9738
    %v9797 = vmul.f32 %v9796, %v9795
    %v9798 = vmul.f32 0.5, %v9797
    %v9799 = vsub.f32 1.5, %v9798
    %v9800 = vmul.f32 %v9795, %v9799
    %vm9801 = vweird.f32 %v9738
    %vm9802 = vweird.f32 %v9795
    %vm9803 = vmor %vm9801, %vm9802
    %v9804 = vsel %vm9803, %v9795, %v9800
    %v9805 = vrsqrt.pop %v9739
    %v9806 = vmul.f32 %v9805, %v9739
    %v9807 = vmul.f32 %v9806, %v9805
    %v9808 = vmul.f32 0.5, %v9807
    %v9809 = vsub.f32 1.5, %v9808
    %v9810 = vmul.f32 %v9805, %v9809
    %vm9811 = vweird.f32 %v9739
    %vm9812 = vweird.f32 %v9805
    %vm9813 = vmor %vm9811, %vm9812
    %v9814 = vsel %vm9813, %v9805, %v9810
    %v9815 = vrsqrt.pop %v9740
    %v9816 = vmul.f32 %v9815, %v9740
    %v9817 = vmul.f32 %v9816, %v9815
    %v9818 = vmul.f32 0.5, %v9817
    %v9819 = vsub.f32 1.5, %v9818
    %v9820 = vmul.f32 %v9815, %v9819
    %vm9821 = vweird.f32 %v9740
    %vm9822 = vweird.f32 %v9815
    %vm9823 = vmor %vm9821, %vm9822
    %v9824 = vsel %vm9823, %v9815, %v9820
    %v9825 = vrsqrt.pop %v9741
    %v9826 = vmul.f32 %v9825, %v9741
    %v9827 = vmul.f32 %v9826, %v9825
    %v9828 = vmul.f32 0.5, %v9827
    %v9829 = vsub.f32 1.5, %v9828
    %v9830 = vmul.f32 %v9825, %v9829
    %vm9831 = vweird.f32 %v9741
    %vm9832 = vweird.f32 %v9825
    %vm9833 = vmor %vm9831, %vm9832
    %v9834 = vsel %vm9833, %v9825, %v9830
    %v9835 = vrsqrt.pop %v9742
    %v9836 = vmul.f32 %v9835, %v9742
    %v9837 = vmul.f32 %v9836, %v9835
    %v9838 = vmul.f32 0.5, %v9837
    %v9839 = vsub.f32 1.5, %v9838
    %v9840 = vmul.f32 %v9835, %v9839
    %vm9841 = vweird.f32 %v9742
    %vm9842 = vweird.f32 %v9835
    %vm9843 = vmor %vm9841, %vm9842
    %v9844 = vsel %vm9843, %v9835, %v9840
    %v9845 = vrsqrt.pop %v9743
    %v9846 = vmul.f32 %v9845, %v9743
    %v9847 = vmul.f32 %v9846, %v9845
    %v9848 = vmul.f32 0.5, %v9847
    %v9849 = vsub.f32 1.5, %v9848
    %v9850 = vmul.f32 %v9845, %v9849
    %vm9851 = vweird.f32 %v9743
    %vm9852 = vweird.f32 %v9845
    %vm9853 = vmor %vm9851, %vm9852
    %v9854 = vsel %vm9853, %v9845, %v9850
    %v9855 = vrsqrt.pop %v9744
    %v9856 = vmul.f32 %v9855, %v9744
    %v9857 = vmul.f32 %v9856, %v9855
    %v9858 = vmul.f32 0.5, %v9857
    %v9859 = vsub.f32 1.5, %v9858
    %v9860 = vmul.f32 %v9855, %v9859
    %vm9861 = vweird.f32 %v9744
    %vm9862 = vweird.f32 %v9855
    %vm9863 = vmor %vm9861, %vm9862
    %v9864 = vsel %vm9863, %v9855, %v9860
    %v9865 = vmul.f32 %v9661, %v9754
    %v9866 = vmul.f32 %v9662, %v9764
    %v9867 = vmul.f32 %v9663, %v9774
    %v9868 = vmul.f32 %v9664, %v9784
    %v9869 = vmul.f32 %v9665, %v9794
    %v9870 = vmul.f32 %v9666, %v9804
    %v9871 = vmul.f32 %v9667, %v9814
    %v9872 = vmul.f32 %v9668, %v9824
    %v9873 = vmul.f32 %v9669, %v9834
    %v9874 = vmul.f32 %v9670, %v9844
    %v9875 = vmul.f32 %v9671, %v9854
    %v9876 = vmul.f32 %v9672, %v9864
    %v9878 = vperm.slane %v9610, 0
    %v9880 = vmul.f32 %v9865, %v9878
    %v9881 = vmul.f32 %v9866, %v9878
    %v9882 = vmul.f32 %v9867, %v9878
    %v9883 = vmul.f32 %v9868, %v9878
    %v9884 = vmul.f32 %v9869, %v9878
    %v9885 = vmul.f32 %v9870, %v9878
    %v9886 = vmul.f32 %v9871, %v9878
    %v9887 = vmul.f32 %v9872, %v9878
    %v9888 = vmul.f32 %v9873, %v9878
    %v9889 = vmul.f32 %v9874, %v9878
    %v9890 = vmul.f32 %v9875, %v9878
    %v9891 = vmul.f32 %v9876, %v9878
    %v9893 = vperm.slane %v9612, 0
    %v9895 = vadd.f32 %v9880, %v9893
    %v9896 = vadd.f32 %v9881, %v9893
    %v9897 = vadd.f32 %v9882, %v9893
    %v9898 = vadd.f32 %v9883, %v9893
    %v9899 = vadd.f32 %v9884, %v9893
    %v9900 = vadd.f32 %v9885, %v9893
    %v9901 = vadd.f32 %v9886, %v9893
    %v9902 = vadd.f32 %v9887, %v9893
    %v9903 = vadd.f32 %v9888, %v9893
    %v9904 = vadd.f32 %v9889, %v9893
    %v9905 = vadd.f32 %v9890, %v9893
    %v9906 = vadd.f32 %v9891, %v9893
    %v9907 = vpack.c.bf16 %v9896, %v9895
    %v9908 = vpack.c.bf16 %v9898, %v9897
    %v9909 = vpack.c.bf16 %v9900, %v9899
    %v9910 = vpack.c.bf16 %v9902, %v9901
    %v9911 = vpack.c.bf16 %v9904, %v9903
    %v9912 = vpack.c.bf16 %v9906, %v9905
    %s9913 = scalar_lea.vmem %s11, 48
    %v9914 = vld [vmem:[%s9913] sm:$0xf]
    %v9915 = vld [vmem:[%s9913 + $0x4] sm:$0xf]
    %v9916 = vld [vmem:[%s9913 + $0x8] sm:$0xf]
    %v9917 = vld [vmem:[%s9913 + $0xc] sm:$0xf]
    %s9918 = scalar_lea.vmem %s12, 3
    %v9919 = vld [vmem:[%s9918] sm:$0x1]
    %v9921 = vperm.slane %v9919, 0
    %v9927 = vunpack.c.l.b16 %v9914
    %v9928 = vunpack.c.l.b16 %v9915
    %v9929 = vunpack.c.l.b16 %v9916
    %v9930 = vunpack.c.l.b16 %v9917
    %v9931 = vpack.c.b16 %v9928, %v9927
    %v9932 = vpack.c.b16 %v9930, %v9929
    %v9936 = vsel %vm94, %v9907, 0
    %v9939 = vsel %vm94, %v9908, 0
    %v9942 = vsel %vm94, %v9909, 0
    %v9945 = vsel %vm94, %v9910, 0
    %v9948 = vsel %vm94, %v9911, 0
    %v9951 = vsel %vm94, %v9912, 0
    %9953 = vmatpush.bf16.msra.mxu0 0
    %9954 = vmatpush.bf16.msra.mxu0 0
    %9955 = vmatpush.bf16.msra.mxu0 0
    %9956 = vmatpush.bf16.msra.mxu0 0
    %9957 = vmatpush.bf16.msra.mxu0 0
    %9958 = vmatpush.bf16.msra.mxu0 0
    %9959 = vmatpush.bf16.msra.mxu0 %v9932
    %9960 = vmatpush.bf16.msra.mxu0 %v9931
    %9961 = vmatmul.bf16.gmra.mxu0 %v9936
    %v9962 = vpop.f32.mrf.mxu0
    %v9963 = vadd.f32 %v9921, %v9962
    %v9964 = vpop.f32.mrf.mxu0
    %v9965 = vadd.f32 %v9921, %v9964
    %9966 = vmatmul.bf16.gmra.mxu0 %v9939
    %v9967 = vpop.f32.mrf.mxu0
    %v9968 = vadd.f32 %v9921, %v9967
    %v9969 = vpop.f32.mrf.mxu0
    %v9970 = vadd.f32 %v9921, %v9969
    %9971 = vmatmul.bf16.gmra.mxu0 %v9942
    %v9972 = vpop.f32.mrf.mxu0
    %v9973 = vadd.f32 %v9921, %v9972
    %v9974 = vpop.f32.mrf.mxu0
    %v9975 = vadd.f32 %v9921, %v9974
    %9976 = vmatmul.bf16.gmra.mxu0 %v9945
    %v9977 = vpop.f32.mrf.mxu0
    %v9978 = vadd.f32 %v9921, %v9977
    %v9979 = vpop.f32.mrf.mxu0
    %v9980 = vadd.f32 %v9921, %v9979
    %9981 = vmatmul.bf16.gmra.mxu0 %v9948
    %v9982 = vpop.f32.mrf.mxu0
    %v9983 = vadd.f32 %v9921, %v9982
    %v9984 = vpop.f32.mrf.mxu0
    %v9985 = vadd.f32 %v9921, %v9984
    %9986 = vmatmul.bf16.gmra.mxu0 %v9951
    %v9987 = vpop.f32.mrf.mxu0
    %v9988 = vadd.f32 %v9921, %v9987
    %v9989 = vpop.f32.mrf.mxu0
    %v9990 = vadd.f32 %v9921, %v9989
    %9991 = vdwg.mxu0
    %v9992 = vmul.f32 %v9963, 0.5
    %v9993 = vmul.f32 %v9965, 0.5
    %v9994 = vmul.f32 %v9968, 0.5
    %v9995 = vmul.f32 %v9970, 0.5
    %v9996 = vmul.f32 %v9973, 0.5
    %v9997 = vmul.f32 %v9975, 0.5
    %v9998 = vmul.f32 %v9978, 0.5
    %v9999 = vmul.f32 %v9980, 0.5
    %v10000 = vmul.f32 %v9983, 0.5
    %v10001 = vmul.f32 %v9985, 0.5
    %v10002 = vmul.f32 %v9988, 0.5
    %v10003 = vmul.f32 %v9990, 0.5
    %v10004 = vmul.f32 %v9963, 0.70710677
    %v10005 = vmul.f32 %v9965, 0.70710677
    %v10006 = vmul.f32 %v9968, 0.70710677
    %v10007 = vmul.f32 %v9970, 0.70710677
    %v10008 = vmul.f32 %v9973, 0.70710677
    %v10009 = vmul.f32 %v9975, 0.70710677
    %v10010 = vmul.f32 %v9978, 0.70710677
    %v10011 = vmul.f32 %v9980, 0.70710677
    %v10012 = vmul.f32 %v9983, 0.70710677
    %v10013 = vmul.f32 %v9985, 0.70710677
    %v10014 = vmul.f32 %v9988, 0.70710677
    %v10015 = vmul.f32 %v9990, 0.70710677
    %v10016 = vand.u32 2147483647, %v10004
    %v10017 = vand.u32 2147483647, %v10005
    %v10018 = vand.u32 2147483647, %v10006
    %v10019 = vand.u32 2147483647, %v10007
    %v10020 = vand.u32 2147483647, %v10008
    %v10021 = vand.u32 2147483647, %v10009
    %v10022 = vand.u32 2147483647, %v10010
    %v10023 = vand.u32 2147483647, %v10011
    %v10024 = vand.u32 2147483647, %v10012
    %v10025 = vand.u32 2147483647, %v10013
    %v10026 = vand.u32 2147483647, %v10014
    %v10027 = vand.u32 2147483647, %v10015
    %v10028 = vmul.f32 %v10016, 0.3275911
    %v10029 = vmul.f32 %v10017, 0.3275911
    %v10030 = vmul.f32 %v10018, 0.3275911
    %v10031 = vmul.f32 %v10019, 0.3275911
    %v10032 = vmul.f32 %v10020, 0.3275911
    %v10033 = vmul.f32 %v10021, 0.3275911
    %v10034 = vmul.f32 %v10022, 0.3275911
    %v10035 = vmul.f32 %v10023, 0.3275911
    %v10036 = vmul.f32 %v10024, 0.3275911
    %v10037 = vmul.f32 %v10025, 0.3275911
    %v10038 = vmul.f32 %v10026, 0.3275911
    %v10039 = vmul.f32 %v10027, 0.3275911
    %v10040 = vadd.f32 %v10028, 1.0
    %v10041 = vadd.f32 %v10029, 1.0
    %v10042 = vadd.f32 %v10030, 1.0
    %v10043 = vadd.f32 %v10031, 1.0
    %v10044 = vadd.f32 %v10032, 1.0
    %v10045 = vadd.f32 %v10033, 1.0
    %v10046 = vadd.f32 %v10034, 1.0
    %v10047 = vadd.f32 %v10035, 1.0
    %v10048 = vadd.f32 %v10036, 1.0
    %v10049 = vadd.f32 %v10037, 1.0
    %v10050 = vadd.f32 %v10038, 1.0
    %v10051 = vadd.f32 %v10039, 1.0
    %v10052 = vrcp.pop %v10040
    %v10053 = vmul.f32 %v10040, %v10052
    %v10054 = vsub.f32 1.0, %v10053
    %v10055 = vmul.f32 %v10052, %v10054
    %v10056 = vadd.f32 %v10052, %v10055
    %vm10057 = vweird.f32 %v10040
    %vm10058 = vweird.f32 %v10052
    %vm10059 = vmor %vm10057, %vm10058
    %v10060 = vsel %vm10059, %v10052, %v10056
    %v10061 = vand.u32 2147483647, %v10040
    %vm10062 = vcmp.eq.f32.partialorder %v10061, 8.507059e+37
    %v10063 = vand.u32 %v10040, 2147483648
    %v10064 = vor.u32 1.1754944e-38, %v10063
    %v10065 = vsel %vm10062, %v10064, %v10060
    %v10066 = vmul.f32 1.0, %v10065
    %v10067 = vrcp.pop %v10041
    %v10068 = vmul.f32 %v10041, %v10067
    %v10069 = vsub.f32 1.0, %v10068
    %v10070 = vmul.f32 %v10067, %v10069
    %v10071 = vadd.f32 %v10067, %v10070
    %vm10072 = vweird.f32 %v10041
    %vm10073 = vweird.f32 %v10067
    %vm10074 = vmor %vm10072, %vm10073
    %v10075 = vsel %vm10074, %v10067, %v10071
    %v10076 = vand.u32 2147483647, %v10041
    %vm10077 = vcmp.eq.f32.partialorder %v10076, 8.507059e+37
    %v10078 = vand.u32 %v10041, 2147483648
    %v10079 = vor.u32 1.1754944e-38, %v10078
    %v10080 = vsel %vm10077, %v10079, %v10075
    %v10081 = vmul.f32 1.0, %v10080
    %v10082 = vrcp.pop %v10042
    %v10083 = vmul.f32 %v10042, %v10082
    %v10084 = vsub.f32 1.0, %v10083
    %v10085 = vmul.f32 %v10082, %v10084
    %v10086 = vadd.f32 %v10082, %v10085
    %vm10087 = vweird.f32 %v10042
    %vm10088 = vweird.f32 %v10082
    %vm10089 = vmor %vm10087, %vm10088
    %v10090 = vsel %vm10089, %v10082, %v10086
    %v10091 = vand.u32 2147483647, %v10042
    %vm10092 = vcmp.eq.f32.partialorder %v10091, 8.507059e+37
    %v10093 = vand.u32 %v10042, 2147483648
    %v10094 = vor.u32 1.1754944e-38, %v10093
    %v10095 = vsel %vm10092, %v10094, %v10090
    %v10096 = vmul.f32 1.0, %v10095
    %v10097 = vrcp.pop %v10043
    %v10098 = vmul.f32 %v10043, %v10097
    %v10099 = vsub.f32 1.0, %v10098
    %v10100 = vmul.f32 %v10097, %v10099
    %v10101 = vadd.f32 %v10097, %v10100
    %vm10102 = vweird.f32 %v10043
    %vm10103 = vweird.f32 %v10097
    %vm10104 = vmor %vm10102, %vm10103
    %v10105 = vsel %vm10104, %v10097, %v10101
    %v10106 = vand.u32 2147483647, %v10043
    %vm10107 = vcmp.eq.f32.partialorder %v10106, 8.507059e+37
    %v10108 = vand.u32 %v10043, 2147483648
    %v10109 = vor.u32 1.1754944e-38, %v10108
    %v10110 = vsel %vm10107, %v10109, %v10105
    %v10111 = vmul.f32 1.0, %v10110
    %v10112 = vrcp.pop %v10044
    %v10113 = vmul.f32 %v10044, %v10112
    %v10114 = vsub.f32 1.0, %v10113
    %v10115 = vmul.f32 %v10112, %v10114
    %v10116 = vadd.f32 %v10112, %v10115
    %vm10117 = vweird.f32 %v10044
    %vm10118 = vweird.f32 %v10112
    %vm10119 = vmor %vm10117, %vm10118
    %v10120 = vsel %vm10119, %v10112, %v10116
    %v10121 = vand.u32 2147483647, %v10044
    %vm10122 = vcmp.eq.f32.partialorder %v10121, 8.507059e+37
    %v10123 = vand.u32 %v10044, 2147483648
    %v10124 = vor.u32 1.1754944e-38, %v10123
    %v10125 = vsel %vm10122, %v10124, %v10120
    %v10126 = vmul.f32 1.0, %v10125
    %v10127 = vrcp.pop %v10045
    %v10128 = vmul.f32 %v10045, %v10127
    %v10129 = vsub.f32 1.0, %v10128
    %v10130 = vmul.f32 %v10127, %v10129
    %v10131 = vadd.f32 %v10127, %v10130
    %vm10132 = vweird.f32 %v10045
    %vm10133 = vweird.f32 %v10127
    %vm10134 = vmor %vm10132, %vm10133
    %v10135 = vsel %vm10134, %v10127, %v10131
    %v10136 = vand.u32 2147483647, %v10045
    %vm10137 = vcmp.eq.f32.partialorder %v10136, 8.507059e+37
    %v10138 = vand.u32 %v10045, 2147483648
    %v10139 = vor.u32 1.1754944e-38, %v10138
    %v10140 = vsel %vm10137, %v10139, %v10135
    %v10141 = vmul.f32 1.0, %v10140
    %v10142 = vrcp.pop %v10046
    %v10143 = vmul.f32 %v10046, %v10142
    %v10144 = vsub.f32 1.0, %v10143
    %v10145 = vmul.f32 %v10142, %v10144
    %v10146 = vadd.f32 %v10142, %v10145
    %vm10147 = vweird.f32 %v10046
    %vm10148 = vweird.f32 %v10142
    %vm10149 = vmor %vm10147, %vm10148
    %v10150 = vsel %vm10149, %v10142, %v10146
    %v10151 = vand.u32 2147483647, %v10046
    %vm10152 = vcmp.eq.f32.partialorder %v10151, 8.507059e+37
    %v10153 = vand.u32 %v10046, 2147483648
    %v10154 = vor.u32 1.1754944e-38, %v10153
    %v10155 = vsel %vm10152, %v10154, %v10150
    %v10156 = vmul.f32 1.0, %v10155
    %v10157 = vrcp.pop %v10047
    %v10158 = vmul.f32 %v10047, %v10157
    %v10159 = vsub.f32 1.0, %v10158
    %v10160 = vmul.f32 %v10157, %v10159
    %v10161 = vadd.f32 %v10157, %v10160
    %vm10162 = vweird.f32 %v10047
    %vm10163 = vweird.f32 %v10157
    %vm10164 = vmor %vm10162, %vm10163
    %v10165 = vsel %vm10164, %v10157, %v10161
    %v10166 = vand.u32 2147483647, %v10047
    %vm10167 = vcmp.eq.f32.partialorder %v10166, 8.507059e+37
    %v10168 = vand.u32 %v10047, 2147483648
    %v10169 = vor.u32 1.1754944e-38, %v10168
    %v10170 = vsel %vm10167, %v10169, %v10165
    %v10171 = vmul.f32 1.0, %v10170
    %v10172 = vrcp.pop %v10048
    %v10173 = vmul.f32 %v10048, %v10172
    %v10174 = vsub.f32 1.0, %v10173
    %v10175 = vmul.f32 %v10172, %v10174
    %v10176 = vadd.f32 %v10172, %v10175
    %vm10177 = vweird.f32 %v10048
    %vm10178 = vweird.f32 %v10172
    %vm10179 = vmor %vm10177, %vm10178
    %v10180 = vsel %vm10179, %v10172, %v10176
    %v10181 = vand.u32 2147483647, %v10048
    %vm10182 = vcmp.eq.f32.partialorder %v10181, 8.507059e+37
    %v10183 = vand.u32 %v10048, 2147483648
    %v10184 = vor.u32 1.1754944e-38, %v10183
    %v10185 = vsel %vm10182, %v10184, %v10180
    %v10186 = vmul.f32 1.0, %v10185
    %v10187 = vrcp.pop %v10049
    %v10188 = vmul.f32 %v10049, %v10187
    %v10189 = vsub.f32 1.0, %v10188
    %v10190 = vmul.f32 %v10187, %v10189
    %v10191 = vadd.f32 %v10187, %v10190
    %vm10192 = vweird.f32 %v10049
    %vm10193 = vweird.f32 %v10187
    %vm10194 = vmor %vm10192, %vm10193
    %v10195 = vsel %vm10194, %v10187, %v10191
    %v10196 = vand.u32 2147483647, %v10049
    %vm10197 = vcmp.eq.f32.partialorder %v10196, 8.507059e+37
    %v10198 = vand.u32 %v10049, 2147483648
    %v10199 = vor.u32 1.1754944e-38, %v10198
    %v10200 = vsel %vm10197, %v10199, %v10195
    %v10201 = vmul.f32 1.0, %v10200
    %v10202 = vrcp.pop %v10050
    %v10203 = vmul.f32 %v10050, %v10202
    %v10204 = vsub.f32 1.0, %v10203
    %v10205 = vmul.f32 %v10202, %v10204
    %v10206 = vadd.f32 %v10202, %v10205
    %vm10207 = vweird.f32 %v10050
    %vm10208 = vweird.f32 %v10202
    %vm10209 = vmor %vm10207, %vm10208
    %v10210 = vsel %vm10209, %v10202, %v10206
    %v10211 = vand.u32 2147483647, %v10050
    %vm10212 = vcmp.eq.f32.partialorder %v10211, 8.507059e+37
    %v10213 = vand.u32 %v10050, 2147483648
    %v10214 = vor.u32 1.1754944e-38, %v10213
    %v10215 = vsel %vm10212, %v10214, %v10210
    %v10216 = vmul.f32 1.0, %v10215
    %v10217 = vrcp.pop %v10051
    %v10218 = vmul.f32 %v10051, %v10217
    %v10219 = vsub.f32 1.0, %v10218
    %v10220 = vmul.f32 %v10217, %v10219
    %v10221 = vadd.f32 %v10217, %v10220
    %vm10222 = vweird.f32 %v10051
    %vm10223 = vweird.f32 %v10217
    %vm10224 = vmor %vm10222, %vm10223
    %v10225 = vsel %vm10224, %v10217, %v10221
    %v10226 = vand.u32 2147483647, %v10051
    %vm10227 = vcmp.eq.f32.partialorder %v10226, 8.507059e+37
    %v10228 = vand.u32 %v10051, 2147483648
    %v10229 = vor.u32 1.1754944e-38, %v10228
    %v10230 = vsel %vm10227, %v10229, %v10225
    %v10231 = vmul.f32 1.0, %v10230
    %v10232 = vmul.f32 %v10066, 1.0614054
    %v10233 = vmul.f32 %v10081, 1.0614054
    %v10234 = vmul.f32 %v10096, 1.0614054
    %v10235 = vmul.f32 %v10111, 1.0614054
    %v10236 = vmul.f32 %v10126, 1.0614054
    %v10237 = vmul.f32 %v10141, 1.0614054
    %v10238 = vmul.f32 %v10156, 1.0614054
    %v10239 = vmul.f32 %v10171, 1.0614054
    %v10240 = vmul.f32 %v10186, 1.0614054
    %v10241 = vmul.f32 %v10201, 1.0614054
    %v10242 = vmul.f32 %v10216, 1.0614054
    %v10243 = vmul.f32 %v10231, 1.0614054
    %v10244 = vadd.f32 %v10232, -1.4531521
    %v10245 = vadd.f32 %v10233, -1.4531521
    %v10246 = vadd.f32 %v10234, -1.4531521
    %v10247 = vadd.f32 %v10235, -1.4531521
    %v10248 = vadd.f32 %v10236, -1.4531521
    %v10249 = vadd.f32 %v10237, -1.4531521
    %v10250 = vadd.f32 %v10238, -1.4531521
    %v10251 = vadd.f32 %v10239, -1.4531521
    %v10252 = vadd.f32 %v10240, -1.4531521
    %v10253 = vadd.f32 %v10241, -1.4531521
    %v10254 = vadd.f32 %v10242, -1.4531521
    %v10255 = vadd.f32 %v10243, -1.4531521
    %v10256 = vmul.f32 %v10244, %v10066
    %v10257 = vmul.f32 %v10245, %v10081
    %v10258 = vmul.f32 %v10246, %v10096
    %v10259 = vmul.f32 %v10247, %v10111
    %v10260 = vmul.f32 %v10248, %v10126
    %v10261 = vmul.f32 %v10249, %v10141
    %v10262 = vmul.f32 %v10250, %v10156
    %v10263 = vmul.f32 %v10251, %v10171
    %v10264 = vmul.f32 %v10252, %v10186
    %v10265 = vmul.f32 %v10253, %v10201
    %v10266 = vmul.f32 %v10254, %v10216
    %v10267 = vmul.f32 %v10255, %v10231
    %v10268 = vadd.f32 %v10256, 1.4214138
    %v10269 = vadd.f32 %v10257, 1.4214138
    %v10270 = vadd.f32 %v10258, 1.4214138
    %v10271 = vadd.f32 %v10259, 1.4214138
    %v10272 = vadd.f32 %v10260, 1.4214138
    %v10273 = vadd.f32 %v10261, 1.4214138
    %v10274 = vadd.f32 %v10262, 1.4214138
    %v10275 = vadd.f32 %v10263, 1.4214138
    %v10276 = vadd.f32 %v10264, 1.4214138
    %v10277 = vadd.f32 %v10265, 1.4214138
    %v10278 = vadd.f32 %v10266, 1.4214138
    %v10279 = vadd.f32 %v10267, 1.4214138
    %v10280 = vmul.f32 %v10268, %v10066
    %v10281 = vmul.f32 %v10269, %v10081
    %v10282 = vmul.f32 %v10270, %v10096
    %v10283 = vmul.f32 %v10271, %v10111
    %v10284 = vmul.f32 %v10272, %v10126
    %v10285 = vmul.f32 %v10273, %v10141
    %v10286 = vmul.f32 %v10274, %v10156
    %v10287 = vmul.f32 %v10275, %v10171
    %v10288 = vmul.f32 %v10276, %v10186
    %v10289 = vmul.f32 %v10277, %v10201
    %v10290 = vmul.f32 %v10278, %v10216
    %v10291 = vmul.f32 %v10279, %v10231
    %v10292 = vadd.f32 %v10280, -0.28449672
    %v10293 = vadd.f32 %v10281, -0.28449672
    %v10294 = vadd.f32 %v10282, -0.28449672
    %v10295 = vadd.f32 %v10283, -0.28449672
    %v10296 = vadd.f32 %v10284, -0.28449672
    %v10297 = vadd.f32 %v10285, -0.28449672
    %v10298 = vadd.f32 %v10286, -0.28449672
    %v10299 = vadd.f32 %v10287, -0.28449672
    %v10300 = vadd.f32 %v10288, -0.28449672
    %v10301 = vadd.f32 %v10289, -0.28449672
    %v10302 = vadd.f32 %v10290, -0.28449672
    %v10303 = vadd.f32 %v10291, -0.28449672
    %v10304 = vmul.f32 %v10292, %v10066
    %v10305 = vmul.f32 %v10293, %v10081
    %v10306 = vmul.f32 %v10294, %v10096
    %v10307 = vmul.f32 %v10295, %v10111
    %v10308 = vmul.f32 %v10296, %v10126
    %v10309 = vmul.f32 %v10297, %v10141
    %v10310 = vmul.f32 %v10298, %v10156
    %v10311 = vmul.f32 %v10299, %v10171
    %v10312 = vmul.f32 %v10300, %v10186
    %v10313 = vmul.f32 %v10301, %v10201
    %v10314 = vmul.f32 %v10302, %v10216
    %v10315 = vmul.f32 %v10303, %v10231
    %v10316 = vadd.f32 %v10304, 0.2548296
    %v10317 = vadd.f32 %v10305, 0.2548296
    %v10318 = vadd.f32 %v10306, 0.2548296
    %v10319 = vadd.f32 %v10307, 0.2548296
    %v10320 = vadd.f32 %v10308, 0.2548296
    %v10321 = vadd.f32 %v10309, 0.2548296
    %v10322 = vadd.f32 %v10310, 0.2548296
    %v10323 = vadd.f32 %v10311, 0.2548296
    %v10324 = vadd.f32 %v10312, 0.2548296
    %v10325 = vadd.f32 %v10313, 0.2548296
    %v10326 = vadd.f32 %v10314, 0.2548296
    %v10327 = vadd.f32 %v10315, 0.2548296
    %v10328 = vmul.f32 %v10316, %v10066
    %v10329 = vmul.f32 %v10317, %v10081
    %v10330 = vmul.f32 %v10318, %v10096
    %v10331 = vmul.f32 %v10319, %v10111
    %v10332 = vmul.f32 %v10320, %v10126
    %v10333 = vmul.f32 %v10321, %v10141
    %v10334 = vmul.f32 %v10322, %v10156
    %v10335 = vmul.f32 %v10323, %v10171
    %v10336 = vmul.f32 %v10324, %v10186
    %v10337 = vmul.f32 %v10325, %v10201
    %v10338 = vmul.f32 %v10326, %v10216
    %v10339 = vmul.f32 %v10327, %v10231
    %v10340 = vsub.f32 0.0, %v10016
    %v10341 = vsub.f32 0.0, %v10017
    %v10342 = vsub.f32 0.0, %v10018
    %v10343 = vsub.f32 0.0, %v10019
    %v10344 = vsub.f32 0.0, %v10020
    %v10345 = vsub.f32 0.0, %v10021
    %v10346 = vsub.f32 0.0, %v10022
    %v10347 = vsub.f32 0.0, %v10023
    %v10348 = vsub.f32 0.0, %v10024
    %v10349 = vsub.f32 0.0, %v10025
    %v10350 = vsub.f32 0.0, %v10026
    %v10351 = vsub.f32 0.0, %v10027
    %v10352 = vmul.f32 %v10340, %v10016
    %v10353 = vmul.f32 %v10341, %v10017
    %v10354 = vmul.f32 %v10342, %v10018
    %v10355 = vmul.f32 %v10343, %v10019
    %v10356 = vmul.f32 %v10344, %v10020
    %v10357 = vmul.f32 %v10345, %v10021
    %v10358 = vmul.f32 %v10346, %v10022
    %v10359 = vmul.f32 %v10347, %v10023
    %v10360 = vmul.f32 %v10348, %v10024
    %v10361 = vmul.f32 %v10349, %v10025
    %v10362 = vmul.f32 %v10350, %v10026
    %v10363 = vmul.f32 %v10351, %v10027
    %v10364 = vmul.f32 %v10352, 1.442695
    %v10365 = vpow.pop %v10364
    %v10366 = vmul.f32 %v10353, 1.442695
    %v10367 = vpow.pop %v10366
    %v10368 = vmul.f32 %v10354, 1.442695
    %v10369 = vpow.pop %v10368
    %v10370 = vmul.f32 %v10355, 1.442695
    %v10371 = vpow.pop %v10370
    %v10372 = vmul.f32 %v10356, 1.442695
    %v10373 = vpow.pop %v10372
    %v10374 = vmul.f32 %v10357, 1.442695
    %v10375 = vpow.pop %v10374
    %v10376 = vmul.f32 %v10358, 1.442695
    %v10377 = vpow.pop %v10376
    %v10378 = vmul.f32 %v10359, 1.442695
    %v10379 = vpow.pop %v10378
    %v10380 = vmul.f32 %v10360, 1.442695
    %v10381 = vpow.pop %v10380
    %v10382 = vmul.f32 %v10361, 1.442695
    %v10383 = vpow.pop %v10382
    %v10384 = vmul.f32 %v10362, 1.442695
    %v10385 = vpow.pop %v10384
    %v10386 = vmul.f32 %v10363, 1.442695
    %v10387 = vpow.pop %v10386
    %v10388 = vmul.f32 %v10328, %v10365
    %v10389 = vmul.f32 %v10329, %v10367
    %v10390 = vmul.f32 %v10330, %v10369
    %v10391 = vmul.f32 %v10331, %v10371
    %v10392 = vmul.f32 %v10332, %v10373
    %v10393 = vmul.f32 %v10333, %v10375
    %v10394 = vmul.f32 %v10334, %v10377
    %v10395 = vmul.f32 %v10335, %v10379
    %v10396 = vmul.f32 %v10336, %v10381
    %v10397 = vmul.f32 %v10337, %v10383
    %v10398 = vmul.f32 %v10338, %v10385
    %v10399 = vmul.f32 %v10339, %v10387
    %v10400 = vsub.f32 1.0, %v10388
    %v10401 = vsub.f32 1.0, %v10389
    %v10402 = vsub.f32 1.0, %v10390
    %v10403 = vsub.f32 1.0, %v10391
    %v10404 = vsub.f32 1.0, %v10392
    %v10405 = vsub.f32 1.0, %v10393
    %v10406 = vsub.f32 1.0, %v10394
    %v10407 = vsub.f32 1.0, %v10395
    %v10408 = vsub.f32 1.0, %v10396
    %v10409 = vsub.f32 1.0, %v10397
    %v10410 = vsub.f32 1.0, %v10398
    %v10411 = vsub.f32 1.0, %v10399
    %vm10412 = vcmp.lt.f32.partialorder %v10004, 0.0
    %vm10413 = vcmp.lt.f32.partialorder %v10005, 0.0
    %vm10414 = vcmp.lt.f32.partialorder %v10006, 0.0
    %vm10415 = vcmp.lt.f32.partialorder %v10007, 0.0
    %vm10416 = vcmp.lt.f32.partialorder %v10008, 0.0
    %vm10417 = vcmp.lt.f32.partialorder %v10009, 0.0
    %vm10418 = vcmp.lt.f32.partialorder %v10010, 0.0
    %vm10419 = vcmp.lt.f32.partialorder %v10011, 0.0
    %vm10420 = vcmp.lt.f32.partialorder %v10012, 0.0
    %vm10421 = vcmp.lt.f32.partialorder %v10013, 0.0
    %vm10422 = vcmp.lt.f32.partialorder %v10014, 0.0
    %vm10423 = vcmp.lt.f32.partialorder %v10015, 0.0
    %v10424 = vsub.f32 0.0, %v10400
    %v10425 = vsub.f32 0.0, %v10401
    %v10426 = vsub.f32 0.0, %v10402
    %v10427 = vsub.f32 0.0, %v10403
    %v10428 = vsub.f32 0.0, %v10404
    %v10429 = vsub.f32 0.0, %v10405
    %v10430 = vsub.f32 0.0, %v10406
    %v10431 = vsub.f32 0.0, %v10407
    %v10432 = vsub.f32 0.0, %v10408
    %v10433 = vsub.f32 0.0, %v10409
    %v10434 = vsub.f32 0.0, %v10410
    %v10435 = vsub.f32 0.0, %v10411
    %v10436 = vsel %vm10412, %v10424, %v10400
    %v10437 = vsel %vm10413, %v10425, %v10401
    %v10438 = vsel %vm10414, %v10426, %v10402
    %v10439 = vsel %vm10415, %v10427, %v10403
    %v10440 = vsel %vm10416, %v10428, %v10404
    %v10441 = vsel %vm10417, %v10429, %v10405
    %v10442 = vsel %vm10418, %v10430, %v10406
    %v10443 = vsel %vm10419, %v10431, %v10407
    %v10444 = vsel %vm10420, %v10432, %v10408
    %v10445 = vsel %vm10421, %v10433, %v10409
    %v10446 = vsel %vm10422, %v10434, %v10410
    %v10447 = vsel %vm10423, %v10435, %v10411
    %v10448 = vadd.f32 %v10436, 1.0
    %v10449 = vadd.f32 %v10437, 1.0
    %v10450 = vadd.f32 %v10438, 1.0
    %v10451 = vadd.f32 %v10439, 1.0
    %v10452 = vadd.f32 %v10440, 1.0
    %v10453 = vadd.f32 %v10441, 1.0
    %v10454 = vadd.f32 %v10442, 1.0
    %v10455 = vadd.f32 %v10443, 1.0
    %v10456 = vadd.f32 %v10444, 1.0
    %v10457 = vadd.f32 %v10445, 1.0
    %v10458 = vadd.f32 %v10446, 1.0
    %v10459 = vadd.f32 %v10447, 1.0
    %v10460 = vmul.f32 %v9992, %v10448
    %v10461 = vmul.f32 %v9993, %v10449
    %v10462 = vmul.f32 %v9994, %v10450
    %v10463 = vmul.f32 %v9995, %v10451
    %v10464 = vmul.f32 %v9996, %v10452
    %v10465 = vmul.f32 %v9997, %v10453
    %v10466 = vmul.f32 %v9998, %v10454
    %v10467 = vmul.f32 %v9999, %v10455
    %v10468 = vmul.f32 %v10000, %v10456
    %v10469 = vmul.f32 %v10001, %v10457
    %v10470 = vmul.f32 %v10002, %v10458
    %v10471 = vmul.f32 %v10003, %v10459
    %v10472 = vpack.c.bf16 %v10461, %v10460
    %v10473 = vpack.c.bf16 %v10463, %v10462
    %v10474 = vpack.c.bf16 %v10465, %v10464
    %v10475 = vpack.c.bf16 %v10467, %v10466
    %v10476 = vpack.c.bf16 %v10469, %v10468
    %v10477 = vpack.c.bf16 %v10471, %v10470
    %s10478 = scalar_lea.vmem %s13, 192
    %v10479 = vld [vmem:[%s10478] sm:$0xf]
    %v10480 = vld [vmem:[%s10478 + $0x4] sm:$0xf]
    %v10481 = vld [vmem:[%s10478 + $0x8] sm:$0xf]
    %v10482 = vld [vmem:[%s10478 + $0xc] sm:$0xf]
    %v10483 = vld [vmem:[%s10478 + $0x10] sm:$0xf]
    %v10484 = vld [vmem:[%s10478 + $0x14] sm:$0xf]
    %v10485 = vld [vmem:[%s10478 + $0x18] sm:$0xf]
    %v10486 = vld [vmem:[%s10478 + $0x1c] sm:$0xf]
    %v10487 = vld [vmem:[%s10478 + $0x20] sm:$0xf]
    %v10488 = vld [vmem:[%s10478 + $0x24] sm:$0xf]
    %v10489 = vld [vmem:[%s10478 + $0x28] sm:$0xf]
    %v10490 = vld [vmem:[%s10478 + $0x2c] sm:$0xf]
    %v10491 = vld [vmem:[%s10478 + $0x30] sm:$0xf]
    %v10492 = vld [vmem:[%s10478 + $0x34] sm:$0xf]
    %v10493 = vld [vmem:[%s10478 + $0x38] sm:$0xf]
    %v10494 = vld [vmem:[%s10478 + $0x3c] sm:$0xf]
    %v10511 = vunpack.c.l.b16 %v10479
    %v10512 = vunpack.c.l.b16 %v10480
    %v10513 = vunpack.c.l.b16 %v10481
    %v10514 = vunpack.c.l.b16 %v10482
    %v10515 = vunpack.c.l.b16 %v10483
    %v10516 = vunpack.c.l.b16 %v10484
    %v10517 = vunpack.c.l.b16 %v10485
    %v10518 = vunpack.c.l.b16 %v10486
    %v10519 = vunpack.c.l.b16 %v10487
    %v10520 = vunpack.c.l.b16 %v10488
    %v10521 = vunpack.c.l.b16 %v10489
    %v10522 = vunpack.c.l.b16 %v10490
    %v10523 = vunpack.c.l.b16 %v10491
    %v10524 = vunpack.c.l.b16 %v10492
    %v10525 = vunpack.c.l.b16 %v10493
    %v10526 = vunpack.c.l.b16 %v10494
    %v10527 = vpack.c.b16 %v10512, %v10511
    %v10528 = vpack.c.b16 %v10514, %v10513
    %v10529 = vpack.c.b16 %v10516, %v10515
    %v10530 = vpack.c.b16 %v10518, %v10517
    %v10531 = vpack.c.b16 %v10520, %v10519
    %v10532 = vpack.c.b16 %v10522, %v10521
    %v10533 = vpack.c.b16 %v10524, %v10523
    %v10534 = vpack.c.b16 %v10526, %v10525
    %10543 = vmatpush.bf16.msra.mxu0 %v10534
    %10544 = vmatpush.bf16.msra.mxu0 %v10533
    %10545 = vmatpush.bf16.msra.mxu0 %v10532
    %10546 = vmatpush.bf16.msra.mxu0 %v10531
    %10547 = vmatpush.bf16.msra.mxu0 %v10530
    %10548 = vmatpush.bf16.msra.mxu0 %v10529
    %10549 = vmatpush.bf16.msra.mxu0 %v10528
    %10550 = vmatpush.bf16.msra.mxu0 %v10527
    %10551 = vmatmul.bf16.gmra.mxu0 %v10472
    %v10552 = vpop.f32.mrf.mxu0
    %v10553 = vadd.f32 0.0, %v10552
    %v10554 = vpop.f32.mrf.mxu0
    %v10555 = vadd.f32 0.0, %v10554
    %10556 = vmatmul.bf16.gmra.mxu0 %v10473
    %v10557 = vpop.f32.mrf.mxu0
    %v10558 = vadd.f32 0.0, %v10557
    %v10559 = vpop.f32.mrf.mxu0
    %v10560 = vadd.f32 0.0, %v10559
    %10561 = vmatmul.bf16.gmra.mxu0 %v10474
    %v10562 = vpop.f32.mrf.mxu0
    %v10563 = vadd.f32 0.0, %v10562
    %v10564 = vpop.f32.mrf.mxu0
    %v10565 = vadd.f32 0.0, %v10564
    %10566 = vmatmul.bf16.gmra.mxu0 %v10475
    %v10567 = vpop.f32.mrf.mxu0
    %v10568 = vadd.f32 0.0, %v10567
    %v10569 = vpop.f32.mrf.mxu0
    %v10570 = vadd.f32 0.0, %v10569
    %10571 = vmatmul.bf16.gmra.mxu0 %v10476
    %v10572 = vpop.f32.mrf.mxu0
    %v10573 = vadd.f32 0.0, %v10572
    %v10574 = vpop.f32.mrf.mxu0
    %v10575 = vadd.f32 0.0, %v10574
    %10576 = vmatmul.bf16.gmra.mxu0 %v10477
    %v10577 = vpop.f32.mrf.mxu0
    %v10578 = vadd.f32 0.0, %v10577
    %v10579 = vpop.f32.mrf.mxu0
    %v10580 = vadd.f32 0.0, %v10579
    %10581 = vdwg.mxu0
    %v10582 = vadd.f32 %v9597, %v10553
    %v10583 = vadd.f32 %v9598, %v10555
    %v10584 = vadd.f32 %v9599, %v10558
    %v10585 = vadd.f32 %v9600, %v10560
    %v10586 = vadd.f32 %v9601, %v10563
    %v10587 = vadd.f32 %v9602, %v10565
    %v10588 = vadd.f32 %v9603, %v10568
    %v10589 = vadd.f32 %v9604, %v10570
    %v10590 = vadd.f32 %v9605, %v10573
    %v10591 = vadd.f32 %v9606, %v10575
    %v10592 = vadd.f32 %v9607, %v10578
    %v10593 = vadd.f32 %v9608, %v10580
    %s10594 = scalar_lea.vmem %s14, 3
    %v10595 = vld [vmem:[%s10594] sm:$0x1]
    %v10597 = vperm.slane %v10595, 0
    %v10599 = vadd.f32 %v10582, %v10597
    %v10600 = vadd.f32 %v10583, %v10597
    %v10601 = vadd.f32 %v10584, %v10597
    %v10602 = vadd.f32 %v10585, %v10597
    %v10603 = vadd.f32 %v10586, %v10597
    %v10604 = vadd.f32 %v10587, %v10597
    %v10605 = vadd.f32 %v10588, %v10597
    %v10606 = vadd.f32 %v10589, %v10597
    %v10607 = vadd.f32 %v10590, %v10597
    %v10608 = vadd.f32 %v10591, %v10597
    %v10609 = vadd.f32 %v10592, %v10597
    %v10610 = vadd.f32 %v10593, %v10597
    %s10611 = scalar_lea.vmem %s15, 1
    %v10612 = vld [vmem:[%s10611] sm:$0x1]
    %s10613 = scalar_lea.vmem %s16, 1
    %v10614 = vld [vmem:[%s10613] sm:$0x1]
    %v10615 = vsel %vm94, %v10599, 0.0
    %10616 = vadd.xlane.f32.xlu0 %v10615
    %v10617 = vpop.xlane.xlu0 %10616
    %v10618 = vsel %vm94, %v10600, 0.0
    %10619 = vadd.xlane.f32.xlu0 %v10618
    %v10620 = vpop.xlane.xlu0 %10619
    %v10621 = vsel %vm94, %v10601, 0.0
    %10622 = vadd.xlane.f32.xlu0 %v10621
    %v10623 = vpop.xlane.xlu0 %10622
    %v10624 = vsel %vm94, %v10602, 0.0
    %10625 = vadd.xlane.f32.xlu0 %v10624
    %v10626 = vpop.xlane.xlu0 %10625
    %v10627 = vsel %vm94, %v10603, 0.0
    %10628 = vadd.xlane.f32.xlu0 %v10627
    %v10629 = vpop.xlane.xlu0 %10628
    %v10630 = vsel %vm94, %v10604, 0.0
    %10631 = vadd.xlane.f32.xlu0 %v10630
    %v10632 = vpop.xlane.xlu0 %10631
    %v10633 = vsel %vm94, %v10605, 0.0
    %10634 = vadd.xlane.f32.xlu0 %v10633
    %v10635 = vpop.xlane.xlu0 %10634
    %v10636 = vsel %vm94, %v10606, 0.0
    %10637 = vadd.xlane.f32.xlu0 %v10636
    %v10638 = vpop.xlane.xlu0 %10637
    %v10639 = vsel %vm94, %v10607, 0.0
    %10640 = vadd.xlane.f32.xlu0 %v10639
    %v10641 = vpop.xlane.xlu0 %10640
    %v10642 = vsel %vm94, %v10608, 0.0
    %10643 = vadd.xlane.f32.xlu0 %v10642
    %v10644 = vpop.xlane.xlu0 %10643
    %v10645 = vsel %vm94, %v10609, 0.0
    %10646 = vadd.xlane.f32.xlu0 %v10645
    %v10647 = vpop.xlane.xlu0 %10646
    %v10648 = vsel %vm94, %v10610, 0.0
    %10649 = vadd.xlane.f32.xlu0 %v10648
    %v10650 = vpop.xlane.xlu0 %10649
    %v10651 = vmul.f32 %v10617, %v137
    %v10652 = vmul.f32 %v10620, %v137
    %v10653 = vmul.f32 %v10623, %v137
    %v10654 = vmul.f32 %v10626, %v137
    %v10655 = vmul.f32 %v10629, %v137
    %v10656 = vmul.f32 %v10632, %v137
    %v10657 = vmul.f32 %v10635, %v137
    %v10658 = vmul.f32 %v10638, %v137
    %v10659 = vmul.f32 %v10641, %v137
    %v10660 = vmul.f32 %v10644, %v137
    %v10661 = vmul.f32 %v10647, %v137
    %v10662 = vmul.f32 %v10650, %v137
    %v10663 = vsub.f32 %v10599, %v10651
    %v10664 = vsub.f32 %v10600, %v10652
    %v10665 = vsub.f32 %v10601, %v10653
    %v10666 = vsub.f32 %v10602, %v10654
    %v10667 = vsub.f32 %v10603, %v10655
    %v10668 = vsub.f32 %v10604, %v10656
    %v10669 = vsub.f32 %v10605, %v10657
    %v10670 = vsub.f32 %v10606, %v10658
    %v10671 = vsub.f32 %v10607, %v10659
    %v10672 = vsub.f32 %v10608, %v10660
    %v10673 = vsub.f32 %v10609, %v10661
    %v10674 = vsub.f32 %v10610, %v10662
    %v10675 = vmul.f32 %v10663, %v10663
    %v10676 = vmul.f32 %v10664, %v10664
    %v10677 = vmul.f32 %v10665, %v10665
    %v10678 = vmul.f32 %v10666, %v10666
    %v10679 = vmul.f32 %v10667, %v10667
    %v10680 = vmul.f32 %v10668, %v10668
    %v10681 = vmul.f32 %v10669, %v10669
    %v10682 = vmul.f32 %v10670, %v10670
    %v10683 = vmul.f32 %v10671, %v10671
    %v10684 = vmul.f32 %v10672, %v10672
    %v10685 = vmul.f32 %v10673, %v10673
    %v10686 = vmul.f32 %v10674, %v10674
    %v10687 = vsel %vm94, %v10675, 0.0
    %10688 = vadd.xlane.f32.xlu0 %v10687
    %v10689 = vpop.xlane.xlu0 %10688
    %v10690 = vsel %vm94, %v10676, 0.0
    %10691 = vadd.xlane.f32.xlu0 %v10690
    %v10692 = vpop.xlane.xlu0 %10691
    %v10693 = vsel %vm94, %v10677, 0.0
    %10694 = vadd.xlane.f32.xlu0 %v10693
    %v10695 = vpop.xlane.xlu0 %10694
    %v10696 = vsel %vm94, %v10678, 0.0
    %10697 = vadd.xlane.f32.xlu0 %v10696
    %v10698 = vpop.xlane.xlu0 %10697
    %v10699 = vsel %vm94, %v10679, 0.0
    %10700 = vadd.xlane.f32.xlu0 %v10699
    %v10701 = vpop.xlane.xlu0 %10700
    %v10702 = vsel %vm94, %v10680, 0.0
    %10703 = vadd.xlane.f32.xlu0 %v10702
    %v10704 = vpop.xlane.xlu0 %10703
    %v10705 = vsel %vm94, %v10681, 0.0
    %10706 = vadd.xlane.f32.xlu0 %v10705
    %v10707 = vpop.xlane.xlu0 %10706
    %v10708 = vsel %vm94, %v10682, 0.0
    %10709 = vadd.xlane.f32.xlu0 %v10708
    %v10710 = vpop.xlane.xlu0 %10709
    %v10711 = vsel %vm94, %v10683, 0.0
    %10712 = vadd.xlane.f32.xlu0 %v10711
    %v10713 = vpop.xlane.xlu0 %10712
    %v10714 = vsel %vm94, %v10684, 0.0
    %10715 = vadd.xlane.f32.xlu0 %v10714
    %v10716 = vpop.xlane.xlu0 %10715
    %v10717 = vsel %vm94, %v10685, 0.0
    %10718 = vadd.xlane.f32.xlu0 %v10717
    %v10719 = vpop.xlane.xlu0 %10718
    %v10720 = vsel %vm94, %v10686, 0.0
    %10721 = vadd.xlane.f32.xlu0 %v10720
    %v10722 = vpop.xlane.xlu0 %10721
    %v10723 = vmul.f32 %v10689, %v137
    %v10724 = vmul.f32 %v10692, %v137
    %v10725 = vmul.f32 %v10695, %v137
    %v10726 = vmul.f32 %v10698, %v137
    %v10727 = vmul.f32 %v10701, %v137
    %v10728 = vmul.f32 %v10704, %v137
    %v10729 = vmul.f32 %v10707, %v137
    %v10730 = vmul.f32 %v10710, %v137
    %v10731 = vmul.f32 %v10713, %v137
    %v10732 = vmul.f32 %v10716, %v137
    %v10733 = vmul.f32 %v10719, %v137
    %v10734 = vmul.f32 %v10722, %v137
    %v10735 = vadd.f32 %v10723, 1e-05
    %v10736 = vadd.f32 %v10724, 1e-05
    %v10737 = vadd.f32 %v10725, 1e-05
    %v10738 = vadd.f32 %v10726, 1e-05
    %v10739 = vadd.f32 %v10727, 1e-05
    %v10740 = vadd.f32 %v10728, 1e-05
    %v10741 = vadd.f32 %v10729, 1e-05
    %v10742 = vadd.f32 %v10730, 1e-05
    %v10743 = vadd.f32 %v10731, 1e-05
    %v10744 = vadd.f32 %v10732, 1e-05
    %v10745 = vadd.f32 %v10733, 1e-05
    %v10746 = vadd.f32 %v10734, 1e-05
    %v10747 = vrsqrt.pop %v10735
    %v10748 = vmul.f32 %v10747, %v10735
    %v10749 = vmul.f32 %v10748, %v10747
    %v10750 = vmul.f32 0.5, %v10749
    %v10751 = vsub.f32 1.5, %v10750
    %v10752 = vmul.f32 %v10747, %v10751
    %vm10753 = vweird.f32 %v10735
    %vm10754 = vweird.f32 %v10747
    %vm10755 = vmor %vm10753, %vm10754
    %v10756 = vsel %vm10755, %v10747, %v10752
    %v10757 = vrsqrt.pop %v10736
    %v10758 = vmul.f32 %v10757, %v10736
    %v10759 = vmul.f32 %v10758, %v10757
    %v10760 = vmul.f32 0.5, %v10759
    %v10761 = vsub.f32 1.5, %v10760
    %v10762 = vmul.f32 %v10757, %v10761
    %vm10763 = vweird.f32 %v10736
    %vm10764 = vweird.f32 %v10757
    %vm10765 = vmor %vm10763, %vm10764
    %v10766 = vsel %vm10765, %v10757, %v10762
    %v10767 = vrsqrt.pop %v10737
    %v10768 = vmul.f32 %v10767, %v10737
    %v10769 = vmul.f32 %v10768, %v10767
    %v10770 = vmul.f32 0.5, %v10769
    %v10771 = vsub.f32 1.5, %v10770
    %v10772 = vmul.f32 %v10767, %v10771
    %vm10773 = vweird.f32 %v10737
    %vm10774 = vweird.f32 %v10767
    %vm10775 = vmor %vm10773, %vm10774
    %v10776 = vsel %vm10775, %v10767, %v10772
    %v10777 = vrsqrt.pop %v10738
    %v10778 = vmul.f32 %v10777, %v10738
    %v10779 = vmul.f32 %v10778, %v10777
    %v10780 = vmul.f32 0.5, %v10779
    %v10781 = vsub.f32 1.5, %v10780
    %v10782 = vmul.f32 %v10777, %v10781
    %vm10783 = vweird.f32 %v10738
    %vm10784 = vweird.f32 %v10777
    %vm10785 = vmor %vm10783, %vm10784
    %v10786 = vsel %vm10785, %v10777, %v10782
    %v10787 = vrsqrt.pop %v10739
    %v10788 = vmul.f32 %v10787, %v10739
    %v10789 = vmul.f32 %v10788, %v10787
    %v10790 = vmul.f32 0.5, %v10789
    %v10791 = vsub.f32 1.5, %v10790
    %v10792 = vmul.f32 %v10787, %v10791
    %vm10793 = vweird.f32 %v10739
    %vm10794 = vweird.f32 %v10787
    %vm10795 = vmor %vm10793, %vm10794
    %v10796 = vsel %vm10795, %v10787, %v10792
    %v10797 = vrsqrt.pop %v10740
    %v10798 = vmul.f32 %v10797, %v10740
    %v10799 = vmul.f32 %v10798, %v10797
    %v10800 = vmul.f32 0.5, %v10799
    %v10801 = vsub.f32 1.5, %v10800
    %v10802 = vmul.f32 %v10797, %v10801
    %vm10803 = vweird.f32 %v10740
    %vm10804 = vweird.f32 %v10797
    %vm10805 = vmor %vm10803, %vm10804
    %v10806 = vsel %vm10805, %v10797, %v10802
    %v10807 = vrsqrt.pop %v10741
    %v10808 = vmul.f32 %v10807, %v10741
    %v10809 = vmul.f32 %v10808, %v10807
    %v10810 = vmul.f32 0.5, %v10809
    %v10811 = vsub.f32 1.5, %v10810
    %v10812 = vmul.f32 %v10807, %v10811
    %vm10813 = vweird.f32 %v10741
    %vm10814 = vweird.f32 %v10807
    %vm10815 = vmor %vm10813, %vm10814
    %v10816 = vsel %vm10815, %v10807, %v10812
    %v10817 = vrsqrt.pop %v10742
    %v10818 = vmul.f32 %v10817, %v10742
    %v10819 = vmul.f32 %v10818, %v10817
    %v10820 = vmul.f32 0.5, %v10819
    %v10821 = vsub.f32 1.5, %v10820
    %v10822 = vmul.f32 %v10817, %v10821
    %vm10823 = vweird.f32 %v10742
    %vm10824 = vweird.f32 %v10817
    %vm10825 = vmor %vm10823, %vm10824
    %v10826 = vsel %vm10825, %v10817, %v10822
    %v10827 = vrsqrt.pop %v10743
    %v10828 = vmul.f32 %v10827, %v10743
    %v10829 = vmul.f32 %v10828, %v10827
    %v10830 = vmul.f32 0.5, %v10829
    %v10831 = vsub.f32 1.5, %v10830
    %v10832 = vmul.f32 %v10827, %v10831
    %vm10833 = vweird.f32 %v10743
    %vm10834 = vweird.f32 %v10827
    %vm10835 = vmor %vm10833, %vm10834
    %v10836 = vsel %vm10835, %v10827, %v10832
    %v10837 = vrsqrt.pop %v10744
    %v10838 = vmul.f32 %v10837, %v10744
    %v10839 = vmul.f32 %v10838, %v10837
    %v10840 = vmul.f32 0.5, %v10839
    %v10841 = vsub.f32 1.5, %v10840
    %v10842 = vmul.f32 %v10837, %v10841
    %vm10843 = vweird.f32 %v10744
    %vm10844 = vweird.f32 %v10837
    %vm10845 = vmor %vm10843, %vm10844
    %v10846 = vsel %vm10845, %v10837, %v10842
    %v10847 = vrsqrt.pop %v10745
    %v10848 = vmul.f32 %v10847, %v10745
    %v10849 = vmul.f32 %v10848, %v10847
    %v10850 = vmul.f32 0.5, %v10849
    %v10851 = vsub.f32 1.5, %v10850
    %v10852 = vmul.f32 %v10847, %v10851
    %vm10853 = vweird.f32 %v10745
    %vm10854 = vweird.f32 %v10847
    %vm10855 = vmor %vm10853, %vm10854
    %v10856 = vsel %vm10855, %v10847, %v10852
    %v10857 = vrsqrt.pop %v10746
    %v10858 = vmul.f32 %v10857, %v10746
    %v10859 = vmul.f32 %v10858, %v10857
    %v10860 = vmul.f32 0.5, %v10859
    %v10861 = vsub.f32 1.5, %v10860
    %v10862 = vmul.f32 %v10857, %v10861
    %vm10863 = vweird.f32 %v10746
    %vm10864 = vweird.f32 %v10857
    %vm10865 = vmor %vm10863, %vm10864
    %v10866 = vsel %vm10865, %v10857, %v10862
    %v10867 = vmul.f32 %v10663, %v10756
    %v10868 = vmul.f32 %v10664, %v10766
    %v10869 = vmul.f32 %v10665, %v10776
    %v10870 = vmul.f32 %v10666, %v10786
    %v10871 = vmul.f32 %v10667, %v10796
    %v10872 = vmul.f32 %v10668, %v10806
    %v10873 = vmul.f32 %v10669, %v10816
    %v10874 = vmul.f32 %v10670, %v10826
    %v10875 = vmul.f32 %v10671, %v10836
    %v10876 = vmul.f32 %v10672, %v10846
    %v10877 = vmul.f32 %v10673, %v10856
    %v10878 = vmul.f32 %v10674, %v10866
    %v10880 = vperm.slane %v10612, 0
    %v10882 = vmul.f32 %v10867, %v10880
    %v10883 = vmul.f32 %v10868, %v10880
    %v10884 = vmul.f32 %v10869, %v10880
    %v10885 = vmul.f32 %v10870, %v10880
    %v10886 = vmul.f32 %v10871, %v10880
    %v10887 = vmul.f32 %v10872, %v10880
    %v10888 = vmul.f32 %v10873, %v10880
    %v10889 = vmul.f32 %v10874, %v10880
    %v10890 = vmul.f32 %v10875, %v10880
    %v10891 = vmul.f32 %v10876, %v10880
    %v10892 = vmul.f32 %v10877, %v10880
    %v10893 = vmul.f32 %v10878, %v10880
    %v10895 = vperm.slane %v10614, 0
    %v10897 = vadd.f32 %v10882, %v10895
    %v10898 = vadd.f32 %v10883, %v10895
    %v10899 = vadd.f32 %v10884, %v10895
    %v10900 = vadd.f32 %v10885, %v10895
    %v10901 = vadd.f32 %v10886, %v10895
    %v10902 = vadd.f32 %v10887, %v10895
    %v10903 = vadd.f32 %v10888, %v10895
    %v10904 = vadd.f32 %v10889, %v10895
    %v10905 = vadd.f32 %v10890, %v10895
    %v10906 = vadd.f32 %v10891, %v10895
    %v10907 = vadd.f32 %v10892, %v10895
    %v10908 = vadd.f32 %v10893, %v10895
    %v10909 = vpack.c.bf16 %v10898, %v10897
    %v10910 = vpack.c.bf16 %v10900, %v10899
    %v10911 = vpack.c.bf16 %v10902, %v10901
    %v10912 = vpack.c.bf16 %v10904, %v10903
    %v10913 = vpack.c.bf16 %v10906, %v10905
    %v10914 = vpack.c.bf16 %v10908, %v10907
    %s10915 = scalar_lea.vmem %s17, 16
    %v10916 = vld [vmem:[%s10915] sm:$0xf]
    %v10917 = vld [vmem:[%s10915 + $0x4] sm:$0xf]
    %v10918 = vld [vmem:[%s10915 + $0x8] sm:$0xf]
    %v10919 = vld [vmem:[%s10915 + $0xc] sm:$0xf]
    %s10920 = scalar_lea.vmem %s18, 1
    %v10921 = vld [vmem:[%s10920] sm:$0x1]
    %v10923 = vperm.slane %v10921, 0
    %v10929 = vunpack.c.l.b16 %v10916
    %v10930 = vunpack.c.l.b16 %v10917
    %v10931 = vunpack.c.l.b16 %v10918
    %v10932 = vunpack.c.l.b16 %v10919
    %v10933 = vpack.c.b16 %v10930, %v10929
    %v10934 = vpack.c.b16 %v10932, %v10931
    %v10938 = vsel %vm94, %v10909, 0
    %v10941 = vsel %vm94, %v10910, 0
    %v10944 = vsel %vm94, %v10911, 0
    %v10947 = vsel %vm94, %v10912, 0
    %v10950 = vsel %vm94, %v10913, 0
    %v10953 = vsel %vm94, %v10914, 0
    %10955 = vmatpush.bf16.msra.mxu0 0
    %10956 = vmatpush.bf16.msra.mxu0 0
    %10957 = vmatpush.bf16.msra.mxu0 0
    %10958 = vmatpush.bf16.msra.mxu0 0
    %10959 = vmatpush.bf16.msra.mxu0 0
    %10960 = vmatpush.bf16.msra.mxu0 0
    %10961 = vmatpush.bf16.msra.mxu0 %v10934
    %10962 = vmatpush.bf16.msra.mxu0 %v10933
    %10963 = vmatmul.bf16.gmra.mxu0 %v10938
    %v10964 = vpop.f32.mrf.mxu0
    %v10965 = vadd.f32 %v10923, %v10964
    %v10966 = vpop.f32.mrf.mxu0
    %v10967 = vadd.f32 %v10923, %v10966
    %10968 = vmatmul.bf16.gmra.mxu0 %v10941
    %v10969 = vpop.f32.mrf.mxu0
    %v10970 = vadd.f32 %v10923, %v10969
    %v10971 = vpop.f32.mrf.mxu0
    %v10972 = vadd.f32 %v10923, %v10971
    %10973 = vmatmul.bf16.gmra.mxu0 %v10944
    %v10974 = vpop.f32.mrf.mxu0
    %v10975 = vadd.f32 %v10923, %v10974
    %v10976 = vpop.f32.mrf.mxu0
    %v10977 = vadd.f32 %v10923, %v10976
    %10978 = vmatmul.bf16.gmra.mxu0 %v10947
    %v10979 = vpop.f32.mrf.mxu0
    %v10980 = vadd.f32 %v10923, %v10979
    %v10981 = vpop.f32.mrf.mxu0
    %v10982 = vadd.f32 %v10923, %v10981
    %10983 = vmatmul.bf16.gmra.mxu0 %v10950
    %v10984 = vpop.f32.mrf.mxu0
    %v10985 = vadd.f32 %v10923, %v10984
    %v10986 = vpop.f32.mrf.mxu0
    %v10987 = vadd.f32 %v10923, %v10986
    %10988 = vmatmul.bf16.gmra.mxu0 %v10953
    %v10989 = vpop.f32.mrf.mxu0
    %v10990 = vadd.f32 %v10923, %v10989
    %v10991 = vpop.f32.mrf.mxu0
    %v10992 = vadd.f32 %v10923, %v10991
    %10993 = vdwg.mxu0
    %10994 = vmatpush.msra.mxu0 0.0
    %10995 = vmatpush.msra.mxu0 0.0
    %10996 = vmatpush.msra.mxu0 0.0
    %10997 = vmatpush.msra.mxu0 0.0
    %10998 = vmatpush.msra.mxu0 %v10992
    %10999 = vmatpush.msra.mxu0 %v10990
    %11000 = vmatpush.msra.mxu0 %v10987
    %11001 = vmatpush.msra.mxu0 %v10985
    %11002 = vmatpush.msra.mxu0 %v10982
    %11003 = vmatpush.msra.mxu0 %v10980
    %11004 = vmatpush.msra.mxu0 %v10977
    %11005 = vmatpush.msra.mxu0 %v10975
    %11006 = vmatpush.msra.mxu0 %v10972
    %11007 = vmatpush.msra.mxu0 %v10970
    %11008 = vmatpush.msra.mxu0 %v10967
    %11009 = vmatpush.msra.mxu0 %v10965
    %11010 = vmatmul.f32.gmra.mxu0 %v5522
    %v11011 = vpop.f32.mrf.mxu0
    %v11012 = vadd.f32 0.0, %v11011
    %11013 = vdwg.mxu0
    %v11014 = vsel %vm5544, %v11012, inf
    %11015 = vmin.xlane.f32.xlu0 %v11014
    %v11016 = vpop.xlane.xlu0 %11015
    %v11017 = vsel %vm5544, %v11012, -inf
    %11018 = vmax.xlane.f32.xlu0 %v11017
    %v11019 = vpop.xlane.xlu0 %11018
    %v11020 = vsub.f32 %v11019, %v11016
    %vm11021 = vcmp.lt.f32.partialorder %v11020, 1e-05
    %v11022 = vadd.f32 %v11020, 1e-05
    %v11023 = vsel %vm11021, %v11022, %v11020
    %v11024 = vsub.f32 %v11012, %v11016
    %v11025 = vrcp.pop %v11023
    %v11026 = vmul.f32 %v11023, %v11025
    %v11027 = vsub.f32 1.0, %v11026
    %v11028 = vmul.f32 %v11025, %v11027
    %v11029 = vadd.f32 %v11025, %v11028
    %vm11030 = vweird.f32 %v11023
    %vm11031 = vweird.f32 %v11025
    %vm11032 = vmor %vm11030, %vm11031
    %v11033 = vsel %vm11032, %v11025, %v11029
    %v11034 = vand.u32 2147483647, %v11023
    %vm11035 = vcmp.eq.f32.partialorder %v11034, 8.507059e+37
    %v11036 = vand.u32 %v11023, 2147483648
    %v11037 = vor.u32 1.1754944e-38, %v11036
    %v11038 = vsel %vm11035, %v11037, %v11033
    %v11039 = vmul.f32 %v11024, %v11038
    %11040 = vst.msk [vmem:[#allocation4] sm:$0xff] %vm5544, %v11039
    // Predicated region
    $region78: #{dynamics_function_forward.1} parent=1 // pred_check
      _
    $region79: #{dynamics_function_forward.1} parent=1 // pred_check_branch
      %11042 = sbr.rel (0) target = $region81
    $region80: #{dynamics_function_forward.1} parent=1 // pred_region
      %11044 = vsyncadd [#allocation3], 0
      %s11046 = sshll.u32 [#allocation2], 4
      %s11047 = int_to_ptr.vmem [resolvable:$true] %s11046
      %s11048 = sshll.u32 %s19, 4
      %s11049 = int_to_ptr.hbm [resolvable:$true] %s11048
      %11051 = dma.vmem_to_hbm [thread:$0]  %s11047, 128, %s11049, [#allocation3]
    $region81: #{dynamics_function_forward.1} parent=1 // pred_fallthru
      _
    // Predicated region
    $region82: #{dynamics_function_forward.1} parent=1 // pred_check
      _
    $region83: #{dynamics_function_forward.1} parent=1 // pred_check_branch
      %11053 = sbr.rel (0) target = $region85
    $region84: #{dynamics_function_forward.1} parent=1 // pred_region
      %11055 = vsyncadd [#allocation5], 0
      %s11057 = sshll.u32 [#allocation4], 4
      %s11058 = int_to_ptr.vmem [resolvable:$true] %s11057
      %s11059 = sshll.u32 %s20, 4
      %s11060 = int_to_ptr.hbm [resolvable:$true] %s11059
      %11062 = dma.vmem_to_hbm [thread:$0]  %s11058, 128, %s11060, [#allocation5]
    $region85: #{dynamics_function_forward.1} parent=1 // pred_fallthru
      _
    // Predicated region
    $region86: #{dynamics_function_forward.1} parent=1 // pred_check
      _
    $region87: #{dynamics_function_forward.1} parent=1 // pred_check_branch
      %11064 = sbr.rel (0) target = $region89
    $region88: #{dynamics_function_forward.1} parent=1 // pred_region
      %11066 = dma.done [#allocation3], 128
    $region89: #{dynamics_function_forward.1} parent=1 // pred_fallthru
      _
    // Predicated region
    $region90: #{dynamics_function_forward.1} parent=1 // pred_check
      _
    $region91: #{dynamics_function_forward.1} parent=1 // pred_check_branch
      %11068 = sbr.rel (0) target = $region93
    $region92: #{dynamics_function_forward.1} parent=1 // pred_region
      %11070 = dma.done [#allocation5], 128
    $region93: #{dynamics_function_forward.1} parent=1 // pred_fallthru
      _
    %11071 = vsyncpa [#allocation3], 1
    %11072 = vsyncpa [#allocation5], 1

</llo_original>
